<compile_context>
chip_gen: v7x
topology: tpu7x:2x2x1
jax: 0.10.0
libtpu: 0.0.40
codegen_flags: <defaults>
</compile_context>

<pallas_src>
import math

import jax
import jax.numpy as jnp
from jax.experimental import pallas as pl
from jax.experimental.pallas import tpu as pltpu

# ----------------------------- problem configuration --------------------------
B = 2                  # batch
C_IN = 16              # in_channel
C_OUT = 16             # out_channel (== C_IN, required by the residual add)
H = 16
W = 16
PH, PW = 8, 8          # patch_size
HEADS = 2
PC = C_OUT // HEADS    # channels per head
N = PH * PW            # positions per patch
GH, GW = H // PH, W // PW
HW = H * W             # positions per image (lane axis inside the kernel)
CK = 64                # key-chunk size: bounds score tiles to (64, 256) = 16 vregs
SCALE = 1.0 / math.sqrt(PC)


def _mish(x):
    # mish(x) = x * tanh(softplus(x)); branch-free stable softplus
    sp = jnp.maximum(x, 0.0) + jnp.log1p(jnp.exp(-jnp.abs(x)))
    return x * jnp.tanh(sp)


# --------------------------------- Pallas kernel -------------------------------
def attention_kernel(x_ref, pid_q_ref, pid_k_ref, wqkv_ref, bpos_ref,
                     w1_ref, b1_ref, w2_ref, b2_ref, o_ref):
    # Patch id of every image position (query orientation), 2 vregs, hoisted.
    pid_q = pid_q_ref[...]                                     # (1, HW) int32

    for b in range(B):
        xb = x_ref[b]                                          # (C_IN, HW) channels-first

        # Fused Q/K/V projection: ONE MXU matmul; biases + positional encoding
        # + 1/sqrt(pc) scale come in as a single pre-folded additive table.
        qkv = jnp.dot(wqkv_ref[...], xb,
                      preferred_element_type=jnp.float32) + bpos_ref[...]   # (48, HW)

        head_out = []
        for hh in range(HEADS):
            # Head split = free sublane slices (rows are head-major by construction).
            qh = qkv[hh * PC:(hh + 1) * PC, :]                              # (PC, HW), scale folded
            kh = qkv[C_OUT + hh * PC:C_OUT + (hh + 1) * PC, :]              # (PC, HW)
            vh = qkv[2 * C_OUT + hh * PC:2 * C_OUT + (hh + 1) * PC, :]      # (PC, HW)

            out_h = jnp.zeros((PC, HW), jnp.float32)
            # Chunk the key axis: keeps score intermediates at (CK, HW) = 16 vregs.
            for ck in range(HW // CK):
                sl = slice(ck * CK, (ck + 1) * CK)
                # st[nk, nq] = q . k for this key chunk (per-patch scale already in q)
                st = jnp.dot(kh[:, sl].T, qh,
                             preferred_element_type=jnp.float32)            # (CK, HW)
                # Same-patch mask replaces the physical patch regrouping.
                same = pid_k_ref[sl, :] == pid_q                            # (CK, HW)
                st = jnp.where(same, st, -1e30)
                # torch Softmax(dim=-2): normalize over the *query* axis (last axis here).
                st = st - jnp.max(st, axis=-1, keepdims=True)
                e = jnp.exp(st)
                p = e / jnp.sum(e, axis=-1, keepdims=True)                  # exact divide
                out_h = out_h + jnp.dot(vh[:, sl], p,
                                        preferred_element_type=jnp.float32)  # (PC, HW)
            head_out.append(out_h)

        # Heads stacked on the sublane axis -> channel = head*PC + c (torch order).
        attn = jnp.concatenate(head_out, axis=0)                # (C_OUT, HW)

        # MLP (1x1 convs) as channels-first matmuls.
        h1 = jnp.dot(w1_ref[...], attn,
                     preferred_element_type=jnp.float32) + b1_ref[...]
        h1 = _mish(h1)
        h2 = jnp.dot(w2_ref[...], h1,
                     preferred_element_type=jnp.float32) + b2_ref[...]

        o_ref[b] = (h2 + xb).astype(o_ref.dtype)                # residual, (C_OUT, HW)


# ----------------------------------- wrapper -----------------------------------
@jax.jit
def attention_layer(x, params):
    """x: (B, C_IN, H, W) NCHW  ->  (B, C_OUT, H, W)."""
    b, c, h, w = x.shape

    # Free reshape (contiguous): no HBM transpose on the way in.
    x3 = x.reshape(B, C_IN, HW)

    # ---- fold parameters into channels-first kernel operands (tiny, loop-invariant) ----
    # Fused QKV weight, rows = [Q(head0),Q(head1),K(head0),K(head1),V(head0),V(head1)].
    wqkv = jnp.concatenate([params["wq"] * SCALE, params["wk"], params["wv"]], axis=0)  # (48, C_IN)

    # Positional encoding laid out per image column (col = h*W + w), shared across
    # the 2x2 patch grid and across heads; added to Q (scaled) and K only.
    pos_img = params["pos"].T.reshape(PC, PH, PW)               # (pc, ph, pw), as torch views it
    pos_full = jnp.tile(pos_img, (1, GH, GW)).reshape(PC, HW)   # value at (c, h*W+w) = pos[c, h%8, w%8]
    pos_heads = jnp.tile(pos_full, (HEADS, 1))                  # (C_OUT, HW)

    bq = params["bq"].reshape(C_OUT, 1)
    bk = params["bk"].reshape(C_OUT, 1)
    bv = params["bv"].reshape(C_OUT, 1)
    bpos = jnp.concatenate([(bq + pos_heads) * SCALE,
                            bk + pos_heads,
                            jnp.broadcast_to(bv, (C_OUT, HW))], axis=0)     # (48, HW)

    # Patch id per image position, in both orientations, for the same-patch mask.
    pos_idx = jnp.arange(HW, dtype=jnp.int32)
    pid = (pos_idx // (W * PH)) * GW + (pos_idx % W) // PW
    pid_q = pid.reshape(1, HW)
    pid_k = pid.reshape(HW, 1)

    b1 = params["b1"].reshape(C_OUT, 1)
    b2 = params["b2"].reshape(C_OUT, 1)

    vmem = pl.BlockSpec(memory_space=pltpu.MemorySpace.VMEM)    # full-array VMEM blocks
    out3 = pl.pallas_call(
        attention_kernel,
        out_shape=jax.ShapeDtypeStruct((B, C_OUT, HW), jnp.float32),
        in_specs=[vmem] * 9,
        out_specs=vmem,
    )(x3, pid_q, pid_k, wqkv, bpos, params["w1"], b1, params["w2"], b2)

    # Free reshape back to NCHW: no HBM transpose on the way out either.
    return out3.reshape(b, C_OUT, h, w)


# ------------------------- pure-JAX reference (torch semantics) -----------------
def reference(x, params):
    b, c, h, w = x.shape

    def conv1x1(t, wmat, bvec):
        return jnp.einsum("bchw,oc->bohw", t, wmat) + bvec.reshape(1, -1, 1, 1)

    pos_chw = params["pos"].T.reshape(PC, PH, PW)               # (pc, ph, pw), as in torch

    q = conv1x1(x, params["wq"], params["bq"])
    k = conv1x1(x, params["wk"], params["bk"])
    v = conv1x1(x, params["wv"], params["bv"])

    def split(t):
        return (t.reshape(b, HEADS, PC, GH, PH, GW, PW)
                  .transpose(0, 3, 5, 1, 2, 4, 6))              # (b, gh, gw, heads, pc, ph, pw)

    q = split(q) + pos_chw
    k = split(k) + pos_chw
    v = split(v)

    q = q.reshape(b, GH, GW, HEADS, PC, N).transpose(0, 1, 2, 3, 5, 4)  # (..., N, pc)
    k = k.reshape(b, GH, GW, HEADS, PC, N)                              # (..., pc, N)
    v = v.reshape(b, GH, GW, HEADS, PC, N).transpose(0, 1, 2, 3, 5, 4)  # (..., N, pc)

    qk = jnp.matmul(q, k) * SCALE
    qk = jax.nn.softmax(qk, axis=-2)                            # torch Softmax(dim=-2)
    out = jnp.matmul(qk, v)                                     # (b, gh, gw, heads, N, pc)

    out = (out.reshape(b, GH, GW, HEADS, PH, PW, PC)
              .transpose(0, 3, 6, 1, 4, 2, 5)
              .reshape(b, PC * HEADS, h, w))

    h1 = _mish(conv1x1(out, params["w1"], params["b1"]))
    h2 = conv1x1(h1, params["w2"], params["b2"])
    return h2 + x


# ------------------------------------- main -------------------------------------
if __name__ == "__main__":
    key = jax.random.PRNGKey(0)
    ks = jax.random.split(key, 12)

    def init_w(k, shape, scale=0.2):
        return jax.random.normal(k, shape, jnp.float32) * scale

    # orthogonal positional encoding (orthonormal columns), shape (N, C_OUT//HEADS)
    pos = jnp.linalg.qr(jax.random.normal(ks[6], (N, PC), jnp.float32))[0]

    params = {
        "wq": init_w(ks[0], (C_OUT, C_IN)), "bq": init_w(ks[1], (1, C_OUT), 0.05),
        "wk": init_w(ks[2], (C_OUT, C_IN)), "bk": init_w(ks[3], (1, C_OUT), 0.05),
        "wv": init_w(ks[4], (C_OUT, C_IN)), "bv": init_w(ks[5], (1, C_OUT), 0.05),
        "pos": pos,
        "w1": init_w(ks[7], (C_OUT, C_OUT)), "b1": init_w(ks[8], (1, C_OUT), 0.05),
        "w2": init_w(ks[9], (C_OUT, C_OUT)), "b2": init_w(ks[10], (1, C_OUT), 0.05),
    }

    x = jax.random.normal(ks[11], (B, C_IN, H, W), jnp.float32)

    out = jax.block_until_ready(attention_layer(x, params))

    ref = reference(x, params)
    max_err = float(jnp.max(jnp.abs(out - ref)))
    assert max_err < 2e-3, f"mismatch vs reference: {max_err}"

    print("KERNEL_OK")
</pallas_src>

<mosaic_0001>
module attributes {stable_mosaic.version = 11 : i64} {
  func.func @attention_kernel(%arg0: memref<2x16x256xf32, #tpu.memory_space<vmem>>, %arg1: memref<1x256xi32, #tpu.memory_space<vmem>>, %arg2: memref<256x1xi32, #tpu.memory_space<vmem>>, %arg3: memref<48x16xf32, #tpu.memory_space<vmem>>, %arg4: memref<48x256xf32, #tpu.memory_space<vmem>>, %arg5: memref<16x16xf32, #tpu.memory_space<vmem>>, %arg6: memref<16x1xf32, #tpu.memory_space<vmem>>, %arg7: memref<16x16xf32, #tpu.memory_space<vmem>>, %arg8: memref<16x1xf32, #tpu.memory_space<vmem>>, %arg9: memref<2x16x256xf32, #tpu.memory_space<vmem>>) attributes {dimension_semantics = [], scalar_prefetch = 0 : i64, scratch_operands = 0 : i64, tpu.core_type = #tpu.core_type<tc>} {
    %c0 = arith.constant 0 : index
    %c0_0 = arith.constant 0 : index
    %0 = vector.load %arg1[%c0, %c0_0] : memref<1x256xi32, #tpu.memory_space<vmem>>, vector<1x256xi32>
    %c0_1 = arith.constant 0 : index
    %c0_2 = arith.constant 0 : index
    %c0_3 = arith.constant 0 : index
    %1 = vector.load %arg0[%c0_1, %c0_2, %c0_3] : memref<2x16x256xf32, #tpu.memory_space<vmem>>, vector<1x16x256xf32>
    %2 = vector.shape_cast %1 : vector<1x16x256xf32> to vector<16x256xf32>
    %c0_4 = arith.constant 0 : index
    %c0_5 = arith.constant 0 : index
    %3 = vector.load %arg3[%c0_4, %c0_5] : memref<48x16xf32, #tpu.memory_space<vmem>>, vector<48x16xf32>
    %cst = arith.constant dense<0.000000e+00> : vector<48x256xf32>
    %4 = tpu.matmul %3, %2, %cst {dimension_numbers = #tpu.dot_dimension_numbers<[1], [0], [0], [1], [0, 0, 1, 1], [], []>} : vector<48x16xf32>, vector<16x256xf32>, vector<48x256xf32> -> vector<48x256xf32>
    %c0_6 = arith.constant 0 : index
    %c0_7 = arith.constant 0 : index
    %5 = vector.load %arg4[%c0_6, %c0_7] : memref<48x256xf32, #tpu.memory_space<vmem>>, vector<48x256xf32>
    %6 = arith.addf %4, %5 : vector<48x256xf32>
    %7 = vector.extract_strided_slice %6 {offsets = [0, 0], sizes = [8, 256], strides = [1, 1]} : vector<48x256xf32> to vector<8x256xf32>
    %8 = vector.extract_strided_slice %6 {offsets = [16, 0], sizes = [8, 256], strides = [1, 1]} : vector<48x256xf32> to vector<8x256xf32>
    %9 = vector.extract_strided_slice %6 {offsets = [32, 0], sizes = [8, 256], strides = [1, 1]} : vector<48x256xf32> to vector<8x256xf32>
    %cst_8 = arith.constant 0.000000e+00 : f32
    %10 = vector.broadcast %cst_8 : f32 to vector<8x256xf32>
    %11 = vector.extract_strided_slice %8 {offsets = [0, 0], sizes = [8, 64], strides = [1, 1]} : vector<8x256xf32> to vector<8x64xf32>
    %12 = tpu.transpose %11, [1, 0] : vector<8x64xf32> -> vector<64x8xf32>
    %cst_9 = arith.constant dense<0.000000e+00> : vector<64x256xf32>
    %13 = tpu.matmul %12, %7, %cst_9 {dimension_numbers = #tpu.dot_dimension_numbers<[1], [0], [0], [1], [0, 0, 1, 1], [], []>} : vector<64x8xf32>, vector<8x256xf32>, vector<64x256xf32> -> vector<64x256xf32>
    %c0_10 = arith.constant 0 : index
    %c0_11 = arith.constant 0 : index
    %14 = vector.load %arg2[%c0_10, %c0_11] : memref<256x1xi32, #tpu.memory_space<vmem>>, vector<64x1xi32>
    %15 = vector.broadcast %14 : vector<64x1xi32> to vector<64x256xi32>
    %16 = vector.broadcast %0 : vector<1x256xi32> to vector<64x256xi32>
    %17 = arith.cmpi eq, %15, %16 : vector<64x256xi32>
    %cst_12 = arith.constant -1.000000e+30 : f32
    %18 = vector.broadcast %cst_12 : f32 to vector<64x256xf32>
    %19 = arith.select %17, %13, %18 : vector<64x256xi1>, vector<64x256xf32>
    %cst_13 = arith.constant dense<0xFF800000> : vector<64xf32>
    %20 = vector.multi_reduction <maximumf>, %19, %cst_13 [1] : vector<64x256xf32> to vector<64xf32>
    %21 = vector.shape_cast %20 : vector<64xf32> to vector<64x1xf32>
    %22 = vector.broadcast %21 : vector<64x1xf32> to vector<64x256xf32>
    %23 = arith.subf %19, %22 : vector<64x256xf32>
    %24 = math.exp %23 : vector<64x256xf32>
    %cst_14 = arith.constant dense<0.000000e+00> : vector<64xf32>
    %25 = vector.multi_reduction <add>, %24, %cst_14 [1] : vector<64x256xf32> to vector<64xf32>
    %26 = vector.shape_cast %25 : vector<64xf32> to vector<64x1xf32>
    %27 = vector.broadcast %26 : vector<64x1xf32> to vector<64x256xf32>
    %28 = arith.divf %24, %27 : vector<64x256xf32>
    %29 = vector.extract_strided_slice %9 {offsets = [0, 0], sizes = [8, 64], strides = [1, 1]} : vector<8x256xf32> to vector<8x64xf32>
    %cst_15 = arith.constant dense<0.000000e+00> : vector<8x256xf32>
    %30 = tpu.matmul %29, %28, %cst_15 {dimension_numbers = #tpu.dot_dimension_numbers<[1], [0], [0], [1], [0, 0, 1, 1], [], []>} : vector<8x64xf32>, vector<64x256xf32>, vector<8x256xf32> -> vector<8x256xf32>
    %31 = arith.addf %10, %30 : vector<8x256xf32>
    %32 = vector.extract_strided_slice %8 {offsets = [0, 64], sizes = [8, 64], strides = [1, 1]} : vector<8x256xf32> to vector<8x64xf32>
    %33 = tpu.transpose %32, [1, 0] : vector<8x64xf32> -> vector<64x8xf32>
    %cst_16 = arith.constant dense<0.000000e+00> : vector<64x256xf32>
    %34 = tpu.matmul %33, %7, %cst_16 {dimension_numbers = #tpu.dot_dimension_numbers<[1], [0], [0], [1], [0, 0, 1, 1], [], []>} : vector<64x8xf32>, vector<8x256xf32>, vector<64x256xf32> -> vector<64x256xf32>
    %c64 = arith.constant 64 : index
    %c0_17 = arith.constant 0 : index
    %35 = vector.load %arg2[%c64, %c0_17] : memref<256x1xi32, #tpu.memory_space<vmem>>, vector<64x1xi32>
    %36 = vector.broadcast %35 : vector<64x1xi32> to vector<64x256xi32>
    %37 = vector.broadcast %0 : vector<1x256xi32> to vector<64x256xi32>
    %38 = arith.cmpi eq, %36, %37 : vector<64x256xi32>
    %cst_18 = arith.constant -1.000000e+30 : f32
    %39 = vector.broadcast %cst_18 : f32 to vector<64x256xf32>
    %40 = arith.select %38, %34, %39 : vector<64x256xi1>, vector<64x256xf32>
    %cst_19 = arith.constant dense<0xFF800000> : vector<64xf32>
    %41 = vector.multi_reduction <maximumf>, %40, %cst_19 [1] : vector<64x256xf32> to vector<64xf32>
    %42 = vector.shape_cast %41 : vector<64xf32> to vector<64x1xf32>
    %43 = vector.broadcast %42 : vector<64x1xf32> to vector<64x256xf32>
    %44 = arith.subf %40, %43 : vector<64x256xf32>
    %45 = math.exp %44 : vector<64x256xf32>
    %cst_20 = arith.constant dense<0.000000e+00> : vector<64xf32>
    %46 = vector.multi_reduction <add>, %45, %cst_20 [1] : vector<64x256xf32> to vector<64xf32>
    %47 = vector.shape_cast %46 : vector<64xf32> to vector<64x1xf32>
    %48 = vector.broadcast %47 : vector<64x1xf32> to vector<64x256xf32>
    %49 = arith.divf %45, %48 : vector<64x256xf32>
    %50 = vector.extract_strided_slice %9 {offsets = [0, 64], sizes = [8, 64], strides = [1, 1]} : vector<8x256xf32> to vector<8x64xf32>
    %cst_21 = arith.constant dense<0.000000e+00> : vector<8x256xf32>
    %51 = tpu.matmul %50, %49, %cst_21 {dimension_numbers = #tpu.dot_dimension_numbers<[1], [0], [0], [1], [0, 0, 1, 1], [], []>} : vector<8x64xf32>, vector<64x256xf32>, vector<8x256xf32> -> vector<8x256xf32>
    %52 = arith.addf %31, %51 : vector<8x256xf32>
    %53 = vector.extract_strided_slice %8 {offsets = [0, 128], sizes = [8, 64], strides = [1, 1]} : vector<8x256xf32> to vector<8x64xf32>
    %54 = tpu.transpose %53, [1, 0] : vector<8x64xf32> -> vector<64x8xf32>
    %cst_22 = arith.constant dense<0.000000e+00> : vector<64x256xf32>
    %55 = tpu.matmul %54, %7, %cst_22 {dimension_numbers = #tpu.dot_dimension_numbers<[1], [0], [0], [1], [0, 0, 1, 1], [], []>} : vector<64x8xf32>, vector<8x256xf32>, vector<64x256xf32> -> vector<64x256xf32>
    %c128 = arith.constant 128 : index
    %c0_23 = arith.constant 0 : index
    %56 = vector.load %arg2[%c128, %c0_23] : memref<256x1xi32, #tpu.memory_space<vmem>>, vector<64x1xi32>
    %57 = vector.broadcast %56 : vector<64x1xi32> to vector<64x256xi32>
    %58 = vector.broadcast %0 : vector<1x256xi32> to vector<64x256xi32>
    %59 = arith.cmpi eq, %57, %58 : vector<64x256xi32>
    %cst_24 = arith.constant -1.000000e+30 : f32
    %60 = vector.broadcast %cst_24 : f32 to vector<64x256xf32>
    %61 = arith.select %59, %55, %60 : vector<64x256xi1>, vector<64x256xf32>
    %cst_25 = arith.constant dense<0xFF800000> : vector<64xf32>
    %62 = vector.multi_reduction <maximumf>, %61, %cst_25 [1] : vector<64x256xf32> to vector<64xf32>
    %63 = vector.shape_cast %62 : vector<64xf32> to vector<64x1xf32>
    %64 = vector.broadcast %63 : vector<64x1xf32> to vector<64x256xf32>
    %65 = arith.subf %61, %64 : vector<64x256xf32>
    %66 = math.exp %65 : vector<64x256xf32>
    %cst_26 = arith.constant dense<0.000000e+00> : vector<64xf32>
    %67 = vector.multi_reduction <add>, %66, %cst_26 [1] : vector<64x256xf32> to vector<64xf32>
    %68 = vector.shape_cast %67 : vector<64xf32> to vector<64x1xf32>
    %69 = vector.broadcast %68 : vector<64x1xf32> to vector<64x256xf32>
    %70 = arith.divf %66, %69 : vector<64x256xf32>
    %71 = vector.extract_strided_slice %9 {offsets = [0, 128], sizes = [8, 64], strides = [1, 1]} : vector<8x256xf32> to vector<8x64xf32>
    %cst_27 = arith.constant dense<0.000000e+00> : vector<8x256xf32>
    %72 = tpu.matmul %71, %70, %cst_27 {dimension_numbers = #tpu.dot_dimension_numbers<[1], [0], [0], [1], [0, 0, 1, 1], [], []>} : vector<8x64xf32>, vector<64x256xf32>, vector<8x256xf32> -> vector<8x256xf32>
    %73 = arith.addf %52, %72 : vector<8x256xf32>
    %74 = vector.extract_strided_slice %8 {offsets = [0, 192], sizes = [8, 64], strides = [1, 1]} : vector<8x256xf32> to vector<8x64xf32>
    %75 = tpu.transpose %74, [1, 0] : vector<8x64xf32> -> vector<64x8xf32>
    %cst_28 = arith.constant dense<0.000000e+00> : vector<64x256xf32>
    %76 = tpu.matmul %75, %7, %cst_28 {dimension_numbers = #tpu.dot_dimension_numbers<[1], [0], [0], [1], [0, 0, 1, 1], [], []>} : vector<64x8xf32>, vector<8x256xf32>, vector<64x256xf32> -> vector<64x256xf32>
    %c192 = arith.constant 192 : index
    %c0_29 = arith.constant 0 : index
    %77 = vector.load %arg2[%c192, %c0_29] : memref<256x1xi32, #tpu.memory_space<vmem>>, vector<64x1xi32>
    %78 = vector.broadcast %77 : vector<64x1xi32> to vector<64x256xi32>
    %79 = vector.broadcast %0 : vector<1x256xi32> to vector<64x256xi32>
    %80 = arith.cmpi eq, %78, %79 : vector<64x256xi32>
    %cst_30 = arith.constant -1.000000e+30 : f32
    %81 = vector.broadcast %cst_30 : f32 to vector<64x256xf32>
    %82 = arith.select %80, %76, %81 : vector<64x256xi1>, vector<64x256xf32>
    %cst_31 = arith.constant dense<0xFF800000> : vector<64xf32>
    %83 = vector.multi_reduction <maximumf>, %82, %cst_31 [1] : vector<64x256xf32> to vector<64xf32>
    %84 = vector.shape_cast %83 : vector<64xf32> to vector<64x1xf32>
    %85 = vector.broadcast %84 : vector<64x1xf32> to vector<64x256xf32>
    %86 = arith.subf %82, %85 : vector<64x256xf32>
    %87 = math.exp %86 : vector<64x256xf32>
    %cst_32 = arith.constant dense<0.000000e+00> : vector<64xf32>
    %88 = vector.multi_reduction <add>, %87, %cst_32 [1] : vector<64x256xf32> to vector<64xf32>
    %89 = vector.shape_cast %88 : vector<64xf32> to vector<64x1xf32>
    %90 = vector.broadcast %89 : vector<64x1xf32> to vector<64x256xf32>
    %91 = arith.divf %87, %90 : vector<64x256xf32>
    %92 = vector.extract_strided_slice %9 {offsets = [0, 192], sizes = [8, 64], strides = [1, 1]} : vector<8x256xf32> to vector<8x64xf32>
    %cst_33 = arith.constant dense<0.000000e+00> : vector<8x256xf32>
    %93 = tpu.matmul %92, %91, %cst_33 {dimension_numbers = #tpu.dot_dimension_numbers<[1], [0], [0], [1], [0, 0, 1, 1], [], []>} : vector<8x64xf32>, vector<64x256xf32>, vector<8x256xf32> -> vector<8x256xf32>
    %94 = arith.addf %73, %93 : vector<8x256xf32>
    %95 = vector.extract_strided_slice %6 {offsets = [8, 0], sizes = [8, 256], strides = [1, 1]} : vector<48x256xf32> to vector<8x256xf32>
    %96 = vector.extract_strided_slice %6 {offsets = [24, 0], sizes = [8, 256], strides = [1, 1]} : vector<48x256xf32> to vector<8x256xf32>
    %97 = vector.extract_strided_slice %6 {offsets = [40, 0], sizes = [8, 256], strides = [1, 1]} : vector<48x256xf32> to vector<8x256xf32>
    %cst_34 = arith.constant 0.000000e+00 : f32
    %98 = vector.broadcast %cst_34 : f32 to vector<8x256xf32>
    %99 = vector.extract_strided_slice %96 {offsets = [0, 0], sizes = [8, 64], strides = [1, 1]} : vector<8x256xf32> to vector<8x64xf32>
    %100 = tpu.transpose %99, [1, 0] : vector<8x64xf32> -> vector<64x8xf32>
    %cst_35 = arith.constant dense<0.000000e+00> : vector<64x256xf32>
    %101 = tpu.matmul %100, %95, %cst_35 {dimension_numbers = #tpu.dot_dimension_numbers<[1], [0], [0], [1], [0, 0, 1, 1], [], []>} : vector<64x8xf32>, vector<8x256xf32>, vector<64x256xf32> -> vector<64x256xf32>
    %c0_36 = arith.constant 0 : index
    %c0_37 = arith.constant 0 : index
    %102 = vector.load %arg2[%c0_36, %c0_37] : memref<256x1xi32, #tpu.memory_space<vmem>>, vector<64x1xi32>
    %103 = vector.broadcast %102 : vector<64x1xi32> to vector<64x256xi32>
    %104 = vector.broadcast %0 : vector<1x256xi32> to vector<64x256xi32>
    %105 = arith.cmpi eq, %103, %104 : vector<64x256xi32>
    %cst_38 = arith.constant -1.000000e+30 : f32
    %106 = vector.broadcast %cst_38 : f32 to vector<64x256xf32>
    %107 = arith.select %105, %101, %106 : vector<64x256xi1>, vector<64x256xf32>
    %cst_39 = arith.constant dense<0xFF800000> : vector<64xf32>
    %108 = vector.multi_reduction <maximumf>, %107, %cst_39 [1] : vector<64x256xf32> to vector<64xf32>
    %109 = vector.shape_cast %108 : vector<64xf32> to vector<64x1xf32>
    %110 = vector.broadcast %109 : vector<64x1xf32> to vector<64x256xf32>
    %111 = arith.subf %107, %110 : vector<64x256xf32>
    %112 = math.exp %111 : vector<64x256xf32>
    %cst_40 = arith.constant dense<0.000000e+00> : vector<64xf32>
    %113 = vector.multi_reduction <add>, %112, %cst_40 [1] : vector<64x256xf32> to vector<64xf32>
    %114 = vector.shape_cast %113 : vector<64xf32> to vector<64x1xf32>
    %115 = vector.broadcast %114 : vector<64x1xf32> to vector<64x256xf32>
    %116 = arith.divf %112, %115 : vector<64x256xf32>
    %117 = vector.extract_strided_slice %97 {offsets = [0, 0], sizes = [8, 64], strides = [1, 1]} : vector<8x256xf32> to vector<8x64xf32>
    %cst_41 = arith.constant dense<0.000000e+00> : vector<8x256xf32>
    %118 = tpu.matmul %117, %116, %cst_41 {dimension_numbers = #tpu.dot_dimension_numbers<[1], [0], [0], [1], [0, 0, 1, 1], [], []>} : vector<8x64xf32>, vector<64x256xf32>, vector<8x256xf32> -> vector<8x256xf32>
    %119 = arith.addf %98, %118 : vector<8x256xf32>
    %120 = vector.extract_strided_slice %96 {offsets = [0, 64], sizes = [8, 64], strides = [1, 1]} : vector<8x256xf32> to vector<8x64xf32>
    %121 = tpu.transpose %120, [1, 0] : vector<8x64xf32> -> vector<64x8xf32>
    %cst_42 = arith.constant dense<0.000000e+00> : vector<64x256xf32>
    %122 = tpu.matmul %121, %95, %cst_42 {dimension_numbers = #tpu.dot_dimension_numbers<[1], [0], [0], [1], [0, 0, 1, 1], [], []>} : vector<64x8xf32>, vector<8x256xf32>, vector<64x256xf32> -> vector<64x256xf32>
    %c64_43 = arith.constant 64 : index
    %c0_44 = arith.constant 0 : index
    %123 = vector.load %arg2[%c64_43, %c0_44] : memref<256x1xi32, #tpu.memory_space<vmem>>, vector<64x1xi32>
    %124 = vector.broadcast %123 : vector<64x1xi32> to vector<64x256xi32>
    %125 = vector.broadcast %0 : vector<1x256xi32> to vector<64x256xi32>
    %126 = arith.cmpi eq, %124, %125 : vector<64x256xi32>
    %cst_45 = arith.constant -1.000000e+30 : f32
    %127 = vector.broadcast %cst_45 : f32 to vector<64x256xf32>
    %128 = arith.select %126, %122, %127 : vector<64x256xi1>, vector<64x256xf32>
    %cst_46 = arith.constant dense<0xFF800000> : vector<64xf32>
    %129 = vector.multi_reduction <maximumf>, %128, %cst_46 [1] : vector<64x256xf32> to vector<64xf32>
    %130 = vector.shape_cast %129 : vector<64xf32> to vector<64x1xf32>
    %131 = vector.broadcast %130 : vector<64x1xf32> to vector<64x256xf32>
    %132 = arith.subf %128, %131 : vector<64x256xf32>
    %133 = math.exp %132 : vector<64x256xf32>
    %cst_47 = arith.constant dense<0.000000e+00> : vector<64xf32>
    %134 = vector.multi_reduction <add>, %133, %cst_47 [1] : vector<64x256xf32> to vector<64xf32>
    %135 = vector.shape_cast %134 : vector<64xf32> to vector<64x1xf32>
    %136 = vector.broadcast %135 : vector<64x1xf32> to vector<64x256xf32>
    %137 = arith.divf %133, %136 : vector<64x256xf32>
    %138 = vector.extract_strided_slice %97 {offsets = [0, 64], sizes = [8, 64], strides = [1, 1]} : vector<8x256xf32> to vector<8x64xf32>
    %cst_48 = arith.constant dense<0.000000e+00> : vector<8x256xf32>
    %139 = tpu.matmul %138, %137, %cst_48 {dimension_numbers = #tpu.dot_dimension_numbers<[1], [0], [0], [1], [0, 0, 1, 1], [], []>} : vector<8x64xf32>, vector<64x256xf32>, vector<8x256xf32> -> vector<8x256xf32>
    %140 = arith.addf %119, %139 : vector<8x256xf32>
    %141 = vector.extract_strided_slice %96 {offsets = [0, 128], sizes = [8, 64], strides = [1, 1]} : vector<8x256xf32> to vector<8x64xf32>
    %142 = tpu.transpose %141, [1, 0] : vector<8x64xf32> -> vector<64x8xf32>
    %cst_49 = arith.constant dense<0.000000e+00> : vector<64x256xf32>
    %143 = tpu.matmul %142, %95, %cst_49 {dimension_numbers = #tpu.dot_dimension_numbers<[1], [0], [0], [1], [0, 0, 1, 1], [], []>} : vector<64x8xf32>, vector<8x256xf32>, vector<64x256xf32> -> vector<64x256xf32>
    %c128_50 = arith.constant 128 : index
    %c0_51 = arith.constant 0 : index
    %144 = vector.load %arg2[%c128_50, %c0_51] : memref<256x1xi32, #tpu.memory_space<vmem>>, vector<64x1xi32>
    %145 = vector.broadcast %144 : vector<64x1xi32> to vector<64x256xi32>
    %146 = vector.broadcast %0 : vector<1x256xi32> to vector<64x256xi32>
    %147 = arith.cmpi eq, %145, %146 : vector<64x256xi32>
    %cst_52 = arith.constant -1.000000e+30 : f32
    %148 = vector.broadcast %cst_52 : f32 to vector<64x256xf32>
    %149 = arith.select %147, %143, %148 : vector<64x256xi1>, vector<64x256xf32>
    %cst_53 = arith.constant dense<0xFF800000> : vector<64xf32>
    %150 = vector.multi_reduction <maximumf>, %149, %cst_53 [1] : vector<64x256xf32> to vector<64xf32>
    %151 = vector.shape_cast %150 : vector<64xf32> to vector<64x1xf32>
    %152 = vector.broadcast %151 : vector<64x1xf32> to vector<64x256xf32>
    %153 = arith.subf %149, %152 : vector<64x256xf32>
    %154 = math.exp %153 : vector<64x256xf32>
    %cst_54 = arith.constant dense<0.000000e+00> : vector<64xf32>
    %155 = vector.multi_reduction <add>, %154, %cst_54 [1] : vector<64x256xf32> to vector<64xf32>
    %156 = vector.shape_cast %155 : vector<64xf32> to vector<64x1xf32>
    %157 = vector.broadcast %156 : vector<64x1xf32> to vector<64x256xf32>
    %158 = arith.divf %154, %157 : vector<64x256xf32>
    %159 = vector.extract_strided_slice %97 {offsets = [0, 128], sizes = [8, 64], strides = [1, 1]} : vector<8x256xf32> to vector<8x64xf32>
    %cst_55 = arith.constant dense<0.000000e+00> : vector<8x256xf32>
    %160 = tpu.matmul %159, %158, %cst_55 {dimension_numbers = #tpu.dot_dimension_numbers<[1], [0], [0], [1], [0, 0, 1, 1], [], []>} : vector<8x64xf32>, vector<64x256xf32>, vector<8x256xf32> -> vector<8x256xf32>
    %161 = arith.addf %140, %160 : vector<8x256xf32>
    %162 = vector.extract_strided_slice %96 {offsets = [0, 192], sizes = [8, 64], strides = [1, 1]} : vector<8x256xf32> to vector<8x64xf32>
    %163 = tpu.transpose %162, [1, 0] : vector<8x64xf32> -> vector<64x8xf32>
    %cst_56 = arith.constant dense<0.000000e+00> : vector<64x256xf32>
    %164 = tpu.matmul %163, %95, %cst_56 {dimension_numbers = #tpu.dot_dimension_numbers<[1], [0], [0], [1], [0, 0, 1, 1], [], []>} : vector<64x8xf32>, vector<8x256xf32>, vector<64x256xf32> -> vector<64x256xf32>
    %c192_57 = arith.constant 192 : index
    %c0_58 = arith.constant 0 : index
    %165 = vector.load %arg2[%c192_57, %c0_58] : memref<256x1xi32, #tpu.memory_space<vmem>>, vector<64x1xi32>
    %166 = vector.broadcast %165 : vector<64x1xi32> to vector<64x256xi32>
    %167 = vector.broadcast %0 : vector<1x256xi32> to vector<64x256xi32>
    %168 = arith.cmpi eq, %166, %167 : vector<64x256xi32>
    %cst_59 = arith.constant -1.000000e+30 : f32
    %169 = vector.broadcast %cst_59 : f32 to vector<64x256xf32>
    %170 = arith.select %168, %164, %169 : vector<64x256xi1>, vector<64x256xf32>
    %cst_60 = arith.constant dense<0xFF800000> : vector<64xf32>
    %171 = vector.multi_reduction <maximumf>, %170, %cst_60 [1] : vector<64x256xf32> to vector<64xf32>
    %172 = vector.shape_cast %171 : vector<64xf32> to vector<64x1xf32>
    %173 = vector.broadcast %172 : vector<64x1xf32> to vector<64x256xf32>
    %174 = arith.subf %170, %173 : vector<64x256xf32>
    %175 = math.exp %174 : vector<64x256xf32>
    %cst_61 = arith.constant dense<0.000000e+00> : vector<64xf32>
    %176 = vector.multi_reduction <add>, %175, %cst_61 [1] : vector<64x256xf32> to vector<64xf32>
    %177 = vector.shape_cast %176 : vector<64xf32> to vector<64x1xf32>
    %178 = vector.broadcast %177 : vector<64x1xf32> to vector<64x256xf32>
    %179 = arith.divf %175, %178 : vector<64x256xf32>
    %180 = vector.extract_strided_slice %97 {offsets = [0, 192], sizes = [8, 64], strides = [1, 1]} : vector<8x256xf32> to vector<8x64xf32>
    %cst_62 = arith.constant dense<0.000000e+00> : vector<8x256xf32>
    %181 = tpu.matmul %180, %179, %cst_62 {dimension_numbers = #tpu.dot_dimension_numbers<[1], [0], [0], [1], [0, 0, 1, 1], [], []>} : vector<8x64xf32>, vector<64x256xf32>, vector<8x256xf32> -> vector<8x256xf32>
    %182 = arith.addf %161, %181 : vector<8x256xf32>
    %183 = tpu.concatenate %94, %182 in 0 : vector<8x256xf32>, vector<8x256xf32> -> vector<16x256xf32>
    %c0_63 = arith.constant 0 : index
    %c0_64 = arith.constant 0 : index
    %184 = vector.load %arg5[%c0_63, %c0_64] : memref<16x16xf32, #tpu.memory_space<vmem>>, vector<16x16xf32>
    %cst_65 = arith.constant dense<0.000000e+00> : vector<16x256xf32>
    %185 = tpu.matmul %184, %183, %cst_65 {dimension_numbers = #tpu.dot_dimension_numbers<[1], [0], [0], [1], [0, 0, 1, 1], [], []>} : vector<16x16xf32>, vector<16x256xf32>, vector<16x256xf32> -> vector<16x256xf32>
    %c0_66 = arith.constant 0 : index
    %c0_67 = arith.constant 0 : index
    %186 = vector.load %arg6[%c0_66, %c0_67] : memref<16x1xf32, #tpu.memory_space<vmem>>, vector<16x1xf32>
    %187 = vector.broadcast %186 : vector<16x1xf32> to vector<16x256xf32>
    %188 = arith.addf %185, %187 : vector<16x256xf32>
    %cst_68 = arith.constant 0.000000e+00 : f32
    %189 = vector.broadcast %cst_68 : f32 to vector<16x256xf32>
    %190 = arith.maximumf %188, %189 : vector<16x256xf32>
    %191 = math.absf %188 : vector<16x256xf32>
    %cst_69 = arith.constant 0.000000e+00 : f32
    %192 = vector.broadcast %cst_69 : f32 to vector<16x256xf32>
    %193 = arith.subf %192, %191 : vector<16x256xf32>
    %194 = math.exp %193 : vector<16x256xf32>
    %195 = math.log1p %194 : vector<16x256xf32>
    %196 = arith.addf %190, %195 : vector<16x256xf32>
    %197 = math.tanh %196 : vector<16x256xf32>
    %198 = arith.mulf %188, %197 : vector<16x256xf32>
    %c0_70 = arith.constant 0 : index
    %c0_71 = arith.constant 0 : index
    %199 = vector.load %arg7[%c0_70, %c0_71] : memref<16x16xf32, #tpu.memory_space<vmem>>, vector<16x16xf32>
    %cst_72 = arith.constant dense<0.000000e+00> : vector<16x256xf32>
    %200 = tpu.matmul %199, %198, %cst_72 {dimension_numbers = #tpu.dot_dimension_numbers<[1], [0], [0], [1], [0, 0, 1, 1], [], []>} : vector<16x16xf32>, vector<16x256xf32>, vector<16x256xf32> -> vector<16x256xf32>
    %c0_73 = arith.constant 0 : index
    %c0_74 = arith.constant 0 : index
    %201 = vector.load %arg8[%c0_73, %c0_74] : memref<16x1xf32, #tpu.memory_space<vmem>>, vector<16x1xf32>
    %202 = vector.broadcast %201 : vector<16x1xf32> to vector<16x256xf32>
    %203 = arith.addf %200, %202 : vector<16x256xf32>
    %204 = arith.addf %203, %2 : vector<16x256xf32>
    %c0_75 = arith.constant 0 : index
    %c0_76 = arith.constant 0 : index
    %c0_77 = arith.constant 0 : index
    %205 = vector.load %arg9[%c0_75, %c0_76, %c0_77] : memref<2x16x256xf32, #tpu.memory_space<vmem>>, vector<1x16x256xf32>
    %206 = vector.shape_cast %205 : vector<1x16x256xf32> to vector<16x256xf32>
    %207 = vector.shape_cast %204 : vector<16x256xf32> to vector<1x16x256xf32>
    tpu.vector_store %arg9[%c0_75, %c0_76, %c0_77], %207 {strides = array<i32>} : memref<2x16x256xf32, #tpu.memory_space<vmem>>, vector<1x16x256xf32>,
    %c1 = arith.constant 1 : index
    %c0_78 = arith.constant 0 : index
    %c0_79 = arith.constant 0 : index
    %208 = vector.load %arg0[%c1, %c0_78, %c0_79] : memref<2x16x256xf32, #tpu.memory_space<vmem>>, vector<1x16x256xf32>
    %209 = vector.shape_cast %208 : vector<1x16x256xf32> to vector<16x256xf32>
    %c0_80 = arith.constant 0 : index
    %c0_81 = arith.constant 0 : index
    %210 = vector.load %arg3[%c0_80, %c0_81] : memref<48x16xf32, #tpu.memory_space<vmem>>, vector<48x16xf32>
    %cst_82 = arith.constant dense<0.000000e+00> : vector<48x256xf32>
    %211 = tpu.matmul %210, %209, %cst_82 {dimension_numbers = #tpu.dot_dimension_numbers<[1], [0], [0], [1], [0, 0, 1, 1], [], []>} : vector<48x16xf32>, vector<16x256xf32>, vector<48x256xf32> -> vector<48x256xf32>
    %c0_83 = arith.constant 0 : index
    %c0_84 = arith.constant 0 : index
    %212 = vector.load %arg4[%c0_83, %c0_84] : memref<48x256xf32, #tpu.memory_space<vmem>>, vector<48x256xf32>
    %213 = arith.addf %211, %212 : vector<48x256xf32>
    %214 = vector.extract_strided_slice %213 {offsets = [0, 0], sizes = [8, 256], strides = [1, 1]} : vector<48x256xf32> to vector<8x256xf32>
    %215 = vector.extract_strided_slice %213 {offsets = [16, 0], sizes = [8, 256], strides = [1, 1]} : vector<48x256xf32> to vector<8x256xf32>
    %216 = vector.extract_strided_slice %213 {offsets = [32, 0], sizes = [8, 256], strides = [1, 1]} : vector<48x256xf32> to vector<8x256xf32>
    %cst_85 = arith.constant 0.000000e+00 : f32
    %217 = vector.broadcast %cst_85 : f32 to vector<8x256xf32>
    %218 = vector.extract_strided_slice %215 {offsets = [0, 0], sizes = [8, 64], strides = [1, 1]} : vector<8x256xf32> to vector<8x64xf32>
    %219 = tpu.transpose %218, [1, 0] : vector<8x64xf32> -> vector<64x8xf32>
    %cst_86 = arith.constant dense<0.000000e+00> : vector<64x256xf32>
    %220 = tpu.matmul %219, %214, %cst_86 {dimension_numbers = #tpu.dot_dimension_numbers<[1], [0], [0], [1], [0, 0, 1, 1], [], []>} : vector<64x8xf32>, vector<8x256xf32>, vector<64x256xf32> -> vector<64x256xf32>
    %c0_87 = arith.constant 0 : index
    %c0_88 = arith.constant 0 : index
    %221 = vector.load %arg2[%c0_87, %c0_88] : memref<256x1xi32, #tpu.memory_space<vmem>>, vector<64x1xi32>
    %222 = vector.broadcast %221 : vector<64x1xi32> to vector<64x256xi32>
    %223 = vector.broadcast %0 : vector<1x256xi32> to vector<64x256xi32>
    %224 = arith.cmpi eq, %222, %223 : vector<64x256xi32>
    %cst_89 = arith.constant -1.000000e+30 : f32
    %225 = vector.broadcast %cst_89 : f32 to vector<64x256xf32>
    %226 = arith.select %224, %220, %225 : vector<64x256xi1>, vector<64x256xf32>
    %cst_90 = arith.constant dense<0xFF800000> : vector<64xf32>
    %227 = vector.multi_reduction <maximumf>, %226, %cst_90 [1] : vector<64x256xf32> to vector<64xf32>
    %228 = vector.shape_cast %227 : vector<64xf32> to vector<64x1xf32>
    %229 = vector.broadcast %228 : vector<64x1xf32> to vector<64x256xf32>
    %230 = arith.subf %226, %229 : vector<64x256xf32>
    %231 = math.exp %230 : vector<64x256xf32>
    %cst_91 = arith.constant dense<0.000000e+00> : vector<64xf32>
    %232 = vector.multi_reduction <add>, %231, %cst_91 [1] : vector<64x256xf32> to vector<64xf32>
    %233 = vector.shape_cast %232 : vector<64xf32> to vector<64x1xf32>
    %234 = vector.broadcast %233 : vector<64x1xf32> to vector<64x256xf32>
    %235 = arith.divf %231, %234 : vector<64x256xf32>
    %236 = vector.extract_strided_slice %216 {offsets = [0, 0], sizes = [8, 64], strides = [1, 1]} : vector<8x256xf32> to vector<8x64xf32>
    %cst_92 = arith.constant dense<0.000000e+00> : vector<8x256xf32>
    %237 = tpu.matmul %236, %235, %cst_92 {dimension_numbers = #tpu.dot_dimension_numbers<[1], [0], [0], [1], [0, 0, 1, 1], [], []>} : vector<8x64xf32>, vector<64x256xf32>, vector<8x256xf32> -> vector<8x256xf32>
    %238 = arith.addf %217, %237 : vector<8x256xf32>
    %239 = vector.extract_strided_slice %215 {offsets = [0, 64], sizes = [8, 64], strides = [1, 1]} : vector<8x256xf32> to vector<8x64xf32>
    %240 = tpu.transpose %239, [1, 0] : vector<8x64xf32> -> vector<64x8xf32>
    %cst_93 = arith.constant dense<0.000000e+00> : vector<64x256xf32>
    %241 = tpu.matmul %240, %214, %cst_93 {dimension_numbers = #tpu.dot_dimension_numbers<[1], [0], [0], [1], [0, 0, 1, 1], [], []>} : vector<64x8xf32>, vector<8x256xf32>, vector<64x256xf32> -> vector<64x256xf32>
    %c64_94 = arith.constant 64 : index
    %c0_95 = arith.constant 0 : index
    %242 = vector.load %arg2[%c64_94, %c0_95] : memref<256x1xi32, #tpu.memory_space<vmem>>, vector<64x1xi32>
    %243 = vector.broadcast %242 : vector<64x1xi32> to vector<64x256xi32>
    %244 = vector.broadcast %0 : vector<1x256xi32> to vector<64x256xi32>
    %245 = arith.cmpi eq, %243, %244 : vector<64x256xi32>
    %cst_96 = arith.constant -1.000000e+30 : f32
    %246 = vector.broadcast %cst_96 : f32 to vector<64x256xf32>
    %247 = arith.select %245, %241, %246 : vector<64x256xi1>, vector<64x256xf32>
    %cst_97 = arith.constant dense<0xFF800000> : vector<64xf32>
    %248 = vector.multi_reduction <maximumf>, %247, %cst_97 [1] : vector<64x256xf32> to vector<64xf32>
    %249 = vector.shape_cast %248 : vector<64xf32> to vector<64x1xf32>
    %250 = vector.broadcast %249 : vector<64x1xf32> to vector<64x256xf32>
    %251 = arith.subf %247, %250 : vector<64x256xf32>
    %252 = math.exp %251 : vector<64x256xf32>
    %cst_98 = arith.constant dense<0.000000e+00> : vector<64xf32>
    %253 = vector.multi_reduction <add>, %252, %cst_98 [1] : vector<64x256xf32> to vector<64xf32>
    %254 = vector.shape_cast %253 : vector<64xf32> to vector<64x1xf32>
    %255 = vector.broadcast %254 : vector<64x1xf32> to vector<64x256xf32>
    %256 = arith.divf %252, %255 : vector<64x256xf32>
    %257 = vector.extract_strided_slice %216 {offsets = [0, 64], sizes = [8, 64], strides = [1, 1]} : vector<8x256xf32> to vector<8x64xf32>
    %cst_99 = arith.constant dense<0.000000e+00> : vector<8x256xf32>
    %258 = tpu.matmul %257, %256, %cst_99 {dimension_numbers = #tpu.dot_dimension_numbers<[1], [0], [0], [1], [0, 0, 1, 1], [], []>} : vector<8x64xf32>, vector<64x256xf32>, vector<8x256xf32> -> vector<8x256xf32>
    %259 = arith.addf %238, %258 : vector<8x256xf32>
    %260 = vector.extract_strided_slice %215 {offsets = [0, 128], sizes = [8, 64], strides = [1, 1]} : vector<8x256xf32> to vector<8x64xf32>
    %261 = tpu.transpose %260, [1, 0] : vector<8x64xf32> -> vector<64x8xf32>
    %cst_100 = arith.constant dense<0.000000e+00> : vector<64x256xf32>
    %262 = tpu.matmul %261, %214, %cst_100 {dimension_numbers = #tpu.dot_dimension_numbers<[1], [0], [0], [1], [0, 0, 1, 1], [], []>} : vector<64x8xf32>, vector<8x256xf32>, vector<64x256xf32> -> vector<64x256xf32>
    %c128_101 = arith.constant 128 : index
    %c0_102 = arith.constant 0 : index
    %263 = vector.load %arg2[%c128_101, %c0_102] : memref<256x1xi32, #tpu.memory_space<vmem>>, vector<64x1xi32>
    %264 = vector.broadcast %263 : vector<64x1xi32> to vector<64x256xi32>
    %265 = vector.broadcast %0 : vector<1x256xi32> to vector<64x256xi32>
    %266 = arith.cmpi eq, %264, %265 : vector<64x256xi32>
    %cst_103 = arith.constant -1.000000e+30 : f32
    %267 = vector.broadcast %cst_103 : f32 to vector<64x256xf32>
    %268 = arith.select %266, %262, %267 : vector<64x256xi1>, vector<64x256xf32>
    %cst_104 = arith.constant dense<0xFF800000> : vector<64xf32>
    %269 = vector.multi_reduction <maximumf>, %268, %cst_104 [1] : vector<64x256xf32> to vector<64xf32>
    %270 = vector.shape_cast %269 : vector<64xf32> to vector<64x1xf32>
    %271 = vector.broadcast %270 : vector<64x1xf32> to vector<64x256xf32>
    %272 = arith.subf %268, %271 : vector<64x256xf32>
    %273 = math.exp %272 : vector<64x256xf32>
    %cst_105 = arith.constant dense<0.000000e+00> : vector<64xf32>
    %274 = vector.multi_reduction <add>, %273, %cst_105 [1] : vector<64x256xf32> to vector<64xf32>
    %275 = vector.shape_cast %274 : vector<64xf32> to vector<64x1xf32>
    %276 = vector.broadcast %275 : vector<64x1xf32> to vector<64x256xf32>
    %277 = arith.divf %273, %276 : vector<64x256xf32>
    %278 = vector.extract_strided_slice %216 {offsets = [0, 128], sizes = [8, 64], strides = [1, 1]} : vector<8x256xf32> to vector<8x64xf32>
    %cst_106 = arith.constant dense<0.000000e+00> : vector<8x256xf32>
    %279 = tpu.matmul %278, %277, %cst_106 {dimension_numbers = #tpu.dot_dimension_numbers<[1], [0], [0], [1], [0, 0, 1, 1], [], []>} : vector<8x64xf32>, vector<64x256xf32>, vector<8x256xf32> -> vector<8x256xf32>
    %280 = arith.addf %259, %279 : vector<8x256xf32>
    %281 = vector.extract_strided_slice %215 {offsets = [0, 192], sizes = [8, 64], strides = [1, 1]} : vector<8x256xf32> to vector<8x64xf32>
    %282 = tpu.transpose %281, [1, 0] : vector<8x64xf32> -> vector<64x8xf32>
    %cst_107 = arith.constant dense<0.000000e+00> : vector<64x256xf32>
    %283 = tpu.matmul %282, %214, %cst_107 {dimension_numbers = #tpu.dot_dimension_numbers<[1], [0], [0], [1], [0, 0, 1, 1], [], []>} : vector<64x8xf32>, vector<8x256xf32>, vector<64x256xf32> -> vector<64x256xf32>
    %c192_108 = arith.constant 192 : index
    %c0_109 = arith.constant 0 : index
    %284 = vector.load %arg2[%c192_108, %c0_109] : memref<256x1xi32, #tpu.memory_space<vmem>>, vector<64x1xi32>
    %285 = vector.broadcast %284 : vector<64x1xi32> to vector<64x256xi32>
    %286 = vector.broadcast %0 : vector<1x256xi32> to vector<64x256xi32>
    %287 = arith.cmpi eq, %285, %286 : vector<64x256xi32>
    %cst_110 = arith.constant -1.000000e+30 : f32
    %288 = vector.broadcast %cst_110 : f32 to vector<64x256xf32>
    %289 = arith.select %287, %283, %288 : vector<64x256xi1>, vector<64x256xf32>
    %cst_111 = arith.constant dense<0xFF800000> : vector<64xf32>
    %290 = vector.multi_reduction <maximumf>, %289, %cst_111 [1] : vector<64x256xf32> to vector<64xf32>
    %291 = vector.shape_cast %290 : vector<64xf32> to vector<64x1xf32>
    %292 = vector.broadcast %291 : vector<64x1xf32> to vector<64x256xf32>
    %293 = arith.subf %289, %292 : vector<64x256xf32>
    %294 = math.exp %293 : vector<64x256xf32>
    %cst_112 = arith.constant dense<0.000000e+00> : vector<64xf32>
    %295 = vector.multi_reduction <add>, %294, %cst_112 [1] : vector<64x256xf32> to vector<64xf32>
    %296 = vector.shape_cast %295 : vector<64xf32> to vector<64x1xf32>
    %297 = vector.broadcast %296 : vector<64x1xf32> to vector<64x256xf32>
    %298 = arith.divf %294, %297 : vector<64x256xf32>
    %299 = vector.extract_strided_slice %216 {offsets = [0, 192], sizes = [8, 64], strides = [1, 1]} : vector<8x256xf32> to vector<8x64xf32>
    %cst_113 = arith.constant dense<0.000000e+00> : vector<8x256xf32>
    %300 = tpu.matmul %299, %298, %cst_113 {dimension_numbers = #tpu.dot_dimension_numbers<[1], [0], [0], [1], [0, 0, 1, 1], [], []>} : vector<8x64xf32>, vector<64x256xf32>, vector<8x256xf32> -> vector<8x256xf32>
    %301 = arith.addf %280, %300 : vector<8x256xf32>
    %302 = vector.extract_strided_slice %213 {offsets = [8, 0], sizes = [8, 256], strides = [1, 1]} : vector<48x256xf32> to vector<8x256xf32>
    %303 = vector.extract_strided_slice %213 {offsets = [24, 0], sizes = [8, 256], strides = [1, 1]} : vector<48x256xf32> to vector<8x256xf32>
    %304 = vector.extract_strided_slice %213 {offsets = [40, 0], sizes = [8, 256], strides = [1, 1]} : vector<48x256xf32> to vector<8x256xf32>
    %cst_114 = arith.constant 0.000000e+00 : f32
    %305 = vector.broadcast %cst_114 : f32 to vector<8x256xf32>
    %306 = vector.extract_strided_slice %303 {offsets = [0, 0], sizes = [8, 64], strides = [1, 1]} : vector<8x256xf32> to vector<8x64xf32>
    %307 = tpu.transpose %306, [1, 0] : vector<8x64xf32> -> vector<64x8xf32>
    %cst_115 = arith.constant dense<0.000000e+00> : vector<64x256xf32>
    %308 = tpu.matmul %307, %302, %cst_115 {dimension_numbers = #tpu.dot_dimension_numbers<[1], [0], [0], [1], [0, 0, 1, 1], [], []>} : vector<64x8xf32>, vector<8x256xf32>, vector<64x256xf32> -> vector<64x256xf32>
    %c0_116 = arith.constant 0 : index
    %c0_117 = arith.constant 0 : index
    %309 = vector.load %arg2[%c0_116, %c0_117] : memref<256x1xi32, #tpu.memory_space<vmem>>, vector<64x1xi32>
    %310 = vector.broadcast %309 : vector<64x1xi32> to vector<64x256xi32>
    %311 = vector.broadcast %0 : vector<1x256xi32> to vector<64x256xi32>
    %312 = arith.cmpi eq, %310, %311 : vector<64x256xi32>
    %cst_118 = arith.constant -1.000000e+30 : f32
    %313 = vector.broadcast %cst_118 : f32 to vector<64x256xf32>
    %314 = arith.select %312, %308, %313 : vector<64x256xi1>, vector<64x256xf32>
    %cst_119 = arith.constant dense<0xFF800000> : vector<64xf32>
    %315 = vector.multi_reduction <maximumf>, %314, %cst_119 [1] : vector<64x256xf32> to vector<64xf32>
    %316 = vector.shape_cast %315 : vector<64xf32> to vector<64x1xf32>
    %317 = vector.broadcast %316 : vector<64x1xf32> to vector<64x256xf32>
    %318 = arith.subf %314, %317 : vector<64x256xf32>
    %319 = math.exp %318 : vector<64x256xf32>
    %cst_120 = arith.constant dense<0.000000e+00> : vector<64xf32>
    %320 = vector.multi_reduction <add>, %319, %cst_120 [1] : vector<64x256xf32> to vector<64xf32>
    %321 = vector.shape_cast %320 : vector<64xf32> to vector<64x1xf32>
    %322 = vector.broadcast %321 : vector<64x1xf32> to vector<64x256xf32>
    %323 = arith.divf %319, %322 : vector<64x256xf32>
    %324 = vector.extract_strided_slice %304 {offsets = [0, 0], sizes = [8, 64], strides = [1, 1]} : vector<8x256xf32> to vector<8x64xf32>
    %cst_121 = arith.constant dense<0.000000e+00> : vector<8x256xf32>
    %325 = tpu.matmul %324, %323, %cst_121 {dimension_numbers = #tpu.dot_dimension_numbers<[1], [0], [0], [1], [0, 0, 1, 1], [], []>} : vector<8x64xf32>, vector<64x256xf32>, vector<8x256xf32> -> vector<8x256xf32>
    %326 = arith.addf %305, %325 : vector<8x256xf32>
    %327 = vector.extract_strided_slice %303 {offsets = [0, 64], sizes = [8, 64], strides = [1, 1]} : vector<8x256xf32> to vector<8x64xf32>
    %328 = tpu.transpose %327, [1, 0] : vector<8x64xf32> -> vector<64x8xf32>
    %cst_122 = arith.constant dense<0.000000e+00> : vector<64x256xf32>
    %329 = tpu.matmul %328, %302, %cst_122 {dimension_numbers = #tpu.dot_dimension_numbers<[1], [0], [0], [1], [0, 0, 1, 1], [], []>} : vector<64x8xf32>, vector<8x256xf32>, vector<64x256xf32> -> vector<64x256xf32>
    %c64_123 = arith.constant 64 : index
    %c0_124 = arith.constant 0 : index
    %330 = vector.load %arg2[%c64_123, %c0_124] : memref<256x1xi32, #tpu.memory_space<vmem>>, vector<64x1xi32>
    %331 = vector.broadcast %330 : vector<64x1xi32> to vector<64x256xi32>
    %332 = vector.broadcast %0 : vector<1x256xi32> to vector<64x256xi32>
    %333 = arith.cmpi eq, %331, %332 : vector<64x256xi32>
    %cst_125 = arith.constant -1.000000e+30 : f32
    %334 = vector.broadcast %cst_125 : f32 to vector<64x256xf32>
    %335 = arith.select %333, %329, %334 : vector<64x256xi1>, vector<64x256xf32>
    %cst_126 = arith.constant dense<0xFF800000> : vector<64xf32>
    %336 = vector.multi_reduction <maximumf>, %335, %cst_126 [1] : vector<64x256xf32> to vector<64xf32>
    %337 = vector.shape_cast %336 : vector<64xf32> to vector<64x1xf32>
    %338 = vector.broadcast %337 : vector<64x1xf32> to vector<64x256xf32>
    %339 = arith.subf %335, %338 : vector<64x256xf32>
    %340 = math.exp %339 : vector<64x256xf32>
    %cst_127 = arith.constant dense<0.000000e+00> : vector<64xf32>
    %341 = vector.multi_reduction <add>, %340, %cst_127 [1] : vector<64x256xf32> to vector<64xf32>
    %342 = vector.shape_cast %341 : vector<64xf32> to vector<64x1xf32>
    %343 = vector.broadcast %342 : vector<64x1xf32> to vector<64x256xf32>
    %344 = arith.divf %340, %343 : vector<64x256xf32>
    %345 = vector.extract_strided_slice %304 {offsets = [0, 64], sizes = [8, 64], strides = [1, 1]} : vector<8x256xf32> to vector<8x64xf32>
    %cst_128 = arith.constant dense<0.000000e+00> : vector<8x256xf32>
    %346 = tpu.matmul %345, %344, %cst_128 {dimension_numbers = #tpu.dot_dimension_numbers<[1], [0], [0], [1], [0, 0, 1, 1], [], []>} : vector<8x64xf32>, vector<64x256xf32>, vector<8x256xf32> -> vector<8x256xf32>
    %347 = arith.addf %326, %346 : vector<8x256xf32>
    %348 = vector.extract_strided_slice %303 {offsets = [0, 128], sizes = [8, 64], strides = [1, 1]} : vector<8x256xf32> to vector<8x64xf32>
    %349 = tpu.transpose %348, [1, 0] : vector<8x64xf32> -> vector<64x8xf32>
    %cst_129 = arith.constant dense<0.000000e+00> : vector<64x256xf32>
    %350 = tpu.matmul %349, %302, %cst_129 {dimension_numbers = #tpu.dot_dimension_numbers<[1], [0], [0], [1], [0, 0, 1, 1], [], []>} : vector<64x8xf32>, vector<8x256xf32>, vector<64x256xf32> -> vector<64x256xf32>
    %c128_130 = arith.constant 128 : index
    %c0_131 = arith.constant 0 : index
    %351 = vector.load %arg2[%c128_130, %c0_131] : memref<256x1xi32, #tpu.memory_space<vmem>>, vector<64x1xi32>
    %352 = vector.broadcast %351 : vector<64x1xi32> to vector<64x256xi32>
    %353 = vector.broadcast %0 : vector<1x256xi32> to vector<64x256xi32>
    %354 = arith.cmpi eq, %352, %353 : vector<64x256xi32>
    %cst_132 = arith.constant -1.000000e+30 : f32
    %355 = vector.broadcast %cst_132 : f32 to vector<64x256xf32>
    %356 = arith.select %354, %350, %355 : vector<64x256xi1>, vector<64x256xf32>
    %cst_133 = arith.constant dense<0xFF800000> : vector<64xf32>
    %357 = vector.multi_reduction <maximumf>, %356, %cst_133 [1] : vector<64x256xf32> to vector<64xf32>
    %358 = vector.shape_cast %357 : vector<64xf32> to vector<64x1xf32>
    %359 = vector.broadcast %358 : vector<64x1xf32> to vector<64x256xf32>
    %360 = arith.subf %356, %359 : vector<64x256xf32>
    %361 = math.exp %360 : vector<64x256xf32>
    %cst_134 = arith.constant dense<0.000000e+00> : vector<64xf32>
    %362 = vector.multi_reduction <add>, %361, %cst_134 [1] : vector<64x256xf32> to vector<64xf32>
    %363 = vector.shape_cast %362 : vector<64xf32> to vector<64x1xf32>
    %364 = vector.broadcast %363 : vector<64x1xf32> to vector<64x256xf32>
    %365 = arith.divf %361, %364 : vector<64x256xf32>
    %366 = vector.extract_strided_slice %304 {offsets = [0, 128], sizes = [8, 64], strides = [1, 1]} : vector<8x256xf32> to vector<8x64xf32>
    %cst_135 = arith.constant dense<0.000000e+00> : vector<8x256xf32>
    %367 = tpu.matmul %366, %365, %cst_135 {dimension_numbers = #tpu.dot_dimension_numbers<[1], [0], [0], [1], [0, 0, 1, 1], [], []>} : vector<8x64xf32>, vector<64x256xf32>, vector<8x256xf32> -> vector<8x256xf32>
    %368 = arith.addf %347, %367 : vector<8x256xf32>
    %369 = vector.extract_strided_slice %303 {offsets = [0, 192], sizes = [8, 64], strides = [1, 1]} : vector<8x256xf32> to vector<8x64xf32>
    %370 = tpu.transpose %369, [1, 0] : vector<8x64xf32> -> vector<64x8xf32>
    %cst_136 = arith.constant dense<0.000000e+00> : vector<64x256xf32>
    %371 = tpu.matmul %370, %302, %cst_136 {dimension_numbers = #tpu.dot_dimension_numbers<[1], [0], [0], [1], [0, 0, 1, 1], [], []>} : vector<64x8xf32>, vector<8x256xf32>, vector<64x256xf32> -> vector<64x256xf32>
    %c192_137 = arith.constant 192 : index
    %c0_138 = arith.constant 0 : index
    %372 = vector.load %arg2[%c192_137, %c0_138] : memref<256x1xi32, #tpu.memory_space<vmem>>, vector<64x1xi32>
    %373 = vector.broadcast %372 : vector<64x1xi32> to vector<64x256xi32>
    %374 = vector.broadcast %0 : vector<1x256xi32> to vector<64x256xi32>
    %375 = arith.cmpi eq, %373, %374 : vector<64x256xi32>
    %cst_139 = arith.constant -1.000000e+30 : f32
    %376 = vector.broadcast %cst_139 : f32 to vector<64x256xf32>
    %377 = arith.select %375, %371, %376 : vector<64x256xi1>, vector<64x256xf32>
    %cst_140 = arith.constant dense<0xFF800000> : vector<64xf32>
    %378 = vector.multi_reduction <maximumf>, %377, %cst_140 [1] : vector<64x256xf32> to vector<64xf32>
    %379 = vector.shape_cast %378 : vector<64xf32> to vector<64x1xf32>
    %380 = vector.broadcast %379 : vector<64x1xf32> to vector<64x256xf32>
    %381 = arith.subf %377, %380 : vector<64x256xf32>
    %382 = math.exp %381 : vector<64x256xf32>
    %cst_141 = arith.constant dense<0.000000e+00> : vector<64xf32>
    %383 = vector.multi_reduction <add>, %382, %cst_141 [1] : vector<64x256xf32> to vector<64xf32>
    %384 = vector.shape_cast %383 : vector<64xf32> to vector<64x1xf32>
    %385 = vector.broadcast %384 : vector<64x1xf32> to vector<64x256xf32>
    %386 = arith.divf %382, %385 : vector<64x256xf32>
    %387 = vector.extract_strided_slice %304 {offsets = [0, 192], sizes = [8, 64], strides = [1, 1]} : vector<8x256xf32> to vector<8x64xf32>
    %cst_142 = arith.constant dense<0.000000e+00> : vector<8x256xf32>
    %388 = tpu.matmul %387, %386, %cst_142 {dimension_numbers = #tpu.dot_dimension_numbers<[1], [0], [0], [1], [0, 0, 1, 1], [], []>} : vector<8x64xf32>, vector<64x256xf32>, vector<8x256xf32> -> vector<8x256xf32>
    %389 = arith.addf %368, %388 : vector<8x256xf32>
    %390 = tpu.concatenate %301, %389 in 0 : vector<8x256xf32>, vector<8x256xf32> -> vector<16x256xf32>
    %c0_143 = arith.constant 0 : index
    %c0_144 = arith.constant 0 : index
    %391 = vector.load %arg5[%c0_143, %c0_144] : memref<16x16xf32, #tpu.memory_space<vmem>>, vector<16x16xf32>
    %cst_145 = arith.constant dense<0.000000e+00> : vector<16x256xf32>
    %392 = tpu.matmul %391, %390, %cst_145 {dimension_numbers = #tpu.dot_dimension_numbers<[1], [0], [0], [1], [0, 0, 1, 1], [], []>} : vector<16x16xf32>, vector<16x256xf32>, vector<16x256xf32> -> vector<16x256xf32>
    %c0_146 = arith.constant 0 : index
    %c0_147 = arith.constant 0 : index
    %393 = vector.load %arg6[%c0_146, %c0_147] : memref<16x1xf32, #tpu.memory_space<vmem>>, vector<16x1xf32>
    %394 = vector.broadcast %393 : vector<16x1xf32> to vector<16x256xf32>
    %395 = arith.addf %392, %394 : vector<16x256xf32>
    %cst_148 = arith.constant 0.000000e+00 : f32
    %396 = vector.broadcast %cst_148 : f32 to vector<16x256xf32>
    %397 = arith.maximumf %395, %396 : vector<16x256xf32>
    %398 = math.absf %395 : vector<16x256xf32>
    %cst_149 = arith.constant 0.000000e+00 : f32
    %399 = vector.broadcast %cst_149 : f32 to vector<16x256xf32>
    %400 = arith.subf %399, %398 : vector<16x256xf32>
    %401 = math.exp %400 : vector<16x256xf32>
    %402 = math.log1p %401 : vector<16x256xf32>
    %403 = arith.addf %397, %402 : vector<16x256xf32>
    %404 = math.tanh %403 : vector<16x256xf32>
    %405 = arith.mulf %395, %404 : vector<16x256xf32>
    %c0_150 = arith.constant 0 : index
    %c0_151 = arith.constant 0 : index
    %406 = vector.load %arg7[%c0_150, %c0_151] : memref<16x16xf32, #tpu.memory_space<vmem>>, vector<16x16xf32>
    %cst_152 = arith.constant dense<0.000000e+00> : vector<16x256xf32>
    %407 = tpu.matmul %406, %405, %cst_152 {dimension_numbers = #tpu.dot_dimension_numbers<[1], [0], [0], [1], [0, 0, 1, 1], [], []>} : vector<16x16xf32>, vector<16x256xf32>, vector<16x256xf32> -> vector<16x256xf32>
    %c0_153 = arith.constant 0 : index
    %c0_154 = arith.constant 0 : index
    %408 = vector.load %arg8[%c0_153, %c0_154] : memref<16x1xf32, #tpu.memory_space<vmem>>, vector<16x1xf32>
    %409 = vector.broadcast %408 : vector<16x1xf32> to vector<16x256xf32>
    %410 = arith.addf %407, %409 : vector<16x256xf32>
    %411 = arith.addf %410, %209 : vector<16x256xf32>
    %c1_155 = arith.constant 1 : index
    %c0_156 = arith.constant 0 : index
    %c0_157 = arith.constant 0 : index
    %412 = vector.load %arg9[%c1_155, %c0_156, %c0_157] : memref<2x16x256xf32, #tpu.memory_space<vmem>>, vector<1x16x256xf32>
    %413 = vector.shape_cast %412 : vector<1x16x256xf32> to vector<16x256xf32>
    %414 = vector.shape_cast %411 : vector<16x256xf32> to vector<1x16x256xf32>
    tpu.vector_store %arg9[%c1_155, %c0_156, %c0_157], %414 {strides = array<i32>} : memref<2x16x256xf32, #tpu.memory_space<vmem>>, vector<1x16x256xf32>,
    return
  }
}

</mosaic_0001>

<llo_original>
// kernel: attention_layer.1
$region0: #{attention_layer.1}
  #allocation0 [shape = 'u32[]', space=smem, size = 0x4, offset = 0x4, fixed_abs, tag = 'smem constant byte address 0x4 - core index']
  #allocation1 [shape = 'u32[144,128]{1,0:T(1,128)}', space=vmem, size = 0x12000, scoped, tag = 'internal scratch']
  %s0 = inlined_call_operand.vmem [shape: f32[2,16,256], index: 0, kind: input, shape index: {}]
  %s1 = inlined_call_operand.vmem [shape: s32[1,256], index: 1, kind: input, shape index: {}]
  %s2 = inlined_call_operand.vmem [shape: s32[256,1], index: 2, kind: input, shape index: {}]
  %s3 = inlined_call_operand.vmem [shape: f32[48,16], index: 3, kind: input, shape index: {}]
  %s4 = inlined_call_operand.vmem [shape: f32[48,256], index: 4, kind: input, shape index: {}]
  %s5 = inlined_call_operand.vmem [shape: f32[16,16], index: 5, kind: input, shape index: {}]
  %s6 = inlined_call_operand.vmem [shape: f32[16,1], index: 6, kind: input, shape index: {}]
  %s7 = inlined_call_operand.vmem [shape: f32[16,16], index: 7, kind: input, shape index: {}]
  %s8 = inlined_call_operand.vmem [shape: f32[16,1], index: 8, kind: input, shape index: {}]
  %s9 = inlined_call_operand.vmem [shape: f32[2,16,256], index: 9, kind: output, shape index: {}]
  %s10 = sld [smem:[#allocation0]]
  $region46: #{attention_layer.1} parent=0
    _
  %s12 = ssub.s32 1, %s10
  %s13 = scalar_select 0, %s12, %s10
  // Predicated region
  $region2: #{attention_layer.1} parent=0 // pred_check
    _
  $region3: #{attention_layer.1} parent=0 // pred_check_branch
    %15 = sbr.rel (0) target = $region5
  $region4: #{attention_layer.1} parent=0 // pred_region
    _
  $region5: #{attention_layer.1} parent=0 // pred_fallthru
    _
  // Predicated region
  $region6: #{attention_layer.1} parent=0 // pred_check
    _
  $region7: #{attention_layer.1} parent=0 // pred_check_branch
    %17 = sbr.rel (0) target = $region9
  $region8: #{attention_layer.1} parent=0 // pred_region
    _
  $region9: #{attention_layer.1} parent=0 // pred_fallthru
    _
  // Predicated region
  $region10: #{attention_layer.1} parent=0 // pred_check
    _
  $region11: #{attention_layer.1} parent=0 // pred_check_branch
    %19 = sbr.rel (0) target = $region13
  $region12: #{attention_layer.1} parent=0 // pred_region
    _
  $region13: #{attention_layer.1} parent=0 // pred_fallthru
    _
  // Predicated region
  $region14: #{attention_layer.1} parent=0 // pred_check
    _
  $region15: #{attention_layer.1} parent=0 // pred_check_branch
    %21 = sbr.rel (0) target = $region17
  $region16: #{attention_layer.1} parent=0 // pred_region
    _
  $region17: #{attention_layer.1} parent=0 // pred_fallthru
    _
  // Predicated region
  $region18: #{attention_layer.1} parent=0 // pred_check
    _
  $region19: #{attention_layer.1} parent=0 // pred_check_branch
    %23 = sbr.rel (0) target = $region21
  $region20: #{attention_layer.1} parent=0 // pred_region
    _
  $region21: #{attention_layer.1} parent=0 // pred_fallthru
    _
  // Predicated region
  $region22: #{attention_layer.1} parent=0 // pred_check
    _
  $region23: #{attention_layer.1} parent=0 // pred_check_branch
    %25 = sbr.rel (0) target = $region25
  $region24: #{attention_layer.1} parent=0 // pred_region
    _
  $region25: #{attention_layer.1} parent=0 // pred_fallthru
    _
  // Predicated region
  $region26: #{attention_layer.1} parent=0 // pred_check
    _
  $region27: #{attention_layer.1} parent=0 // pred_check_branch
    %27 = sbr.rel (0) target = $region29
  $region28: #{attention_layer.1} parent=0 // pred_region
    _
  $region29: #{attention_layer.1} parent=0 // pred_fallthru
    _
  // Predicated region
  $region30: #{attention_layer.1} parent=0 // pred_check
    _
  $region31: #{attention_layer.1} parent=0 // pred_check_branch
    %29 = sbr.rel (0) target = $region33
  $region32: #{attention_layer.1} parent=0 // pred_region
    _
  $region33: #{attention_layer.1} parent=0 // pred_fallthru
    _
  // Predicated region
  $region34: #{attention_layer.1} parent=0 // pred_check
    _
  $region35: #{attention_layer.1} parent=0 // pred_check_branch
    %31 = sbr.rel (0) target = $region37
  $region36: #{attention_layer.1} parent=0 // pred_region
    _
  $region37: #{attention_layer.1} parent=0 // pred_fallthru
    _
  %v32 = vld [vmem:[%s1] sm:$0x3]
  %v33 = vld [vmem:[%s0] sm:$0xff]
  %v34 = vld [vmem:[%s0 + $0x8] sm:$0xff]
  %v35 = vld [vmem:[%s0 + $0x10] sm:$0xff]
  %v36 = vld [vmem:[%s0 + $0x18] sm:$0xff]
  %v37 = vld [vmem:[%s3] sm:$0xff]
  %v38 = vld [vmem:[%s3 + $0x8] sm:$0xff]
  %v39 = vld [vmem:[%s3 + $0x10] sm:$0xff]
  %v40 = vld [vmem:[%s3 + $0x18] sm:$0xff]
  %v41 = vld [vmem:[%s3 + $0x20] sm:$0xff]
  %v42 = vld [vmem:[%s3 + $0x28] sm:$0xff]
  %v43 = vld [vmem:[%s4] sm:$0xff]
  %v44 = vld [vmem:[%s4 + $0x8] sm:$0xff]
  %v45 = vld [vmem:[%s4 + $0x10] sm:$0xff]
  %v46 = vld [vmem:[%s4 + $0x18] sm:$0xff]
  %v47 = vld [vmem:[%s4 + $0x20] sm:$0xff]
  %v48 = vld [vmem:[%s4 + $0x28] sm:$0xff]
  %v49 = vld [vmem:[%s4 + $0x30] sm:$0xff]
  %v50 = vld [vmem:[%s4 + $0x38] sm:$0xff]
  %v51 = vld [vmem:[%s4 + $0x40] sm:$0xff]
  %v52 = vld [vmem:[%s4 + $0x48] sm:$0xff]
  %v53 = vld [vmem:[%s4 + $0x50] sm:$0xff]
  %v54 = vld [vmem:[%s4 + $0x58] sm:$0xff]
  %vm55 = vcmask 130048
  %v57 = vsel %vm55, %v37, 0
  %v60 = vsel %vm55, %v38, 0
  %v63 = vsel %vm55, %v39, 0
  %v66 = vsel %vm55, %v40, 0
  %v69 = vsel %vm55, %v41, 0
  %v72 = vsel %vm55, %v42, 0
  %74 = vmatprep.subr.mxu0 %v34
  %75 = vmatpush1.msra.mxu0 %v33
  %76 = vmatprep.subr.mxu0 %v36
  %77 = vmatpush1.msra.mxu0 %v35
  %78 = vmatprep.subr.mxu0 0.0
  %79 = vmatpush1.msra.mxu0 0.0
  %80 = vmatprep.subr.mxu0 0.0
  %81 = vmatpush1.msra.mxu0 0.0
  %82 = vmatprep.subr.mxu0 0.0
  %83 = vmatpush1.msra.mxu0 0.0
  %84 = vmatprep.subr.mxu0 0.0
  %85 = vmatpush1.msra.mxu0 0.0
  %86 = vmatprep.subr.mxu0 0.0
  %87 = vmatpush1.msra.mxu0 0.0
  %88 = vmatprep.subr.mxu0 0.0
  %89 = vmatpush1.msra.mxu0 0.0
  %90 = vmatprep.subr.mxu0 0.0
  %91 = vmatpush1.msra.mxu0 0.0
  %92 = vmatprep.subr.mxu0 0.0
  %93 = vmatpush1.msra.mxu0 0.0
  %94 = vmatprep.subr.mxu0 0.0
  %95 = vmatpush1.msra.mxu0 0.0
  %96 = vmatprep.subr.mxu0 0.0
  %97 = vmatpush1.msra.mxu0 0.0
  %98 = vmatprep.subr.mxu0 0.0
  %99 = vmatpush1.msra.mxu0 0.0
  %100 = vmatprep.subr.mxu0 0.0
  %101 = vmatpush1.msra.mxu0 0.0
  %102 = vmatprep.subr.mxu0 0.0
  %103 = vmatpush1.msra.mxu0 0.0
  %104 = vmatprep.subr.mxu0 0.0
  %105 = vmatpush1.msra.mxu0 0.0
  %106 = vmatprep.subr.mxu0 0.0
  %107 = vmatpush1.msra.mxu0 0.0
  %108 = vmatprep.subr.mxu0 0.0
  %109 = vmatpush1.msra.mxu0 0.0
  %110 = vmatprep.subr.mxu0 0.0
  %111 = vmatpush1.msra.mxu0 0.0
  %112 = vmatprep.subr.mxu0 0.0
  %113 = vmatpush1.msra.mxu0 0.0
  %114 = vmatprep.subr.mxu0 0.0
  %115 = vmatpush1.msra.mxu0 0.0
  %116 = vmatprep.subr.mxu0 0.0
  %117 = vmatpush1.msra.mxu0 0.0
  %118 = vmatprep.subr.mxu0 0.0
  %119 = vmatpush1.msra.mxu0 0.0
  %120 = vmatprep.subr.mxu0 0.0
  %121 = vmatpush1.msra.mxu0 0.0
  %122 = vmatprep.subr.mxu0 0.0
  %123 = vmatpush1.msra.mxu0 0.0
  %124 = vmatprep.subr.mxu0 0.0
  %125 = vmatpush1.msra.mxu0 0.0
  %126 = vmatprep.subr.mxu0 0.0
  %127 = vmatpush1.msra.mxu0 0.0
  %128 = vmatprep.subr.mxu0 0.0
  %129 = vmatpush1.msra.mxu0 0.0
  %130 = vmatprep.subr.mxu0 0.0
  %131 = vmatpush1.msra.mxu0 0.0
  %132 = vmatprep.subr.mxu0 0.0
  %133 = vmatpush1.msra.mxu0 0.0
  %134 = vmatprep.subr.mxu0 0.0
  %135 = vmatpush1.msra.mxu0 0.0
  %136 = vmatprep.subr.mxu0 0.0
  %137 = vmatpush1.msra.mxu0 0.0
  %138 = vmatprep.mubr.f32.mxu0 0.0
  %139 = vmatmul.mubr.f32.gmra.mrb[0].mxu0 %v57
  %v140 = vpop.f32.mrb[0].mxu0
  %v141 = vadd.f32 %v43, %v140
  %v142 = vpop.f32.mrb[0].mxu0
  %v143 = vadd.f32 %v44, %v142
  %144 = vmatprep.mubr.f32.mxu0 0.0
  %145 = vmatmul.mubr.f32.gmra.mrb[0].mxu0 %v60
  %v146 = vpop.f32.mrb[0].mxu0
  %v147 = vadd.f32 %v45, %v146
  %v148 = vpop.f32.mrb[0].mxu0
  %v149 = vadd.f32 %v46, %v148
  %150 = vmatprep.mubr.f32.mxu0 0.0
  %151 = vmatmul.mubr.f32.gmra.mrb[0].mxu0 %v63
  %v152 = vpop.f32.mrb[0].mxu0
  %v153 = vadd.f32 %v47, %v152
  %v154 = vpop.f32.mrb[0].mxu0
  %v155 = vadd.f32 %v48, %v154
  %156 = vmatprep.mubr.f32.mxu0 0.0
  %157 = vmatmul.mubr.f32.gmra.mrb[0].mxu0 %v66
  %v158 = vpop.f32.mrb[0].mxu0
  %v159 = vadd.f32 %v49, %v158
  %v160 = vpop.f32.mrb[0].mxu0
  %v161 = vadd.f32 %v50, %v160
  %162 = vmatprep.mubr.f32.mxu0 0.0
  %163 = vmatmul.mubr.f32.gmra.mrb[0].mxu0 %v69
  %v164 = vpop.f32.mrb[0].mxu0
  %v165 = vadd.f32 %v51, %v164
  %v166 = vpop.f32.mrb[0].mxu0
  %v167 = vadd.f32 %v52, %v166
  %168 = vmatprep.mubr.f32.mxu0 0.0
  %169 = vmatmul.mubr.f32.gmra.mrb[0].mxu0 %v72
  %v170 = vpop.f32.mrb[0].mxu0
  %v171 = vadd.f32 %v53, %v170
  %v172 = vpop.f32.mrb[0].mxu0
  %v173 = vadd.f32 %v54, %v172
  %174 = vdwg.mxu0
  %175 = vxpose.xlu0.b32.start [1/16] %v153, 128
  %176 = vxpose.xlu0.b32.cont [2/16] 0.0, 128
  %177 = vxpose.xlu0.b32.cont [3/16] 0.0, 128
  %178 = vxpose.xlu0.b32.cont [4/16] 0.0, 128
  %179 = vxpose.xlu0.b32.cont [5/16] 0.0, 128
  %180 = vxpose.xlu0.b32.cont [6/16] 0.0, 128
  %181 = vxpose.xlu0.b32.cont [7/16] 0.0, 128
  %182 = vxpose.xlu0.b32.cont [8/16] 0.0, 128
  %183 = vxpose.xlu0.b32.cont [9/16] 0.0, 128
  %184 = vxpose.xlu0.b32.cont [10/16] 0.0, 128
  %185 = vxpose.xlu0.b32.cont [11/16] 0.0, 128
  %186 = vxpose.xlu0.b32.cont [12/16] 0.0, 128
  %187 = vxpose.xlu0.b32.cont [13/16] 0.0, 128
  %188 = vxpose.xlu0.b32.cont [14/16] 0.0, 128
  %189 = vxpose.xlu0.b32.cont [15/16] 0.0, 128
  %190 = vxpose.xlu0.b32.end [16/16] 0.0, 128
  %v191 = vpop.trf.xlu0
  %v192 = vpop.trf.xlu0
  %v193 = vpop.trf.xlu0
  %v194 = vpop.trf.xlu0
  %v195 = vpop.trf.xlu0
  %v196 = vpop.trf.xlu0
  %v197 = vpop.trf.xlu0
  %v198 = vpop.trf.xlu0
  %v199 = vpop.trf.xlu0
  %v200 = vpop.trf.xlu0
  %v201 = vpop.trf.xlu0
  %v202 = vpop.trf.xlu0
  %v203 = vpop.trf.xlu0
  %v204 = vpop.trf.xlu0
  %v205 = vpop.trf.xlu0
  %v206 = vpop.trf.xlu0
  %vm207 = vcmask 64512
  %v209 = vsel %vm207, %v191, 0
  %v212 = vsel %vm207, %v192, 0
  %v215 = vsel %vm207, %v193, 0
  %v218 = vsel %vm207, %v194, 0
  %v221 = vsel %vm207, %v195, 0
  %v224 = vsel %vm207, %v196, 0
  %v227 = vsel %vm207, %v197, 0
  %v230 = vsel %vm207, %v198, 0
  %232 = vmatprep.subr.mxu0 %v143
  %233 = vmatpush1.msra.mxu0 %v141
  %234 = vmatprep.subr.mxu0 0.0
  %235 = vmatpush1.msra.mxu0 0.0
  %236 = vmatprep.subr.mxu0 0.0
  %237 = vmatpush1.msra.mxu0 0.0
  %238 = vmatprep.subr.mxu0 0.0
  %239 = vmatpush1.msra.mxu0 0.0
  %240 = vmatprep.subr.mxu0 0.0
  %241 = vmatpush1.msra.mxu0 0.0
  %242 = vmatprep.subr.mxu0 0.0
  %243 = vmatpush1.msra.mxu0 0.0
  %244 = vmatprep.subr.mxu0 0.0
  %245 = vmatpush1.msra.mxu0 0.0
  %246 = vmatprep.subr.mxu0 0.0
  %247 = vmatpush1.msra.mxu0 0.0
  %248 = vmatprep.subr.mxu0 0.0
  %249 = vmatpush1.msra.mxu0 0.0
  %250 = vmatprep.subr.mxu0 0.0
  %251 = vmatpush1.msra.mxu0 0.0
  %252 = vmatprep.subr.mxu0 0.0
  %253 = vmatpush1.msra.mxu0 0.0
  %254 = vmatprep.subr.mxu0 0.0
  %255 = vmatpush1.msra.mxu0 0.0
  %256 = vmatprep.subr.mxu0 0.0
  %257 = vmatpush1.msra.mxu0 0.0
  %258 = vmatprep.subr.mxu0 0.0
  %259 = vmatpush1.msra.mxu0 0.0
  %260 = vmatprep.subr.mxu0 0.0
  %261 = vmatpush1.msra.mxu0 0.0
  %262 = vmatprep.subr.mxu0 0.0
  %263 = vmatpush1.msra.mxu0 0.0
  %264 = vmatprep.subr.mxu0 0.0
  %265 = vmatpush1.msra.mxu0 0.0
  %266 = vmatprep.subr.mxu0 0.0
  %267 = vmatpush1.msra.mxu0 0.0
  %268 = vmatprep.subr.mxu0 0.0
  %269 = vmatpush1.msra.mxu0 0.0
  %270 = vmatprep.subr.mxu0 0.0
  %271 = vmatpush1.msra.mxu0 0.0
  %272 = vmatprep.subr.mxu0 0.0
  %273 = vmatpush1.msra.mxu0 0.0
  %274 = vmatprep.subr.mxu0 0.0
  %275 = vmatpush1.msra.mxu0 0.0
  %276 = vmatprep.subr.mxu0 0.0
  %277 = vmatpush1.msra.mxu0 0.0
  %278 = vmatprep.subr.mxu0 0.0
  %279 = vmatpush1.msra.mxu0 0.0
  %280 = vmatprep.subr.mxu0 0.0
  %281 = vmatpush1.msra.mxu0 0.0
  %282 = vmatprep.subr.mxu0 0.0
  %283 = vmatpush1.msra.mxu0 0.0
  %284 = vmatprep.subr.mxu0 0.0
  %285 = vmatpush1.msra.mxu0 0.0
  %286 = vmatprep.subr.mxu0 0.0
  %287 = vmatpush1.msra.mxu0 0.0
  %288 = vmatprep.subr.mxu0 0.0
  %289 = vmatpush1.msra.mxu0 0.0
  %290 = vmatprep.subr.mxu0 0.0
  %291 = vmatpush1.msra.mxu0 0.0
  %292 = vmatprep.subr.mxu0 0.0
  %293 = vmatpush1.msra.mxu0 0.0
  %294 = vmatprep.subr.mxu0 0.0
  %295 = vmatpush1.msra.mxu0 0.0
  %296 = vmatprep.mubr.f32.mxu0 0.0
  %297 = vmatmul.mubr.f32.gmra.mrb[0].mxu0 %v209
  %v298 = vpop.f32.mrb[0].mxu0
  %v299 = vadd.f32 0.0, %v298
  %v300 = vpop.f32.mrb[0].mxu0
  %v301 = vadd.f32 0.0, %v300
  %302 = vmatprep.mubr.f32.mxu0 0.0
  %303 = vmatmul.mubr.f32.gmra.mrb[0].mxu0 %v212
  %v304 = vpop.f32.mrb[0].mxu0
  %v305 = vadd.f32 0.0, %v304
  %v306 = vpop.f32.mrb[0].mxu0
  %v307 = vadd.f32 0.0, %v306
  %308 = vmatprep.mubr.f32.mxu0 0.0
  %309 = vmatmul.mubr.f32.gmra.mrb[0].mxu0 %v215
  %v310 = vpop.f32.mrb[0].mxu0
  %v311 = vadd.f32 0.0, %v310
  %v312 = vpop.f32.mrb[0].mxu0
  %v313 = vadd.f32 0.0, %v312
  %314 = vmatprep.mubr.f32.mxu0 0.0
  %315 = vmatmul.mubr.f32.gmra.mrb[0].mxu0 %v218
  %v316 = vpop.f32.mrb[0].mxu0
  %v317 = vadd.f32 0.0, %v316
  %v318 = vpop.f32.mrb[0].mxu0
  %v319 = vadd.f32 0.0, %v318
  %320 = vmatprep.mubr.f32.mxu0 0.0
  %321 = vmatmul.mubr.f32.gmra.mrb[0].mxu0 %v221
  %v322 = vpop.f32.mrb[0].mxu0
  %v323 = vadd.f32 0.0, %v322
  %v324 = vpop.f32.mrb[0].mxu0
  %v325 = vadd.f32 0.0, %v324
  %326 = vmatprep.mubr.f32.mxu0 0.0
  %327 = vmatmul.mubr.f32.gmra.mrb[0].mxu0 %v224
  %v328 = vpop.f32.mrb[0].mxu0
  %v329 = vadd.f32 0.0, %v328
  %v330 = vpop.f32.mrb[0].mxu0
  %v331 = vadd.f32 0.0, %v330
  %332 = vmatprep.mubr.f32.mxu0 0.0
  %333 = vmatmul.mubr.f32.gmra.mrb[0].mxu0 %v227
  %v334 = vpop.f32.mrb[0].mxu0
  %v335 = vadd.f32 0.0, %v334
  %v336 = vpop.f32.mrb[0].mxu0
  %v337 = vadd.f32 0.0, %v336
  %338 = vmatprep.mubr.f32.mxu0 0.0
  %339 = vmatmul.mubr.f32.gmra.mrb[0].mxu0 %v230
  %v340 = vpop.f32.mrb[0].mxu0
  %v341 = vadd.f32 0.0, %v340
  %v342 = vpop.f32.mrb[0].mxu0
  %v343 = vadd.f32 0.0, %v342
  %344 = vdwg.mxu0
  %v345 = vld [vmem:[%s2] sm:$0xff]
  %v346 = vld [vmem:[%s2 + $0x8] sm:$0xff]
  %v347 = vld [vmem:[%s2 + $0x10] sm:$0xff]
  %v348 = vld [vmem:[%s2 + $0x18] sm:$0xff]
  %v349 = vld [vmem:[%s2 + $0x20] sm:$0xff]
  %v350 = vld [vmem:[%s2 + $0x28] sm:$0xff]
  %v351 = vld [vmem:[%s2 + $0x30] sm:$0xff]
  %v352 = vld [vmem:[%s2 + $0x38] sm:$0xff]
  %353 = vset.pattern.permute.xlu0 0
  %354 = vperm.xlu0 %353, %v345
  %v355 = vpop.permute.xlu0 %354
  %356 = vset.pattern.permute.xlu0 0
  %357 = vperm.xlu0 %356, %v346
  %v358 = vpop.permute.xlu0 %357
  %359 = vset.pattern.permute.xlu0 0
  %360 = vperm.xlu0 %359, %v347
  %v361 = vpop.permute.xlu0 %360
  %362 = vset.pattern.permute.xlu0 0
  %363 = vperm.xlu0 %362, %v348
  %v364 = vpop.permute.xlu0 %363
  %365 = vset.pattern.permute.xlu0 0
  %366 = vperm.xlu0 %365, %v349
  %v367 = vpop.permute.xlu0 %366
  %368 = vset.pattern.permute.xlu0 0
  %369 = vperm.xlu0 %368, %v350
  %v370 = vpop.permute.xlu0 %369
  %371 = vset.pattern.permute.xlu0 0
  %372 = vperm.xlu0 %371, %v351
  %v373 = vpop.permute.xlu0 %372
  %374 = vset.pattern.permute.xlu0 0
  %375 = vperm.xlu0 %374, %v352
  %v376 = vpop.permute.xlu0 %375
  %v377 = vlaneseq
  %v378 = vshrl.u32 %v377, 7
  %v379 = vsub.s32 0, %v378
  %v380 = vrot.slane %v32, %v379
  %v381 = vlaneseq
  %v382 = vshrl.u32 %v381, 7
  %v383 = vsub.s32 1, %v382
  %v384 = vrot.slane %v32, %v383
  %vm385 = vcmp.eq.s32.totalorder %v355, %v380
  %vm386 = vcmp.eq.s32.totalorder %v355, %v384
  %vm387 = vcmp.eq.s32.totalorder %v358, %v380
  %vm388 = vcmp.eq.s32.totalorder %v358, %v384
  %vm389 = vcmp.eq.s32.totalorder %v361, %v380
  %vm390 = vcmp.eq.s32.totalorder %v361, %v384
  %vm391 = vcmp.eq.s32.totalorder %v364, %v380
  %vm392 = vcmp.eq.s32.totalorder %v364, %v384
  %vm393 = vcmp.eq.s32.totalorder %v367, %v380
  %vm394 = vcmp.eq.s32.totalorder %v367, %v384
  %vm395 = vcmp.eq.s32.totalorder %v370, %v380
  %vm396 = vcmp.eq.s32.totalorder %v370, %v384
  %vm397 = vcmp.eq.s32.totalorder %v373, %v380
  %vm398 = vcmp.eq.s32.totalorder %v373, %v384
  %vm399 = vcmp.eq.s32.totalorder %v376, %v380
  %vm400 = vcmp.eq.s32.totalorder %v376, %v384
  %v401 = vsel %vm385, %v299, -1e+30
  %v402 = vsel %vm386, %v301, -1e+30
  %v403 = vsel %vm387, %v305, -1e+30
  %v404 = vsel %vm388, %v307, -1e+30
  %v405 = vsel %vm389, %v311, -1e+30
  %v406 = vsel %vm390, %v313, -1e+30
  %v407 = vsel %vm391, %v317, -1e+30
  %v408 = vsel %vm392, %v319, -1e+30
  %v409 = vsel %vm393, %v323, -1e+30
  %v410 = vsel %vm394, %v325, -1e+30
  %v411 = vsel %vm395, %v329, -1e+30
  %v412 = vsel %vm396, %v331, -1e+30
  %v413 = vsel %vm397, %v335, -1e+30
  %v414 = vsel %vm398, %v337, -1e+30
  %v415 = vsel %vm399, %v341, -1e+30
  %v416 = vsel %vm400, %v343, -1e+30
  %v417 = vmax.f32 %v401, %v402
  %418 = vmax.xlane.f32.xlu0 %v417
  %v419 = vpop.xlane.xlu0 %418
  %v420 = vmax.f32 %v403, %v404
  %421 = vmax.xlane.f32.xlu0 %v420
  %v422 = vpop.xlane.xlu0 %421
  %v423 = vmax.f32 %v405, %v406
  %424 = vmax.xlane.f32.xlu0 %v423
  %v425 = vpop.xlane.xlu0 %424
  %v426 = vmax.f32 %v407, %v408
  %427 = vmax.xlane.f32.xlu0 %v426
  %v428 = vpop.xlane.xlu0 %427
  %v429 = vmax.f32 %v409, %v410
  %430 = vmax.xlane.f32.xlu0 %v429
  %v431 = vpop.xlane.xlu0 %430
  %v432 = vmax.f32 %v411, %v412
  %433 = vmax.xlane.f32.xlu0 %v432
  %v434 = vpop.xlane.xlu0 %433
  %v435 = vmax.f32 %v413, %v414
  %436 = vmax.xlane.f32.xlu0 %v435
  %v437 = vpop.xlane.xlu0 %436
  %v438 = vmax.f32 %v415, %v416
  %439 = vmax.xlane.f32.xlu0 %v438
  %v440 = vpop.xlane.xlu0 %439
  %v441 = vsub.f32 %v401, %v419
  %v442 = vsub.f32 %v402, %v419
  %v443 = vsub.f32 %v403, %v422
  %v444 = vsub.f32 %v404, %v422
  %v445 = vsub.f32 %v405, %v425
  %v446 = vsub.f32 %v406, %v425
  %v447 = vsub.f32 %v407, %v428
  %v448 = vsub.f32 %v408, %v428
  %v449 = vsub.f32 %v409, %v431
  %v450 = vsub.f32 %v410, %v431
  %v451 = vsub.f32 %v411, %v434
  %v452 = vsub.f32 %v412, %v434
  %v453 = vsub.f32 %v413, %v437
  %v454 = vsub.f32 %v414, %v437
  %v455 = vsub.f32 %v415, %v440
  %v456 = vsub.f32 %v416, %v440
  %v457 = vmul.f32 %v441, 1.442695
  %v458 = vpow.pop %v457
  %v459 = vmul.f32 %v442, 1.442695
  %v460 = vpow.pop %v459
  %v461 = vmul.f32 %v443, 1.442695
  %v462 = vpow.pop %v461
  %v463 = vmul.f32 %v444, 1.442695
  %v464 = vpow.pop %v463
  %v465 = vmul.f32 %v445, 1.442695
  %v466 = vpow.pop %v465
  %v467 = vmul.f32 %v446, 1.442695
  %v468 = vpow.pop %v467
  %v469 = vmul.f32 %v447, 1.442695
  %v470 = vpow.pop %v469
  %v471 = vmul.f32 %v448, 1.442695
  %v472 = vpow.pop %v471
  %v473 = vmul.f32 %v449, 1.442695
  %v474 = vpow.pop %v473
  %v475 = vmul.f32 %v450, 1.442695
  %v476 = vpow.pop %v475
  %v477 = vmul.f32 %v451, 1.442695
  %v478 = vpow.pop %v477
  %v479 = vmul.f32 %v452, 1.442695
  %v480 = vpow.pop %v479
  %v481 = vmul.f32 %v453, 1.442695
  %v482 = vpow.pop %v481
  %v483 = vmul.f32 %v454, 1.442695
  %v484 = vpow.pop %v483
  %v485 = vmul.f32 %v455, 1.442695
  %v486 = vpow.pop %v485
  %v487 = vmul.f32 %v456, 1.442695
  %v488 = vpow.pop %v487
  %v489 = vadd.f32 %v458, %v460
  %490 = vadd.xlane.f32.xlu0 %v489
  %v491 = vpop.xlane.xlu0 %490
  %v492 = vadd.f32 %v462, %v464
  %493 = vadd.xlane.f32.xlu0 %v492
  %v494 = vpop.xlane.xlu0 %493
  %v495 = vadd.f32 %v466, %v468
  %496 = vadd.xlane.f32.xlu0 %v495
  %v497 = vpop.xlane.xlu0 %496
  %v498 = vadd.f32 %v470, %v472
  %499 = vadd.xlane.f32.xlu0 %v498
  %v500 = vpop.xlane.xlu0 %499
  %v501 = vadd.f32 %v474, %v476
  %502 = vadd.xlane.f32.xlu0 %v501
  %v503 = vpop.xlane.xlu0 %502
  %v504 = vadd.f32 %v478, %v480
  %505 = vadd.xlane.f32.xlu0 %v504
  %v506 = vpop.xlane.xlu0 %505
  %v507 = vadd.f32 %v482, %v484
  %508 = vadd.xlane.f32.xlu0 %v507
  %v509 = vpop.xlane.xlu0 %508
  %v510 = vadd.f32 %v486, %v488
  %511 = vadd.xlane.f32.xlu0 %v510
  %v512 = vpop.xlane.xlu0 %511
  %v513 = vrcp.pop %v491
  %v514 = vmul.f32 %v458, %v513
  %v515 = vmul.f32 %v460, %v513
  %v516 = vrcp.pop %v494
  %v517 = vmul.f32 %v462, %v516
  %v518 = vmul.f32 %v464, %v516
  %v519 = vrcp.pop %v497
  %v520 = vmul.f32 %v466, %v519
  %v521 = vmul.f32 %v468, %v519
  %v522 = vrcp.pop %v500
  %v523 = vmul.f32 %v470, %v522
  %v524 = vmul.f32 %v472, %v522
  %v525 = vrcp.pop %v503
  %v526 = vmul.f32 %v474, %v525
  %v527 = vmul.f32 %v476, %v525
  %v528 = vrcp.pop %v506
  %v529 = vmul.f32 %v478, %v528
  %v530 = vmul.f32 %v480, %v528
  %v531 = vrcp.pop %v509
  %v532 = vmul.f32 %v482, %v531
  %v533 = vmul.f32 %v484, %v531
  %v534 = vrcp.pop %v512
  %v535 = vmul.f32 %v486, %v534
  %v536 = vmul.f32 %v488, %v534
  %538 = vrot.lane.b32.xlu0 %v153, 64
  %v539 = vpop.permute.xlu0 %538
  %541 = vxpose.xlu0.b32.start [1/16] %v539, 128
  %542 = vxpose.xlu0.b32.cont [2/16] 0.0, 128
  %543 = vxpose.xlu0.b32.cont [3/16] 0.0, 128
  %544 = vxpose.xlu0.b32.cont [4/16] 0.0, 128
  %545 = vxpose.xlu0.b32.cont [5/16] 0.0, 128
  %546 = vxpose.xlu0.b32.cont [6/16] 0.0, 128
  %547 = vxpose.xlu0.b32.cont [7/16] 0.0, 128
  %548 = vxpose.xlu0.b32.cont [8/16] 0.0, 128
  %549 = vxpose.xlu0.b32.cont [9/16] 0.0, 128
  %550 = vxpose.xlu0.b32.cont [10/16] 0.0, 128
  %551 = vxpose.xlu0.b32.cont [11/16] 0.0, 128
  %552 = vxpose.xlu0.b32.cont [12/16] 0.0, 128
  %553 = vxpose.xlu0.b32.cont [13/16] 0.0, 128
  %554 = vxpose.xlu0.b32.cont [14/16] 0.0, 128
  %555 = vxpose.xlu0.b32.cont [15/16] 0.0, 128
  %556 = vxpose.xlu0.b32.end [16/16] 0.0, 128
  %v557 = vpop.trf.xlu0
  %v558 = vpop.trf.xlu0
  %v559 = vpop.trf.xlu0
  %v560 = vpop.trf.xlu0
  %v561 = vpop.trf.xlu0
  %v562 = vpop.trf.xlu0
  %v563 = vpop.trf.xlu0
  %v564 = vpop.trf.xlu0
  %v565 = vpop.trf.xlu0
  %v566 = vpop.trf.xlu0
  %v567 = vpop.trf.xlu0
  %v568 = vpop.trf.xlu0
  %v569 = vpop.trf.xlu0
  %v570 = vpop.trf.xlu0
  %v571 = vpop.trf.xlu0
  %v572 = vpop.trf.xlu0
  %v574 = vsel %vm207, %v557, 0
  %v577 = vsel %vm207, %v558, 0
  %v580 = vsel %vm207, %v559, 0
  %v583 = vsel %vm207, %v560, 0
  %v586 = vsel %vm207, %v561, 0
  %v589 = vsel %vm207, %v562, 0
  %v592 = vsel %vm207, %v563, 0
  %v595 = vsel %vm207, %v564, 0
  %597 = vmatprep.subr.mxu0 %v143
  %598 = vmatpush1.msra.mxu0 %v141
  %599 = vmatprep.subr.mxu0 0.0
  %600 = vmatpush1.msra.mxu0 0.0
  %601 = vmatprep.subr.mxu0 0.0
  %602 = vmatpush1.msra.mxu0 0.0
  %603 = vmatprep.subr.mxu0 0.0
  %604 = vmatpush1.msra.mxu0 0.0
  %605 = vmatprep.subr.mxu0 0.0
  %606 = vmatpush1.msra.mxu0 0.0
  %607 = vmatprep.subr.mxu0 0.0
  %608 = vmatpush1.msra.mxu0 0.0
  %609 = vmatprep.subr.mxu0 0.0
  %610 = vmatpush1.msra.mxu0 0.0
  %611 = vmatprep.subr.mxu0 0.0
  %612 = vmatpush1.msra.mxu0 0.0
  %613 = vmatprep.subr.mxu0 0.0
  %614 = vmatpush1.msra.mxu0 0.0
  %615 = vmatprep.subr.mxu0 0.0
  %616 = vmatpush1.msra.mxu0 0.0
  %617 = vmatprep.subr.mxu0 0.0
  %618 = vmatpush1.msra.mxu0 0.0
  %619 = vmatprep.subr.mxu0 0.0
  %620 = vmatpush1.msra.mxu0 0.0
  %621 = vmatprep.subr.mxu0 0.0
  %622 = vmatpush1.msra.mxu0 0.0
  %623 = vmatprep.subr.mxu0 0.0
  %624 = vmatpush1.msra.mxu0 0.0
  %625 = vmatprep.subr.mxu0 0.0
  %626 = vmatpush1.msra.mxu0 0.0
  %627 = vmatprep.subr.mxu0 0.0
  %628 = vmatpush1.msra.mxu0 0.0
  %629 = vmatprep.subr.mxu0 0.0
  %630 = vmatpush1.msra.mxu0 0.0
  %631 = vmatprep.subr.mxu0 0.0
  %632 = vmatpush1.msra.mxu0 0.0
  %633 = vmatprep.subr.mxu0 0.0
  %634 = vmatpush1.msra.mxu0 0.0
  %635 = vmatprep.subr.mxu0 0.0
  %636 = vmatpush1.msra.mxu0 0.0
  %637 = vmatprep.subr.mxu0 0.0
  %638 = vmatpush1.msra.mxu0 0.0
  %639 = vmatprep.subr.mxu0 0.0
  %640 = vmatpush1.msra.mxu0 0.0
  %641 = vmatprep.subr.mxu0 0.0
  %642 = vmatpush1.msra.mxu0 0.0
  %643 = vmatprep.subr.mxu0 0.0
  %644 = vmatpush1.msra.mxu0 0.0
  %645 = vmatprep.subr.mxu0 0.0
  %646 = vmatpush1.msra.mxu0 0.0
  %647 = vmatprep.subr.mxu0 0.0
  %648 = vmatpush1.msra.mxu0 0.0
  %649 = vmatprep.subr.mxu0 0.0
  %650 = vmatpush1.msra.mxu0 0.0
  %651 = vmatprep.subr.mxu0 0.0
  %652 = vmatpush1.msra.mxu0 0.0
  %653 = vmatprep.subr.mxu0 0.0
  %654 = vmatpush1.msra.mxu0 0.0
  %655 = vmatprep.subr.mxu0 0.0
  %656 = vmatpush1.msra.mxu0 0.0
  %657 = vmatprep.subr.mxu0 0.0
  %658 = vmatpush1.msra.mxu0 0.0
  %659 = vmatprep.subr.mxu0 0.0
  %660 = vmatpush1.msra.mxu0 0.0
  %661 = vmatprep.mubr.f32.mxu0 0.0
  %662 = vmatmul.mubr.f32.gmra.mrb[0].mxu0 %v574
  %v663 = vpop.f32.mrb[0].mxu0
  %v664 = vadd.f32 0.0, %v663
  %v665 = vpop.f32.mrb[0].mxu0
  %v666 = vadd.f32 0.0, %v665
  %667 = vmatprep.mubr.f32.mxu0 0.0
  %668 = vmatmul.mubr.f32.gmra.mrb[0].mxu0 %v577
  %v669 = vpop.f32.mrb[0].mxu0
  %v670 = vadd.f32 0.0, %v669
  %v671 = vpop.f32.mrb[0].mxu0
  %v672 = vadd.f32 0.0, %v671
  %673 = vmatprep.mubr.f32.mxu0 0.0
  %674 = vmatmul.mubr.f32.gmra.mrb[0].mxu0 %v580
  %v675 = vpop.f32.mrb[0].mxu0
  %v676 = vadd.f32 0.0, %v675
  %v677 = vpop.f32.mrb[0].mxu0
  %v678 = vadd.f32 0.0, %v677
  %679 = vmatprep.mubr.f32.mxu0 0.0
  %680 = vmatmul.mubr.f32.gmra.mrb[0].mxu0 %v583
  %v681 = vpop.f32.mrb[0].mxu0
  %v682 = vadd.f32 0.0, %v681
  %v683 = vpop.f32.mrb[0].mxu0
  %v684 = vadd.f32 0.0, %v683
  %685 = vmatprep.mubr.f32.mxu0 0.0
  %686 = vmatmul.mubr.f32.gmra.mrb[0].mxu0 %v586
  %v687 = vpop.f32.mrb[0].mxu0
  %v688 = vadd.f32 0.0, %v687
  %v689 = vpop.f32.mrb[0].mxu0
  %v690 = vadd.f32 0.0, %v689
  %691 = vmatprep.mubr.f32.mxu0 0.0
  %692 = vmatmul.mubr.f32.gmra.mrb[0].mxu0 %v589
  %v693 = vpop.f32.mrb[0].mxu0
  %v694 = vadd.f32 0.0, %v693
  %v695 = vpop.f32.mrb[0].mxu0
  %v696 = vadd.f32 0.0, %v695
  %697 = vmatprep.mubr.f32.mxu0 0.0
  %698 = vmatmul.mubr.f32.gmra.mrb[0].mxu0 %v592
  %v699 = vpop.f32.mrb[0].mxu0
  %v700 = vadd.f32 0.0, %v699
  %v701 = vpop.f32.mrb[0].mxu0
  %v702 = vadd.f32 0.0, %v701
  %703 = vmatprep.mubr.f32.mxu0 0.0
  %704 = vmatmul.mubr.f32.gmra.mrb[0].mxu0 %v595
  %v705 = vpop.f32.mrb[0].mxu0
  %v706 = vadd.f32 0.0, %v705
  %v707 = vpop.f32.mrb[0].mxu0
  %v708 = vadd.f32 0.0, %v707
  %709 = vdwg.mxu0
  %v710 = vld [vmem:[%s2 + $0x40] sm:$0xff]
  %v711 = vld [vmem:[%s2 + $0x48] sm:$0xff]
  %v712 = vld [vmem:[%s2 + $0x50] sm:$0xff]
  %v713 = vld [vmem:[%s2 + $0x58] sm:$0xff]
  %v714 = vld [vmem:[%s2 + $0x60] sm:$0xff]
  %v715 = vld [vmem:[%s2 + $0x68] sm:$0xff]
  %v716 = vld [vmem:[%s2 + $0x70] sm:$0xff]
  %v717 = vld [vmem:[%s2 + $0x78] sm:$0xff]
  %718 = vset.pattern.permute.xlu0 0
  %719 = vperm.xlu0 %718, %v710
  %v720 = vpop.permute.xlu0 %719
  %721 = vset.pattern.permute.xlu0 0
  %722 = vperm.xlu0 %721, %v711
  %v723 = vpop.permute.xlu0 %722
  %724 = vset.pattern.permute.xlu0 0
  %725 = vperm.xlu0 %724, %v712
  %v726 = vpop.permute.xlu0 %725
  %727 = vset.pattern.permute.xlu0 0
  %728 = vperm.xlu0 %727, %v713
  %v729 = vpop.permute.xlu0 %728
  %730 = vset.pattern.permute.xlu0 0
  %731 = vperm.xlu0 %730, %v714
  %v732 = vpop.permute.xlu0 %731
  %733 = vset.pattern.permute.xlu0 0
  %734 = vperm.xlu0 %733, %v715
  %v735 = vpop.permute.xlu0 %734
  %736 = vset.pattern.permute.xlu0 0
  %737 = vperm.xlu0 %736, %v716
  %v738 = vpop.permute.xlu0 %737
  %739 = vset.pattern.permute.xlu0 0
  %740 = vperm.xlu0 %739, %v717
  %v741 = vpop.permute.xlu0 %740
  %vm742 = vcmp.eq.s32.totalorder %v720, %v380
  %vm743 = vcmp.eq.s32.totalorder %v720, %v384
  %vm744 = vcmp.eq.s32.totalorder %v723, %v380
  %vm745 = vcmp.eq.s32.totalorder %v723, %v384
  %vm746 = vcmp.eq.s32.totalorder %v726, %v380
  %vm747 = vcmp.eq.s32.totalorder %v726, %v384
  %vm748 = vcmp.eq.s32.totalorder %v729, %v380
  %vm749 = vcmp.eq.s32.totalorder %v729, %v384
  %vm750 = vcmp.eq.s32.totalorder %v732, %v380
  %vm751 = vcmp.eq.s32.totalorder %v732, %v384
  %vm752 = vcmp.eq.s32.totalorder %v735, %v380
  %vm753 = vcmp.eq.s32.totalorder %v735, %v384
  %vm754 = vcmp.eq.s32.totalorder %v738, %v380
  %vm755 = vcmp.eq.s32.totalorder %v738, %v384
  %vm756 = vcmp.eq.s32.totalorder %v741, %v380
  %vm757 = vcmp.eq.s32.totalorder %v741, %v384
  %v758 = vsel %vm742, %v664, -1e+30
  %v759 = vsel %vm743, %v666, -1e+30
  %v760 = vsel %vm744, %v670, -1e+30
  %v761 = vsel %vm745, %v672, -1e+30
  %v762 = vsel %vm746, %v676, -1e+30
  %v763 = vsel %vm747, %v678, -1e+30
  %v764 = vsel %vm748, %v682, -1e+30
  %v765 = vsel %vm749, %v684, -1e+30
  %v766 = vsel %vm750, %v688, -1e+30
  %v767 = vsel %vm751, %v690, -1e+30
  %v768 = vsel %vm752, %v694, -1e+30
  %v769 = vsel %vm753, %v696, -1e+30
  %v770 = vsel %vm754, %v700, -1e+30
  %v771 = vsel %vm755, %v702, -1e+30
  %v772 = vsel %vm756, %v706, -1e+30
  %v773 = vsel %vm757, %v708, -1e+30
  %v774 = vmax.f32 %v758, %v759
  %775 = vmax.xlane.f32.xlu0 %v774
  %v776 = vpop.xlane.xlu0 %775
  %v777 = vmax.f32 %v760, %v761
  %778 = vmax.xlane.f32.xlu0 %v777
  %v779 = vpop.xlane.xlu0 %778
  %v780 = vmax.f32 %v762, %v763
  %781 = vmax.xlane.f32.xlu0 %v780
  %v782 = vpop.xlane.xlu0 %781
  %v783 = vmax.f32 %v764, %v765
  %784 = vmax.xlane.f32.xlu0 %v783
  %v785 = vpop.xlane.xlu0 %784
  %v786 = vmax.f32 %v766, %v767
  %787 = vmax.xlane.f32.xlu0 %v786
  %v788 = vpop.xlane.xlu0 %787
  %v789 = vmax.f32 %v768, %v769
  %790 = vmax.xlane.f32.xlu0 %v789
  %v791 = vpop.xlane.xlu0 %790
  %v792 = vmax.f32 %v770, %v771
  %793 = vmax.xlane.f32.xlu0 %v792
  %v794 = vpop.xlane.xlu0 %793
  %v795 = vmax.f32 %v772, %v773
  %796 = vmax.xlane.f32.xlu0 %v795
  %v797 = vpop.xlane.xlu0 %796
  %v798 = vsub.f32 %v758, %v776
  %v799 = vsub.f32 %v759, %v776
  %v800 = vsub.f32 %v760, %v779
  %v801 = vsub.f32 %v761, %v779
  %v802 = vsub.f32 %v762, %v782
  %v803 = vsub.f32 %v763, %v782
  %v804 = vsub.f32 %v764, %v785
  %v805 = vsub.f32 %v765, %v785
  %v806 = vsub.f32 %v766, %v788
  %v807 = vsub.f32 %v767, %v788
  %v808 = vsub.f32 %v768, %v791
  %v809 = vsub.f32 %v769, %v791
  %v810 = vsub.f32 %v770, %v794
  %v811 = vsub.f32 %v771, %v794
  %v812 = vsub.f32 %v772, %v797
  %v813 = vsub.f32 %v773, %v797
  %v814 = vmul.f32 %v798, 1.442695
  %v815 = vpow.pop %v814
  %v816 = vmul.f32 %v799, 1.442695
  %v817 = vpow.pop %v816
  %v818 = vmul.f32 %v800, 1.442695
  %v819 = vpow.pop %v818
  %v820 = vmul.f32 %v801, 1.442695
  %v821 = vpow.pop %v820
  %v822 = vmul.f32 %v802, 1.442695
  %v823 = vpow.pop %v822
  %v824 = vmul.f32 %v803, 1.442695
  %v825 = vpow.pop %v824
  %v826 = vmul.f32 %v804, 1.442695
  %v827 = vpow.pop %v826
  %v828 = vmul.f32 %v805, 1.442695
  %v829 = vpow.pop %v828
  %v830 = vmul.f32 %v806, 1.442695
  %v831 = vpow.pop %v830
  %v832 = vmul.f32 %v807, 1.442695
  %v833 = vpow.pop %v832
  %v834 = vmul.f32 %v808, 1.442695
  %v835 = vpow.pop %v834
  %v836 = vmul.f32 %v809, 1.442695
  %v837 = vpow.pop %v836
  %v838 = vmul.f32 %v810, 1.442695
  %v839 = vpow.pop %v838
  %v840 = vmul.f32 %v811, 1.442695
  %v841 = vpow.pop %v840
  %v842 = vmul.f32 %v812, 1.442695
  %v843 = vpow.pop %v842
  %v844 = vmul.f32 %v813, 1.442695
  %v845 = vpow.pop %v844
  %v846 = vadd.f32 %v815, %v817
  %847 = vadd.xlane.f32.xlu0 %v846
  %v848 = vpop.xlane.xlu0 %847
  %v849 = vadd.f32 %v819, %v821
  %850 = vadd.xlane.f32.xlu0 %v849
  %v851 = vpop.xlane.xlu0 %850
  %v852 = vadd.f32 %v823, %v825
  %853 = vadd.xlane.f32.xlu0 %v852
  %v854 = vpop.xlane.xlu0 %853
  %v855 = vadd.f32 %v827, %v829
  %856 = vadd.xlane.f32.xlu0 %v855
  %v857 = vpop.xlane.xlu0 %856
  %v858 = vadd.f32 %v831, %v833
  %859 = vadd.xlane.f32.xlu0 %v858
  %v860 = vpop.xlane.xlu0 %859
  %v861 = vadd.f32 %v835, %v837
  %862 = vadd.xlane.f32.xlu0 %v861
  %v863 = vpop.xlane.xlu0 %862
  %v864 = vadd.f32 %v839, %v841
  %865 = vadd.xlane.f32.xlu0 %v864
  %v866 = vpop.xlane.xlu0 %865
  %v867 = vadd.f32 %v843, %v845
  %868 = vadd.xlane.f32.xlu0 %v867
  %v869 = vpop.xlane.xlu0 %868
  %v870 = vrcp.pop %v848
  %v871 = vmul.f32 %v815, %v870
  %v872 = vmul.f32 %v817, %v870
  %v873 = vrcp.pop %v851
  %v874 = vmul.f32 %v819, %v873
  %v875 = vmul.f32 %v821, %v873
  %v876 = vrcp.pop %v854
  %v877 = vmul.f32 %v823, %v876
  %v878 = vmul.f32 %v825, %v876
  %v879 = vrcp.pop %v857
  %v880 = vmul.f32 %v827, %v879
  %v881 = vmul.f32 %v829, %v879
  %v882 = vrcp.pop %v860
  %v883 = vmul.f32 %v831, %v882
  %v884 = vmul.f32 %v833, %v882
  %v885 = vrcp.pop %v863
  %v886 = vmul.f32 %v835, %v885
  %v887 = vmul.f32 %v837, %v885
  %v888 = vrcp.pop %v866
  %v889 = vmul.f32 %v839, %v888
  %v890 = vmul.f32 %v841, %v888
  %v891 = vrcp.pop %v869
  %v892 = vmul.f32 %v843, %v891
  %v893 = vmul.f32 %v845, %v891
  %895 = vrot.lane.b32.xlu0 %v165, 64
  %v896 = vpop.permute.xlu0 %895
  %vm897 = vcmask 523264
  %v898 = vsel %vm897, %v896, 0
  %900 = vmatprep.subr.mxu0 %v872
  %901 = vmatpush1.msra.mxu0 %v871
  %902 = vmatprep.subr.mxu0 %v875
  %903 = vmatpush1.msra.mxu0 %v874
  %904 = vmatprep.subr.mxu0 %v878
  %905 = vmatpush1.msra.mxu0 %v877
  %906 = vmatprep.subr.mxu0 %v881
  %907 = vmatpush1.msra.mxu0 %v880
  %908 = vmatprep.subr.mxu0 %v884
  %909 = vmatpush1.msra.mxu0 %v883
  %910 = vmatprep.subr.mxu0 %v887
  %911 = vmatpush1.msra.mxu0 %v886
  %912 = vmatprep.subr.mxu0 %v890
  %913 = vmatpush1.msra.mxu0 %v889
  %914 = vmatprep.subr.mxu0 %v893
  %915 = vmatpush1.msra.mxu0 %v892
  %916 = vmatprep.subr.mxu0 0.0
  %917 = vmatpush1.msra.mxu0 0.0
  %918 = vmatprep.subr.mxu0 0.0
  %919 = vmatpush1.msra.mxu0 0.0
  %920 = vmatprep.subr.mxu0 0.0
  %921 = vmatpush1.msra.mxu0 0.0
  %922 = vmatprep.subr.mxu0 0.0
  %923 = vmatpush1.msra.mxu0 0.0
  %924 = vmatprep.subr.mxu0 0.0
  %925 = vmatpush1.msra.mxu0 0.0
  %926 = vmatprep.subr.mxu0 0.0
  %927 = vmatpush1.msra.mxu0 0.0
  %928 = vmatprep.subr.mxu0 0.0
  %929 = vmatpush1.msra.mxu0 0.0
  %930 = vmatprep.subr.mxu0 0.0
  %931 = vmatpush1.msra.mxu0 0.0
  %932 = vmatprep.subr.mxu0 0.0
  %933 = vmatpush1.msra.mxu0 0.0
  %934 = vmatprep.subr.mxu0 0.0
  %935 = vmatpush1.msra.mxu0 0.0
  %936 = vmatprep.subr.mxu0 0.0
  %937 = vmatpush1.msra.mxu0 0.0
  %938 = vmatprep.subr.mxu0 0.0
  %939 = vmatpush1.msra.mxu0 0.0
  %940 = vmatprep.subr.mxu0 0.0
  %941 = vmatpush1.msra.mxu0 0.0
  %942 = vmatprep.subr.mxu0 0.0
  %943 = vmatpush1.msra.mxu0 0.0
  %944 = vmatprep.subr.mxu0 0.0
  %945 = vmatpush1.msra.mxu0 0.0
  %946 = vmatprep.subr.mxu0 0.0
  %947 = vmatpush1.msra.mxu0 0.0
  %948 = vmatprep.subr.mxu0 0.0
  %949 = vmatpush1.msra.mxu0 0.0
  %950 = vmatprep.subr.mxu0 0.0
  %951 = vmatpush1.msra.mxu0 0.0
  %952 = vmatprep.subr.mxu0 0.0
  %953 = vmatpush1.msra.mxu0 0.0
  %954 = vmatprep.subr.mxu0 0.0
  %955 = vmatpush1.msra.mxu0 0.0
  %956 = vmatprep.subr.mxu0 0.0
  %957 = vmatpush1.msra.mxu0 0.0
  %958 = vmatprep.subr.mxu0 0.0
  %959 = vmatpush1.msra.mxu0 0.0
  %960 = vmatprep.subr.mxu0 0.0
  %961 = vmatpush1.msra.mxu0 0.0
  %962 = vmatprep.subr.mxu0 0.0
  %963 = vmatpush1.msra.mxu0 0.0
  %964 = vmatprep.mubr.f32.mxu0 0.0
  %965 = vmatmul.mubr.f32.gmra.mrb[0].mxu0 %v898
  %v966 = vpop.f32.mrb[0].mxu0
  %v967 = vadd.f32 0.0, %v966
  %v968 = vpop.f32.mrb[0].mxu0
  %v969 = vadd.f32 0.0, %v968
  %970 = vdwg.mxu0
  %v971 = vsel %vm897, %v165, 0
  %973 = vmatprep.subr.mxu0 %v515
  %974 = vmatpush1.msra.mxu0 %v514
  %975 = vmatprep.subr.mxu0 %v518
  %976 = vmatpush1.msra.mxu0 %v517
  %977 = vmatprep.subr.mxu0 %v521
  %978 = vmatpush1.msra.mxu0 %v520
  %979 = vmatprep.subr.mxu0 %v524
  %980 = vmatpush1.msra.mxu0 %v523
  %981 = vmatprep.subr.mxu0 %v527
  %982 = vmatpush1.msra.mxu0 %v526
  %983 = vmatprep.subr.mxu0 %v530
  %984 = vmatpush1.msra.mxu0 %v529
  %985 = vmatprep.subr.mxu0 %v533
  %986 = vmatpush1.msra.mxu0 %v532
  %987 = vmatprep.subr.mxu0 %v536
  %988 = vmatpush1.msra.mxu0 %v535
  %989 = vmatprep.subr.mxu0 0.0
  %990 = vmatpush1.msra.mxu0 0.0
  %991 = vmatprep.subr.mxu0 0.0
  %992 = vmatpush1.msra.mxu0 0.0
  %993 = vmatprep.subr.mxu0 0.0
  %994 = vmatpush1.msra.mxu0 0.0
  %995 = vmatprep.subr.mxu0 0.0
  %996 = vmatpush1.msra.mxu0 0.0
  %997 = vmatprep.subr.mxu0 0.0
  %998 = vmatpush1.msra.mxu0 0.0
  %999 = vmatprep.subr.mxu0 0.0
  %1000 = vmatpush1.msra.mxu0 0.0
  %1001 = vmatprep.subr.mxu0 0.0
  %1002 = vmatpush1.msra.mxu0 0.0
  %1003 = vmatprep.subr.mxu0 0.0
  %1004 = vmatpush1.msra.mxu0 0.0
  %1005 = vmatprep.subr.mxu0 0.0
  %1006 = vmatpush1.msra.mxu0 0.0
  %1007 = vmatprep.subr.mxu0 0.0
  %1008 = vmatpush1.msra.mxu0 0.0
  %1009 = vmatprep.subr.mxu0 0.0
  %1010 = vmatpush1.msra.mxu0 0.0
  %1011 = vmatprep.subr.mxu0 0.0
  %1012 = vmatpush1.msra.mxu0 0.0
  %1013 = vmatprep.subr.mxu0 0.0
  %1014 = vmatpush1.msra.mxu0 0.0
  %1015 = vmatprep.subr.mxu0 0.0
  %1016 = vmatpush1.msra.mxu0 0.0
  %1017 = vmatprep.subr.mxu0 0.0
  %1018 = vmatpush1.msra.mxu0 0.0
  %1019 = vmatprep.subr.mxu0 0.0
  %1020 = vmatpush1.msra.mxu0 0.0
  %1021 = vmatprep.subr.mxu0 0.0
  %1022 = vmatpush1.msra.mxu0 0.0
  %1023 = vmatprep.subr.mxu0 0.0
  %1024 = vmatpush1.msra.mxu0 0.0
  %1025 = vmatprep.subr.mxu0 0.0
  %1026 = vmatpush1.msra.mxu0 0.0
  %1027 = vmatprep.subr.mxu0 0.0
  %1028 = vmatpush1.msra.mxu0 0.0
  %1029 = vmatprep.subr.mxu0 0.0
  %1030 = vmatpush1.msra.mxu0 0.0
  %1031 = vmatprep.subr.mxu0 0.0
  %1032 = vmatpush1.msra.mxu0 0.0
  %1033 = vmatprep.subr.mxu0 0.0
  %1034 = vmatpush1.msra.mxu0 0.0
  %1035 = vmatprep.subr.mxu0 0.0
  %1036 = vmatpush1.msra.mxu0 0.0
  %1037 = vmatprep.mubr.f32.mxu0 0.0
  %1038 = vmatmul.mubr.f32.gmra.mrb[0].mxu0 %v971
  %v1039 = vpop.f32.mrb[0].mxu0
  %v1040 = vadd.f32 %v967, %v1039
  %v1041 = vpop.f32.mrb[0].mxu0
  %v1042 = vadd.f32 %v969, %v1041
  %1043 = vdwg.mxu0
  %1044 = vxpose.xlu0.b32.start [1/16] %v155, 128
  %1045 = vxpose.xlu0.b32.cont [2/16] 0.0, 128
  %1046 = vxpose.xlu0.b32.cont [3/16] 0.0, 128
  %1047 = vxpose.xlu0.b32.cont [4/16] 0.0, 128
  %1048 = vxpose.xlu0.b32.cont [5/16] 0.0, 128
  %1049 = vxpose.xlu0.b32.cont [6/16] 0.0, 128
  %1050 = vxpose.xlu0.b32.cont [7/16] 0.0, 128
  %1051 = vxpose.xlu0.b32.cont [8/16] 0.0, 128
  %1052 = vxpose.xlu0.b32.cont [9/16] 0.0, 128
  %1053 = vxpose.xlu0.b32.cont [10/16] 0.0, 128
  %1054 = vxpose.xlu0.b32.cont [11/16] 0.0, 128
  %1055 = vxpose.xlu0.b32.cont [12/16] 0.0, 128
  %1056 = vxpose.xlu0.b32.cont [13/16] 0.0, 128
  %1057 = vxpose.xlu0.b32.cont [14/16] 0.0, 128
  %1058 = vxpose.xlu0.b32.cont [15/16] 0.0, 128
  %1059 = vxpose.xlu0.b32.end [16/16] 0.0, 128
  %v1060 = vpop.trf.xlu0
  %v1061 = vpop.trf.xlu0
  %v1062 = vpop.trf.xlu0
  %v1063 = vpop.trf.xlu0
  %v1064 = vpop.trf.xlu0
  %v1065 = vpop.trf.xlu0
  %v1066 = vpop.trf.xlu0
  %v1067 = vpop.trf.xlu0
  %v1068 = vpop.trf.xlu0
  %v1069 = vpop.trf.xlu0
  %v1070 = vpop.trf.xlu0
  %v1071 = vpop.trf.xlu0
  %v1072 = vpop.trf.xlu0
  %v1073 = vpop.trf.xlu0
  %v1074 = vpop.trf.xlu0
  %v1075 = vpop.trf.xlu0
  %v1077 = vsel %vm207, %v1060, 0
  %v1080 = vsel %vm207, %v1061, 0
  %v1083 = vsel %vm207, %v1062, 0
  %v1086 = vsel %vm207, %v1063, 0
  %v1089 = vsel %vm207, %v1064, 0
  %v1092 = vsel %vm207, %v1065, 0
  %v1095 = vsel %vm207, %v1066, 0
  %v1098 = vsel %vm207, %v1067, 0
  %1100 = vmatprep.subr.mxu0 %v143
  %1101 = vmatpush1.msra.mxu0 %v141
  %1102 = vmatprep.subr.mxu0 0.0
  %1103 = vmatpush1.msra.mxu0 0.0
  %1104 = vmatprep.subr.mxu0 0.0
  %1105 = vmatpush1.msra.mxu0 0.0
  %1106 = vmatprep.subr.mxu0 0.0
  %1107 = vmatpush1.msra.mxu0 0.0
  %1108 = vmatprep.subr.mxu0 0.0
  %1109 = vmatpush1.msra.mxu0 0.0
  %1110 = vmatprep.subr.mxu0 0.0
  %1111 = vmatpush1.msra.mxu0 0.0
  %1112 = vmatprep.subr.mxu0 0.0
  %1113 = vmatpush1.msra.mxu0 0.0
  %1114 = vmatprep.subr.mxu0 0.0
  %1115 = vmatpush1.msra.mxu0 0.0
  %1116 = vmatprep.subr.mxu0 0.0
  %1117 = vmatpush1.msra.mxu0 0.0
  %1118 = vmatprep.subr.mxu0 0.0
  %1119 = vmatpush1.msra.mxu0 0.0
  %1120 = vmatprep.subr.mxu0 0.0
  %1121 = vmatpush1.msra.mxu0 0.0
  %1122 = vmatprep.subr.mxu0 0.0
  %1123 = vmatpush1.msra.mxu0 0.0
  %1124 = vmatprep.subr.mxu0 0.0
  %1125 = vmatpush1.msra.mxu0 0.0
  %1126 = vmatprep.subr.mxu0 0.0
  %1127 = vmatpush1.msra.mxu0 0.0
  %1128 = vmatprep.subr.mxu0 0.0
  %1129 = vmatpush1.msra.mxu0 0.0
  %1130 = vmatprep.subr.mxu0 0.0
  %1131 = vmatpush1.msra.mxu0 0.0
  %1132 = vmatprep.subr.mxu0 0.0
  %1133 = vmatpush1.msra.mxu0 0.0
  %1134 = vmatprep.subr.mxu0 0.0
  %1135 = vmatpush1.msra.mxu0 0.0
  %1136 = vmatprep.subr.mxu0 0.0
  %1137 = vmatpush1.msra.mxu0 0.0
  %1138 = vmatprep.subr.mxu0 0.0
  %1139 = vmatpush1.msra.mxu0 0.0
  %1140 = vmatprep.subr.mxu0 0.0
  %1141 = vmatpush1.msra.mxu0 0.0
  %1142 = vmatprep.subr.mxu0 0.0
  %1143 = vmatpush1.msra.mxu0 0.0
  %1144 = vmatprep.subr.mxu0 0.0
  %1145 = vmatpush1.msra.mxu0 0.0
  %1146 = vmatprep.subr.mxu0 0.0
  %1147 = vmatpush1.msra.mxu0 0.0
  %1148 = vmatprep.subr.mxu0 0.0
  %1149 = vmatpush1.msra.mxu0 0.0
  %1150 = vmatprep.subr.mxu0 0.0
  %1151 = vmatpush1.msra.mxu0 0.0
  %1152 = vmatprep.subr.mxu0 0.0
  %1153 = vmatpush1.msra.mxu0 0.0
  %1154 = vmatprep.subr.mxu0 0.0
  %1155 = vmatpush1.msra.mxu0 0.0
  %1156 = vmatprep.subr.mxu0 0.0
  %1157 = vmatpush1.msra.mxu0 0.0
  %1158 = vmatprep.subr.mxu0 0.0
  %1159 = vmatpush1.msra.mxu0 0.0
  %1160 = vmatprep.subr.mxu0 0.0
  %1161 = vmatpush1.msra.mxu0 0.0
  %1162 = vmatprep.subr.mxu0 0.0
  %1163 = vmatpush1.msra.mxu0 0.0
  %1164 = vmatprep.mubr.f32.mxu0 0.0
  %1165 = vmatmul.mubr.f32.gmra.mrb[0].mxu0 %v1077
  %v1166 = vpop.f32.mrb[0].mxu0
  %v1167 = vadd.f32 0.0, %v1166
  %v1168 = vpop.f32.mrb[0].mxu0
  %v1169 = vadd.f32 0.0, %v1168
  %1170 = vmatprep.mubr.f32.mxu0 0.0
  %1171 = vmatmul.mubr.f32.gmra.mrb[0].mxu0 %v1080
  %v1172 = vpop.f32.mrb[0].mxu0
  %v1173 = vadd.f32 0.0, %v1172
  %v1174 = vpop.f32.mrb[0].mxu0
  %v1175 = vadd.f32 0.0, %v1174
  %1176 = vmatprep.mubr.f32.mxu0 0.0
  %1177 = vmatmul.mubr.f32.gmra.mrb[0].mxu0 %v1083
  %v1178 = vpop.f32.mrb[0].mxu0
  %v1179 = vadd.f32 0.0, %v1178
  %v1180 = vpop.f32.mrb[0].mxu0
  %v1181 = vadd.f32 0.0, %v1180
  %1182 = vmatprep.mubr.f32.mxu0 0.0
  %1183 = vmatmul.mubr.f32.gmra.mrb[0].mxu0 %v1086
  %v1184 = vpop.f32.mrb[0].mxu0
  %v1185 = vadd.f32 0.0, %v1184
  %v1186 = vpop.f32.mrb[0].mxu0
  %v1187 = vadd.f32 0.0, %v1186
  %1188 = vmatprep.mubr.f32.mxu0 0.0
  %1189 = vmatmul.mubr.f32.gmra.mrb[0].mxu0 %v1089
  %v1190 = vpop.f32.mrb[0].mxu0
  %v1191 = vadd.f32 0.0, %v1190
  %v1192 = vpop.f32.mrb[0].mxu0
  %v1193 = vadd.f32 0.0, %v1192
  %1194 = vmatprep.mubr.f32.mxu0 0.0
  %1195 = vmatmul.mubr.f32.gmra.mrb[0].mxu0 %v1092
  %v1196 = vpop.f32.mrb[0].mxu0
  %v1197 = vadd.f32 0.0, %v1196
  %v1198 = vpop.f32.mrb[0].mxu0
  %v1199 = vadd.f32 0.0, %v1198
  %1200 = vmatprep.mubr.f32.mxu0 0.0
  %1201 = vmatmul.mubr.f32.gmra.mrb[0].mxu0 %v1095
  %v1202 = vpop.f32.mrb[0].mxu0
  %v1203 = vadd.f32 0.0, %v1202
  %v1204 = vpop.f32.mrb[0].mxu0
  %v1205 = vadd.f32 0.0, %v1204
  %1206 = vmatprep.mubr.f32.mxu0 0.0
  %1207 = vmatmul.mubr.f32.gmra.mrb[0].mxu0 %v1098
  %v1208 = vpop.f32.mrb[0].mxu0
  %v1209 = vadd.f32 0.0, %v1208
  %v1210 = vpop.f32.mrb[0].mxu0
  %v1211 = vadd.f32 0.0, %v1210
  %1212 = vdwg.mxu0
  %v1213 = vld [vmem:[%s2 + $0x80] sm:$0xff]
  %v1214 = vld [vmem:[%s2 + $0x88] sm:$0xff]
  %v1215 = vld [vmem:[%s2 + $0x90] sm:$0xff]
  %v1216 = vld [vmem:[%s2 + $0x98] sm:$0xff]
  %v1217 = vld [vmem:[%s2 + $0xa0] sm:$0xff]
  %v1218 = vld [vmem:[%s2 + $0xa8] sm:$0xff]
  %v1219 = vld [vmem:[%s2 + $0xb0] sm:$0xff]
  %v1220 = vld [vmem:[%s2 + $0xb8] sm:$0xff]
  %1221 = vset.pattern.permute.xlu0 0
  %1222 = vperm.xlu0 %1221, %v1213
  %v1223 = vpop.permute.xlu0 %1222
  %1224 = vset.pattern.permute.xlu0 0
  %1225 = vperm.xlu0 %1224, %v1214
  %v1226 = vpop.permute.xlu0 %1225
  %1227 = vset.pattern.permute.xlu0 0
  %1228 = vperm.xlu0 %1227, %v1215
  %v1229 = vpop.permute.xlu0 %1228
  %1230 = vset.pattern.permute.xlu0 0
  %1231 = vperm.xlu0 %1230, %v1216
  %v1232 = vpop.permute.xlu0 %1231
  %1233 = vset.pattern.permute.xlu0 0
  %1234 = vperm.xlu0 %1233, %v1217
  %v1235 = vpop.permute.xlu0 %1234
  %1236 = vset.pattern.permute.xlu0 0
  %1237 = vperm.xlu0 %1236, %v1218
  %v1238 = vpop.permute.xlu0 %1237
  %1239 = vset.pattern.permute.xlu0 0
  %1240 = vperm.xlu0 %1239, %v1219
  %v1241 = vpop.permute.xlu0 %1240
  %1242 = vset.pattern.permute.xlu0 0
  %1243 = vperm.xlu0 %1242, %v1220
  %v1244 = vpop.permute.xlu0 %1243
  %vm1245 = vcmp.eq.s32.totalorder %v1223, %v380
  %vm1246 = vcmp.eq.s32.totalorder %v1223, %v384
  %vm1247 = vcmp.eq.s32.totalorder %v1226, %v380
  %vm1248 = vcmp.eq.s32.totalorder %v1226, %v384
  %vm1249 = vcmp.eq.s32.totalorder %v1229, %v380
  %vm1250 = vcmp.eq.s32.totalorder %v1229, %v384
  %vm1251 = vcmp.eq.s32.totalorder %v1232, %v380
  %vm1252 = vcmp.eq.s32.totalorder %v1232, %v384
  %vm1253 = vcmp.eq.s32.totalorder %v1235, %v380
  %vm1254 = vcmp.eq.s32.totalorder %v1235, %v384
  %vm1255 = vcmp.eq.s32.totalorder %v1238, %v380
  %vm1256 = vcmp.eq.s32.totalorder %v1238, %v384
  %vm1257 = vcmp.eq.s32.totalorder %v1241, %v380
  %vm1258 = vcmp.eq.s32.totalorder %v1241, %v384
  %vm1259 = vcmp.eq.s32.totalorder %v1244, %v380
  %vm1260 = vcmp.eq.s32.totalorder %v1244, %v384
  %v1261 = vsel %vm1245, %v1167, -1e+30
  %v1262 = vsel %vm1246, %v1169, -1e+30
  %v1263 = vsel %vm1247, %v1173, -1e+30
  %v1264 = vsel %vm1248, %v1175, -1e+30
  %v1265 = vsel %vm1249, %v1179, -1e+30
  %v1266 = vsel %vm1250, %v1181, -1e+30
  %v1267 = vsel %vm1251, %v1185, -1e+30
  %v1268 = vsel %vm1252, %v1187, -1e+30
  %v1269 = vsel %vm1253, %v1191, -1e+30
  %v1270 = vsel %vm1254, %v1193, -1e+30
  %v1271 = vsel %vm1255, %v1197, -1e+30
  %v1272 = vsel %vm1256, %v1199, -1e+30
  %v1273 = vsel %vm1257, %v1203, -1e+30
  %v1274 = vsel %vm1258, %v1205, -1e+30
  %v1275 = vsel %vm1259, %v1209, -1e+30
  %v1276 = vsel %vm1260, %v1211, -1e+30
  %v1277 = vmax.f32 %v1261, %v1262
  %1278 = vmax.xlane.f32.xlu0 %v1277
  %v1279 = vpop.xlane.xlu0 %1278
  %v1280 = vmax.f32 %v1263, %v1264
  %1281 = vmax.xlane.f32.xlu0 %v1280
  %v1282 = vpop.xlane.xlu0 %1281
  %v1283 = vmax.f32 %v1265, %v1266
  %1284 = vmax.xlane.f32.xlu0 %v1283
  %v1285 = vpop.xlane.xlu0 %1284
  %v1286 = vmax.f32 %v1267, %v1268
  %1287 = vmax.xlane.f32.xlu0 %v1286
  %v1288 = vpop.xlane.xlu0 %1287
  %v1289 = vmax.f32 %v1269, %v1270
  %1290 = vmax.xlane.f32.xlu0 %v1289
  %v1291 = vpop.xlane.xlu0 %1290
  %v1292 = vmax.f32 %v1271, %v1272
  %1293 = vmax.xlane.f32.xlu0 %v1292
  %v1294 = vpop.xlane.xlu0 %1293
  %v1295 = vmax.f32 %v1273, %v1274
  %1296 = vmax.xlane.f32.xlu0 %v1295
  %v1297 = vpop.xlane.xlu0 %1296
  %v1298 = vmax.f32 %v1275, %v1276
  %1299 = vmax.xlane.f32.xlu0 %v1298
  %v1300 = vpop.xlane.xlu0 %1299
  %v1301 = vsub.f32 %v1261, %v1279
  %v1302 = vsub.f32 %v1262, %v1279
  %v1303 = vsub.f32 %v1263, %v1282
  %v1304 = vsub.f32 %v1264, %v1282
  %v1305 = vsub.f32 %v1265, %v1285
  %v1306 = vsub.f32 %v1266, %v1285
  %v1307 = vsub.f32 %v1267, %v1288
  %v1308 = vsub.f32 %v1268, %v1288
  %v1309 = vsub.f32 %v1269, %v1291
  %v1310 = vsub.f32 %v1270, %v1291
  %v1311 = vsub.f32 %v1271, %v1294
  %v1312 = vsub.f32 %v1272, %v1294
  %v1313 = vsub.f32 %v1273, %v1297
  %v1314 = vsub.f32 %v1274, %v1297
  %v1315 = vsub.f32 %v1275, %v1300
  %v1316 = vsub.f32 %v1276, %v1300
  %v1317 = vmul.f32 %v1301, 1.442695
  %v1318 = vpow.pop %v1317
  %v1319 = vmul.f32 %v1302, 1.442695
  %v1320 = vpow.pop %v1319
  %v1321 = vmul.f32 %v1303, 1.442695
  %v1322 = vpow.pop %v1321
  %v1323 = vmul.f32 %v1304, 1.442695
  %v1324 = vpow.pop %v1323
  %v1325 = vmul.f32 %v1305, 1.442695
  %v1326 = vpow.pop %v1325
  %v1327 = vmul.f32 %v1306, 1.442695
  %v1328 = vpow.pop %v1327
  %v1329 = vmul.f32 %v1307, 1.442695
  %v1330 = vpow.pop %v1329
  %v1331 = vmul.f32 %v1308, 1.442695
  %v1332 = vpow.pop %v1331
  %v1333 = vmul.f32 %v1309, 1.442695
  %v1334 = vpow.pop %v1333
  %v1335 = vmul.f32 %v1310, 1.442695
  %v1336 = vpow.pop %v1335
  %v1337 = vmul.f32 %v1311, 1.442695
  %v1338 = vpow.pop %v1337
  %v1339 = vmul.f32 %v1312, 1.442695
  %v1340 = vpow.pop %v1339
  %v1341 = vmul.f32 %v1313, 1.442695
  %v1342 = vpow.pop %v1341
  %v1343 = vmul.f32 %v1314, 1.442695
  %v1344 = vpow.pop %v1343
  %v1345 = vmul.f32 %v1315, 1.442695
  %v1346 = vpow.pop %v1345
  %v1347 = vmul.f32 %v1316, 1.442695
  %v1348 = vpow.pop %v1347
  %v1349 = vadd.f32 %v1318, %v1320
  %1350 = vadd.xlane.f32.xlu0 %v1349
  %v1351 = vpop.xlane.xlu0 %1350
  %v1352 = vadd.f32 %v1322, %v1324
  %1353 = vadd.xlane.f32.xlu0 %v1352
  %v1354 = vpop.xlane.xlu0 %1353
  %v1355 = vadd.f32 %v1326, %v1328
  %1356 = vadd.xlane.f32.xlu0 %v1355
  %v1357 = vpop.xlane.xlu0 %1356
  %v1358 = vadd.f32 %v1330, %v1332
  %1359 = vadd.xlane.f32.xlu0 %v1358
  %v1360 = vpop.xlane.xlu0 %1359
  %v1361 = vadd.f32 %v1334, %v1336
  %1362 = vadd.xlane.f32.xlu0 %v1361
  %v1363 = vpop.xlane.xlu0 %1362
  %v1364 = vadd.f32 %v1338, %v1340
  %1365 = vadd.xlane.f32.xlu0 %v1364
  %v1366 = vpop.xlane.xlu0 %1365
  %v1367 = vadd.f32 %v1342, %v1344
  %1368 = vadd.xlane.f32.xlu0 %v1367
  %v1369 = vpop.xlane.xlu0 %1368
  %v1370 = vadd.f32 %v1346, %v1348
  %1371 = vadd.xlane.f32.xlu0 %v1370
  %v1372 = vpop.xlane.xlu0 %1371
  %v1373 = vrcp.pop %v1351
  %v1374 = vmul.f32 %v1318, %v1373
  %v1375 = vmul.f32 %v1320, %v1373
  %v1376 = vrcp.pop %v1354
  %v1377 = vmul.f32 %v1322, %v1376
  %v1378 = vmul.f32 %v1324, %v1376
  %v1379 = vrcp.pop %v1357
  %v1380 = vmul.f32 %v1326, %v1379
  %v1381 = vmul.f32 %v1328, %v1379
  %v1382 = vrcp.pop %v1360
  %v1383 = vmul.f32 %v1330, %v1382
  %v1384 = vmul.f32 %v1332, %v1382
  %v1385 = vrcp.pop %v1363
  %v1386 = vmul.f32 %v1334, %v1385
  %v1387 = vmul.f32 %v1336, %v1385
  %v1388 = vrcp.pop %v1366
  %v1389 = vmul.f32 %v1338, %v1388
  %v1390 = vmul.f32 %v1340, %v1388
  %v1391 = vrcp.pop %v1369
  %v1392 = vmul.f32 %v1342, %v1391
  %v1393 = vmul.f32 %v1344, %v1391
  %v1394 = vrcp.pop %v1372
  %v1395 = vmul.f32 %v1346, %v1394
  %v1396 = vmul.f32 %v1348, %v1394
  %v1398 = vsel %vm897, %v167, 0
  %1400 = vmatprep.subr.mxu0 %v1375
  %1401 = vmatpush1.msra.mxu0 %v1374
  %1402 = vmatprep.subr.mxu0 %v1378
  %1403 = vmatpush1.msra.mxu0 %v1377
  %1404 = vmatprep.subr.mxu0 %v1381
  %1405 = vmatpush1.msra.mxu0 %v1380
  %1406 = vmatprep.subr.mxu0 %v1384
  %1407 = vmatpush1.msra.mxu0 %v1383
  %1408 = vmatprep.subr.mxu0 %v1387
  %1409 = vmatpush1.msra.mxu0 %v1386
  %1410 = vmatprep.subr.mxu0 %v1390
  %1411 = vmatpush1.msra.mxu0 %v1389
  %1412 = vmatprep.subr.mxu0 %v1393
  %1413 = vmatpush1.msra.mxu0 %v1392
  %1414 = vmatprep.subr.mxu0 %v1396
  %1415 = vmatpush1.msra.mxu0 %v1395
  %1416 = vmatprep.subr.mxu0 0.0
  %1417 = vmatpush1.msra.mxu0 0.0
  %1418 = vmatprep.subr.mxu0 0.0
  %1419 = vmatpush1.msra.mxu0 0.0
  %1420 = vmatprep.subr.mxu0 0.0
  %1421 = vmatpush1.msra.mxu0 0.0
  %1422 = vmatprep.subr.mxu0 0.0
  %1423 = vmatpush1.msra.mxu0 0.0
  %1424 = vmatprep.subr.mxu0 0.0
  %1425 = vmatpush1.msra.mxu0 0.0
  %1426 = vmatprep.subr.mxu0 0.0
  %1427 = vmatpush1.msra.mxu0 0.0
  %1428 = vmatprep.subr.mxu0 0.0
  %1429 = vmatpush1.msra.mxu0 0.0
  %1430 = vmatprep.subr.mxu0 0.0
  %1431 = vmatpush1.msra.mxu0 0.0
  %1432 = vmatprep.subr.mxu0 0.0
  %1433 = vmatpush1.msra.mxu0 0.0
  %1434 = vmatprep.subr.mxu0 0.0
  %1435 = vmatpush1.msra.mxu0 0.0
  %1436 = vmatprep.subr.mxu0 0.0
  %1437 = vmatpush1.msra.mxu0 0.0
  %1438 = vmatprep.subr.mxu0 0.0
  %1439 = vmatpush1.msra.mxu0 0.0
  %1440 = vmatprep.subr.mxu0 0.0
  %1441 = vmatpush1.msra.mxu0 0.0
  %1442 = vmatprep.subr.mxu0 0.0
  %1443 = vmatpush1.msra.mxu0 0.0
  %1444 = vmatprep.subr.mxu0 0.0
  %1445 = vmatpush1.msra.mxu0 0.0
  %1446 = vmatprep.subr.mxu0 0.0
  %1447 = vmatpush1.msra.mxu0 0.0
  %1448 = vmatprep.subr.mxu0 0.0
  %1449 = vmatpush1.msra.mxu0 0.0
  %1450 = vmatprep.subr.mxu0 0.0
  %1451 = vmatpush1.msra.mxu0 0.0
  %1452 = vmatprep.subr.mxu0 0.0
  %1453 = vmatpush1.msra.mxu0 0.0
  %1454 = vmatprep.subr.mxu0 0.0
  %1455 = vmatpush1.msra.mxu0 0.0
  %1456 = vmatprep.subr.mxu0 0.0
  %1457 = vmatpush1.msra.mxu0 0.0
  %1458 = vmatprep.subr.mxu0 0.0
  %1459 = vmatpush1.msra.mxu0 0.0
  %1460 = vmatprep.subr.mxu0 0.0
  %1461 = vmatpush1.msra.mxu0 0.0
  %1462 = vmatprep.subr.mxu0 0.0
  %1463 = vmatpush1.msra.mxu0 0.0
  %1464 = vmatprep.mubr.f32.mxu0 0.0
  %1465 = vmatmul.mubr.f32.gmra.mrb[0].mxu0 %v1398
  %v1466 = vpop.f32.mrb[0].mxu0
  %v1467 = vadd.f32 0.0, %v1466
  %v1468 = vpop.f32.mrb[0].mxu0
  %v1469 = vadd.f32 0.0, %v1468
  %1470 = vdwg.mxu0
  %v1471 = vadd.f32 %v1040, %v1467
  %v1472 = vadd.f32 %v1042, %v1469
  %1474 = vrot.lane.b32.xlu0 %v155, 64
  %v1475 = vpop.permute.xlu0 %1474
  %1477 = vxpose.xlu0.b32.start [1/16] %v1475, 128
  %1478 = vxpose.xlu0.b32.cont [2/16] 0.0, 128
  %1479 = vxpose.xlu0.b32.cont [3/16] 0.0, 128
  %1480 = vxpose.xlu0.b32.cont [4/16] 0.0, 128
  %1481 = vxpose.xlu0.b32.cont [5/16] 0.0, 128
  %1482 = vxpose.xlu0.b32.cont [6/16] 0.0, 128
  %1483 = vxpose.xlu0.b32.cont [7/16] 0.0, 128
  %1484 = vxpose.xlu0.b32.cont [8/16] 0.0, 128
  %1485 = vxpose.xlu0.b32.cont [9/16] 0.0, 128
  %1486 = vxpose.xlu0.b32.cont [10/16] 0.0, 128
  %1487 = vxpose.xlu0.b32.cont [11/16] 0.0, 128
  %1488 = vxpose.xlu0.b32.cont [12/16] 0.0, 128
  %1489 = vxpose.xlu0.b32.cont [13/16] 0.0, 128
  %1490 = vxpose.xlu0.b32.cont [14/16] 0.0, 128
  %1491 = vxpose.xlu0.b32.cont [15/16] 0.0, 128
  %1492 = vxpose.xlu0.b32.end [16/16] 0.0, 128
  %v1493 = vpop.trf.xlu0
  %v1494 = vpop.trf.xlu0
  %v1495 = vpop.trf.xlu0
  %v1496 = vpop.trf.xlu0
  %v1497 = vpop.trf.xlu0
  %v1498 = vpop.trf.xlu0
  %v1499 = vpop.trf.xlu0
  %v1500 = vpop.trf.xlu0
  %v1501 = vpop.trf.xlu0
  %v1502 = vpop.trf.xlu0
  %v1503 = vpop.trf.xlu0
  %v1504 = vpop.trf.xlu0
  %v1505 = vpop.trf.xlu0
  %v1506 = vpop.trf.xlu0
  %v1507 = vpop.trf.xlu0
  %v1508 = vpop.trf.xlu0
  %v1510 = vsel %vm207, %v1493, 0
  %v1513 = vsel %vm207, %v1494, 0
  %v1516 = vsel %vm207, %v1495, 0
  %v1519 = vsel %vm207, %v1496, 0
  %v1522 = vsel %vm207, %v1497, 0
  %v1525 = vsel %vm207, %v1498, 0
  %v1528 = vsel %vm207, %v1499, 0
  %v1531 = vsel %vm207, %v1500, 0
  %1533 = vmatprep.subr.mxu0 %v143
  %1534 = vmatpush1.msra.mxu0 %v141
  %1535 = vmatprep.subr.mxu0 0.0
  %1536 = vmatpush1.msra.mxu0 0.0
  %1537 = vmatprep.subr.mxu0 0.0
  %1538 = vmatpush1.msra.mxu0 0.0
  %1539 = vmatprep.subr.mxu0 0.0
  %1540 = vmatpush1.msra.mxu0 0.0
  %1541 = vmatprep.subr.mxu0 0.0
  %1542 = vmatpush1.msra.mxu0 0.0
  %1543 = vmatprep.subr.mxu0 0.0
  %1544 = vmatpush1.msra.mxu0 0.0
  %1545 = vmatprep.subr.mxu0 0.0
  %1546 = vmatpush1.msra.mxu0 0.0
  %1547 = vmatprep.subr.mxu0 0.0
  %1548 = vmatpush1.msra.mxu0 0.0
  %1549 = vmatprep.subr.mxu0 0.0
  %1550 = vmatpush1.msra.mxu0 0.0
  %1551 = vmatprep.subr.mxu0 0.0
  %1552 = vmatpush1.msra.mxu0 0.0
  %1553 = vmatprep.subr.mxu0 0.0
  %1554 = vmatpush1.msra.mxu0 0.0
  %1555 = vmatprep.subr.mxu0 0.0
  %1556 = vmatpush1.msra.mxu0 0.0
  %1557 = vmatprep.subr.mxu0 0.0
  %1558 = vmatpush1.msra.mxu0 0.0
  %1559 = vmatprep.subr.mxu0 0.0
  %1560 = vmatpush1.msra.mxu0 0.0
  %1561 = vmatprep.subr.mxu0 0.0
  %1562 = vmatpush1.msra.mxu0 0.0
  %1563 = vmatprep.subr.mxu0 0.0
  %1564 = vmatpush1.msra.mxu0 0.0
  %1565 = vmatprep.subr.mxu0 0.0
  %1566 = vmatpush1.msra.mxu0 0.0
  %1567 = vmatprep.subr.mxu0 0.0
  %1568 = vmatpush1.msra.mxu0 0.0
  %1569 = vmatprep.subr.mxu0 0.0
  %1570 = vmatpush1.msra.mxu0 0.0
  %1571 = vmatprep.subr.mxu0 0.0
  %1572 = vmatpush1.msra.mxu0 0.0
  %1573 = vmatprep.subr.mxu0 0.0
  %1574 = vmatpush1.msra.mxu0 0.0
  %1575 = vmatprep.subr.mxu0 0.0
  %1576 = vmatpush1.msra.mxu0 0.0
  %1577 = vmatprep.subr.mxu0 0.0
  %1578 = vmatpush1.msra.mxu0 0.0
  %1579 = vmatprep.subr.mxu0 0.0
  %1580 = vmatpush1.msra.mxu0 0.0
  %1581 = vmatprep.subr.mxu0 0.0
  %1582 = vmatpush1.msra.mxu0 0.0
  %1583 = vmatprep.subr.mxu0 0.0
  %1584 = vmatpush1.msra.mxu0 0.0
  %1585 = vmatprep.subr.mxu0 0.0
  %1586 = vmatpush1.msra.mxu0 0.0
  %1587 = vmatprep.subr.mxu0 0.0
  %1588 = vmatpush1.msra.mxu0 0.0
  %1589 = vmatprep.subr.mxu0 0.0
  %1590 = vmatpush1.msra.mxu0 0.0
  %1591 = vmatprep.subr.mxu0 0.0
  %1592 = vmatpush1.msra.mxu0 0.0
  %1593 = vmatprep.subr.mxu0 0.0
  %1594 = vmatpush1.msra.mxu0 0.0
  %1595 = vmatprep.subr.mxu0 0.0
  %1596 = vmatpush1.msra.mxu0 0.0
  %1597 = vmatprep.mubr.f32.mxu0 0.0
  %1598 = vmatmul.mubr.f32.gmra.mrb[0].mxu0 %v1510
  %v1599 = vpop.f32.mrb[0].mxu0
  %v1600 = vadd.f32 0.0, %v1599
  %v1601 = vpop.f32.mrb[0].mxu0
  %v1602 = vadd.f32 0.0, %v1601
  %1603 = vmatprep.mubr.f32.mxu0 0.0
  %1604 = vmatmul.mubr.f32.gmra.mrb[0].mxu0 %v1513
  %v1605 = vpop.f32.mrb[0].mxu0
  %v1606 = vadd.f32 0.0, %v1605
  %v1607 = vpop.f32.mrb[0].mxu0
  %v1608 = vadd.f32 0.0, %v1607
  %1609 = vmatprep.mubr.f32.mxu0 0.0
  %1610 = vmatmul.mubr.f32.gmra.mrb[0].mxu0 %v1516
  %v1611 = vpop.f32.mrb[0].mxu0
  %v1612 = vadd.f32 0.0, %v1611
  %v1613 = vpop.f32.mrb[0].mxu0
  %v1614 = vadd.f32 0.0, %v1613
  %1615 = vmatprep.mubr.f32.mxu0 0.0
  %1616 = vmatmul.mubr.f32.gmra.mrb[0].mxu0 %v1519
  %v1617 = vpop.f32.mrb[0].mxu0
  %v1618 = vadd.f32 0.0, %v1617
  %v1619 = vpop.f32.mrb[0].mxu0
  %v1620 = vadd.f32 0.0, %v1619
  %1621 = vmatprep.mubr.f32.mxu0 0.0
  %1622 = vmatmul.mubr.f32.gmra.mrb[0].mxu0 %v1522
  %v1623 = vpop.f32.mrb[0].mxu0
  %v1624 = vadd.f32 0.0, %v1623
  %v1625 = vpop.f32.mrb[0].mxu0
  %v1626 = vadd.f32 0.0, %v1625
  %1627 = vmatprep.mubr.f32.mxu0 0.0
  %1628 = vmatmul.mubr.f32.gmra.mrb[0].mxu0 %v1525
  %v1629 = vpop.f32.mrb[0].mxu0
  %v1630 = vadd.f32 0.0, %v1629
  %v1631 = vpop.f32.mrb[0].mxu0
  %v1632 = vadd.f32 0.0, %v1631
  %1633 = vmatprep.mubr.f32.mxu0 0.0
  %1634 = vmatmul.mubr.f32.gmra.mrb[0].mxu0 %v1528
  %v1635 = vpop.f32.mrb[0].mxu0
  %v1636 = vadd.f32 0.0, %v1635
  %v1637 = vpop.f32.mrb[0].mxu0
  %v1638 = vadd.f32 0.0, %v1637
  %1639 = vmatprep.mubr.f32.mxu0 0.0
  %1640 = vmatmul.mubr.f32.gmra.mrb[0].mxu0 %v1531
  %v1641 = vpop.f32.mrb[0].mxu0
  %v1642 = vadd.f32 0.0, %v1641
  %v1643 = vpop.f32.mrb[0].mxu0
  %v1644 = vadd.f32 0.0, %v1643
  %1645 = vdwg.mxu0
  %v1646 = vld [vmem:[%s2 + $0xc0] sm:$0xff]
  %v1647 = vld [vmem:[%s2 + $0xc8] sm:$0xff]
  %v1648 = vld [vmem:[%s2 + $0xd0] sm:$0xff]
  %v1649 = vld [vmem:[%s2 + $0xd8] sm:$0xff]
  %v1650 = vld [vmem:[%s2 + $0xe0] sm:$0xff]
  %v1651 = vld [vmem:[%s2 + $0xe8] sm:$0xff]
  %v1652 = vld [vmem:[%s2 + $0xf0] sm:$0xff]
  %v1653 = vld [vmem:[%s2 + $0xf8] sm:$0xff]
  %1654 = vset.pattern.permute.xlu0 0
  %1655 = vperm.xlu0 %1654, %v1646
  %v1656 = vpop.permute.xlu0 %1655
  %1657 = vset.pattern.permute.xlu0 0
  %1658 = vperm.xlu0 %1657, %v1647
  %v1659 = vpop.permute.xlu0 %1658
  %1660 = vset.pattern.permute.xlu0 0
  %1661 = vperm.xlu0 %1660, %v1648
  %v1662 = vpop.permute.xlu0 %1661
  %1663 = vset.pattern.permute.xlu0 0
  %1664 = vperm.xlu0 %1663, %v1649
  %v1665 = vpop.permute.xlu0 %1664
  %1666 = vset.pattern.permute.xlu0 0
  %1667 = vperm.xlu0 %1666, %v1650
  %v1668 = vpop.permute.xlu0 %1667
  %1669 = vset.pattern.permute.xlu0 0
  %1670 = vperm.xlu0 %1669, %v1651
  %v1671 = vpop.permute.xlu0 %1670
  %1672 = vset.pattern.permute.xlu0 0
  %1673 = vperm.xlu0 %1672, %v1652
  %v1674 = vpop.permute.xlu0 %1673
  %1675 = vset.pattern.permute.xlu0 0
  %1676 = vperm.xlu0 %1675, %v1653
  %v1677 = vpop.permute.xlu0 %1676
  %vm1678 = vcmp.eq.s32.totalorder %v1656, %v380
  %vm1679 = vcmp.eq.s32.totalorder %v1656, %v384
  %vm1680 = vcmp.eq.s32.totalorder %v1659, %v380
  %vm1681 = vcmp.eq.s32.totalorder %v1659, %v384
  %vm1682 = vcmp.eq.s32.totalorder %v1662, %v380
  %vm1683 = vcmp.eq.s32.totalorder %v1662, %v384
  %vm1684 = vcmp.eq.s32.totalorder %v1665, %v380
  %vm1685 = vcmp.eq.s32.totalorder %v1665, %v384
  %vm1686 = vcmp.eq.s32.totalorder %v1668, %v380
  %vm1687 = vcmp.eq.s32.totalorder %v1668, %v384
  %vm1688 = vcmp.eq.s32.totalorder %v1671, %v380
  %vm1689 = vcmp.eq.s32.totalorder %v1671, %v384
  %vm1690 = vcmp.eq.s32.totalorder %v1674, %v380
  %vm1691 = vcmp.eq.s32.totalorder %v1674, %v384
  %vm1692 = vcmp.eq.s32.totalorder %v1677, %v380
  %vm1693 = vcmp.eq.s32.totalorder %v1677, %v384
  %v1694 = vsel %vm1678, %v1600, -1e+30
  %v1695 = vsel %vm1679, %v1602, -1e+30
  %v1696 = vsel %vm1680, %v1606, -1e+30
  %v1697 = vsel %vm1681, %v1608, -1e+30
  %v1698 = vsel %vm1682, %v1612, -1e+30
  %v1699 = vsel %vm1683, %v1614, -1e+30
  %v1700 = vsel %vm1684, %v1618, -1e+30
  %v1701 = vsel %vm1685, %v1620, -1e+30
  %v1702 = vsel %vm1686, %v1624, -1e+30
  %v1703 = vsel %vm1687, %v1626, -1e+30
  %v1704 = vsel %vm1688, %v1630, -1e+30
  %v1705 = vsel %vm1689, %v1632, -1e+30
  %v1706 = vsel %vm1690, %v1636, -1e+30
  %v1707 = vsel %vm1691, %v1638, -1e+30
  %v1708 = vsel %vm1692, %v1642, -1e+30
  %v1709 = vsel %vm1693, %v1644, -1e+30
  %v1710 = vmax.f32 %v1694, %v1695
  %1711 = vmax.xlane.f32.xlu0 %v1710
  %v1712 = vpop.xlane.xlu0 %1711
  %v1713 = vmax.f32 %v1696, %v1697
  %1714 = vmax.xlane.f32.xlu0 %v1713
  %v1715 = vpop.xlane.xlu0 %1714
  %v1716 = vmax.f32 %v1698, %v1699
  %1717 = vmax.xlane.f32.xlu0 %v1716
  %v1718 = vpop.xlane.xlu0 %1717
  %v1719 = vmax.f32 %v1700, %v1701
  %1720 = vmax.xlane.f32.xlu0 %v1719
  %v1721 = vpop.xlane.xlu0 %1720
  %v1722 = vmax.f32 %v1702, %v1703
  %1723 = vmax.xlane.f32.xlu0 %v1722
  %v1724 = vpop.xlane.xlu0 %1723
  %v1725 = vmax.f32 %v1704, %v1705
  %1726 = vmax.xlane.f32.xlu0 %v1725
  %v1727 = vpop.xlane.xlu0 %1726
  %v1728 = vmax.f32 %v1706, %v1707
  %1729 = vmax.xlane.f32.xlu0 %v1728
  %v1730 = vpop.xlane.xlu0 %1729
  %v1731 = vmax.f32 %v1708, %v1709
  %1732 = vmax.xlane.f32.xlu0 %v1731
  %v1733 = vpop.xlane.xlu0 %1732
  %v1734 = vsub.f32 %v1694, %v1712
  %v1735 = vsub.f32 %v1695, %v1712
  %v1736 = vsub.f32 %v1696, %v1715
  %v1737 = vsub.f32 %v1697, %v1715
  %v1738 = vsub.f32 %v1698, %v1718
  %v1739 = vsub.f32 %v1699, %v1718
  %v1740 = vsub.f32 %v1700, %v1721
  %v1741 = vsub.f32 %v1701, %v1721
  %v1742 = vsub.f32 %v1702, %v1724
  %v1743 = vsub.f32 %v1703, %v1724
  %v1744 = vsub.f32 %v1704, %v1727
  %v1745 = vsub.f32 %v1705, %v1727
  %v1746 = vsub.f32 %v1706, %v1730
  %v1747 = vsub.f32 %v1707, %v1730
  %v1748 = vsub.f32 %v1708, %v1733
  %v1749 = vsub.f32 %v1709, %v1733
  %v1750 = vmul.f32 %v1734, 1.442695
  %v1751 = vpow.pop %v1750
  %v1752 = vmul.f32 %v1735, 1.442695
  %v1753 = vpow.pop %v1752
  %v1754 = vmul.f32 %v1736, 1.442695
  %v1755 = vpow.pop %v1754
  %v1756 = vmul.f32 %v1737, 1.442695
  %v1757 = vpow.pop %v1756
  %v1758 = vmul.f32 %v1738, 1.442695
  %v1759 = vpow.pop %v1758
  %v1760 = vmul.f32 %v1739, 1.442695
  %v1761 = vpow.pop %v1760
  %v1762 = vmul.f32 %v1740, 1.442695
  %v1763 = vpow.pop %v1762
  %v1764 = vmul.f32 %v1741, 1.442695
  %v1765 = vpow.pop %v1764
  %v1766 = vmul.f32 %v1742, 1.442695
  %v1767 = vpow.pop %v1766
  %v1768 = vmul.f32 %v1743, 1.442695
  %v1769 = vpow.pop %v1768
  %v1770 = vmul.f32 %v1744, 1.442695
  %v1771 = vpow.pop %v1770
  %v1772 = vmul.f32 %v1745, 1.442695
  %v1773 = vpow.pop %v1772
  %v1774 = vmul.f32 %v1746, 1.442695
  %v1775 = vpow.pop %v1774
  %v1776 = vmul.f32 %v1747, 1.442695
  %v1777 = vpow.pop %v1776
  %v1778 = vmul.f32 %v1748, 1.442695
  %v1779 = vpow.pop %v1778
  %v1780 = vmul.f32 %v1749, 1.442695
  %v1781 = vpow.pop %v1780
  %v1782 = vadd.f32 %v1751, %v1753
  %1783 = vadd.xlane.f32.xlu0 %v1782
  %v1784 = vpop.xlane.xlu0 %1783
  %v1785 = vadd.f32 %v1755, %v1757
  %1786 = vadd.xlane.f32.xlu0 %v1785
  %v1787 = vpop.xlane.xlu0 %1786
  %v1788 = vadd.f32 %v1759, %v1761
  %1789 = vadd.xlane.f32.xlu0 %v1788
  %v1790 = vpop.xlane.xlu0 %1789
  %v1791 = vadd.f32 %v1763, %v1765
  %1792 = vadd.xlane.f32.xlu0 %v1791
  %v1793 = vpop.xlane.xlu0 %1792
  %v1794 = vadd.f32 %v1767, %v1769
  %1795 = vadd.xlane.f32.xlu0 %v1794
  %v1796 = vpop.xlane.xlu0 %1795
  %v1797 = vadd.f32 %v1771, %v1773
  %1798 = vadd.xlane.f32.xlu0 %v1797
  %v1799 = vpop.xlane.xlu0 %1798
  %v1800 = vadd.f32 %v1775, %v1777
  %1801 = vadd.xlane.f32.xlu0 %v1800
  %v1802 = vpop.xlane.xlu0 %1801
  %v1803 = vadd.f32 %v1779, %v1781
  %1804 = vadd.xlane.f32.xlu0 %v1803
  %v1805 = vpop.xlane.xlu0 %1804
  %v1806 = vrcp.pop %v1784
  %v1807 = vmul.f32 %v1751, %v1806
  %v1808 = vmul.f32 %v1753, %v1806
  %v1809 = vrcp.pop %v1787
  %v1810 = vmul.f32 %v1755, %v1809
  %v1811 = vmul.f32 %v1757, %v1809
  %v1812 = vrcp.pop %v1790
  %v1813 = vmul.f32 %v1759, %v1812
  %v1814 = vmul.f32 %v1761, %v1812
  %v1815 = vrcp.pop %v1793
  %v1816 = vmul.f32 %v1763, %v1815
  %v1817 = vmul.f32 %v1765, %v1815
  %v1818 = vrcp.pop %v1796
  %v1819 = vmul.f32 %v1767, %v1818
  %v1820 = vmul.f32 %v1769, %v1818
  %v1821 = vrcp.pop %v1799
  %v1822 = vmul.f32 %v1771, %v1821
  %v1823 = vmul.f32 %v1773, %v1821
  %v1824 = vrcp.pop %v1802
  %v1825 = vmul.f32 %v1775, %v1824
  %v1826 = vmul.f32 %v1777, %v1824
  %v1827 = vrcp.pop %v1805
  %v1828 = vmul.f32 %v1779, %v1827
  %v1829 = vmul.f32 %v1781, %v1827
  %1830 = vrot.lane.b32.xlu0 %v167, 64
  %v1831 = vpop.permute.xlu0 %1830
  %v1832 = vsel %vm897, %v1831, 0
  %1834 = vmatprep.subr.mxu0 %v1808
  %1835 = vmatpush1.msra.mxu0 %v1807
  %1836 = vmatprep.subr.mxu0 %v1811
  %1837 = vmatpush1.msra.mxu0 %v1810
  %1838 = vmatprep.subr.mxu0 %v1814
  %1839 = vmatpush1.msra.mxu0 %v1813
  %1840 = vmatprep.subr.mxu0 %v1817
  %1841 = vmatpush1.msra.mxu0 %v1816
  %1842 = vmatprep.subr.mxu0 %v1820
  %1843 = vmatpush1.msra.mxu0 %v1819
  %1844 = vmatprep.subr.mxu0 %v1823
  %1845 = vmatpush1.msra.mxu0 %v1822
  %1846 = vmatprep.subr.mxu0 %v1826
  %1847 = vmatpush1.msra.mxu0 %v1825
  %1848 = vmatprep.subr.mxu0 %v1829
  %1849 = vmatpush1.msra.mxu0 %v1828
  %1850 = vmatprep.subr.mxu0 0.0
  %1851 = vmatpush1.msra.mxu0 0.0
  %1852 = vmatprep.subr.mxu0 0.0
  %1853 = vmatpush1.msra.mxu0 0.0
  %1854 = vmatprep.subr.mxu0 0.0
  %1855 = vmatpush1.msra.mxu0 0.0
  %1856 = vmatprep.subr.mxu0 0.0
  %1857 = vmatpush1.msra.mxu0 0.0
  %1858 = vmatprep.subr.mxu0 0.0
  %1859 = vmatpush1.msra.mxu0 0.0
  %1860 = vmatprep.subr.mxu0 0.0
  %1861 = vmatpush1.msra.mxu0 0.0
  %1862 = vmatprep.subr.mxu0 0.0
  %1863 = vmatpush1.msra.mxu0 0.0
  %1864 = vmatprep.subr.mxu0 0.0
  %1865 = vmatpush1.msra.mxu0 0.0
  %1866 = vmatprep.subr.mxu0 0.0
  %1867 = vmatpush1.msra.mxu0 0.0
  %1868 = vmatprep.subr.mxu0 0.0
  %1869 = vmatpush1.msra.mxu0 0.0
  %1870 = vmatprep.subr.mxu0 0.0
  %1871 = vmatpush1.msra.mxu0 0.0
  %1872 = vmatprep.subr.mxu0 0.0
  %1873 = vmatpush1.msra.mxu0 0.0
  %1874 = vmatprep.subr.mxu0 0.0
  %1875 = vmatpush1.msra.mxu0 0.0
  %1876 = vmatprep.subr.mxu0 0.0
  %1877 = vmatpush1.msra.mxu0 0.0
  %1878 = vmatprep.subr.mxu0 0.0
  %1879 = vmatpush1.msra.mxu0 0.0
  %1880 = vmatprep.subr.mxu0 0.0
  %1881 = vmatpush1.msra.mxu0 0.0
  %1882 = vmatprep.subr.mxu0 0.0
  %1883 = vmatpush1.msra.mxu0 0.0
  %1884 = vmatprep.subr.mxu0 0.0
  %1885 = vmatpush1.msra.mxu0 0.0
  %1886 = vmatprep.subr.mxu0 0.0
  %1887 = vmatpush1.msra.mxu0 0.0
  %1888 = vmatprep.subr.mxu0 0.0
  %1889 = vmatpush1.msra.mxu0 0.0
  %1890 = vmatprep.subr.mxu0 0.0
  %1891 = vmatpush1.msra.mxu0 0.0
  %1892 = vmatprep.subr.mxu0 0.0
  %1893 = vmatpush1.msra.mxu0 0.0
  %1894 = vmatprep.subr.mxu0 0.0
  %1895 = vmatpush1.msra.mxu0 0.0
  %1896 = vmatprep.subr.mxu0 0.0
  %1897 = vmatpush1.msra.mxu0 0.0
  %1898 = vmatprep.mubr.f32.mxu0 0.0
  %1899 = vmatmul.mubr.f32.gmra.mrb[0].mxu0 %v1832
  %v1900 = vpop.f32.mrb[0].mxu0
  %v1901 = vadd.f32 0.0, %v1900
  %v1902 = vpop.f32.mrb[0].mxu0
  %v1903 = vadd.f32 0.0, %v1902
  %1904 = vdwg.mxu0
  %v1905 = vadd.f32 %v1471, %v1901
  %v1906 = vadd.f32 %v1472, %v1903
  %1907 = vxpose.xlu0.b32.start [1/16] %v159, 128
  %1908 = vxpose.xlu0.b32.cont [2/16] 0.0, 128
  %1909 = vxpose.xlu0.b32.cont [3/16] 0.0, 128
  %1910 = vxpose.xlu0.b32.cont [4/16] 0.0, 128
  %1911 = vxpose.xlu0.b32.cont [5/16] 0.0, 128
  %1912 = vxpose.xlu0.b32.cont [6/16] 0.0, 128
  %1913 = vxpose.xlu0.b32.cont [7/16] 0.0, 128
  %1914 = vxpose.xlu0.b32.cont [8/16] 0.0, 128
  %1915 = vxpose.xlu0.b32.cont [9/16] 0.0, 128
  %1916 = vxpose.xlu0.b32.cont [10/16] 0.0, 128
  %1917 = vxpose.xlu0.b32.cont [11/16] 0.0, 128
  %1918 = vxpose.xlu0.b32.cont [12/16] 0.0, 128
  %1919 = vxpose.xlu0.b32.cont [13/16] 0.0, 128
  %1920 = vxpose.xlu0.b32.cont [14/16] 0.0, 128
  %1921 = vxpose.xlu0.b32.cont [15/16] 0.0, 128
  %1922 = vxpose.xlu0.b32.end [16/16] 0.0, 128
  %v1923 = vpop.trf.xlu0
  %v1924 = vpop.trf.xlu0
  %v1925 = vpop.trf.xlu0
  %v1926 = vpop.trf.xlu0
  %v1927 = vpop.trf.xlu0
  %v1928 = vpop.trf.xlu0
  %v1929 = vpop.trf.xlu0
  %v1930 = vpop.trf.xlu0
  %v1931 = vpop.trf.xlu0
  %v1932 = vpop.trf.xlu0
  %v1933 = vpop.trf.xlu0
  %v1934 = vpop.trf.xlu0
  %v1935 = vpop.trf.xlu0
  %v1936 = vpop.trf.xlu0
  %v1937 = vpop.trf.xlu0
  %v1938 = vpop.trf.xlu0
  %v1940 = vsel %vm207, %v1923, 0
  %v1943 = vsel %vm207, %v1924, 0
  %v1946 = vsel %vm207, %v1925, 0
  %v1949 = vsel %vm207, %v1926, 0
  %v1952 = vsel %vm207, %v1927, 0
  %v1955 = vsel %vm207, %v1928, 0
  %v1958 = vsel %vm207, %v1929, 0
  %v1961 = vsel %vm207, %v1930, 0
  %1963 = vmatprep.subr.mxu0 %v149
  %1964 = vmatpush1.msra.mxu0 %v147
  %1965 = vmatprep.subr.mxu0 0.0
  %1966 = vmatpush1.msra.mxu0 0.0
  %1967 = vmatprep.subr.mxu0 0.0
  %1968 = vmatpush1.msra.mxu0 0.0
  %1969 = vmatprep.subr.mxu0 0.0
  %1970 = vmatpush1.msra.mxu0 0.0
  %1971 = vmatprep.subr.mxu0 0.0
  %1972 = vmatpush1.msra.mxu0 0.0
  %1973 = vmatprep.subr.mxu0 0.0
  %1974 = vmatpush1.msra.mxu0 0.0
  %1975 = vmatprep.subr.mxu0 0.0
  %1976 = vmatpush1.msra.mxu0 0.0
  %1977 = vmatprep.subr.mxu0 0.0
  %1978 = vmatpush1.msra.mxu0 0.0
  %1979 = vmatprep.subr.mxu0 0.0
  %1980 = vmatpush1.msra.mxu0 0.0
  %1981 = vmatprep.subr.mxu0 0.0
  %1982 = vmatpush1.msra.mxu0 0.0
  %1983 = vmatprep.subr.mxu0 0.0
  %1984 = vmatpush1.msra.mxu0 0.0
  %1985 = vmatprep.subr.mxu0 0.0
  %1986 = vmatpush1.msra.mxu0 0.0
  %1987 = vmatprep.subr.mxu0 0.0
  %1988 = vmatpush1.msra.mxu0 0.0
  %1989 = vmatprep.subr.mxu0 0.0
  %1990 = vmatpush1.msra.mxu0 0.0
  %1991 = vmatprep.subr.mxu0 0.0
  %1992 = vmatpush1.msra.mxu0 0.0
  %1993 = vmatprep.subr.mxu0 0.0
  %1994 = vmatpush1.msra.mxu0 0.0
  %1995 = vmatprep.subr.mxu0 0.0
  %1996 = vmatpush1.msra.mxu0 0.0
  %1997 = vmatprep.subr.mxu0 0.0
  %1998 = vmatpush1.msra.mxu0 0.0
  %1999 = vmatprep.subr.mxu0 0.0
  %2000 = vmatpush1.msra.mxu0 0.0
  %2001 = vmatprep.subr.mxu0 0.0
  %2002 = vmatpush1.msra.mxu0 0.0
  %2003 = vmatprep.subr.mxu0 0.0
  %2004 = vmatpush1.msra.mxu0 0.0
  %2005 = vmatprep.subr.mxu0 0.0
  %2006 = vmatpush1.msra.mxu0 0.0
  %2007 = vmatprep.subr.mxu0 0.0
  %2008 = vmatpush1.msra.mxu0 0.0
  %2009 = vmatprep.subr.mxu0 0.0
  %2010 = vmatpush1.msra.mxu0 0.0
  %2011 = vmatprep.subr.mxu0 0.0
  %2012 = vmatpush1.msra.mxu0 0.0
  %2013 = vmatprep.subr.mxu0 0.0
  %2014 = vmatpush1.msra.mxu0 0.0
  %2015 = vmatprep.subr.mxu0 0.0
  %2016 = vmatpush1.msra.mxu0 0.0
  %2017 = vmatprep.subr.mxu0 0.0
  %2018 = vmatpush1.msra.mxu0 0.0
  %2019 = vmatprep.subr.mxu0 0.0
  %2020 = vmatpush1.msra.mxu0 0.0
  %2021 = vmatprep.subr.mxu0 0.0
  %2022 = vmatpush1.msra.mxu0 0.0
  %2023 = vmatprep.subr.mxu0 0.0
  %2024 = vmatpush1.msra.mxu0 0.0
  %2025 = vmatprep.subr.mxu0 0.0
  %2026 = vmatpush1.msra.mxu0 0.0
  %2027 = vmatprep.mubr.f32.mxu0 0.0
  %2028 = vmatmul.mubr.f32.gmra.mrb[0].mxu0 %v1940
  %v2029 = vpop.f32.mrb[0].mxu0
  %v2030 = vadd.f32 0.0, %v2029
  %v2031 = vpop.f32.mrb[0].mxu0
  %v2032 = vadd.f32 0.0, %v2031
  %2033 = vmatprep.mubr.f32.mxu0 0.0
  %2034 = vmatmul.mubr.f32.gmra.mrb[0].mxu0 %v1943
  %v2035 = vpop.f32.mrb[0].mxu0
  %v2036 = vadd.f32 0.0, %v2035
  %v2037 = vpop.f32.mrb[0].mxu0
  %v2038 = vadd.f32 0.0, %v2037
  %2039 = vmatprep.mubr.f32.mxu0 0.0
  %2040 = vmatmul.mubr.f32.gmra.mrb[0].mxu0 %v1946
  %v2041 = vpop.f32.mrb[0].mxu0
  %v2042 = vadd.f32 0.0, %v2041
  %v2043 = vpop.f32.mrb[0].mxu0
  %v2044 = vadd.f32 0.0, %v2043
  %2045 = vmatprep.mubr.f32.mxu0 0.0
  %2046 = vmatmul.mubr.f32.gmra.mrb[0].mxu0 %v1949
  %v2047 = vpop.f32.mrb[0].mxu0
  %v2048 = vadd.f32 0.0, %v2047
  %v2049 = vpop.f32.mrb[0].mxu0
  %v2050 = vadd.f32 0.0, %v2049
  %2051 = vmatprep.mubr.f32.mxu0 0.0
  %2052 = vmatmul.mubr.f32.gmra.mrb[0].mxu0 %v1952
  %v2053 = vpop.f32.mrb[0].mxu0
  %v2054 = vadd.f32 0.0, %v2053
  %v2055 = vpop.f32.mrb[0].mxu0
  %v2056 = vadd.f32 0.0, %v2055
  %2057 = vmatprep.mubr.f32.mxu0 0.0
  %2058 = vmatmul.mubr.f32.gmra.mrb[0].mxu0 %v1955
  %v2059 = vpop.f32.mrb[0].mxu0
  %v2060 = vadd.f32 0.0, %v2059
  %v2061 = vpop.f32.mrb[0].mxu0
  %v2062 = vadd.f32 0.0, %v2061
  %2063 = vmatprep.mubr.f32.mxu0 0.0
  %2064 = vmatmul.mubr.f32.gmra.mrb[0].mxu0 %v1958
  %v2065 = vpop.f32.mrb[0].mxu0
  %v2066 = vadd.f32 0.0, %v2065
  %v2067 = vpop.f32.mrb[0].mxu0
  %v2068 = vadd.f32 0.0, %v2067
  %2069 = vmatprep.mubr.f32.mxu0 0.0
  %2070 = vmatmul.mubr.f32.gmra.mrb[0].mxu0 %v1961
  %v2071 = vpop.f32.mrb[0].mxu0
  %v2072 = vadd.f32 0.0, %v2071
  %v2073 = vpop.f32.mrb[0].mxu0
  %v2074 = vadd.f32 0.0, %v2073
  %2075 = vdwg.mxu0
  %v2076 = vsel %vm385, %v2030, -1e+30
  %v2077 = vsel %vm386, %v2032, -1e+30
  %v2078 = vsel %vm387, %v2036, -1e+30
  %v2079 = vsel %vm388, %v2038, -1e+30
  %v2080 = vsel %vm389, %v2042, -1e+30
  %v2081 = vsel %vm390, %v2044, -1e+30
  %v2082 = vsel %vm391, %v2048, -1e+30
  %v2083 = vsel %vm392, %v2050, -1e+30
  %v2084 = vsel %vm393, %v2054, -1e+30
  %v2085 = vsel %vm394, %v2056, -1e+30
  %v2086 = vsel %vm395, %v2060, -1e+30
  %v2087 = vsel %vm396, %v2062, -1e+30
  %v2088 = vsel %vm397, %v2066, -1e+30
  %v2089 = vsel %vm398, %v2068, -1e+30
  %v2090 = vsel %vm399, %v2072, -1e+30
  %v2091 = vsel %vm400, %v2074, -1e+30
  %v2092 = vmax.f32 %v2076, %v2077
  %2093 = vmax.xlane.f32.xlu0 %v2092
  %v2094 = vpop.xlane.xlu0 %2093
  %v2095 = vmax.f32 %v2078, %v2079
  %2096 = vmax.xlane.f32.xlu0 %v2095
  %v2097 = vpop.xlane.xlu0 %2096
  %v2098 = vmax.f32 %v2080, %v2081
  %2099 = vmax.xlane.f32.xlu0 %v2098
  %v2100 = vpop.xlane.xlu0 %2099
  %v2101 = vmax.f32 %v2082, %v2083
  %2102 = vmax.xlane.f32.xlu0 %v2101
  %v2103 = vpop.xlane.xlu0 %2102
  %v2104 = vmax.f32 %v2084, %v2085
  %2105 = vmax.xlane.f32.xlu0 %v2104
  %v2106 = vpop.xlane.xlu0 %2105
  %v2107 = vmax.f32 %v2086, %v2087
  %2108 = vmax.xlane.f32.xlu0 %v2107
  %v2109 = vpop.xlane.xlu0 %2108
  %v2110 = vmax.f32 %v2088, %v2089
  %2111 = vmax.xlane.f32.xlu0 %v2110
  %v2112 = vpop.xlane.xlu0 %2111
  %v2113 = vmax.f32 %v2090, %v2091
  %2114 = vmax.xlane.f32.xlu0 %v2113
  %v2115 = vpop.xlane.xlu0 %2114
  %v2116 = vsub.f32 %v2076, %v2094
  %v2117 = vsub.f32 %v2077, %v2094
  %v2118 = vsub.f32 %v2078, %v2097
  %v2119 = vsub.f32 %v2079, %v2097
  %v2120 = vsub.f32 %v2080, %v2100
  %v2121 = vsub.f32 %v2081, %v2100
  %v2122 = vsub.f32 %v2082, %v2103
  %v2123 = vsub.f32 %v2083, %v2103
  %v2124 = vsub.f32 %v2084, %v2106
  %v2125 = vsub.f32 %v2085, %v2106
  %v2126 = vsub.f32 %v2086, %v2109
  %v2127 = vsub.f32 %v2087, %v2109
  %v2128 = vsub.f32 %v2088, %v2112
  %v2129 = vsub.f32 %v2089, %v2112
  %v2130 = vsub.f32 %v2090, %v2115
  %v2131 = vsub.f32 %v2091, %v2115
  %v2132 = vmul.f32 %v2116, 1.442695
  %v2133 = vpow.pop %v2132
  %v2134 = vmul.f32 %v2117, 1.442695
  %v2135 = vpow.pop %v2134
  %v2136 = vmul.f32 %v2118, 1.442695
  %v2137 = vpow.pop %v2136
  %v2138 = vmul.f32 %v2119, 1.442695
  %v2139 = vpow.pop %v2138
  %v2140 = vmul.f32 %v2120, 1.442695
  %v2141 = vpow.pop %v2140
  %v2142 = vmul.f32 %v2121, 1.442695
  %v2143 = vpow.pop %v2142
  %v2144 = vmul.f32 %v2122, 1.442695
  %v2145 = vpow.pop %v2144
  %v2146 = vmul.f32 %v2123, 1.442695
  %v2147 = vpow.pop %v2146
  %v2148 = vmul.f32 %v2124, 1.442695
  %v2149 = vpow.pop %v2148
  %v2150 = vmul.f32 %v2125, 1.442695
  %v2151 = vpow.pop %v2150
  %v2152 = vmul.f32 %v2126, 1.442695
  %v2153 = vpow.pop %v2152
  %v2154 = vmul.f32 %v2127, 1.442695
  %v2155 = vpow.pop %v2154
  %v2156 = vmul.f32 %v2128, 1.442695
  %v2157 = vpow.pop %v2156
  %v2158 = vmul.f32 %v2129, 1.442695
  %v2159 = vpow.pop %v2158
  %v2160 = vmul.f32 %v2130, 1.442695
  %v2161 = vpow.pop %v2160
  %v2162 = vmul.f32 %v2131, 1.442695
  %v2163 = vpow.pop %v2162
  %v2164 = vadd.f32 %v2133, %v2135
  %2165 = vadd.xlane.f32.xlu0 %v2164
  %v2166 = vpop.xlane.xlu0 %2165
  %v2167 = vadd.f32 %v2137, %v2139
  %2168 = vadd.xlane.f32.xlu0 %v2167
  %v2169 = vpop.xlane.xlu0 %2168
  %v2170 = vadd.f32 %v2141, %v2143
  %2171 = vadd.xlane.f32.xlu0 %v2170
  %v2172 = vpop.xlane.xlu0 %2171
  %v2173 = vadd.f32 %v2145, %v2147
  %2174 = vadd.xlane.f32.xlu0 %v2173
  %v2175 = vpop.xlane.xlu0 %2174
  %v2176 = vadd.f32 %v2149, %v2151
  %2177 = vadd.xlane.f32.xlu0 %v2176
  %v2178 = vpop.xlane.xlu0 %2177
  %v2179 = vadd.f32 %v2153, %v2155
  %2180 = vadd.xlane.f32.xlu0 %v2179
  %v2181 = vpop.xlane.xlu0 %2180
  %v2182 = vadd.f32 %v2157, %v2159
  %2183 = vadd.xlane.f32.xlu0 %v2182
  %v2184 = vpop.xlane.xlu0 %2183
  %v2185 = vadd.f32 %v2161, %v2163
  %2186 = vadd.xlane.f32.xlu0 %v2185
  %v2187 = vpop.xlane.xlu0 %2186
  %v2188 = vrcp.pop %v2166
  %v2189 = vmul.f32 %v2133, %v2188
  %v2190 = vmul.f32 %v2135, %v2188
  %v2191 = vrcp.pop %v2169
  %v2192 = vmul.f32 %v2137, %v2191
  %v2193 = vmul.f32 %v2139, %v2191
  %v2194 = vrcp.pop %v2172
  %v2195 = vmul.f32 %v2141, %v2194
  %v2196 = vmul.f32 %v2143, %v2194
  %v2197 = vrcp.pop %v2175
  %v2198 = vmul.f32 %v2145, %v2197
  %v2199 = vmul.f32 %v2147, %v2197
  %v2200 = vrcp.pop %v2178
  %v2201 = vmul.f32 %v2149, %v2200
  %v2202 = vmul.f32 %v2151, %v2200
  %v2203 = vrcp.pop %v2181
  %v2204 = vmul.f32 %v2153, %v2203
  %v2205 = vmul.f32 %v2155, %v2203
  %v2206 = vrcp.pop %v2184
  %v2207 = vmul.f32 %v2157, %v2206
  %v2208 = vmul.f32 %v2159, %v2206
  %v2209 = vrcp.pop %v2187
  %v2210 = vmul.f32 %v2161, %v2209
  %v2211 = vmul.f32 %v2163, %v2209
  %2213 = vrot.lane.b32.xlu0 %v159, 64
  %v2214 = vpop.permute.xlu0 %2213
  %2216 = vxpose.xlu0.b32.start [1/16] %v2214, 128
  %2217 = vxpose.xlu0.b32.cont [2/16] 0.0, 128
  %2218 = vxpose.xlu0.b32.cont [3/16] 0.0, 128
  %2219 = vxpose.xlu0.b32.cont [4/16] 0.0, 128
  %2220 = vxpose.xlu0.b32.cont [5/16] 0.0, 128
  %2221 = vxpose.xlu0.b32.cont [6/16] 0.0, 128
  %2222 = vxpose.xlu0.b32.cont [7/16] 0.0, 128
  %2223 = vxpose.xlu0.b32.cont [8/16] 0.0, 128
  %2224 = vxpose.xlu0.b32.cont [9/16] 0.0, 128
  %2225 = vxpose.xlu0.b32.cont [10/16] 0.0, 128
  %2226 = vxpose.xlu0.b32.cont [11/16] 0.0, 128
  %2227 = vxpose.xlu0.b32.cont [12/16] 0.0, 128
  %2228 = vxpose.xlu0.b32.cont [13/16] 0.0, 128
  %2229 = vxpose.xlu0.b32.cont [14/16] 0.0, 128
  %2230 = vxpose.xlu0.b32.cont [15/16] 0.0, 128
  %2231 = vxpose.xlu0.b32.end [16/16] 0.0, 128
  %v2232 = vpop.trf.xlu0
  %v2233 = vpop.trf.xlu0
  %v2234 = vpop.trf.xlu0
  %v2235 = vpop.trf.xlu0
  %v2236 = vpop.trf.xlu0
  %v2237 = vpop.trf.xlu0
  %v2238 = vpop.trf.xlu0
  %v2239 = vpop.trf.xlu0
  %v2240 = vpop.trf.xlu0
  %v2241 = vpop.trf.xlu0
  %v2242 = vpop.trf.xlu0
  %v2243 = vpop.trf.xlu0
  %v2244 = vpop.trf.xlu0
  %v2245 = vpop.trf.xlu0
  %v2246 = vpop.trf.xlu0
  %v2247 = vpop.trf.xlu0
  %v2249 = vsel %vm207, %v2232, 0
  %v2252 = vsel %vm207, %v2233, 0
  %v2255 = vsel %vm207, %v2234, 0
  %v2258 = vsel %vm207, %v2235, 0
  %v2261 = vsel %vm207, %v2236, 0
  %v2264 = vsel %vm207, %v2237, 0
  %v2267 = vsel %vm207, %v2238, 0
  %v2270 = vsel %vm207, %v2239, 0
  %2272 = vmatprep.subr.mxu0 %v149
  %2273 = vmatpush1.msra.mxu0 %v147
  %2274 = vmatprep.subr.mxu0 0.0
  %2275 = vmatpush1.msra.mxu0 0.0
  %2276 = vmatprep.subr.mxu0 0.0
  %2277 = vmatpush1.msra.mxu0 0.0
  %2278 = vmatprep.subr.mxu0 0.0
  %2279 = vmatpush1.msra.mxu0 0.0
  %2280 = vmatprep.subr.mxu0 0.0
  %2281 = vmatpush1.msra.mxu0 0.0
  %2282 = vmatprep.subr.mxu0 0.0
  %2283 = vmatpush1.msra.mxu0 0.0
  %2284 = vmatprep.subr.mxu0 0.0
  %2285 = vmatpush1.msra.mxu0 0.0
  %2286 = vmatprep.subr.mxu0 0.0
  %2287 = vmatpush1.msra.mxu0 0.0
  %2288 = vmatprep.subr.mxu0 0.0
  %2289 = vmatpush1.msra.mxu0 0.0
  %2290 = vmatprep.subr.mxu0 0.0
  %2291 = vmatpush1.msra.mxu0 0.0
  %2292 = vmatprep.subr.mxu0 0.0
  %2293 = vmatpush1.msra.mxu0 0.0
  %2294 = vmatprep.subr.mxu0 0.0
  %2295 = vmatpush1.msra.mxu0 0.0
  %2296 = vmatprep.subr.mxu0 0.0
  %2297 = vmatpush1.msra.mxu0 0.0
  %2298 = vmatprep.subr.mxu0 0.0
  %2299 = vmatpush1.msra.mxu0 0.0
  %2300 = vmatprep.subr.mxu0 0.0
  %2301 = vmatpush1.msra.mxu0 0.0
  %2302 = vmatprep.subr.mxu0 0.0
  %2303 = vmatpush1.msra.mxu0 0.0
  %2304 = vmatprep.subr.mxu0 0.0
  %2305 = vmatpush1.msra.mxu0 0.0
  %2306 = vmatprep.subr.mxu0 0.0
  %2307 = vmatpush1.msra.mxu0 0.0
  %2308 = vmatprep.subr.mxu0 0.0
  %2309 = vmatpush1.msra.mxu0 0.0
  %2310 = vmatprep.subr.mxu0 0.0
  %2311 = vmatpush1.msra.mxu0 0.0
  %2312 = vmatprep.subr.mxu0 0.0
  %2313 = vmatpush1.msra.mxu0 0.0
  %2314 = vmatprep.subr.mxu0 0.0
  %2315 = vmatpush1.msra.mxu0 0.0
  %2316 = vmatprep.subr.mxu0 0.0
  %2317 = vmatpush1.msra.mxu0 0.0
  %2318 = vmatprep.subr.mxu0 0.0
  %2319 = vmatpush1.msra.mxu0 0.0
  %2320 = vmatprep.subr.mxu0 0.0
  %2321 = vmatpush1.msra.mxu0 0.0
  %2322 = vmatprep.subr.mxu0 0.0
  %2323 = vmatpush1.msra.mxu0 0.0
  %2324 = vmatprep.subr.mxu0 0.0
  %2325 = vmatpush1.msra.mxu0 0.0
  %2326 = vmatprep.subr.mxu0 0.0
  %2327 = vmatpush1.msra.mxu0 0.0
  %2328 = vmatprep.subr.mxu0 0.0
  %2329 = vmatpush1.msra.mxu0 0.0
  %2330 = vmatprep.subr.mxu0 0.0
  %2331 = vmatpush1.msra.mxu0 0.0
  %2332 = vmatprep.subr.mxu0 0.0
  %2333 = vmatpush1.msra.mxu0 0.0
  %2334 = vmatprep.subr.mxu0 0.0
  %2335 = vmatpush1.msra.mxu0 0.0
  %2336 = vmatprep.mubr.f32.mxu0 0.0
  %2337 = vmatmul.mubr.f32.gmra.mrb[0].mxu0 %v2249
  %v2338 = vpop.f32.mrb[0].mxu0
  %v2339 = vadd.f32 0.0, %v2338
  %v2340 = vpop.f32.mrb[0].mxu0
  %v2341 = vadd.f32 0.0, %v2340
  %2342 = vmatprep.mubr.f32.mxu0 0.0
  %2343 = vmatmul.mubr.f32.gmra.mrb[0].mxu0 %v2252
  %v2344 = vpop.f32.mrb[0].mxu0
  %v2345 = vadd.f32 0.0, %v2344
  %v2346 = vpop.f32.mrb[0].mxu0
  %v2347 = vadd.f32 0.0, %v2346
  %2348 = vmatprep.mubr.f32.mxu0 0.0
  %2349 = vmatmul.mubr.f32.gmra.mrb[0].mxu0 %v2255
  %v2350 = vpop.f32.mrb[0].mxu0
  %v2351 = vadd.f32 0.0, %v2350
  %v2352 = vpop.f32.mrb[0].mxu0
  %v2353 = vadd.f32 0.0, %v2352
  %2354 = vmatprep.mubr.f32.mxu0 0.0
  %2355 = vmatmul.mubr.f32.gmra.mrb[0].mxu0 %v2258
  %v2356 = vpop.f32.mrb[0].mxu0
  %v2357 = vadd.f32 0.0, %v2356
  %v2358 = vpop.f32.mrb[0].mxu0
  %v2359 = vadd.f32 0.0, %v2358
  %2360 = vmatprep.mubr.f32.mxu0 0.0
  %2361 = vmatmul.mubr.f32.gmra.mrb[0].mxu0 %v2261
  %v2362 = vpop.f32.mrb[0].mxu0
  %v2363 = vadd.f32 0.0, %v2362
  %v2364 = vpop.f32.mrb[0].mxu0
  %v2365 = vadd.f32 0.0, %v2364
  %2366 = vmatprep.mubr.f32.mxu0 0.0
  %2367 = vmatmul.mubr.f32.gmra.mrb[0].mxu0 %v2264
  %v2368 = vpop.f32.mrb[0].mxu0
  %v2369 = vadd.f32 0.0, %v2368
  %v2370 = vpop.f32.mrb[0].mxu0
  %v2371 = vadd.f32 0.0, %v2370
  %2372 = vmatprep.mubr.f32.mxu0 0.0
  %2373 = vmatmul.mubr.f32.gmra.mrb[0].mxu0 %v2267
  %v2374 = vpop.f32.mrb[0].mxu0
  %v2375 = vadd.f32 0.0, %v2374
  %v2376 = vpop.f32.mrb[0].mxu0
  %v2377 = vadd.f32 0.0, %v2376
  %2378 = vmatprep.mubr.f32.mxu0 0.0
  %2379 = vmatmul.mubr.f32.gmra.mrb[0].mxu0 %v2270
  %v2380 = vpop.f32.mrb[0].mxu0
  %v2381 = vadd.f32 0.0, %v2380
  %v2382 = vpop.f32.mrb[0].mxu0
  %v2383 = vadd.f32 0.0, %v2382
  %2384 = vdwg.mxu0
  %v2385 = vsel %vm742, %v2339, -1e+30
  %v2386 = vsel %vm743, %v2341, -1e+30
  %v2387 = vsel %vm744, %v2345, -1e+30
  %v2388 = vsel %vm745, %v2347, -1e+30
  %v2389 = vsel %vm746, %v2351, -1e+30
  %v2390 = vsel %vm747, %v2353, -1e+30
  %v2391 = vsel %vm748, %v2357, -1e+30
  %v2392 = vsel %vm749, %v2359, -1e+30
  %v2393 = vsel %vm750, %v2363, -1e+30
  %v2394 = vsel %vm751, %v2365, -1e+30
  %v2395 = vsel %vm752, %v2369, -1e+30
  %v2396 = vsel %vm753, %v2371, -1e+30
  %v2397 = vsel %vm754, %v2375, -1e+30
  %v2398 = vsel %vm755, %v2377, -1e+30
  %v2399 = vsel %vm756, %v2381, -1e+30
  %v2400 = vsel %vm757, %v2383, -1e+30
  %v2401 = vmax.f32 %v2385, %v2386
  %2402 = vmax.xlane.f32.xlu0 %v2401
  %v2403 = vpop.xlane.xlu0 %2402
  %v2404 = vmax.f32 %v2387, %v2388
  %2405 = vmax.xlane.f32.xlu0 %v2404
  %v2406 = vpop.xlane.xlu0 %2405
  %v2407 = vmax.f32 %v2389, %v2390
  %2408 = vmax.xlane.f32.xlu0 %v2407
  %v2409 = vpop.xlane.xlu0 %2408
  %v2410 = vmax.f32 %v2391, %v2392
  %2411 = vmax.xlane.f32.xlu0 %v2410
  %v2412 = vpop.xlane.xlu0 %2411
  %v2413 = vmax.f32 %v2393, %v2394
  %2414 = vmax.xlane.f32.xlu0 %v2413
  %v2415 = vpop.xlane.xlu0 %2414
  %v2416 = vmax.f32 %v2395, %v2396
  %2417 = vmax.xlane.f32.xlu0 %v2416
  %v2418 = vpop.xlane.xlu0 %2417
  %v2419 = vmax.f32 %v2397, %v2398
  %2420 = vmax.xlane.f32.xlu0 %v2419
  %v2421 = vpop.xlane.xlu0 %2420
  %v2422 = vmax.f32 %v2399, %v2400
  %2423 = vmax.xlane.f32.xlu0 %v2422
  %v2424 = vpop.xlane.xlu0 %2423
  %v2425 = vsub.f32 %v2385, %v2403
  %v2426 = vsub.f32 %v2386, %v2403
  %v2427 = vsub.f32 %v2387, %v2406
  %v2428 = vsub.f32 %v2388, %v2406
  %v2429 = vsub.f32 %v2389, %v2409
  %v2430 = vsub.f32 %v2390, %v2409
  %v2431 = vsub.f32 %v2391, %v2412
  %v2432 = vsub.f32 %v2392, %v2412
  %v2433 = vsub.f32 %v2393, %v2415
  %v2434 = vsub.f32 %v2394, %v2415
  %v2435 = vsub.f32 %v2395, %v2418
  %v2436 = vsub.f32 %v2396, %v2418
  %v2437 = vsub.f32 %v2397, %v2421
  %v2438 = vsub.f32 %v2398, %v2421
  %v2439 = vsub.f32 %v2399, %v2424
  %v2440 = vsub.f32 %v2400, %v2424
  %v2441 = vmul.f32 %v2425, 1.442695
  %v2442 = vpow.pop %v2441
  %v2443 = vmul.f32 %v2426, 1.442695
  %v2444 = vpow.pop %v2443
  %v2445 = vmul.f32 %v2427, 1.442695
  %v2446 = vpow.pop %v2445
  %v2447 = vmul.f32 %v2428, 1.442695
  %v2448 = vpow.pop %v2447
  %v2449 = vmul.f32 %v2429, 1.442695
  %v2450 = vpow.pop %v2449
  %v2451 = vmul.f32 %v2430, 1.442695
  %v2452 = vpow.pop %v2451
  %v2453 = vmul.f32 %v2431, 1.442695
  %v2454 = vpow.pop %v2453
  %v2455 = vmul.f32 %v2432, 1.442695
  %v2456 = vpow.pop %v2455
  %v2457 = vmul.f32 %v2433, 1.442695
  %v2458 = vpow.pop %v2457
  %v2459 = vmul.f32 %v2434, 1.442695
  %v2460 = vpow.pop %v2459
  %v2461 = vmul.f32 %v2435, 1.442695
  %v2462 = vpow.pop %v2461
  %v2463 = vmul.f32 %v2436, 1.442695
  %v2464 = vpow.pop %v2463
  %v2465 = vmul.f32 %v2437, 1.442695
  %v2466 = vpow.pop %v2465
  %v2467 = vmul.f32 %v2438, 1.442695
  %v2468 = vpow.pop %v2467
  %v2469 = vmul.f32 %v2439, 1.442695
  %v2470 = vpow.pop %v2469
  %v2471 = vmul.f32 %v2440, 1.442695
  %v2472 = vpow.pop %v2471
  %v2473 = vadd.f32 %v2442, %v2444
  %2474 = vadd.xlane.f32.xlu0 %v2473
  %v2475 = vpop.xlane.xlu0 %2474
  %v2476 = vadd.f32 %v2446, %v2448
  %2477 = vadd.xlane.f32.xlu0 %v2476
  %v2478 = vpop.xlane.xlu0 %2477
  %v2479 = vadd.f32 %v2450, %v2452
  %2480 = vadd.xlane.f32.xlu0 %v2479
  %v2481 = vpop.xlane.xlu0 %2480
  %v2482 = vadd.f32 %v2454, %v2456
  %2483 = vadd.xlane.f32.xlu0 %v2482
  %v2484 = vpop.xlane.xlu0 %2483
  %v2485 = vadd.f32 %v2458, %v2460
  %2486 = vadd.xlane.f32.xlu0 %v2485
  %v2487 = vpop.xlane.xlu0 %2486
  %v2488 = vadd.f32 %v2462, %v2464
  %2489 = vadd.xlane.f32.xlu0 %v2488
  %v2490 = vpop.xlane.xlu0 %2489
  %v2491 = vadd.f32 %v2466, %v2468
  %2492 = vadd.xlane.f32.xlu0 %v2491
  %v2493 = vpop.xlane.xlu0 %2492
  %v2494 = vadd.f32 %v2470, %v2472
  %2495 = vadd.xlane.f32.xlu0 %v2494
  %v2496 = vpop.xlane.xlu0 %2495
  %v2497 = vrcp.pop %v2475
  %v2498 = vmul.f32 %v2442, %v2497
  %v2499 = vmul.f32 %v2444, %v2497
  %v2500 = vrcp.pop %v2478
  %v2501 = vmul.f32 %v2446, %v2500
  %v2502 = vmul.f32 %v2448, %v2500
  %v2503 = vrcp.pop %v2481
  %v2504 = vmul.f32 %v2450, %v2503
  %v2505 = vmul.f32 %v2452, %v2503
  %v2506 = vrcp.pop %v2484
  %v2507 = vmul.f32 %v2454, %v2506
  %v2508 = vmul.f32 %v2456, %v2506
  %v2509 = vrcp.pop %v2487
  %v2510 = vmul.f32 %v2458, %v2509
  %v2511 = vmul.f32 %v2460, %v2509
  %v2512 = vrcp.pop %v2490
  %v2513 = vmul.f32 %v2462, %v2512
  %v2514 = vmul.f32 %v2464, %v2512
  %v2515 = vrcp.pop %v2493
  %v2516 = vmul.f32 %v2466, %v2515
  %v2517 = vmul.f32 %v2468, %v2515
  %v2518 = vrcp.pop %v2496
  %v2519 = vmul.f32 %v2470, %v2518
  %v2520 = vmul.f32 %v2472, %v2518
  %2522 = vrot.lane.b32.xlu0 %v171, 64
  %v2523 = vpop.permute.xlu0 %2522
  %v2524 = vsel %vm897, %v2523, 0
  %2526 = vmatprep.subr.mxu0 %v2499
  %2527 = vmatpush1.msra.mxu0 %v2498
  %2528 = vmatprep.subr.mxu0 %v2502
  %2529 = vmatpush1.msra.mxu0 %v2501
  %2530 = vmatprep.subr.mxu0 %v2505
  %2531 = vmatpush1.msra.mxu0 %v2504
  %2532 = vmatprep.subr.mxu0 %v2508
  %2533 = vmatpush1.msra.mxu0 %v2507
  %2534 = vmatprep.subr.mxu0 %v2511
  %2535 = vmatpush1.msra.mxu0 %v2510
  %2536 = vmatprep.subr.mxu0 %v2514
  %2537 = vmatpush1.msra.mxu0 %v2513
  %2538 = vmatprep.subr.mxu0 %v2517
  %2539 = vmatpush1.msra.mxu0 %v2516
  %2540 = vmatprep.subr.mxu0 %v2520
  %2541 = vmatpush1.msra.mxu0 %v2519
  %2542 = vmatprep.subr.mxu0 0.0
  %2543 = vmatpush1.msra.mxu0 0.0
  %2544 = vmatprep.subr.mxu0 0.0
  %2545 = vmatpush1.msra.mxu0 0.0
  %2546 = vmatprep.subr.mxu0 0.0
  %2547 = vmatpush1.msra.mxu0 0.0
  %2548 = vmatprep.subr.mxu0 0.0
  %2549 = vmatpush1.msra.mxu0 0.0
  %2550 = vmatprep.subr.mxu0 0.0
  %2551 = vmatpush1.msra.mxu0 0.0
  %2552 = vmatprep.subr.mxu0 0.0
  %2553 = vmatpush1.msra.mxu0 0.0
  %2554 = vmatprep.subr.mxu0 0.0
  %2555 = vmatpush1.msra.mxu0 0.0
  %2556 = vmatprep.subr.mxu0 0.0
  %2557 = vmatpush1.msra.mxu0 0.0
  %2558 = vmatprep.subr.mxu0 0.0
  %2559 = vmatpush1.msra.mxu0 0.0
  %2560 = vmatprep.subr.mxu0 0.0
  %2561 = vmatpush1.msra.mxu0 0.0
  %2562 = vmatprep.subr.mxu0 0.0
  %2563 = vmatpush1.msra.mxu0 0.0
  %2564 = vmatprep.subr.mxu0 0.0
  %2565 = vmatpush1.msra.mxu0 0.0
  %2566 = vmatprep.subr.mxu0 0.0
  %2567 = vmatpush1.msra.mxu0 0.0
  %2568 = vmatprep.subr.mxu0 0.0
  %2569 = vmatpush1.msra.mxu0 0.0
  %2570 = vmatprep.subr.mxu0 0.0
  %2571 = vmatpush1.msra.mxu0 0.0
  %2572 = vmatprep.subr.mxu0 0.0
  %2573 = vmatpush1.msra.mxu0 0.0
  %2574 = vmatprep.subr.mxu0 0.0
  %2575 = vmatpush1.msra.mxu0 0.0
  %2576 = vmatprep.subr.mxu0 0.0
  %2577 = vmatpush1.msra.mxu0 0.0
  %2578 = vmatprep.subr.mxu0 0.0
  %2579 = vmatpush1.msra.mxu0 0.0
  %2580 = vmatprep.subr.mxu0 0.0
  %2581 = vmatpush1.msra.mxu0 0.0
  %2582 = vmatprep.subr.mxu0 0.0
  %2583 = vmatpush1.msra.mxu0 0.0
  %2584 = vmatprep.subr.mxu0 0.0
  %2585 = vmatpush1.msra.mxu0 0.0
  %2586 = vmatprep.subr.mxu0 0.0
  %2587 = vmatpush1.msra.mxu0 0.0
  %2588 = vmatprep.subr.mxu0 0.0
  %2589 = vmatpush1.msra.mxu0 0.0
  %2590 = vmatprep.mubr.f32.mxu0 0.0
  %2591 = vmatmul.mubr.f32.gmra.mrb[0].mxu0 %v2524
  %v2592 = vpop.f32.mrb[0].mxu0
  %v2593 = vadd.f32 0.0, %v2592
  %v2594 = vpop.f32.mrb[0].mxu0
  %v2595 = vadd.f32 0.0, %v2594
  %2596 = vdwg.mxu0
  %v2597 = vsel %vm897, %v171, 0
  %2599 = vmatprep.subr.mxu0 %v2190
  %2600 = vmatpush1.msra.mxu0 %v2189
  %2601 = vmatprep.subr.mxu0 %v2193
  %2602 = vmatpush1.msra.mxu0 %v2192
  %2603 = vmatprep.subr.mxu0 %v2196
  %2604 = vmatpush1.msra.mxu0 %v2195
  %2605 = vmatprep.subr.mxu0 %v2199
  %2606 = vmatpush1.msra.mxu0 %v2198
  %2607 = vmatprep.subr.mxu0 %v2202
  %2608 = vmatpush1.msra.mxu0 %v2201
  %2609 = vmatprep.subr.mxu0 %v2205
  %2610 = vmatpush1.msra.mxu0 %v2204
  %2611 = vmatprep.subr.mxu0 %v2208
  %2612 = vmatpush1.msra.mxu0 %v2207
  %2613 = vmatprep.subr.mxu0 %v2211
  %2614 = vmatpush1.msra.mxu0 %v2210
  %2615 = vmatprep.subr.mxu0 0.0
  %2616 = vmatpush1.msra.mxu0 0.0
  %2617 = vmatprep.subr.mxu0 0.0
  %2618 = vmatpush1.msra.mxu0 0.0
  %2619 = vmatprep.subr.mxu0 0.0
  %2620 = vmatpush1.msra.mxu0 0.0
  %2621 = vmatprep.subr.mxu0 0.0
  %2622 = vmatpush1.msra.mxu0 0.0
  %2623 = vmatprep.subr.mxu0 0.0
  %2624 = vmatpush1.msra.mxu0 0.0
  %2625 = vmatprep.subr.mxu0 0.0
  %2626 = vmatpush1.msra.mxu0 0.0
  %2627 = vmatprep.subr.mxu0 0.0
  %2628 = vmatpush1.msra.mxu0 0.0
  %2629 = vmatprep.subr.mxu0 0.0
  %2630 = vmatpush1.msra.mxu0 0.0
  %2631 = vmatprep.subr.mxu0 0.0
  %2632 = vmatpush1.msra.mxu0 0.0
  %2633 = vmatprep.subr.mxu0 0.0
  %2634 = vmatpush1.msra.mxu0 0.0
  %2635 = vmatprep.subr.mxu0 0.0
  %2636 = vmatpush1.msra.mxu0 0.0
  %2637 = vmatprep.subr.mxu0 0.0
  %2638 = vmatpush1.msra.mxu0 0.0
  %2639 = vmatprep.subr.mxu0 0.0
  %2640 = vmatpush1.msra.mxu0 0.0
  %2641 = vmatprep.subr.mxu0 0.0
  %2642 = vmatpush1.msra.mxu0 0.0
  %2643 = vmatprep.subr.mxu0 0.0
  %2644 = vmatpush1.msra.mxu0 0.0
  %2645 = vmatprep.subr.mxu0 0.0
  %2646 = vmatpush1.msra.mxu0 0.0
  %2647 = vmatprep.subr.mxu0 0.0
  %2648 = vmatpush1.msra.mxu0 0.0
  %2649 = vmatprep.subr.mxu0 0.0
  %2650 = vmatpush1.msra.mxu0 0.0
  %2651 = vmatprep.subr.mxu0 0.0
  %2652 = vmatpush1.msra.mxu0 0.0
  %2653 = vmatprep.subr.mxu0 0.0
  %2654 = vmatpush1.msra.mxu0 0.0
  %2655 = vmatprep.subr.mxu0 0.0
  %2656 = vmatpush1.msra.mxu0 0.0
  %2657 = vmatprep.subr.mxu0 0.0
  %2658 = vmatpush1.msra.mxu0 0.0
  %2659 = vmatprep.subr.mxu0 0.0
  %2660 = vmatpush1.msra.mxu0 0.0
  %2661 = vmatprep.subr.mxu0 0.0
  %2662 = vmatpush1.msra.mxu0 0.0
  %2663 = vmatprep.mubr.f32.mxu0 0.0
  %2664 = vmatmul.mubr.f32.gmra.mrb[0].mxu0 %v2597
  %v2665 = vpop.f32.mrb[0].mxu0
  %v2666 = vadd.f32 %v2593, %v2665
  %v2667 = vpop.f32.mrb[0].mxu0
  %v2668 = vadd.f32 %v2595, %v2667
  %2669 = vdwg.mxu0
  %2670 = vxpose.xlu0.b32.start [1/16] %v161, 128
  %2671 = vxpose.xlu0.b32.cont [2/16] 0.0, 128
  %2672 = vxpose.xlu0.b32.cont [3/16] 0.0, 128
  %2673 = vxpose.xlu0.b32.cont [4/16] 0.0, 128
  %2674 = vxpose.xlu0.b32.cont [5/16] 0.0, 128
  %2675 = vxpose.xlu0.b32.cont [6/16] 0.0, 128
  %2676 = vxpose.xlu0.b32.cont [7/16] 0.0, 128
  %2677 = vxpose.xlu0.b32.cont [8/16] 0.0, 128
  %2678 = vxpose.xlu0.b32.cont [9/16] 0.0, 128
  %2679 = vxpose.xlu0.b32.cont [10/16] 0.0, 128
  %2680 = vxpose.xlu0.b32.cont [11/16] 0.0, 128
  %2681 = vxpose.xlu0.b32.cont [12/16] 0.0, 128
  %2682 = vxpose.xlu0.b32.cont [13/16] 0.0, 128
  %2683 = vxpose.xlu0.b32.cont [14/16] 0.0, 128
  %2684 = vxpose.xlu0.b32.cont [15/16] 0.0, 128
  %2685 = vxpose.xlu0.b32.end [16/16] 0.0, 128
  %v2686 = vpop.trf.xlu0
  %v2687 = vpop.trf.xlu0
  %v2688 = vpop.trf.xlu0
  %v2689 = vpop.trf.xlu0
  %v2690 = vpop.trf.xlu0
  %v2691 = vpop.trf.xlu0
  %v2692 = vpop.trf.xlu0
  %v2693 = vpop.trf.xlu0
  %v2694 = vpop.trf.xlu0
  %v2695 = vpop.trf.xlu0
  %v2696 = vpop.trf.xlu0
  %v2697 = vpop.trf.xlu0
  %v2698 = vpop.trf.xlu0
  %v2699 = vpop.trf.xlu0
  %v2700 = vpop.trf.xlu0
  %v2701 = vpop.trf.xlu0
  %v2703 = vsel %vm207, %v2686, 0
  %v2706 = vsel %vm207, %v2687, 0
  %v2709 = vsel %vm207, %v2688, 0
  %v2712 = vsel %vm207, %v2689, 0
  %v2715 = vsel %vm207, %v2690, 0
  %v2718 = vsel %vm207, %v2691, 0
  %v2721 = vsel %vm207, %v2692, 0
  %v2724 = vsel %vm207, %v2693, 0
  %2726 = vmatprep.subr.mxu0 %v149
  %2727 = vmatpush1.msra.mxu0 %v147
  %2728 = vmatprep.subr.mxu0 0.0
  %2729 = vmatpush1.msra.mxu0 0.0
  %2730 = vmatprep.subr.mxu0 0.0
  %2731 = vmatpush1.msra.mxu0 0.0
  %2732 = vmatprep.subr.mxu0 0.0
  %2733 = vmatpush1.msra.mxu0 0.0
  %2734 = vmatprep.subr.mxu0 0.0
  %2735 = vmatpush1.msra.mxu0 0.0
  %2736 = vmatprep.subr.mxu0 0.0
  %2737 = vmatpush1.msra.mxu0 0.0
  %2738 = vmatprep.subr.mxu0 0.0
  %2739 = vmatpush1.msra.mxu0 0.0
  %2740 = vmatprep.subr.mxu0 0.0
  %2741 = vmatpush1.msra.mxu0 0.0
  %2742 = vmatprep.subr.mxu0 0.0
  %2743 = vmatpush1.msra.mxu0 0.0
  %2744 = vmatprep.subr.mxu0 0.0
  %2745 = vmatpush1.msra.mxu0 0.0
  %2746 = vmatprep.subr.mxu0 0.0
  %2747 = vmatpush1.msra.mxu0 0.0
  %2748 = vmatprep.subr.mxu0 0.0
  %2749 = vmatpush1.msra.mxu0 0.0
  %2750 = vmatprep.subr.mxu0 0.0
  %2751 = vmatpush1.msra.mxu0 0.0
  %2752 = vmatprep.subr.mxu0 0.0
  %2753 = vmatpush1.msra.mxu0 0.0
  %2754 = vmatprep.subr.mxu0 0.0
  %2755 = vmatpush1.msra.mxu0 0.0
  %2756 = vmatprep.subr.mxu0 0.0
  %2757 = vmatpush1.msra.mxu0 0.0
  %2758 = vmatprep.subr.mxu0 0.0
  %2759 = vmatpush1.msra.mxu0 0.0
  %2760 = vmatprep.subr.mxu0 0.0
  %2761 = vmatpush1.msra.mxu0 0.0
  %2762 = vmatprep.subr.mxu0 0.0
  %2763 = vmatpush1.msra.mxu0 0.0
  %2764 = vmatprep.subr.mxu0 0.0
  %2765 = vmatpush1.msra.mxu0 0.0
  %2766 = vmatprep.subr.mxu0 0.0
  %2767 = vmatpush1.msra.mxu0 0.0
  %2768 = vmatprep.subr.mxu0 0.0
  %2769 = vmatpush1.msra.mxu0 0.0
  %2770 = vmatprep.subr.mxu0 0.0
  %2771 = vmatpush1.msra.mxu0 0.0
  %2772 = vmatprep.subr.mxu0 0.0
  %2773 = vmatpush1.msra.mxu0 0.0
  %2774 = vmatprep.subr.mxu0 0.0
  %2775 = vmatpush1.msra.mxu0 0.0
  %2776 = vmatprep.subr.mxu0 0.0
  %2777 = vmatpush1.msra.mxu0 0.0
  %2778 = vmatprep.subr.mxu0 0.0
  %2779 = vmatpush1.msra.mxu0 0.0
  %2780 = vmatprep.subr.mxu0 0.0
  %2781 = vmatpush1.msra.mxu0 0.0
  %2782 = vmatprep.subr.mxu0 0.0
  %2783 = vmatpush1.msra.mxu0 0.0
  %2784 = vmatprep.subr.mxu0 0.0
  %2785 = vmatpush1.msra.mxu0 0.0
  %2786 = vmatprep.subr.mxu0 0.0
  %2787 = vmatpush1.msra.mxu0 0.0
  %2788 = vmatprep.subr.mxu0 0.0
  %2789 = vmatpush1.msra.mxu0 0.0
  %2790 = vmatprep.mubr.f32.mxu0 0.0
  %2791 = vmatmul.mubr.f32.gmra.mrb[0].mxu0 %v2703
  %v2792 = vpop.f32.mrb[0].mxu0
  %v2793 = vadd.f32 0.0, %v2792
  %v2794 = vpop.f32.mrb[0].mxu0
  %v2795 = vadd.f32 0.0, %v2794
  %2796 = vmatprep.mubr.f32.mxu0 0.0
  %2797 = vmatmul.mubr.f32.gmra.mrb[0].mxu0 %v2706
  %v2798 = vpop.f32.mrb[0].mxu0
  %v2799 = vadd.f32 0.0, %v2798
  %v2800 = vpop.f32.mrb[0].mxu0
  %v2801 = vadd.f32 0.0, %v2800
  %2802 = vmatprep.mubr.f32.mxu0 0.0
  %2803 = vmatmul.mubr.f32.gmra.mrb[0].mxu0 %v2709
  %v2804 = vpop.f32.mrb[0].mxu0
  %v2805 = vadd.f32 0.0, %v2804
  %v2806 = vpop.f32.mrb[0].mxu0
  %v2807 = vadd.f32 0.0, %v2806
  %2808 = vmatprep.mubr.f32.mxu0 0.0
  %2809 = vmatmul.mubr.f32.gmra.mrb[0].mxu0 %v2712
  %v2810 = vpop.f32.mrb[0].mxu0
  %v2811 = vadd.f32 0.0, %v2810
  %v2812 = vpop.f32.mrb[0].mxu0
  %v2813 = vadd.f32 0.0, %v2812
  %2814 = vmatprep.mubr.f32.mxu0 0.0
  %2815 = vmatmul.mubr.f32.gmra.mrb[0].mxu0 %v2715
  %v2816 = vpop.f32.mrb[0].mxu0
  %v2817 = vadd.f32 0.0, %v2816
  %v2818 = vpop.f32.mrb[0].mxu0
  %v2819 = vadd.f32 0.0, %v2818
  %2820 = vmatprep.mubr.f32.mxu0 0.0
  %2821 = vmatmul.mubr.f32.gmra.mrb[0].mxu0 %v2718
  %v2822 = vpop.f32.mrb[0].mxu0
  %v2823 = vadd.f32 0.0, %v2822
  %v2824 = vpop.f32.mrb[0].mxu0
  %v2825 = vadd.f32 0.0, %v2824
  %2826 = vmatprep.mubr.f32.mxu0 0.0
  %2827 = vmatmul.mubr.f32.gmra.mrb[0].mxu0 %v2721
  %v2828 = vpop.f32.mrb[0].mxu0
  %v2829 = vadd.f32 0.0, %v2828
  %v2830 = vpop.f32.mrb[0].mxu0
  %v2831 = vadd.f32 0.0, %v2830
  %2832 = vmatprep.mubr.f32.mxu0 0.0
  %2833 = vmatmul.mubr.f32.gmra.mrb[0].mxu0 %v2724
  %v2834 = vpop.f32.mrb[0].mxu0
  %v2835 = vadd.f32 0.0, %v2834
  %v2836 = vpop.f32.mrb[0].mxu0
  %v2837 = vadd.f32 0.0, %v2836
  %2838 = vdwg.mxu0
  %v2839 = vsel %vm1245, %v2793, -1e+30
  %v2840 = vsel %vm1246, %v2795, -1e+30
  %v2841 = vsel %vm1247, %v2799, -1e+30
  %v2842 = vsel %vm1248, %v2801, -1e+30
  %v2843 = vsel %vm1249, %v2805, -1e+30
  %v2844 = vsel %vm1250, %v2807, -1e+30
  %v2845 = vsel %vm1251, %v2811, -1e+30
  %v2846 = vsel %vm1252, %v2813, -1e+30
  %v2847 = vsel %vm1253, %v2817, -1e+30
  %v2848 = vsel %vm1254, %v2819, -1e+30
  %v2849 = vsel %vm1255, %v2823, -1e+30
  %v2850 = vsel %vm1256, %v2825, -1e+30
  %v2851 = vsel %vm1257, %v2829, -1e+30
  %v2852 = vsel %vm1258, %v2831, -1e+30
  %v2853 = vsel %vm1259, %v2835, -1e+30
  %v2854 = vsel %vm1260, %v2837, -1e+30
  %v2855 = vmax.f32 %v2839, %v2840
  %2856 = vmax.xlane.f32.xlu0 %v2855
  %v2857 = vpop.xlane.xlu0 %2856
  %v2858 = vmax.f32 %v2841, %v2842
  %2859 = vmax.xlane.f32.xlu0 %v2858
  %v2860 = vpop.xlane.xlu0 %2859
  %v2861 = vmax.f32 %v2843, %v2844
  %2862 = vmax.xlane.f32.xlu0 %v2861
  %v2863 = vpop.xlane.xlu0 %2862
  %v2864 = vmax.f32 %v2845, %v2846
  %2865 = vmax.xlane.f32.xlu0 %v2864
  %v2866 = vpop.xlane.xlu0 %2865
  %v2867 = vmax.f32 %v2847, %v2848
  %2868 = vmax.xlane.f32.xlu0 %v2867
  %v2869 = vpop.xlane.xlu0 %2868
  %v2870 = vmax.f32 %v2849, %v2850
  %2871 = vmax.xlane.f32.xlu0 %v2870
  %v2872 = vpop.xlane.xlu0 %2871
  %v2873 = vmax.f32 %v2851, %v2852
  %2874 = vmax.xlane.f32.xlu0 %v2873
  %v2875 = vpop.xlane.xlu0 %2874
  %v2876 = vmax.f32 %v2853, %v2854
  %2877 = vmax.xlane.f32.xlu0 %v2876
  %v2878 = vpop.xlane.xlu0 %2877
  %v2879 = vsub.f32 %v2839, %v2857
  %v2880 = vsub.f32 %v2840, %v2857
  %v2881 = vsub.f32 %v2841, %v2860
  %v2882 = vsub.f32 %v2842, %v2860
  %v2883 = vsub.f32 %v2843, %v2863
  %v2884 = vsub.f32 %v2844, %v2863
  %v2885 = vsub.f32 %v2845, %v2866
  %v2886 = vsub.f32 %v2846, %v2866
  %v2887 = vsub.f32 %v2847, %v2869
  %v2888 = vsub.f32 %v2848, %v2869
  %v2889 = vsub.f32 %v2849, %v2872
  %v2890 = vsub.f32 %v2850, %v2872
  %v2891 = vsub.f32 %v2851, %v2875
  %v2892 = vsub.f32 %v2852, %v2875
  %v2893 = vsub.f32 %v2853, %v2878
  %v2894 = vsub.f32 %v2854, %v2878
  %v2895 = vmul.f32 %v2879, 1.442695
  %v2896 = vpow.pop %v2895
  %v2897 = vmul.f32 %v2880, 1.442695
  %v2898 = vpow.pop %v2897
  %v2899 = vmul.f32 %v2881, 1.442695
  %v2900 = vpow.pop %v2899
  %v2901 = vmul.f32 %v2882, 1.442695
  %v2902 = vpow.pop %v2901
  %v2903 = vmul.f32 %v2883, 1.442695
  %v2904 = vpow.pop %v2903
  %v2905 = vmul.f32 %v2884, 1.442695
  %v2906 = vpow.pop %v2905
  %v2907 = vmul.f32 %v2885, 1.442695
  %v2908 = vpow.pop %v2907
  %v2909 = vmul.f32 %v2886, 1.442695
  %v2910 = vpow.pop %v2909
  %v2911 = vmul.f32 %v2887, 1.442695
  %v2912 = vpow.pop %v2911
  %v2913 = vmul.f32 %v2888, 1.442695
  %v2914 = vpow.pop %v2913
  %v2915 = vmul.f32 %v2889, 1.442695
  %v2916 = vpow.pop %v2915
  %v2917 = vmul.f32 %v2890, 1.442695
  %v2918 = vpow.pop %v2917
  %v2919 = vmul.f32 %v2891, 1.442695
  %v2920 = vpow.pop %v2919
  %v2921 = vmul.f32 %v2892, 1.442695
  %v2922 = vpow.pop %v2921
  %v2923 = vmul.f32 %v2893, 1.442695
  %v2924 = vpow.pop %v2923
  %v2925 = vmul.f32 %v2894, 1.442695
  %v2926 = vpow.pop %v2925
  %v2927 = vadd.f32 %v2896, %v2898
  %2928 = vadd.xlane.f32.xlu0 %v2927
  %v2929 = vpop.xlane.xlu0 %2928
  %v2930 = vadd.f32 %v2900, %v2902
  %2931 = vadd.xlane.f32.xlu0 %v2930
  %v2932 = vpop.xlane.xlu0 %2931
  %v2933 = vadd.f32 %v2904, %v2906
  %2934 = vadd.xlane.f32.xlu0 %v2933
  %v2935 = vpop.xlane.xlu0 %2934
  %v2936 = vadd.f32 %v2908, %v2910
  %2937 = vadd.xlane.f32.xlu0 %v2936
  %v2938 = vpop.xlane.xlu0 %2937
  %v2939 = vadd.f32 %v2912, %v2914
  %2940 = vadd.xlane.f32.xlu0 %v2939
  %v2941 = vpop.xlane.xlu0 %2940
  %v2942 = vadd.f32 %v2916, %v2918
  %2943 = vadd.xlane.f32.xlu0 %v2942
  %v2944 = vpop.xlane.xlu0 %2943
  %v2945 = vadd.f32 %v2920, %v2922
  %2946 = vadd.xlane.f32.xlu0 %v2945
  %v2947 = vpop.xlane.xlu0 %2946
  %v2948 = vadd.f32 %v2924, %v2926
  %2949 = vadd.xlane.f32.xlu0 %v2948
  %v2950 = vpop.xlane.xlu0 %2949
  %v2951 = vrcp.pop %v2929
  %v2952 = vmul.f32 %v2896, %v2951
  %v2953 = vmul.f32 %v2898, %v2951
  %v2954 = vrcp.pop %v2932
  %v2955 = vmul.f32 %v2900, %v2954
  %v2956 = vmul.f32 %v2902, %v2954
  %v2957 = vrcp.pop %v2935
  %v2958 = vmul.f32 %v2904, %v2957
  %v2959 = vmul.f32 %v2906, %v2957
  %v2960 = vrcp.pop %v2938
  %v2961 = vmul.f32 %v2908, %v2960
  %v2962 = vmul.f32 %v2910, %v2960
  %v2963 = vrcp.pop %v2941
  %v2964 = vmul.f32 %v2912, %v2963
  %v2965 = vmul.f32 %v2914, %v2963
  %v2966 = vrcp.pop %v2944
  %v2967 = vmul.f32 %v2916, %v2966
  %v2968 = vmul.f32 %v2918, %v2966
  %v2969 = vrcp.pop %v2947
  %v2970 = vmul.f32 %v2920, %v2969
  %v2971 = vmul.f32 %v2922, %v2969
  %v2972 = vrcp.pop %v2950
  %v2973 = vmul.f32 %v2924, %v2972
  %v2974 = vmul.f32 %v2926, %v2972
  %v2976 = vsel %vm897, %v173, 0
  %2978 = vmatprep.subr.mxu0 %v2953
  %2979 = vmatpush1.msra.mxu0 %v2952
  %2980 = vmatprep.subr.mxu0 %v2956
  %2981 = vmatpush1.msra.mxu0 %v2955
  %2982 = vmatprep.subr.mxu0 %v2959
  %2983 = vmatpush1.msra.mxu0 %v2958
  %2984 = vmatprep.subr.mxu0 %v2962
  %2985 = vmatpush1.msra.mxu0 %v2961
  %2986 = vmatprep.subr.mxu0 %v2965
  %2987 = vmatpush1.msra.mxu0 %v2964
  %2988 = vmatprep.subr.mxu0 %v2968
  %2989 = vmatpush1.msra.mxu0 %v2967
  %2990 = vmatprep.subr.mxu0 %v2971
  %2991 = vmatpush1.msra.mxu0 %v2970
  %2992 = vmatprep.subr.mxu0 %v2974
  %2993 = vmatpush1.msra.mxu0 %v2973
  %2994 = vmatprep.subr.mxu0 0.0
  %2995 = vmatpush1.msra.mxu0 0.0
  %2996 = vmatprep.subr.mxu0 0.0
  %2997 = vmatpush1.msra.mxu0 0.0
  %2998 = vmatprep.subr.mxu0 0.0
  %2999 = vmatpush1.msra.mxu0 0.0
  %3000 = vmatprep.subr.mxu0 0.0
  %3001 = vmatpush1.msra.mxu0 0.0
  %3002 = vmatprep.subr.mxu0 0.0
  %3003 = vmatpush1.msra.mxu0 0.0
  %3004 = vmatprep.subr.mxu0 0.0
  %3005 = vmatpush1.msra.mxu0 0.0
  %3006 = vmatprep.subr.mxu0 0.0
  %3007 = vmatpush1.msra.mxu0 0.0
  %3008 = vmatprep.subr.mxu0 0.0
  %3009 = vmatpush1.msra.mxu0 0.0
  %3010 = vmatprep.subr.mxu0 0.0
  %3011 = vmatpush1.msra.mxu0 0.0
  %3012 = vmatprep.subr.mxu0 0.0
  %3013 = vmatpush1.msra.mxu0 0.0
  %3014 = vmatprep.subr.mxu0 0.0
  %3015 = vmatpush1.msra.mxu0 0.0
  %3016 = vmatprep.subr.mxu0 0.0
  %3017 = vmatpush1.msra.mxu0 0.0
  %3018 = vmatprep.subr.mxu0 0.0
  %3019 = vmatpush1.msra.mxu0 0.0
  %3020 = vmatprep.subr.mxu0 0.0
  %3021 = vmatpush1.msra.mxu0 0.0
  %3022 = vmatprep.subr.mxu0 0.0
  %3023 = vmatpush1.msra.mxu0 0.0
  %3024 = vmatprep.subr.mxu0 0.0
  %3025 = vmatpush1.msra.mxu0 0.0
  %3026 = vmatprep.subr.mxu0 0.0
  %3027 = vmatpush1.msra.mxu0 0.0
  %3028 = vmatprep.subr.mxu0 0.0
  %3029 = vmatpush1.msra.mxu0 0.0
  %3030 = vmatprep.subr.mxu0 0.0
  %3031 = vmatpush1.msra.mxu0 0.0
  %3032 = vmatprep.subr.mxu0 0.0
  %3033 = vmatpush1.msra.mxu0 0.0
  %3034 = vmatprep.subr.mxu0 0.0
  %3035 = vmatpush1.msra.mxu0 0.0
  %3036 = vmatprep.subr.mxu0 0.0
  %3037 = vmatpush1.msra.mxu0 0.0
  %3038 = vmatprep.subr.mxu0 0.0
  %3039 = vmatpush1.msra.mxu0 0.0
  %3040 = vmatprep.subr.mxu0 0.0
  %3041 = vmatpush1.msra.mxu0 0.0
  %3042 = vmatprep.mubr.f32.mxu0 0.0
  %3043 = vmatmul.mubr.f32.gmra.mrb[0].mxu0 %v2976
  %v3044 = vpop.f32.mrb[0].mxu0
  %v3045 = vadd.f32 0.0, %v3044
  %v3046 = vpop.f32.mrb[0].mxu0
  %v3047 = vadd.f32 0.0, %v3046
  %3048 = vdwg.mxu0
  %v3049 = vadd.f32 %v2666, %v3045
  %v3050 = vadd.f32 %v2668, %v3047
  %3052 = vrot.lane.b32.xlu0 %v161, 64
  %v3053 = vpop.permute.xlu0 %3052
  %3055 = vxpose.xlu0.b32.start [1/16] %v3053, 128
  %3056 = vxpose.xlu0.b32.cont [2/16] 0.0, 128
  %3057 = vxpose.xlu0.b32.cont [3/16] 0.0, 128
  %3058 = vxpose.xlu0.b32.cont [4/16] 0.0, 128
  %3059 = vxpose.xlu0.b32.cont [5/16] 0.0, 128
  %3060 = vxpose.xlu0.b32.cont [6/16] 0.0, 128
  %3061 = vxpose.xlu0.b32.cont [7/16] 0.0, 128
  %3062 = vxpose.xlu0.b32.cont [8/16] 0.0, 128
  %3063 = vxpose.xlu0.b32.cont [9/16] 0.0, 128
  %3064 = vxpose.xlu0.b32.cont [10/16] 0.0, 128
  %3065 = vxpose.xlu0.b32.cont [11/16] 0.0, 128
  %3066 = vxpose.xlu0.b32.cont [12/16] 0.0, 128
  %3067 = vxpose.xlu0.b32.cont [13/16] 0.0, 128
  %3068 = vxpose.xlu0.b32.cont [14/16] 0.0, 128
  %3069 = vxpose.xlu0.b32.cont [15/16] 0.0, 128
  %3070 = vxpose.xlu0.b32.end [16/16] 0.0, 128
  %v3071 = vpop.trf.xlu0
  %v3072 = vpop.trf.xlu0
  %v3073 = vpop.trf.xlu0
  %v3074 = vpop.trf.xlu0
  %v3075 = vpop.trf.xlu0
  %v3076 = vpop.trf.xlu0
  %v3077 = vpop.trf.xlu0
  %v3078 = vpop.trf.xlu0
  %v3079 = vpop.trf.xlu0
  %v3080 = vpop.trf.xlu0
  %v3081 = vpop.trf.xlu0
  %v3082 = vpop.trf.xlu0
  %v3083 = vpop.trf.xlu0
  %v3084 = vpop.trf.xlu0
  %v3085 = vpop.trf.xlu0
  %v3086 = vpop.trf.xlu0
  %v3088 = vsel %vm207, %v3071, 0
  %v3091 = vsel %vm207, %v3072, 0
  %v3094 = vsel %vm207, %v3073, 0
  %v3097 = vsel %vm207, %v3074, 0
  %v3100 = vsel %vm207, %v3075, 0
  %v3103 = vsel %vm207, %v3076, 0
  %v3106 = vsel %vm207, %v3077, 0
  %v3109 = vsel %vm207, %v3078, 0
  %3111 = vmatprep.subr.mxu0 %v149
  %3112 = vmatpush1.msra.mxu0 %v147
  %3113 = vmatprep.subr.mxu0 0.0
  %3114 = vmatpush1.msra.mxu0 0.0
  %3115 = vmatprep.subr.mxu0 0.0
  %3116 = vmatpush1.msra.mxu0 0.0
  %3117 = vmatprep.subr.mxu0 0.0
  %3118 = vmatpush1.msra.mxu0 0.0
  %3119 = vmatprep.subr.mxu0 0.0
  %3120 = vmatpush1.msra.mxu0 0.0
  %3121 = vmatprep.subr.mxu0 0.0
  %3122 = vmatpush1.msra.mxu0 0.0
  %3123 = vmatprep.subr.mxu0 0.0
  %3124 = vmatpush1.msra.mxu0 0.0
  %3125 = vmatprep.subr.mxu0 0.0
  %3126 = vmatpush1.msra.mxu0 0.0
  %3127 = vmatprep.subr.mxu0 0.0
  %3128 = vmatpush1.msra.mxu0 0.0
  %3129 = vmatprep.subr.mxu0 0.0
  %3130 = vmatpush1.msra.mxu0 0.0
  %3131 = vmatprep.subr.mxu0 0.0
  %3132 = vmatpush1.msra.mxu0 0.0
  %3133 = vmatprep.subr.mxu0 0.0
  %3134 = vmatpush1.msra.mxu0 0.0
  %3135 = vmatprep.subr.mxu0 0.0
  %3136 = vmatpush1.msra.mxu0 0.0
  %3137 = vmatprep.subr.mxu0 0.0
  %3138 = vmatpush1.msra.mxu0 0.0
  %3139 = vmatprep.subr.mxu0 0.0
  %3140 = vmatpush1.msra.mxu0 0.0
  %3141 = vmatprep.subr.mxu0 0.0
  %3142 = vmatpush1.msra.mxu0 0.0
  %3143 = vmatprep.subr.mxu0 0.0
  %3144 = vmatpush1.msra.mxu0 0.0
  %3145 = vmatprep.subr.mxu0 0.0
  %3146 = vmatpush1.msra.mxu0 0.0
  %3147 = vmatprep.subr.mxu0 0.0
  %3148 = vmatpush1.msra.mxu0 0.0
  %3149 = vmatprep.subr.mxu0 0.0
  %3150 = vmatpush1.msra.mxu0 0.0
  %3151 = vmatprep.subr.mxu0 0.0
  %3152 = vmatpush1.msra.mxu0 0.0
  %3153 = vmatprep.subr.mxu0 0.0
  %3154 = vmatpush1.msra.mxu0 0.0
  %3155 = vmatprep.subr.mxu0 0.0
  %3156 = vmatpush1.msra.mxu0 0.0
  %3157 = vmatprep.subr.mxu0 0.0
  %3158 = vmatpush1.msra.mxu0 0.0
  %3159 = vmatprep.subr.mxu0 0.0
  %3160 = vmatpush1.msra.mxu0 0.0
  %3161 = vmatprep.subr.mxu0 0.0
  %3162 = vmatpush1.msra.mxu0 0.0
  %3163 = vmatprep.subr.mxu0 0.0
  %3164 = vmatpush1.msra.mxu0 0.0
  %3165 = vmatprep.subr.mxu0 0.0
  %3166 = vmatpush1.msra.mxu0 0.0
  %3167 = vmatprep.subr.mxu0 0.0
  %3168 = vmatpush1.msra.mxu0 0.0
  %3169 = vmatprep.subr.mxu0 0.0
  %3170 = vmatpush1.msra.mxu0 0.0
  %3171 = vmatprep.subr.mxu0 0.0
  %3172 = vmatpush1.msra.mxu0 0.0
  %3173 = vmatprep.subr.mxu0 0.0
  %3174 = vmatpush1.msra.mxu0 0.0
  %3175 = vmatprep.mubr.f32.mxu0 0.0
  %3176 = vmatmul.mubr.f32.gmra.mrb[0].mxu0 %v3088
  %v3177 = vpop.f32.mrb[0].mxu0
  %v3178 = vadd.f32 0.0, %v3177
  %v3179 = vpop.f32.mrb[0].mxu0
  %v3180 = vadd.f32 0.0, %v3179
  %3181 = vmatprep.mubr.f32.mxu0 0.0
  %3182 = vmatmul.mubr.f32.gmra.mrb[0].mxu0 %v3091
  %v3183 = vpop.f32.mrb[0].mxu0
  %v3184 = vadd.f32 0.0, %v3183
  %v3185 = vpop.f32.mrb[0].mxu0
  %v3186 = vadd.f32 0.0, %v3185
  %3187 = vmatprep.mubr.f32.mxu0 0.0
  %3188 = vmatmul.mubr.f32.gmra.mrb[0].mxu0 %v3094
  %v3189 = vpop.f32.mrb[0].mxu0
  %v3190 = vadd.f32 0.0, %v3189
  %v3191 = vpop.f32.mrb[0].mxu0
  %v3192 = vadd.f32 0.0, %v3191
  %3193 = vmatprep.mubr.f32.mxu0 0.0
  %3194 = vmatmul.mubr.f32.gmra.mrb[0].mxu0 %v3097
  %v3195 = vpop.f32.mrb[0].mxu0
  %v3196 = vadd.f32 0.0, %v3195
  %v3197 = vpop.f32.mrb[0].mxu0
  %v3198 = vadd.f32 0.0, %v3197
  %3199 = vmatprep.mubr.f32.mxu0 0.0
  %3200 = vmatmul.mubr.f32.gmra.mrb[0].mxu0 %v3100
  %v3201 = vpop.f32.mrb[0].mxu0
  %v3202 = vadd.f32 0.0, %v3201
  %v3203 = vpop.f32.mrb[0].mxu0
  %v3204 = vadd.f32 0.0, %v3203
  %3205 = vmatprep.mubr.f32.mxu0 0.0
  %3206 = vmatmul.mubr.f32.gmra.mrb[0].mxu0 %v3103
  %v3207 = vpop.f32.mrb[0].mxu0
  %v3208 = vadd.f32 0.0, %v3207
  %v3209 = vpop.f32.mrb[0].mxu0
  %v3210 = vadd.f32 0.0, %v3209
  %3211 = vmatprep.mubr.f32.mxu0 0.0
  %3212 = vmatmul.mubr.f32.gmra.mrb[0].mxu0 %v3106
  %v3213 = vpop.f32.mrb[0].mxu0
  %v3214 = vadd.f32 0.0, %v3213
  %v3215 = vpop.f32.mrb[0].mxu0
  %v3216 = vadd.f32 0.0, %v3215
  %3217 = vmatprep.mubr.f32.mxu0 0.0
  %3218 = vmatmul.mubr.f32.gmra.mrb[0].mxu0 %v3109
  %v3219 = vpop.f32.mrb[0].mxu0
  %v3220 = vadd.f32 0.0, %v3219
  %v3221 = vpop.f32.mrb[0].mxu0
  %v3222 = vadd.f32 0.0, %v3221
  %3223 = vdwg.mxu0
  %v3224 = vsel %vm1678, %v3178, -1e+30
  %v3225 = vsel %vm1679, %v3180, -1e+30
  %v3226 = vsel %vm1680, %v3184, -1e+30
  %v3227 = vsel %vm1681, %v3186, -1e+30
  %v3228 = vsel %vm1682, %v3190, -1e+30
  %v3229 = vsel %vm1683, %v3192, -1e+30
  %v3230 = vsel %vm1684, %v3196, -1e+30
  %v3231 = vsel %vm1685, %v3198, -1e+30
  %v3232 = vsel %vm1686, %v3202, -1e+30
  %v3233 = vsel %vm1687, %v3204, -1e+30
  %v3234 = vsel %vm1688, %v3208, -1e+30
  %v3235 = vsel %vm1689, %v3210, -1e+30
  %v3236 = vsel %vm1690, %v3214, -1e+30
  %v3237 = vsel %vm1691, %v3216, -1e+30
  %v3238 = vsel %vm1692, %v3220, -1e+30
  %v3239 = vsel %vm1693, %v3222, -1e+30
  %v3240 = vmax.f32 %v3224, %v3225
  %3241 = vmax.xlane.f32.xlu0 %v3240
  %v3242 = vpop.xlane.xlu0 %3241
  %v3243 = vmax.f32 %v3226, %v3227
  %3244 = vmax.xlane.f32.xlu0 %v3243
  %v3245 = vpop.xlane.xlu0 %3244
  %v3246 = vmax.f32 %v3228, %v3229
  %3247 = vmax.xlane.f32.xlu0 %v3246
  %v3248 = vpop.xlane.xlu0 %3247
  %v3249 = vmax.f32 %v3230, %v3231
  %3250 = vmax.xlane.f32.xlu0 %v3249
  %v3251 = vpop.xlane.xlu0 %3250
  %v3252 = vmax.f32 %v3232, %v3233
  %3253 = vmax.xlane.f32.xlu0 %v3252
  %v3254 = vpop.xlane.xlu0 %3253
  %v3255 = vmax.f32 %v3234, %v3235
  %3256 = vmax.xlane.f32.xlu0 %v3255
  %v3257 = vpop.xlane.xlu0 %3256
  %v3258 = vmax.f32 %v3236, %v3237
  %3259 = vmax.xlane.f32.xlu0 %v3258
  %v3260 = vpop.xlane.xlu0 %3259
  %v3261 = vmax.f32 %v3238, %v3239
  %3262 = vmax.xlane.f32.xlu0 %v3261
  %v3263 = vpop.xlane.xlu0 %3262
  %v3264 = vsub.f32 %v3224, %v3242
  %v3265 = vsub.f32 %v3225, %v3242
  %v3266 = vsub.f32 %v3226, %v3245
  %v3267 = vsub.f32 %v3227, %v3245
  %v3268 = vsub.f32 %v3228, %v3248
  %v3269 = vsub.f32 %v3229, %v3248
  %v3270 = vsub.f32 %v3230, %v3251
  %v3271 = vsub.f32 %v3231, %v3251
  %v3272 = vsub.f32 %v3232, %v3254
  %v3273 = vsub.f32 %v3233, %v3254
  %v3274 = vsub.f32 %v3234, %v3257
  %v3275 = vsub.f32 %v3235, %v3257
  %v3276 = vsub.f32 %v3236, %v3260
  %v3277 = vsub.f32 %v3237, %v3260
  %v3278 = vsub.f32 %v3238, %v3263
  %v3279 = vsub.f32 %v3239, %v3263
  %v3280 = vmul.f32 %v3264, 1.442695
  %v3281 = vpow.pop %v3280
  %v3282 = vmul.f32 %v3265, 1.442695
  %v3283 = vpow.pop %v3282
  %v3284 = vmul.f32 %v3266, 1.442695
  %v3285 = vpow.pop %v3284
  %v3286 = vmul.f32 %v3267, 1.442695
  %v3287 = vpow.pop %v3286
  %v3288 = vmul.f32 %v3268, 1.442695
  %v3289 = vpow.pop %v3288
  %v3290 = vmul.f32 %v3269, 1.442695
  %v3291 = vpow.pop %v3290
  %v3292 = vmul.f32 %v3270, 1.442695
  %v3293 = vpow.pop %v3292
  %v3294 = vmul.f32 %v3271, 1.442695
  %v3295 = vpow.pop %v3294
  %v3296 = vmul.f32 %v3272, 1.442695
  %v3297 = vpow.pop %v3296
  %v3298 = vmul.f32 %v3273, 1.442695
  %v3299 = vpow.pop %v3298
  %v3300 = vmul.f32 %v3274, 1.442695
  %v3301 = vpow.pop %v3300
  %v3302 = vmul.f32 %v3275, 1.442695
  %v3303 = vpow.pop %v3302
  %v3304 = vmul.f32 %v3276, 1.442695
  %v3305 = vpow.pop %v3304
  %v3306 = vmul.f32 %v3277, 1.442695
  %v3307 = vpow.pop %v3306
  %v3308 = vmul.f32 %v3278, 1.442695
  %v3309 = vpow.pop %v3308
  %v3310 = vmul.f32 %v3279, 1.442695
  %v3311 = vpow.pop %v3310
  %v3312 = vadd.f32 %v3281, %v3283
  %3313 = vadd.xlane.f32.xlu0 %v3312
  %v3314 = vpop.xlane.xlu0 %3313
  %v3315 = vadd.f32 %v3285, %v3287
  %3316 = vadd.xlane.f32.xlu0 %v3315
  %v3317 = vpop.xlane.xlu0 %3316
  %v3318 = vadd.f32 %v3289, %v3291
  %3319 = vadd.xlane.f32.xlu0 %v3318
  %v3320 = vpop.xlane.xlu0 %3319
  %v3321 = vadd.f32 %v3293, %v3295
  %3322 = vadd.xlane.f32.xlu0 %v3321
  %v3323 = vpop.xlane.xlu0 %3322
  %v3324 = vadd.f32 %v3297, %v3299
  %3325 = vadd.xlane.f32.xlu0 %v3324
  %v3326 = vpop.xlane.xlu0 %3325
  %v3327 = vadd.f32 %v3301, %v3303
  %3328 = vadd.xlane.f32.xlu0 %v3327
  %v3329 = vpop.xlane.xlu0 %3328
  %v3330 = vadd.f32 %v3305, %v3307
  %3331 = vadd.xlane.f32.xlu0 %v3330
  %v3332 = vpop.xlane.xlu0 %3331
  %v3333 = vadd.f32 %v3309, %v3311
  %3334 = vadd.xlane.f32.xlu0 %v3333
  %v3335 = vpop.xlane.xlu0 %3334
  %v3336 = vrcp.pop %v3314
  %v3337 = vmul.f32 %v3281, %v3336
  %v3338 = vmul.f32 %v3283, %v3336
  %v3339 = vrcp.pop %v3317
  %v3340 = vmul.f32 %v3285, %v3339
  %v3341 = vmul.f32 %v3287, %v3339
  %v3342 = vrcp.pop %v3320
  %v3343 = vmul.f32 %v3289, %v3342
  %v3344 = vmul.f32 %v3291, %v3342
  %v3345 = vrcp.pop %v3323
  %v3346 = vmul.f32 %v3293, %v3345
  %v3347 = vmul.f32 %v3295, %v3345
  %v3348 = vrcp.pop %v3326
  %v3349 = vmul.f32 %v3297, %v3348
  %v3350 = vmul.f32 %v3299, %v3348
  %v3351 = vrcp.pop %v3329
  %v3352 = vmul.f32 %v3301, %v3351
  %v3353 = vmul.f32 %v3303, %v3351
  %v3354 = vrcp.pop %v3332
  %v3355 = vmul.f32 %v3305, %v3354
  %v3356 = vmul.f32 %v3307, %v3354
  %v3357 = vrcp.pop %v3335
  %v3358 = vmul.f32 %v3309, %v3357
  %v3359 = vmul.f32 %v3311, %v3357
  %3360 = vrot.lane.b32.xlu0 %v173, 64
  %v3361 = vpop.permute.xlu0 %3360
  %v3362 = vsel %vm897, %v3361, 0
  %3364 = vmatprep.subr.mxu0 %v3338
  %3365 = vmatpush1.msra.mxu0 %v3337
  %3366 = vmatprep.subr.mxu0 %v3341
  %3367 = vmatpush1.msra.mxu0 %v3340
  %3368 = vmatprep.subr.mxu0 %v3344
  %3369 = vmatpush1.msra.mxu0 %v3343
  %3370 = vmatprep.subr.mxu0 %v3347
  %3371 = vmatpush1.msra.mxu0 %v3346
  %3372 = vmatprep.subr.mxu0 %v3350
  %3373 = vmatpush1.msra.mxu0 %v3349
  %3374 = vmatprep.subr.mxu0 %v3353
  %3375 = vmatpush1.msra.mxu0 %v3352
  %3376 = vmatprep.subr.mxu0 %v3356
  %3377 = vmatpush1.msra.mxu0 %v3355
  %3378 = vmatprep.subr.mxu0 %v3359
  %3379 = vmatpush1.msra.mxu0 %v3358
  %3380 = vmatprep.subr.mxu0 0.0
  %3381 = vmatpush1.msra.mxu0 0.0
  %3382 = vmatprep.subr.mxu0 0.0
  %3383 = vmatpush1.msra.mxu0 0.0
  %3384 = vmatprep.subr.mxu0 0.0
  %3385 = vmatpush1.msra.mxu0 0.0
  %3386 = vmatprep.subr.mxu0 0.0
  %3387 = vmatpush1.msra.mxu0 0.0
  %3388 = vmatprep.subr.mxu0 0.0
  %3389 = vmatpush1.msra.mxu0 0.0
  %3390 = vmatprep.subr.mxu0 0.0
  %3391 = vmatpush1.msra.mxu0 0.0
  %3392 = vmatprep.subr.mxu0 0.0
  %3393 = vmatpush1.msra.mxu0 0.0
  %3394 = vmatprep.subr.mxu0 0.0
  %3395 = vmatpush1.msra.mxu0 0.0
  %3396 = vmatprep.subr.mxu0 0.0
  %3397 = vmatpush1.msra.mxu0 0.0
  %3398 = vmatprep.subr.mxu0 0.0
  %3399 = vmatpush1.msra.mxu0 0.0
  %3400 = vmatprep.subr.mxu0 0.0
  %3401 = vmatpush1.msra.mxu0 0.0
  %3402 = vmatprep.subr.mxu0 0.0
  %3403 = vmatpush1.msra.mxu0 0.0
  %3404 = vmatprep.subr.mxu0 0.0
  %3405 = vmatpush1.msra.mxu0 0.0
  %3406 = vmatprep.subr.mxu0 0.0
  %3407 = vmatpush1.msra.mxu0 0.0
  %3408 = vmatprep.subr.mxu0 0.0
  %3409 = vmatpush1.msra.mxu0 0.0
  %3410 = vmatprep.subr.mxu0 0.0
  %3411 = vmatpush1.msra.mxu0 0.0
  %3412 = vmatprep.subr.mxu0 0.0
  %3413 = vmatpush1.msra.mxu0 0.0
  %3414 = vmatprep.subr.mxu0 0.0
  %3415 = vmatpush1.msra.mxu0 0.0
  %3416 = vmatprep.subr.mxu0 0.0
  %3417 = vmatpush1.msra.mxu0 0.0
  %3418 = vmatprep.subr.mxu0 0.0
  %3419 = vmatpush1.msra.mxu0 0.0
  %3420 = vmatprep.subr.mxu0 0.0
  %3421 = vmatpush1.msra.mxu0 0.0
  %3422 = vmatprep.subr.mxu0 0.0
  %3423 = vmatpush1.msra.mxu0 0.0
  %3424 = vmatprep.subr.mxu0 0.0
  %3425 = vmatpush1.msra.mxu0 0.0
  %3426 = vmatprep.subr.mxu0 0.0
  %3427 = vmatpush1.msra.mxu0 0.0
  %3428 = vmatprep.mubr.f32.mxu0 0.0
  %3429 = vmatmul.mubr.f32.gmra.mrb[0].mxu0 %v3362
  %v3430 = vpop.f32.mrb[0].mxu0
  %v3431 = vadd.f32 0.0, %v3430
  %v3432 = vpop.f32.mrb[0].mxu0
  %v3433 = vadd.f32 0.0, %v3432
  %3434 = vdwg.mxu0
  %v3435 = vadd.f32 %v3049, %v3431
  %v3436 = vadd.f32 %v3050, %v3433
  %v3437 = vld [vmem:[%s5] sm:$0xff]
  %v3438 = vld [vmem:[%s5 + $0x8] sm:$0xff]
  %v3439 = vld [vmem:[%s6] sm:$0xff]
  %v3440 = vld [vmem:[%s6 + $0x8] sm:$0xff]
  %3442 = vset.pattern.permute.xlu0 0
  %3443 = vperm.xlu0 %3442, %v3439
  %v3444 = vpop.permute.xlu0 %3443
  %3447 = vset.pattern.permute.xlu0 0
  %3448 = vperm.xlu0 %3447, %v3440
  %v3449 = vpop.permute.xlu0 %3448
  %v3452 = vsel %vm55, %v3437, 0
  %v3455 = vsel %vm55, %v3438, 0
  %3457 = vmatprep.subr.mxu0 %v1906
  %3458 = vmatpush1.msra.mxu0 %v1905
  %3459 = vmatprep.subr.mxu0 %v3436
  %3460 = vmatpush1.msra.mxu0 %v3435
  %3461 = vmatprep.subr.mxu0 0.0
  %3462 = vmatpush1.msra.mxu0 0.0
  %3463 = vmatprep.subr.mxu0 0.0
  %3464 = vmatpush1.msra.mxu0 0.0
  %3465 = vmatprep.subr.mxu0 0.0
  %3466 = vmatpush1.msra.mxu0 0.0
  %3467 = vmatprep.subr.mxu0 0.0
  %3468 = vmatpush1.msra.mxu0 0.0
  %3469 = vmatprep.subr.mxu0 0.0
  %3470 = vmatpush1.msra.mxu0 0.0
  %3471 = vmatprep.subr.mxu0 0.0
  %3472 = vmatpush1.msra.mxu0 0.0
  %3473 = vmatprep.subr.mxu0 0.0
  %3474 = vmatpush1.msra.mxu0 0.0
  %3475 = vmatprep.subr.mxu0 0.0
  %3476 = vmatpush1.msra.mxu0 0.0
  %3477 = vmatprep.subr.mxu0 0.0
  %3478 = vmatpush1.msra.mxu0 0.0
  %3479 = vmatprep.subr.mxu0 0.0
  %3480 = vmatpush1.msra.mxu0 0.0
  %3481 = vmatprep.subr.mxu0 0.0
  %3482 = vmatpush1.msra.mxu0 0.0
  %3483 = vmatprep.subr.mxu0 0.0
  %3484 = vmatpush1.msra.mxu0 0.0
  %3485 = vmatprep.subr.mxu0 0.0
  %3486 = vmatpush1.msra.mxu0 0.0
  %3487 = vmatprep.subr.mxu0 0.0
  %3488 = vmatpush1.msra.mxu0 0.0
  %3489 = vmatprep.subr.mxu0 0.0
  %3490 = vmatpush1.msra.mxu0 0.0
  %3491 = vmatprep.subr.mxu0 0.0
  %3492 = vmatpush1.msra.mxu0 0.0
  %3493 = vmatprep.subr.mxu0 0.0
  %3494 = vmatpush1.msra.mxu0 0.0
  %3495 = vmatprep.subr.mxu0 0.0
  %3496 = vmatpush1.msra.mxu0 0.0
  %3497 = vmatprep.subr.mxu0 0.0
  %3498 = vmatpush1.msra.mxu0 0.0
  %3499 = vmatprep.subr.mxu0 0.0
  %3500 = vmatpush1.msra.mxu0 0.0
  %3501 = vmatprep.subr.mxu0 0.0
  %3502 = vmatpush1.msra.mxu0 0.0
  %3503 = vmatprep.subr.mxu0 0.0
  %3504 = vmatpush1.msra.mxu0 0.0
  %3505 = vmatprep.subr.mxu0 0.0
  %3506 = vmatpush1.msra.mxu0 0.0
  %3507 = vmatprep.subr.mxu0 0.0
  %3508 = vmatpush1.msra.mxu0 0.0
  %3509 = vmatprep.subr.mxu0 0.0
  %3510 = vmatpush1.msra.mxu0 0.0
  %3511 = vmatprep.subr.mxu0 0.0
  %3512 = vmatpush1.msra.mxu0 0.0
  %3513 = vmatprep.subr.mxu0 0.0
  %3514 = vmatpush1.msra.mxu0 0.0
  %3515 = vmatprep.subr.mxu0 0.0
  %3516 = vmatpush1.msra.mxu0 0.0
  %3517 = vmatprep.subr.mxu0 0.0
  %3518 = vmatpush1.msra.mxu0 0.0
  %3519 = vmatprep.subr.mxu0 0.0
  %3520 = vmatpush1.msra.mxu0 0.0
  %3521 = vmatprep.mubr.f32.mxu0 0.0
  %3522 = vmatmul.mubr.f32.gmra.mrb[0].mxu0 %v3452
  %v3523 = vpop.f32.mrb[0].mxu0
  %v3524 = vadd.f32 %v3444, %v3523
  %v3525 = vpop.f32.mrb[0].mxu0
  %v3526 = vadd.f32 %v3444, %v3525
  %3527 = vmatprep.mubr.f32.mxu0 0.0
  %3528 = vmatmul.mubr.f32.gmra.mrb[0].mxu0 %v3455
  %v3529 = vpop.f32.mrb[0].mxu0
  %v3530 = vadd.f32 %v3449, %v3529
  %v3531 = vpop.f32.mrb[0].mxu0
  %v3532 = vadd.f32 %v3449, %v3531
  %3533 = vdwg.mxu0
  %v3534 = vmax.f32 %v3524, 0.0
  %v3535 = vmax.f32 %v3526, 0.0
  %v3536 = vmax.f32 %v3530, 0.0
  %v3537 = vmax.f32 %v3532, 0.0
  %v3538 = vand.u32 2147483647, %v3524
  %v3539 = vand.u32 2147483647, %v3526
  %v3540 = vand.u32 2147483647, %v3530
  %v3541 = vand.u32 2147483647, %v3532
  %v3542 = vsub.f32 0.0, %v3538
  %v3543 = vsub.f32 0.0, %v3539
  %v3544 = vsub.f32 0.0, %v3540
  %v3545 = vsub.f32 0.0, %v3541
  %v3546 = vmul.f32 %v3542, 1.442695
  %v3547 = vpow.pop %v3546
  %v3548 = vmul.f32 %v3543, 1.442695
  %v3549 = vpow.pop %v3548
  %v3550 = vmul.f32 %v3544, 1.442695
  %v3551 = vpow.pop %v3550
  %v3552 = vmul.f32 %v3545, 1.442695
  %v3553 = vpow.pop %v3552
  %v3554 = vadd.f32 %v3547, 1.0
  %v3555 = vlog2.pop %v3554
  %v3556 = vmul.f32 %v3555, 0.6931472
  %v3557 = vmul.f32 -0.5, %v3547
  %v3558 = vadd.f32 %v3557, 1.0
  %v3559 = vmul.f32 %v3558, %v3547
  %v3560 = vand.u32 2147483647, %v3547
  %vm3561 = vcmp.lt.f32.partialorder %v3560, 0.0004427343
  %v3562 = vsel %vm3561, %v3559, %v3556
  %v3563 = vadd.f32 %v3549, 1.0
  %v3564 = vlog2.pop %v3563
  %v3565 = vmul.f32 %v3564, 0.6931472
  %v3566 = vmul.f32 -0.5, %v3549
  %v3567 = vadd.f32 %v3566, 1.0
  %v3568 = vmul.f32 %v3567, %v3549
  %v3569 = vand.u32 2147483647, %v3549
  %vm3570 = vcmp.lt.f32.partialorder %v3569, 0.0004427343
  %v3571 = vsel %vm3570, %v3568, %v3565
  %v3572 = vadd.f32 %v3551, 1.0
  %v3573 = vlog2.pop %v3572
  %v3574 = vmul.f32 %v3573, 0.6931472
  %v3575 = vmul.f32 -0.5, %v3551
  %v3576 = vadd.f32 %v3575, 1.0
  %v3577 = vmul.f32 %v3576, %v3551
  %v3578 = vand.u32 2147483647, %v3551
  %vm3579 = vcmp.lt.f32.partialorder %v3578, 0.0004427343
  %v3580 = vsel %vm3579, %v3577, %v3574
  %v3581 = vadd.f32 %v3553, 1.0
  %v3582 = vlog2.pop %v3581
  %v3583 = vmul.f32 %v3582, 0.6931472
  %v3584 = vmul.f32 -0.5, %v3553
  %v3585 = vadd.f32 %v3584, 1.0
  %v3586 = vmul.f32 %v3585, %v3553
  %v3587 = vand.u32 2147483647, %v3553
  %vm3588 = vcmp.lt.f32.partialorder %v3587, 0.0004427343
  %v3589 = vsel %vm3588, %v3586, %v3583
  %v3590 = vadd.f32 %v3534, %v3562
  %v3591 = vadd.f32 %v3535, %v3571
  %v3592 = vadd.f32 %v3536, %v3580
  %v3593 = vadd.f32 %v3537, %v3589
  %v3594 = vtanh.pop %v3590
  %v3595 = vtanh.pop %v3591
  %v3596 = vtanh.pop %v3592
  %v3597 = vtanh.pop %v3593
  %v3598 = vmul.f32 %v3524, %v3594
  %v3599 = vmul.f32 %v3526, %v3595
  %v3600 = vmul.f32 %v3530, %v3596
  %v3601 = vmul.f32 %v3532, %v3597
  %v3602 = vld [vmem:[%s7] sm:$0xff]
  %v3603 = vld [vmem:[%s7 + $0x8] sm:$0xff]
  %v3604 = vld [vmem:[%s8] sm:$0xff]
  %v3605 = vld [vmem:[%s8 + $0x8] sm:$0xff]
  %3607 = vset.pattern.permute.xlu0 0
  %3608 = vperm.xlu0 %3607, %v3604
  %v3609 = vpop.permute.xlu0 %3608
  %3612 = vset.pattern.permute.xlu0 0
  %3613 = vperm.xlu0 %3612, %v3605
  %v3614 = vpop.permute.xlu0 %3613
  %v3617 = vsel %vm55, %v3602, 0
  %v3620 = vsel %vm55, %v3603, 0
  %3622 = vmatprep.subr.mxu0 %v3599
  %3623 = vmatpush1.msra.mxu0 %v3598
  %3624 = vmatprep.subr.mxu0 %v3601
  %3625 = vmatpush1.msra.mxu0 %v3600
  %3626 = vmatprep.subr.mxu0 0.0
  %3627 = vmatpush1.msra.mxu0 0.0
  %3628 = vmatprep.subr.mxu0 0.0
  %3629 = vmatpush1.msra.mxu0 0.0
  %3630 = vmatprep.subr.mxu0 0.0
  %3631 = vmatpush1.msra.mxu0 0.0
  %3632 = vmatprep.subr.mxu0 0.0
  %3633 = vmatpush1.msra.mxu0 0.0
  %3634 = vmatprep.subr.mxu0 0.0
  %3635 = vmatpush1.msra.mxu0 0.0
  %3636 = vmatprep.subr.mxu0 0.0
  %3637 = vmatpush1.msra.mxu0 0.0
  %3638 = vmatprep.subr.mxu0 0.0
  %3639 = vmatpush1.msra.mxu0 0.0
  %3640 = vmatprep.subr.mxu0 0.0
  %3641 = vmatpush1.msra.mxu0 0.0
  %3642 = vmatprep.subr.mxu0 0.0
  %3643 = vmatpush1.msra.mxu0 0.0
  %3644 = vmatprep.subr.mxu0 0.0
  %3645 = vmatpush1.msra.mxu0 0.0
  %3646 = vmatprep.subr.mxu0 0.0
  %3647 = vmatpush1.msra.mxu0 0.0
  %3648 = vmatprep.subr.mxu0 0.0
  %3649 = vmatpush1.msra.mxu0 0.0
  %3650 = vmatprep.subr.mxu0 0.0
  %3651 = vmatpush1.msra.mxu0 0.0
  %3652 = vmatprep.subr.mxu0 0.0
  %3653 = vmatpush1.msra.mxu0 0.0
  %3654 = vmatprep.subr.mxu0 0.0
  %3655 = vmatpush1.msra.mxu0 0.0
  %3656 = vmatprep.subr.mxu0 0.0
  %3657 = vmatpush1.msra.mxu0 0.0
  %3658 = vmatprep.subr.mxu0 0.0
  %3659 = vmatpush1.msra.mxu0 0.0
  %3660 = vmatprep.subr.mxu0 0.0
  %3661 = vmatpush1.msra.mxu0 0.0
  %3662 = vmatprep.subr.mxu0 0.0
  %3663 = vmatpush1.msra.mxu0 0.0
  %3664 = vmatprep.subr.mxu0 0.0
  %3665 = vmatpush1.msra.mxu0 0.0
  %3666 = vmatprep.subr.mxu0 0.0
  %3667 = vmatpush1.msra.mxu0 0.0
  %3668 = vmatprep.subr.mxu0 0.0
  %3669 = vmatpush1.msra.mxu0 0.0
  %3670 = vmatprep.subr.mxu0 0.0
  %3671 = vmatpush1.msra.mxu0 0.0
  %3672 = vmatprep.subr.mxu0 0.0
  %3673 = vmatpush1.msra.mxu0 0.0
  %3674 = vmatprep.subr.mxu0 0.0
  %3675 = vmatpush1.msra.mxu0 0.0
  %3676 = vmatprep.subr.mxu0 0.0
  %3677 = vmatpush1.msra.mxu0 0.0
  %3678 = vmatprep.subr.mxu0 0.0
  %3679 = vmatpush1.msra.mxu0 0.0
  %3680 = vmatprep.subr.mxu0 0.0
  %3681 = vmatpush1.msra.mxu0 0.0
  %3682 = vmatprep.subr.mxu0 0.0
  %3683 = vmatpush1.msra.mxu0 0.0
  %3684 = vmatprep.subr.mxu0 0.0
  %3685 = vmatpush1.msra.mxu0 0.0
  %3686 = vmatprep.mubr.f32.mxu0 0.0
  %3687 = vmatmul.mubr.f32.gmra.mrb[0].mxu0 %v3617
  %v3688 = vpop.f32.mrb[0].mxu0
  %v3689 = vadd.f32 %v3609, %v3688
  %v3690 = vpop.f32.mrb[0].mxu0
  %v3691 = vadd.f32 %v3609, %v3690
  %3692 = vmatprep.mubr.f32.mxu0 0.0
  %3693 = vmatmul.mubr.f32.gmra.mrb[0].mxu0 %v3620
  %v3694 = vpop.f32.mrb[0].mxu0
  %v3695 = vadd.f32 %v3614, %v3694
  %v3696 = vpop.f32.mrb[0].mxu0
  %v3697 = vadd.f32 %v3614, %v3696
  %3698 = vdwg.mxu0
  %v3699 = vadd.f32 %v3689, %v33
  %v3700 = vadd.f32 %v3691, %v34
  %v3701 = vadd.f32 %v3695, %v35
  %v3702 = vadd.f32 %v3697, %v36
  %3703 = vst [vmem:[%s9] sm:$0xff] %v3699
  %3704 = vst [vmem:[%s9 + $0x8] sm:$0xff] %v3700
  %3705 = vst [vmem:[%s9 + $0x10] sm:$0xff] %v3701
  %3706 = vst [vmem:[%s9 + $0x18] sm:$0xff] %v3702
  %s3707 = scalar_lea.vmem %s0, 32
  %v3708 = vld [vmem:[%s3707] sm:$0xff]
  %v3709 = vld [vmem:[%s3707 + $0x8] sm:$0xff]
  %v3710 = vld [vmem:[%s3707 + $0x10] sm:$0xff]
  %v3711 = vld [vmem:[%s3707 + $0x18] sm:$0xff]
  %v3712 = vld [vmem:[%s3] sm:$0xff]
  %v3713 = vld [vmem:[%s3 + $0x8] sm:$0xff]
  %v3714 = vld [vmem:[%s3 + $0x10] sm:$0xff]
  %v3715 = vld [vmem:[%s3 + $0x18] sm:$0xff]
  %v3716 = vld [vmem:[%s3 + $0x20] sm:$0xff]
  %v3717 = vld [vmem:[%s3 + $0x28] sm:$0xff]
  %v3718 = vld [vmem:[%s4] sm:$0xff]
  %v3719 = vld [vmem:[%s4 + $0x8] sm:$0xff]
  %v3720 = vld [vmem:[%s4 + $0x10] sm:$0xff]
  %v3721 = vld [vmem:[%s4 + $0x18] sm:$0xff]
  %v3722 = vld [vmem:[%s4 + $0x20] sm:$0xff]
  %v3723 = vld [vmem:[%s4 + $0x28] sm:$0xff]
  %v3724 = vld [vmem:[%s4 + $0x30] sm:$0xff]
  %v3725 = vld [vmem:[%s4 + $0x38] sm:$0xff]
  %v3726 = vld [vmem:[%s4 + $0x40] sm:$0xff]
  %v3727 = vld [vmem:[%s4 + $0x48] sm:$0xff]
  %v3728 = vld [vmem:[%s4 + $0x50] sm:$0xff]
  %v3729 = vld [vmem:[%s4 + $0x58] sm:$0xff]
  %v3731 = vsel %vm55, %v3712, 0
  %v3734 = vsel %vm55, %v3713, 0
  %v3737 = vsel %vm55, %v3714, 0
  %v3740 = vsel %vm55, %v3715, 0
  %v3743 = vsel %vm55, %v3716, 0
  %v3746 = vsel %vm55, %v3717, 0
  %3748 = vmatprep.subr.mxu0 %v3709
  %3749 = vmatpush1.msra.mxu0 %v3708
  %3750 = vmatprep.subr.mxu0 %v3711
  %3751 = vmatpush1.msra.mxu0 %v3710
  %3752 = vmatprep.subr.mxu0 0.0
  %3753 = vmatpush1.msra.mxu0 0.0
  %3754 = vmatprep.subr.mxu0 0.0
  %3755 = vmatpush1.msra.mxu0 0.0
  %3756 = vmatprep.subr.mxu0 0.0
  %3757 = vmatpush1.msra.mxu0 0.0
  %3758 = vmatprep.subr.mxu0 0.0
  %3759 = vmatpush1.msra.mxu0 0.0
  %3760 = vmatprep.subr.mxu0 0.0
  %3761 = vmatpush1.msra.mxu0 0.0
  %3762 = vmatprep.subr.mxu0 0.0
  %3763 = vmatpush1.msra.mxu0 0.0
  %3764 = vmatprep.subr.mxu0 0.0
  %3765 = vmatpush1.msra.mxu0 0.0
  %3766 = vmatprep.subr.mxu0 0.0
  %3767 = vmatpush1.msra.mxu0 0.0
  %3768 = vmatprep.subr.mxu0 0.0
  %3769 = vmatpush1.msra.mxu0 0.0
  %3770 = vmatprep.subr.mxu0 0.0
  %3771 = vmatpush1.msra.mxu0 0.0
  %3772 = vmatprep.subr.mxu0 0.0
  %3773 = vmatpush1.msra.mxu0 0.0
  %3774 = vmatprep.subr.mxu0 0.0
  %3775 = vmatpush1.msra.mxu0 0.0
  %3776 = vmatprep.subr.mxu0 0.0
  %3777 = vmatpush1.msra.mxu0 0.0
  %3778 = vmatprep.subr.mxu0 0.0
  %3779 = vmatpush1.msra.mxu0 0.0
  %3780 = vmatprep.subr.mxu0 0.0
  %3781 = vmatpush1.msra.mxu0 0.0
  %3782 = vmatprep.subr.mxu0 0.0
  %3783 = vmatpush1.msra.mxu0 0.0
  %3784 = vmatprep.subr.mxu0 0.0
  %3785 = vmatpush1.msra.mxu0 0.0
  %3786 = vmatprep.subr.mxu0 0.0
  %3787 = vmatpush1.msra.mxu0 0.0
  %3788 = vmatprep.subr.mxu0 0.0
  %3789 = vmatpush1.msra.mxu0 0.0
  %3790 = vmatprep.subr.mxu0 0.0
  %3791 = vmatpush1.msra.mxu0 0.0
  %3792 = vmatprep.subr.mxu0 0.0
  %3793 = vmatpush1.msra.mxu0 0.0
  %3794 = vmatprep.subr.mxu0 0.0
  %3795 = vmatpush1.msra.mxu0 0.0
  %3796 = vmatprep.subr.mxu0 0.0
  %3797 = vmatpush1.msra.mxu0 0.0
  %3798 = vmatprep.subr.mxu0 0.0
  %3799 = vmatpush1.msra.mxu0 0.0
  %3800 = vmatprep.subr.mxu0 0.0
  %3801 = vmatpush1.msra.mxu0 0.0
  %3802 = vmatprep.subr.mxu0 0.0
  %3803 = vmatpush1.msra.mxu0 0.0
  %3804 = vmatprep.subr.mxu0 0.0
  %3805 = vmatpush1.msra.mxu0 0.0
  %3806 = vmatprep.subr.mxu0 0.0
  %3807 = vmatpush1.msra.mxu0 0.0
  %3808 = vmatprep.subr.mxu0 0.0
  %3809 = vmatpush1.msra.mxu0 0.0
  %3810 = vmatprep.subr.mxu0 0.0
  %3811 = vmatpush1.msra.mxu0 0.0
  %3812 = vmatprep.mubr.f32.mxu0 0.0
  %3813 = vmatmul.mubr.f32.gmra.mrb[0].mxu0 %v3731
  %v3814 = vpop.f32.mrb[0].mxu0
  %v3815 = vadd.f32 %v3718, %v3814
  %v3816 = vpop.f32.mrb[0].mxu0
  %v3817 = vadd.f32 %v3719, %v3816
  %3818 = vmatprep.mubr.f32.mxu0 0.0
  %3819 = vmatmul.mubr.f32.gmra.mrb[0].mxu0 %v3734
  %v3820 = vpop.f32.mrb[0].mxu0
  %v3821 = vadd.f32 %v3720, %v3820
  %v3822 = vpop.f32.mrb[0].mxu0
  %v3823 = vadd.f32 %v3721, %v3822
  %3824 = vmatprep.mubr.f32.mxu0 0.0
  %3825 = vmatmul.mubr.f32.gmra.mrb[0].mxu0 %v3737
  %v3826 = vpop.f32.mrb[0].mxu0
  %v3827 = vadd.f32 %v3722, %v3826
  %v3828 = vpop.f32.mrb[0].mxu0
  %v3829 = vadd.f32 %v3723, %v3828
  %3830 = vmatprep.mubr.f32.mxu0 0.0
  %3831 = vmatmul.mubr.f32.gmra.mrb[0].mxu0 %v3740
  %v3832 = vpop.f32.mrb[0].mxu0
  %v3833 = vadd.f32 %v3724, %v3832
  %v3834 = vpop.f32.mrb[0].mxu0
  %v3835 = vadd.f32 %v3725, %v3834
  %3836 = vmatprep.mubr.f32.mxu0 0.0
  %3837 = vmatmul.mubr.f32.gmra.mrb[0].mxu0 %v3743
  %v3838 = vpop.f32.mrb[0].mxu0
  %v3839 = vadd.f32 %v3726, %v3838
  %v3840 = vpop.f32.mrb[0].mxu0
  %v3841 = vadd.f32 %v3727, %v3840
  %3842 = vmatprep.mubr.f32.mxu0 0.0
  %3843 = vmatmul.mubr.f32.gmra.mrb[0].mxu0 %v3746
  %v3844 = vpop.f32.mrb[0].mxu0
  %v3845 = vadd.f32 %v3728, %v3844
  %v3846 = vpop.f32.mrb[0].mxu0
  %v3847 = vadd.f32 %v3729, %v3846
  %3848 = vdwg.mxu0
  %3849 = vxpose.xlu0.b32.start [1/16] %v3827, 128
  %3850 = vxpose.xlu0.b32.cont [2/16] 0.0, 128
  %3851 = vxpose.xlu0.b32.cont [3/16] 0.0, 128
  %3852 = vxpose.xlu0.b32.cont [4/16] 0.0, 128
  %3853 = vxpose.xlu0.b32.cont [5/16] 0.0, 128
  %3854 = vxpose.xlu0.b32.cont [6/16] 0.0, 128
  %3855 = vxpose.xlu0.b32.cont [7/16] 0.0, 128
  %3856 = vxpose.xlu0.b32.cont [8/16] 0.0, 128
  %3857 = vxpose.xlu0.b32.cont [9/16] 0.0, 128
  %3858 = vxpose.xlu0.b32.cont [10/16] 0.0, 128
  %3859 = vxpose.xlu0.b32.cont [11/16] 0.0, 128
  %3860 = vxpose.xlu0.b32.cont [12/16] 0.0, 128
  %3861 = vxpose.xlu0.b32.cont [13/16] 0.0, 128
  %3862 = vxpose.xlu0.b32.cont [14/16] 0.0, 128
  %3863 = vxpose.xlu0.b32.cont [15/16] 0.0, 128
  %3864 = vxpose.xlu0.b32.end [16/16] 0.0, 128
  %v3865 = vpop.trf.xlu0
  %v3866 = vpop.trf.xlu0
  %v3867 = vpop.trf.xlu0
  %v3868 = vpop.trf.xlu0
  %v3869 = vpop.trf.xlu0
  %v3870 = vpop.trf.xlu0
  %v3871 = vpop.trf.xlu0
  %v3872 = vpop.trf.xlu0
  %v3873 = vpop.trf.xlu0
  %v3874 = vpop.trf.xlu0
  %v3875 = vpop.trf.xlu0
  %v3876 = vpop.trf.xlu0
  %v3877 = vpop.trf.xlu0
  %v3878 = vpop.trf.xlu0
  %v3879 = vpop.trf.xlu0
  %v3880 = vpop.trf.xlu0
  %v3882 = vsel %vm207, %v3865, 0
  %v3885 = vsel %vm207, %v3866, 0
  %v3888 = vsel %vm207, %v3867, 0
  %v3891 = vsel %vm207, %v3868, 0
  %v3894 = vsel %vm207, %v3869, 0
  %v3897 = vsel %vm207, %v3870, 0
  %v3900 = vsel %vm207, %v3871, 0
  %v3903 = vsel %vm207, %v3872, 0
  %3905 = vmatprep.subr.mxu0 %v3817
  %3906 = vmatpush1.msra.mxu0 %v3815
  %3907 = vmatprep.subr.mxu0 0.0
  %3908 = vmatpush1.msra.mxu0 0.0
  %3909 = vmatprep.subr.mxu0 0.0
  %3910 = vmatpush1.msra.mxu0 0.0
  %3911 = vmatprep.subr.mxu0 0.0
  %3912 = vmatpush1.msra.mxu0 0.0
  %3913 = vmatprep.subr.mxu0 0.0
  %3914 = vmatpush1.msra.mxu0 0.0
  %3915 = vmatprep.subr.mxu0 0.0
  %3916 = vmatpush1.msra.mxu0 0.0
  %3917 = vmatprep.subr.mxu0 0.0
  %3918 = vmatpush1.msra.mxu0 0.0
  %3919 = vmatprep.subr.mxu0 0.0
  %3920 = vmatpush1.msra.mxu0 0.0
  %3921 = vmatprep.subr.mxu0 0.0
  %3922 = vmatpush1.msra.mxu0 0.0
  %3923 = vmatprep.subr.mxu0 0.0
  %3924 = vmatpush1.msra.mxu0 0.0
  %3925 = vmatprep.subr.mxu0 0.0
  %3926 = vmatpush1.msra.mxu0 0.0
  %3927 = vmatprep.subr.mxu0 0.0
  %3928 = vmatpush1.msra.mxu0 0.0
  %3929 = vmatprep.subr.mxu0 0.0
  %3930 = vmatpush1.msra.mxu0 0.0
  %3931 = vmatprep.subr.mxu0 0.0
  %3932 = vmatpush1.msra.mxu0 0.0
  %3933 = vmatprep.subr.mxu0 0.0
  %3934 = vmatpush1.msra.mxu0 0.0
  %3935 = vmatprep.subr.mxu0 0.0
  %3936 = vmatpush1.msra.mxu0 0.0
  %3937 = vmatprep.subr.mxu0 0.0
  %3938 = vmatpush1.msra.mxu0 0.0
  %3939 = vmatprep.subr.mxu0 0.0
  %3940 = vmatpush1.msra.mxu0 0.0
  %3941 = vmatprep.subr.mxu0 0.0
  %3942 = vmatpush1.msra.mxu0 0.0
  %3943 = vmatprep.subr.mxu0 0.0
  %3944 = vmatpush1.msra.mxu0 0.0
  %3945 = vmatprep.subr.mxu0 0.0
  %3946 = vmatpush1.msra.mxu0 0.0
  %3947 = vmatprep.subr.mxu0 0.0
  %3948 = vmatpush1.msra.mxu0 0.0
  %3949 = vmatprep.subr.mxu0 0.0
  %3950 = vmatpush1.msra.mxu0 0.0
  %3951 = vmatprep.subr.mxu0 0.0
  %3952 = vmatpush1.msra.mxu0 0.0
  %3953 = vmatprep.subr.mxu0 0.0
  %3954 = vmatpush1.msra.mxu0 0.0
  %3955 = vmatprep.subr.mxu0 0.0
  %3956 = vmatpush1.msra.mxu0 0.0
  %3957 = vmatprep.subr.mxu0 0.0
  %3958 = vmatpush1.msra.mxu0 0.0
  %3959 = vmatprep.subr.mxu0 0.0
  %3960 = vmatpush1.msra.mxu0 0.0
  %3961 = vmatprep.subr.mxu0 0.0
  %3962 = vmatpush1.msra.mxu0 0.0
  %3963 = vmatprep.subr.mxu0 0.0
  %3964 = vmatpush1.msra.mxu0 0.0
  %3965 = vmatprep.subr.mxu0 0.0
  %3966 = vmatpush1.msra.mxu0 0.0
  %3967 = vmatprep.subr.mxu0 0.0
  %3968 = vmatpush1.msra.mxu0 0.0
  %3969 = vmatprep.mubr.f32.mxu0 0.0
  %3970 = vmatmul.mubr.f32.gmra.mrb[0].mxu0 %v3882
  %v3971 = vpop.f32.mrb[0].mxu0
  %v3972 = vadd.f32 0.0, %v3971
  %v3973 = vpop.f32.mrb[0].mxu0
  %v3974 = vadd.f32 0.0, %v3973
  %3975 = vmatprep.mubr.f32.mxu0 0.0
  %3976 = vmatmul.mubr.f32.gmra.mrb[0].mxu0 %v3885
  %v3977 = vpop.f32.mrb[0].mxu0
  %v3978 = vadd.f32 0.0, %v3977
  %v3979 = vpop.f32.mrb[0].mxu0
  %v3980 = vadd.f32 0.0, %v3979
  %3981 = vmatprep.mubr.f32.mxu0 0.0
  %3982 = vmatmul.mubr.f32.gmra.mrb[0].mxu0 %v3888
  %v3983 = vpop.f32.mrb[0].mxu0
  %v3984 = vadd.f32 0.0, %v3983
  %v3985 = vpop.f32.mrb[0].mxu0
  %v3986 = vadd.f32 0.0, %v3985
  %3987 = vmatprep.mubr.f32.mxu0 0.0
  %3988 = vmatmul.mubr.f32.gmra.mrb[0].mxu0 %v3891
  %v3989 = vpop.f32.mrb[0].mxu0
  %v3990 = vadd.f32 0.0, %v3989
  %v3991 = vpop.f32.mrb[0].mxu0
  %v3992 = vadd.f32 0.0, %v3991
  %3993 = vmatprep.mubr.f32.mxu0 0.0
  %3994 = vmatmul.mubr.f32.gmra.mrb[0].mxu0 %v3894
  %v3995 = vpop.f32.mrb[0].mxu0
  %v3996 = vadd.f32 0.0, %v3995
  %v3997 = vpop.f32.mrb[0].mxu0
  %v3998 = vadd.f32 0.0, %v3997
  %3999 = vmatprep.mubr.f32.mxu0 0.0
  %4000 = vmatmul.mubr.f32.gmra.mrb[0].mxu0 %v3897
  %v4001 = vpop.f32.mrb[0].mxu0
  %v4002 = vadd.f32 0.0, %v4001
  %v4003 = vpop.f32.mrb[0].mxu0
  %v4004 = vadd.f32 0.0, %v4003
  %4005 = vmatprep.mubr.f32.mxu0 0.0
  %4006 = vmatmul.mubr.f32.gmra.mrb[0].mxu0 %v3900
  %v4007 = vpop.f32.mrb[0].mxu0
  %v4008 = vadd.f32 0.0, %v4007
  %v4009 = vpop.f32.mrb[0].mxu0
  %v4010 = vadd.f32 0.0, %v4009
  %4011 = vmatprep.mubr.f32.mxu0 0.0
  %4012 = vmatmul.mubr.f32.gmra.mrb[0].mxu0 %v3903
  %v4013 = vpop.f32.mrb[0].mxu0
  %v4014 = vadd.f32 0.0, %v4013
  %v4015 = vpop.f32.mrb[0].mxu0
  %v4016 = vadd.f32 0.0, %v4015
  %4017 = vdwg.mxu0
  %v4018 = vld [vmem:[%s2] sm:$0xff]
  %v4019 = vld [vmem:[%s2 + $0x8] sm:$0xff]
  %v4020 = vld [vmem:[%s2 + $0x10] sm:$0xff]
  %v4021 = vld [vmem:[%s2 + $0x18] sm:$0xff]
  %v4022 = vld [vmem:[%s2 + $0x20] sm:$0xff]
  %v4023 = vld [vmem:[%s2 + $0x28] sm:$0xff]
  %v4024 = vld [vmem:[%s2 + $0x30] sm:$0xff]
  %v4025 = vld [vmem:[%s2 + $0x38] sm:$0xff]
  %4026 = vset.pattern.permute.xlu0 0
  %4027 = vperm.xlu0 %4026, %v4018
  %v4028 = vpop.permute.xlu0 %4027
  %4029 = vset.pattern.permute.xlu0 0
  %4030 = vperm.xlu0 %4029, %v4019
  %v4031 = vpop.permute.xlu0 %4030
  %4032 = vset.pattern.permute.xlu0 0
  %4033 = vperm.xlu0 %4032, %v4020
  %v4034 = vpop.permute.xlu0 %4033
  %4035 = vset.pattern.permute.xlu0 0
  %4036 = vperm.xlu0 %4035, %v4021
  %v4037 = vpop.permute.xlu0 %4036
  %4038 = vset.pattern.permute.xlu0 0
  %4039 = vperm.xlu0 %4038, %v4022
  %v4040 = vpop.permute.xlu0 %4039
  %4041 = vset.pattern.permute.xlu0 0
  %4042 = vperm.xlu0 %4041, %v4023
  %v4043 = vpop.permute.xlu0 %4042
  %4044 = vset.pattern.permute.xlu0 0
  %4045 = vperm.xlu0 %4044, %v4024
  %v4046 = vpop.permute.xlu0 %4045
  %4047 = vset.pattern.permute.xlu0 0
  %4048 = vperm.xlu0 %4047, %v4025
  %v4049 = vpop.permute.xlu0 %4048
  %vm4050 = vcmp.eq.s32.totalorder %v4028, %v380
  %vm4051 = vcmp.eq.s32.totalorder %v4028, %v384
  %vm4052 = vcmp.eq.s32.totalorder %v4031, %v380
  %vm4053 = vcmp.eq.s32.totalorder %v4031, %v384
  %vm4054 = vcmp.eq.s32.totalorder %v4034, %v380
  %vm4055 = vcmp.eq.s32.totalorder %v4034, %v384
  %vm4056 = vcmp.eq.s32.totalorder %v4037, %v380
  %vm4057 = vcmp.eq.s32.totalorder %v4037, %v384
  %vm4058 = vcmp.eq.s32.totalorder %v4040, %v380
  %vm4059 = vcmp.eq.s32.totalorder %v4040, %v384
  %vm4060 = vcmp.eq.s32.totalorder %v4043, %v380
  %vm4061 = vcmp.eq.s32.totalorder %v4043, %v384
  %vm4062 = vcmp.eq.s32.totalorder %v4046, %v380
  %vm4063 = vcmp.eq.s32.totalorder %v4046, %v384
  %vm4064 = vcmp.eq.s32.totalorder %v4049, %v380
  %vm4065 = vcmp.eq.s32.totalorder %v4049, %v384
  %v4066 = vsel %vm4050, %v3972, -1e+30
  %v4067 = vsel %vm4051, %v3974, -1e+30
  %v4068 = vsel %vm4052, %v3978, -1e+30
  %v4069 = vsel %vm4053, %v3980, -1e+30
  %v4070 = vsel %vm4054, %v3984, -1e+30
  %v4071 = vsel %vm4055, %v3986, -1e+30
  %v4072 = vsel %vm4056, %v3990, -1e+30
  %v4073 = vsel %vm4057, %v3992, -1e+30
  %v4074 = vsel %vm4058, %v3996, -1e+30
  %v4075 = vsel %vm4059, %v3998, -1e+30
  %v4076 = vsel %vm4060, %v4002, -1e+30
  %v4077 = vsel %vm4061, %v4004, -1e+30
  %v4078 = vsel %vm4062, %v4008, -1e+30
  %v4079 = vsel %vm4063, %v4010, -1e+30
  %v4080 = vsel %vm4064, %v4014, -1e+30
  %v4081 = vsel %vm4065, %v4016, -1e+30
  %v4082 = vmax.f32 %v4066, %v4067
  %4083 = vmax.xlane.f32.xlu0 %v4082
  %v4084 = vpop.xlane.xlu0 %4083
  %v4085 = vmax.f32 %v4068, %v4069
  %4086 = vmax.xlane.f32.xlu0 %v4085
  %v4087 = vpop.xlane.xlu0 %4086
  %v4088 = vmax.f32 %v4070, %v4071
  %4089 = vmax.xlane.f32.xlu0 %v4088
  %v4090 = vpop.xlane.xlu0 %4089
  %v4091 = vmax.f32 %v4072, %v4073
  %4092 = vmax.xlane.f32.xlu0 %v4091
  %v4093 = vpop.xlane.xlu0 %4092
  %v4094 = vmax.f32 %v4074, %v4075
  %4095 = vmax.xlane.f32.xlu0 %v4094
  %v4096 = vpop.xlane.xlu0 %4095
  %v4097 = vmax.f32 %v4076, %v4077
  %4098 = vmax.xlane.f32.xlu0 %v4097
  %v4099 = vpop.xlane.xlu0 %4098
  %v4100 = vmax.f32 %v4078, %v4079
  %4101 = vmax.xlane.f32.xlu0 %v4100
  %v4102 = vpop.xlane.xlu0 %4101
  %v4103 = vmax.f32 %v4080, %v4081
  %4104 = vmax.xlane.f32.xlu0 %v4103
  %v4105 = vpop.xlane.xlu0 %4104
  %v4106 = vsub.f32 %v4066, %v4084
  %v4107 = vsub.f32 %v4067, %v4084
  %v4108 = vsub.f32 %v4068, %v4087
  %v4109 = vsub.f32 %v4069, %v4087
  %v4110 = vsub.f32 %v4070, %v4090
  %v4111 = vsub.f32 %v4071, %v4090
  %v4112 = vsub.f32 %v4072, %v4093
  %v4113 = vsub.f32 %v4073, %v4093
  %v4114 = vsub.f32 %v4074, %v4096
  %v4115 = vsub.f32 %v4075, %v4096
  %v4116 = vsub.f32 %v4076, %v4099
  %v4117 = vsub.f32 %v4077, %v4099
  %v4118 = vsub.f32 %v4078, %v4102
  %v4119 = vsub.f32 %v4079, %v4102
  %v4120 = vsub.f32 %v4080, %v4105
  %v4121 = vsub.f32 %v4081, %v4105
  %v4122 = vmul.f32 %v4106, 1.442695
  %v4123 = vpow.pop %v4122
  %v4124 = vmul.f32 %v4107, 1.442695
  %v4125 = vpow.pop %v4124
  %v4126 = vmul.f32 %v4108, 1.442695
  %v4127 = vpow.pop %v4126
  %v4128 = vmul.f32 %v4109, 1.442695
  %v4129 = vpow.pop %v4128
  %v4130 = vmul.f32 %v4110, 1.442695
  %v4131 = vpow.pop %v4130
  %v4132 = vmul.f32 %v4111, 1.442695
  %v4133 = vpow.pop %v4132
  %v4134 = vmul.f32 %v4112, 1.442695
  %v4135 = vpow.pop %v4134
  %v4136 = vmul.f32 %v4113, 1.442695
  %v4137 = vpow.pop %v4136
  %v4138 = vmul.f32 %v4114, 1.442695
  %v4139 = vpow.pop %v4138
  %v4140 = vmul.f32 %v4115, 1.442695
  %v4141 = vpow.pop %v4140
  %v4142 = vmul.f32 %v4116, 1.442695
  %v4143 = vpow.pop %v4142
  %v4144 = vmul.f32 %v4117, 1.442695
  %v4145 = vpow.pop %v4144
  %v4146 = vmul.f32 %v4118, 1.442695
  %v4147 = vpow.pop %v4146
  %v4148 = vmul.f32 %v4119, 1.442695
  %v4149 = vpow.pop %v4148
  %v4150 = vmul.f32 %v4120, 1.442695
  %v4151 = vpow.pop %v4150
  %v4152 = vmul.f32 %v4121, 1.442695
  %v4153 = vpow.pop %v4152
  %v4154 = vadd.f32 %v4123, %v4125
  %4155 = vadd.xlane.f32.xlu0 %v4154
  %v4156 = vpop.xlane.xlu0 %4155
  %v4157 = vadd.f32 %v4127, %v4129
  %4158 = vadd.xlane.f32.xlu0 %v4157
  %v4159 = vpop.xlane.xlu0 %4158
  %v4160 = vadd.f32 %v4131, %v4133
  %4161 = vadd.xlane.f32.xlu0 %v4160
  %v4162 = vpop.xlane.xlu0 %4161
  %v4163 = vadd.f32 %v4135, %v4137
  %4164 = vadd.xlane.f32.xlu0 %v4163
  %v4165 = vpop.xlane.xlu0 %4164
  %v4166 = vadd.f32 %v4139, %v4141
  %4167 = vadd.xlane.f32.xlu0 %v4166
  %v4168 = vpop.xlane.xlu0 %4167
  %v4169 = vadd.f32 %v4143, %v4145
  %4170 = vadd.xlane.f32.xlu0 %v4169
  %v4171 = vpop.xlane.xlu0 %4170
  %v4172 = vadd.f32 %v4147, %v4149
  %4173 = vadd.xlane.f32.xlu0 %v4172
  %v4174 = vpop.xlane.xlu0 %4173
  %v4175 = vadd.f32 %v4151, %v4153
  %4176 = vadd.xlane.f32.xlu0 %v4175
  %v4177 = vpop.xlane.xlu0 %4176
  %v4178 = vrcp.pop %v4156
  %v4179 = vmul.f32 %v4123, %v4178
  %v4180 = vmul.f32 %v4125, %v4178
  %v4181 = vrcp.pop %v4159
  %v4182 = vmul.f32 %v4127, %v4181
  %v4183 = vmul.f32 %v4129, %v4181
  %v4184 = vrcp.pop %v4162
  %v4185 = vmul.f32 %v4131, %v4184
  %v4186 = vmul.f32 %v4133, %v4184
  %v4187 = vrcp.pop %v4165
  %v4188 = vmul.f32 %v4135, %v4187
  %v4189 = vmul.f32 %v4137, %v4187
  %v4190 = vrcp.pop %v4168
  %v4191 = vmul.f32 %v4139, %v4190
  %v4192 = vmul.f32 %v4141, %v4190
  %v4193 = vrcp.pop %v4171
  %v4194 = vmul.f32 %v4143, %v4193
  %v4195 = vmul.f32 %v4145, %v4193
  %v4196 = vrcp.pop %v4174
  %v4197 = vmul.f32 %v4147, %v4196
  %v4198 = vmul.f32 %v4149, %v4196
  %v4199 = vrcp.pop %v4177
  %v4200 = vmul.f32 %v4151, %v4199
  %v4201 = vmul.f32 %v4153, %v4199
  %4203 = vrot.lane.b32.xlu0 %v3827, 64
  %v4204 = vpop.permute.xlu0 %4203
  %4206 = vxpose.xlu0.b32.start [1/16] %v4204, 128
  %4207 = vxpose.xlu0.b32.cont [2/16] 0.0, 128
  %4208 = vxpose.xlu0.b32.cont [3/16] 0.0, 128
  %4209 = vxpose.xlu0.b32.cont [4/16] 0.0, 128
  %4210 = vxpose.xlu0.b32.cont [5/16] 0.0, 128
  %4211 = vxpose.xlu0.b32.cont [6/16] 0.0, 128
  %4212 = vxpose.xlu0.b32.cont [7/16] 0.0, 128
  %4213 = vxpose.xlu0.b32.cont [8/16] 0.0, 128
  %4214 = vxpose.xlu0.b32.cont [9/16] 0.0, 128
  %4215 = vxpose.xlu0.b32.cont [10/16] 0.0, 128
  %4216 = vxpose.xlu0.b32.cont [11/16] 0.0, 128
  %4217 = vxpose.xlu0.b32.cont [12/16] 0.0, 128
  %4218 = vxpose.xlu0.b32.cont [13/16] 0.0, 128
  %4219 = vxpose.xlu0.b32.cont [14/16] 0.0, 128
  %4220 = vxpose.xlu0.b32.cont [15/16] 0.0, 128
  %4221 = vxpose.xlu0.b32.end [16/16] 0.0, 128
  %v4222 = vpop.trf.xlu0
  %v4223 = vpop.trf.xlu0
  %v4224 = vpop.trf.xlu0
  %v4225 = vpop.trf.xlu0
  %v4226 = vpop.trf.xlu0
  %v4227 = vpop.trf.xlu0
  %v4228 = vpop.trf.xlu0
  %v4229 = vpop.trf.xlu0
  %v4230 = vpop.trf.xlu0
  %v4231 = vpop.trf.xlu0
  %v4232 = vpop.trf.xlu0
  %v4233 = vpop.trf.xlu0
  %v4234 = vpop.trf.xlu0
  %v4235 = vpop.trf.xlu0
  %v4236 = vpop.trf.xlu0
  %v4237 = vpop.trf.xlu0
  %v4239 = vsel %vm207, %v4222, 0
  %v4242 = vsel %vm207, %v4223, 0
  %v4245 = vsel %vm207, %v4224, 0
  %v4248 = vsel %vm207, %v4225, 0
  %v4251 = vsel %vm207, %v4226, 0
  %v4254 = vsel %vm207, %v4227, 0
  %v4257 = vsel %vm207, %v4228, 0
  %v4260 = vsel %vm207, %v4229, 0
  %4262 = vmatprep.subr.mxu0 %v3817
  %4263 = vmatpush1.msra.mxu0 %v3815
  %4264 = vmatprep.subr.mxu0 0.0
  %4265 = vmatpush1.msra.mxu0 0.0
  %4266 = vmatprep.subr.mxu0 0.0
  %4267 = vmatpush1.msra.mxu0 0.0
  %4268 = vmatprep.subr.mxu0 0.0
  %4269 = vmatpush1.msra.mxu0 0.0
  %4270 = vmatprep.subr.mxu0 0.0
  %4271 = vmatpush1.msra.mxu0 0.0
  %4272 = vmatprep.subr.mxu0 0.0
  %4273 = vmatpush1.msra.mxu0 0.0
  %4274 = vmatprep.subr.mxu0 0.0
  %4275 = vmatpush1.msra.mxu0 0.0
  %4276 = vmatprep.subr.mxu0 0.0
  %4277 = vmatpush1.msra.mxu0 0.0
  %4278 = vmatprep.subr.mxu0 0.0
  %4279 = vmatpush1.msra.mxu0 0.0
  %4280 = vmatprep.subr.mxu0 0.0
  %4281 = vmatpush1.msra.mxu0 0.0
  %4282 = vmatprep.subr.mxu0 0.0
  %4283 = vmatpush1.msra.mxu0 0.0
  %4284 = vmatprep.subr.mxu0 0.0
  %4285 = vmatpush1.msra.mxu0 0.0
  %4286 = vmatprep.subr.mxu0 0.0
  %4287 = vmatpush1.msra.mxu0 0.0
  %4288 = vmatprep.subr.mxu0 0.0
  %4289 = vmatpush1.msra.mxu0 0.0
  %4290 = vmatprep.subr.mxu0 0.0
  %4291 = vmatpush1.msra.mxu0 0.0
  %4292 = vmatprep.subr.mxu0 0.0
  %4293 = vmatpush1.msra.mxu0 0.0
  %4294 = vmatprep.subr.mxu0 0.0
  %4295 = vmatpush1.msra.mxu0 0.0
  %4296 = vmatprep.subr.mxu0 0.0
  %4297 = vmatpush1.msra.mxu0 0.0
  %4298 = vmatprep.subr.mxu0 0.0
  %4299 = vmatpush1.msra.mxu0 0.0
  %4300 = vmatprep.subr.mxu0 0.0
  %4301 = vmatpush1.msra.mxu0 0.0
  %4302 = vmatprep.subr.mxu0 0.0
  %4303 = vmatpush1.msra.mxu0 0.0
  %4304 = vmatprep.subr.mxu0 0.0
  %4305 = vmatpush1.msra.mxu0 0.0
  %4306 = vmatprep.subr.mxu0 0.0
  %4307 = vmatpush1.msra.mxu0 0.0
  %4308 = vmatprep.subr.mxu0 0.0
  %4309 = vmatpush1.msra.mxu0 0.0
  %4310 = vmatprep.subr.mxu0 0.0
  %4311 = vmatpush1.msra.mxu0 0.0
  %4312 = vmatprep.subr.mxu0 0.0
  %4313 = vmatpush1.msra.mxu0 0.0
  %4314 = vmatprep.subr.mxu0 0.0
  %4315 = vmatpush1.msra.mxu0 0.0
  %4316 = vmatprep.subr.mxu0 0.0
  %4317 = vmatpush1.msra.mxu0 0.0
  %4318 = vmatprep.subr.mxu0 0.0
  %4319 = vmatpush1.msra.mxu0 0.0
  %4320 = vmatprep.subr.mxu0 0.0
  %4321 = vmatpush1.msra.mxu0 0.0
  %4322 = vmatprep.subr.mxu0 0.0
  %4323 = vmatpush1.msra.mxu0 0.0
  %4324 = vmatprep.subr.mxu0 0.0
  %4325 = vmatpush1.msra.mxu0 0.0
  %4326 = vmatprep.mubr.f32.mxu0 0.0
  %4327 = vmatmul.mubr.f32.gmra.mrb[0].mxu0 %v4239
  %v4328 = vpop.f32.mrb[0].mxu0
  %v4329 = vadd.f32 0.0, %v4328
  %v4330 = vpop.f32.mrb[0].mxu0
  %v4331 = vadd.f32 0.0, %v4330
  %4332 = vmatprep.mubr.f32.mxu0 0.0
  %4333 = vmatmul.mubr.f32.gmra.mrb[0].mxu0 %v4242
  %v4334 = vpop.f32.mrb[0].mxu0
  %v4335 = vadd.f32 0.0, %v4334
  %v4336 = vpop.f32.mrb[0].mxu0
  %v4337 = vadd.f32 0.0, %v4336
  %4338 = vmatprep.mubr.f32.mxu0 0.0
  %4339 = vmatmul.mubr.f32.gmra.mrb[0].mxu0 %v4245
  %v4340 = vpop.f32.mrb[0].mxu0
  %v4341 = vadd.f32 0.0, %v4340
  %v4342 = vpop.f32.mrb[0].mxu0
  %v4343 = vadd.f32 0.0, %v4342
  %4344 = vmatprep.mubr.f32.mxu0 0.0
  %4345 = vmatmul.mubr.f32.gmra.mrb[0].mxu0 %v4248
  %v4346 = vpop.f32.mrb[0].mxu0
  %v4347 = vadd.f32 0.0, %v4346
  %v4348 = vpop.f32.mrb[0].mxu0
  %v4349 = vadd.f32 0.0, %v4348
  %4350 = vmatprep.mubr.f32.mxu0 0.0
  %4351 = vmatmul.mubr.f32.gmra.mrb[0].mxu0 %v4251
  %v4352 = vpop.f32.mrb[0].mxu0
  %v4353 = vadd.f32 0.0, %v4352
  %v4354 = vpop.f32.mrb[0].mxu0
  %v4355 = vadd.f32 0.0, %v4354
  %4356 = vmatprep.mubr.f32.mxu0 0.0
  %4357 = vmatmul.mubr.f32.gmra.mrb[0].mxu0 %v4254
  %v4358 = vpop.f32.mrb[0].mxu0
  %v4359 = vadd.f32 0.0, %v4358
  %v4360 = vpop.f32.mrb[0].mxu0
  %v4361 = vadd.f32 0.0, %v4360
  %4362 = vmatprep.mubr.f32.mxu0 0.0
  %4363 = vmatmul.mubr.f32.gmra.mrb[0].mxu0 %v4257
  %v4364 = vpop.f32.mrb[0].mxu0
  %v4365 = vadd.f32 0.0, %v4364
  %v4366 = vpop.f32.mrb[0].mxu0
  %v4367 = vadd.f32 0.0, %v4366
  %4368 = vmatprep.mubr.f32.mxu0 0.0
  %4369 = vmatmul.mubr.f32.gmra.mrb[0].mxu0 %v4260
  %v4370 = vpop.f32.mrb[0].mxu0
  %v4371 = vadd.f32 0.0, %v4370
  %v4372 = vpop.f32.mrb[0].mxu0
  %v4373 = vadd.f32 0.0, %v4372
  %4374 = vdwg.mxu0
  %v4375 = vld [vmem:[%s2 + $0x40] sm:$0xff]
  %v4376 = vld [vmem:[%s2 + $0x48] sm:$0xff]
  %v4377 = vld [vmem:[%s2 + $0x50] sm:$0xff]
  %v4378 = vld [vmem:[%s2 + $0x58] sm:$0xff]
  %v4379 = vld [vmem:[%s2 + $0x60] sm:$0xff]
  %v4380 = vld [vmem:[%s2 + $0x68] sm:$0xff]
  %v4381 = vld [vmem:[%s2 + $0x70] sm:$0xff]
  %v4382 = vld [vmem:[%s2 + $0x78] sm:$0xff]
  %4383 = vset.pattern.permute.xlu0 0
  %4384 = vperm.xlu0 %4383, %v4375
  %v4385 = vpop.permute.xlu0 %4384
  %4386 = vset.pattern.permute.xlu0 0
  %4387 = vperm.xlu0 %4386, %v4376
  %v4388 = vpop.permute.xlu0 %4387
  %4389 = vset.pattern.permute.xlu0 0
  %4390 = vperm.xlu0 %4389, %v4377
  %v4391 = vpop.permute.xlu0 %4390
  %4392 = vset.pattern.permute.xlu0 0
  %4393 = vperm.xlu0 %4392, %v4378
  %v4394 = vpop.permute.xlu0 %4393
  %4395 = vset.pattern.permute.xlu0 0
  %4396 = vperm.xlu0 %4395, %v4379
  %v4397 = vpop.permute.xlu0 %4396
  %4398 = vset.pattern.permute.xlu0 0
  %4399 = vperm.xlu0 %4398, %v4380
  %v4400 = vpop.permute.xlu0 %4399
  %4401 = vset.pattern.permute.xlu0 0
  %4402 = vperm.xlu0 %4401, %v4381
  %v4403 = vpop.permute.xlu0 %4402
  %4404 = vset.pattern.permute.xlu0 0
  %4405 = vperm.xlu0 %4404, %v4382
  %v4406 = vpop.permute.xlu0 %4405
  %vm4407 = vcmp.eq.s32.totalorder %v4385, %v380
  %vm4408 = vcmp.eq.s32.totalorder %v4385, %v384
  %vm4409 = vcmp.eq.s32.totalorder %v4388, %v380
  %vm4410 = vcmp.eq.s32.totalorder %v4388, %v384
  %vm4411 = vcmp.eq.s32.totalorder %v4391, %v380
  %vm4412 = vcmp.eq.s32.totalorder %v4391, %v384
  %vm4413 = vcmp.eq.s32.totalorder %v4394, %v380
  %vm4414 = vcmp.eq.s32.totalorder %v4394, %v384
  %vm4415 = vcmp.eq.s32.totalorder %v4397, %v380
  %vm4416 = vcmp.eq.s32.totalorder %v4397, %v384
  %vm4417 = vcmp.eq.s32.totalorder %v4400, %v380
  %vm4418 = vcmp.eq.s32.totalorder %v4400, %v384
  %vm4419 = vcmp.eq.s32.totalorder %v4403, %v380
  %vm4420 = vcmp.eq.s32.totalorder %v4403, %v384
  %vm4421 = vcmp.eq.s32.totalorder %v4406, %v380
  %vm4422 = vcmp.eq.s32.totalorder %v4406, %v384
  %v4423 = vsel %vm4407, %v4329, -1e+30
  %v4424 = vsel %vm4408, %v4331, -1e+30
  %v4425 = vsel %vm4409, %v4335, -1e+30
  %v4426 = vsel %vm4410, %v4337, -1e+30
  %v4427 = vsel %vm4411, %v4341, -1e+30
  %v4428 = vsel %vm4412, %v4343, -1e+30
  %v4429 = vsel %vm4413, %v4347, -1e+30
  %v4430 = vsel %vm4414, %v4349, -1e+30
  %v4431 = vsel %vm4415, %v4353, -1e+30
  %v4432 = vsel %vm4416, %v4355, -1e+30
  %v4433 = vsel %vm4417, %v4359, -1e+30
  %v4434 = vsel %vm4418, %v4361, -1e+30
  %v4435 = vsel %vm4419, %v4365, -1e+30
  %v4436 = vsel %vm4420, %v4367, -1e+30
  %v4437 = vsel %vm4421, %v4371, -1e+30
  %v4438 = vsel %vm4422, %v4373, -1e+30
  %v4439 = vmax.f32 %v4423, %v4424
  %4440 = vmax.xlane.f32.xlu0 %v4439
  %v4441 = vpop.xlane.xlu0 %4440
  %v4442 = vmax.f32 %v4425, %v4426
  %4443 = vmax.xlane.f32.xlu0 %v4442
  %v4444 = vpop.xlane.xlu0 %4443
  %v4445 = vmax.f32 %v4427, %v4428
  %4446 = vmax.xlane.f32.xlu0 %v4445
  %v4447 = vpop.xlane.xlu0 %4446
  %v4448 = vmax.f32 %v4429, %v4430
  %4449 = vmax.xlane.f32.xlu0 %v4448
  %v4450 = vpop.xlane.xlu0 %4449
  %v4451 = vmax.f32 %v4431, %v4432
  %4452 = vmax.xlane.f32.xlu0 %v4451
  %v4453 = vpop.xlane.xlu0 %4452
  %v4454 = vmax.f32 %v4433, %v4434
  %4455 = vmax.xlane.f32.xlu0 %v4454
  %v4456 = vpop.xlane.xlu0 %4455
  %v4457 = vmax.f32 %v4435, %v4436
  %4458 = vmax.xlane.f32.xlu0 %v4457
  %v4459 = vpop.xlane.xlu0 %4458
  %v4460 = vmax.f32 %v4437, %v4438
  %4461 = vmax.xlane.f32.xlu0 %v4460
  %v4462 = vpop.xlane.xlu0 %4461
  %v4463 = vsub.f32 %v4423, %v4441
  %v4464 = vsub.f32 %v4424, %v4441
  %v4465 = vsub.f32 %v4425, %v4444
  %v4466 = vsub.f32 %v4426, %v4444
  %v4467 = vsub.f32 %v4427, %v4447
  %v4468 = vsub.f32 %v4428, %v4447
  %v4469 = vsub.f32 %v4429, %v4450
  %v4470 = vsub.f32 %v4430, %v4450
  %v4471 = vsub.f32 %v4431, %v4453
  %v4472 = vsub.f32 %v4432, %v4453
  %v4473 = vsub.f32 %v4433, %v4456
  %v4474 = vsub.f32 %v4434, %v4456
  %v4475 = vsub.f32 %v4435, %v4459
  %v4476 = vsub.f32 %v4436, %v4459
  %v4477 = vsub.f32 %v4437, %v4462
  %v4478 = vsub.f32 %v4438, %v4462
  %v4479 = vmul.f32 %v4463, 1.442695
  %v4480 = vpow.pop %v4479
  %v4481 = vmul.f32 %v4464, 1.442695
  %v4482 = vpow.pop %v4481
  %v4483 = vmul.f32 %v4465, 1.442695
  %v4484 = vpow.pop %v4483
  %v4485 = vmul.f32 %v4466, 1.442695
  %v4486 = vpow.pop %v4485
  %v4487 = vmul.f32 %v4467, 1.442695
  %v4488 = vpow.pop %v4487
  %v4489 = vmul.f32 %v4468, 1.442695
  %v4490 = vpow.pop %v4489
  %v4491 = vmul.f32 %v4469, 1.442695
  %v4492 = vpow.pop %v4491
  %v4493 = vmul.f32 %v4470, 1.442695
  %v4494 = vpow.pop %v4493
  %v4495 = vmul.f32 %v4471, 1.442695
  %v4496 = vpow.pop %v4495
  %v4497 = vmul.f32 %v4472, 1.442695
  %v4498 = vpow.pop %v4497
  %v4499 = vmul.f32 %v4473, 1.442695
  %v4500 = vpow.pop %v4499
  %v4501 = vmul.f32 %v4474, 1.442695
  %v4502 = vpow.pop %v4501
  %v4503 = vmul.f32 %v4475, 1.442695
  %v4504 = vpow.pop %v4503
  %v4505 = vmul.f32 %v4476, 1.442695
  %v4506 = vpow.pop %v4505
  %v4507 = vmul.f32 %v4477, 1.442695
  %v4508 = vpow.pop %v4507
  %v4509 = vmul.f32 %v4478, 1.442695
  %v4510 = vpow.pop %v4509
  %v4511 = vadd.f32 %v4480, %v4482
  %4512 = vadd.xlane.f32.xlu0 %v4511
  %v4513 = vpop.xlane.xlu0 %4512
  %v4514 = vadd.f32 %v4484, %v4486
  %4515 = vadd.xlane.f32.xlu0 %v4514
  %v4516 = vpop.xlane.xlu0 %4515
  %v4517 = vadd.f32 %v4488, %v4490
  %4518 = vadd.xlane.f32.xlu0 %v4517
  %v4519 = vpop.xlane.xlu0 %4518
  %v4520 = vadd.f32 %v4492, %v4494
  %4521 = vadd.xlane.f32.xlu0 %v4520
  %v4522 = vpop.xlane.xlu0 %4521
  %v4523 = vadd.f32 %v4496, %v4498
  %4524 = vadd.xlane.f32.xlu0 %v4523
  %v4525 = vpop.xlane.xlu0 %4524
  %v4526 = vadd.f32 %v4500, %v4502
  %4527 = vadd.xlane.f32.xlu0 %v4526
  %v4528 = vpop.xlane.xlu0 %4527
  %v4529 = vadd.f32 %v4504, %v4506
  %4530 = vadd.xlane.f32.xlu0 %v4529
  %v4531 = vpop.xlane.xlu0 %4530
  %v4532 = vadd.f32 %v4508, %v4510
  %4533 = vadd.xlane.f32.xlu0 %v4532
  %v4534 = vpop.xlane.xlu0 %4533
  %v4535 = vrcp.pop %v4513
  %v4536 = vmul.f32 %v4480, %v4535
  %v4537 = vmul.f32 %v4482, %v4535
  %v4538 = vrcp.pop %v4516
  %v4539 = vmul.f32 %v4484, %v4538
  %v4540 = vmul.f32 %v4486, %v4538
  %v4541 = vrcp.pop %v4519
  %v4542 = vmul.f32 %v4488, %v4541
  %v4543 = vmul.f32 %v4490, %v4541
  %v4544 = vrcp.pop %v4522
  %v4545 = vmul.f32 %v4492, %v4544
  %v4546 = vmul.f32 %v4494, %v4544
  %v4547 = vrcp.pop %v4525
  %v4548 = vmul.f32 %v4496, %v4547
  %v4549 = vmul.f32 %v4498, %v4547
  %v4550 = vrcp.pop %v4528
  %v4551 = vmul.f32 %v4500, %v4550
  %v4552 = vmul.f32 %v4502, %v4550
  %v4553 = vrcp.pop %v4531
  %v4554 = vmul.f32 %v4504, %v4553
  %v4555 = vmul.f32 %v4506, %v4553
  %v4556 = vrcp.pop %v4534
  %v4557 = vmul.f32 %v4508, %v4556
  %v4558 = vmul.f32 %v4510, %v4556
  %4560 = vrot.lane.b32.xlu0 %v3839, 64
  %v4561 = vpop.permute.xlu0 %4560
  %v4562 = vsel %vm897, %v4561, 0
  %4564 = vmatprep.subr.mxu0 %v4537
  %4565 = vmatpush1.msra.mxu0 %v4536
  %4566 = vmatprep.subr.mxu0 %v4540
  %4567 = vmatpush1.msra.mxu0 %v4539
  %4568 = vmatprep.subr.mxu0 %v4543
  %4569 = vmatpush1.msra.mxu0 %v4542
  %4570 = vmatprep.subr.mxu0 %v4546
  %4571 = vmatpush1.msra.mxu0 %v4545
  %4572 = vmatprep.subr.mxu0 %v4549
  %4573 = vmatpush1.msra.mxu0 %v4548
  %4574 = vmatprep.subr.mxu0 %v4552
  %4575 = vmatpush1.msra.mxu0 %v4551
  %4576 = vmatprep.subr.mxu0 %v4555
  %4577 = vmatpush1.msra.mxu0 %v4554
  %4578 = vmatprep.subr.mxu0 %v4558
  %4579 = vmatpush1.msra.mxu0 %v4557
  %4580 = vmatprep.subr.mxu0 0.0
  %4581 = vmatpush1.msra.mxu0 0.0
  %4582 = vmatprep.subr.mxu0 0.0
  %4583 = vmatpush1.msra.mxu0 0.0
  %4584 = vmatprep.subr.mxu0 0.0
  %4585 = vmatpush1.msra.mxu0 0.0
  %4586 = vmatprep.subr.mxu0 0.0
  %4587 = vmatpush1.msra.mxu0 0.0
  %4588 = vmatprep.subr.mxu0 0.0
  %4589 = vmatpush1.msra.mxu0 0.0
  %4590 = vmatprep.subr.mxu0 0.0
  %4591 = vmatpush1.msra.mxu0 0.0
  %4592 = vmatprep.subr.mxu0 0.0
  %4593 = vmatpush1.msra.mxu0 0.0
  %4594 = vmatprep.subr.mxu0 0.0
  %4595 = vmatpush1.msra.mxu0 0.0
  %4596 = vmatprep.subr.mxu0 0.0
  %4597 = vmatpush1.msra.mxu0 0.0
  %4598 = vmatprep.subr.mxu0 0.0
  %4599 = vmatpush1.msra.mxu0 0.0
  %4600 = vmatprep.subr.mxu0 0.0
  %4601 = vmatpush1.msra.mxu0 0.0
  %4602 = vmatprep.subr.mxu0 0.0
  %4603 = vmatpush1.msra.mxu0 0.0
  %4604 = vmatprep.subr.mxu0 0.0
  %4605 = vmatpush1.msra.mxu0 0.0
  %4606 = vmatprep.subr.mxu0 0.0
  %4607 = vmatpush1.msra.mxu0 0.0
  %4608 = vmatprep.subr.mxu0 0.0
  %4609 = vmatpush1.msra.mxu0 0.0
  %4610 = vmatprep.subr.mxu0 0.0
  %4611 = vmatpush1.msra.mxu0 0.0
  %4612 = vmatprep.subr.mxu0 0.0
  %4613 = vmatpush1.msra.mxu0 0.0
  %4614 = vmatprep.subr.mxu0 0.0
  %4615 = vmatpush1.msra.mxu0 0.0
  %4616 = vmatprep.subr.mxu0 0.0
  %4617 = vmatpush1.msra.mxu0 0.0
  %4618 = vmatprep.subr.mxu0 0.0
  %4619 = vmatpush1.msra.mxu0 0.0
  %4620 = vmatprep.subr.mxu0 0.0
  %4621 = vmatpush1.msra.mxu0 0.0
  %4622 = vmatprep.subr.mxu0 0.0
  %4623 = vmatpush1.msra.mxu0 0.0
  %4624 = vmatprep.subr.mxu0 0.0
  %4625 = vmatpush1.msra.mxu0 0.0
  %4626 = vmatprep.subr.mxu0 0.0
  %4627 = vmatpush1.msra.mxu0 0.0
  %4628 = vmatprep.mubr.f32.mxu0 0.0
  %4629 = vmatmul.mubr.f32.gmra.mrb[0].mxu0 %v4562
  %v4630 = vpop.f32.mrb[0].mxu0
  %v4631 = vadd.f32 0.0, %v4630
  %v4632 = vpop.f32.mrb[0].mxu0
  %v4633 = vadd.f32 0.0, %v4632
  %4634 = vdwg.mxu0
  %v4635 = vsel %vm897, %v3839, 0
  %4637 = vmatprep.subr.mxu0 %v4180
  %4638 = vmatpush1.msra.mxu0 %v4179
  %4639 = vmatprep.subr.mxu0 %v4183
  %4640 = vmatpush1.msra.mxu0 %v4182
  %4641 = vmatprep.subr.mxu0 %v4186
  %4642 = vmatpush1.msra.mxu0 %v4185
  %4643 = vmatprep.subr.mxu0 %v4189
  %4644 = vmatpush1.msra.mxu0 %v4188
  %4645 = vmatprep.subr.mxu0 %v4192
  %4646 = vmatpush1.msra.mxu0 %v4191
  %4647 = vmatprep.subr.mxu0 %v4195
  %4648 = vmatpush1.msra.mxu0 %v4194
  %4649 = vmatprep.subr.mxu0 %v4198
  %4650 = vmatpush1.msra.mxu0 %v4197
  %4651 = vmatprep.subr.mxu0 %v4201
  %4652 = vmatpush1.msra.mxu0 %v4200
  %4653 = vmatprep.subr.mxu0 0.0
  %4654 = vmatpush1.msra.mxu0 0.0
  %4655 = vmatprep.subr.mxu0 0.0
  %4656 = vmatpush1.msra.mxu0 0.0
  %4657 = vmatprep.subr.mxu0 0.0
  %4658 = vmatpush1.msra.mxu0 0.0
  %4659 = vmatprep.subr.mxu0 0.0
  %4660 = vmatpush1.msra.mxu0 0.0
  %4661 = vmatprep.subr.mxu0 0.0
  %4662 = vmatpush1.msra.mxu0 0.0
  %4663 = vmatprep.subr.mxu0 0.0
  %4664 = vmatpush1.msra.mxu0 0.0
  %4665 = vmatprep.subr.mxu0 0.0
  %4666 = vmatpush1.msra.mxu0 0.0
  %4667 = vmatprep.subr.mxu0 0.0
  %4668 = vmatpush1.msra.mxu0 0.0
  %4669 = vmatprep.subr.mxu0 0.0
  %4670 = vmatpush1.msra.mxu0 0.0
  %4671 = vmatprep.subr.mxu0 0.0
  %4672 = vmatpush1.msra.mxu0 0.0
  %4673 = vmatprep.subr.mxu0 0.0
  %4674 = vmatpush1.msra.mxu0 0.0
  %4675 = vmatprep.subr.mxu0 0.0
  %4676 = vmatpush1.msra.mxu0 0.0
  %4677 = vmatprep.subr.mxu0 0.0
  %4678 = vmatpush1.msra.mxu0 0.0
  %4679 = vmatprep.subr.mxu0 0.0
  %4680 = vmatpush1.msra.mxu0 0.0
  %4681 = vmatprep.subr.mxu0 0.0
  %4682 = vmatpush1.msra.mxu0 0.0
  %4683 = vmatprep.subr.mxu0 0.0
  %4684 = vmatpush1.msra.mxu0 0.0
  %4685 = vmatprep.subr.mxu0 0.0
  %4686 = vmatpush1.msra.mxu0 0.0
  %4687 = vmatprep.subr.mxu0 0.0
  %4688 = vmatpush1.msra.mxu0 0.0
  %4689 = vmatprep.subr.mxu0 0.0
  %4690 = vmatpush1.msra.mxu0 0.0
  %4691 = vmatprep.subr.mxu0 0.0
  %4692 = vmatpush1.msra.mxu0 0.0
  %4693 = vmatprep.subr.mxu0 0.0
  %4694 = vmatpush1.msra.mxu0 0.0
  %4695 = vmatprep.subr.mxu0 0.0
  %4696 = vmatpush1.msra.mxu0 0.0
  %4697 = vmatprep.subr.mxu0 0.0
  %4698 = vmatpush1.msra.mxu0 0.0
  %4699 = vmatprep.subr.mxu0 0.0
  %4700 = vmatpush1.msra.mxu0 0.0
  %4701 = vmatprep.mubr.f32.mxu0 0.0
  %4702 = vmatmul.mubr.f32.gmra.mrb[0].mxu0 %v4635
  %v4703 = vpop.f32.mrb[0].mxu0
  %v4704 = vadd.f32 %v4631, %v4703
  %v4705 = vpop.f32.mrb[0].mxu0
  %v4706 = vadd.f32 %v4633, %v4705
  %4707 = vdwg.mxu0
  %4708 = vxpose.xlu0.b32.start [1/16] %v3829, 128
  %4709 = vxpose.xlu0.b32.cont [2/16] 0.0, 128
  %4710 = vxpose.xlu0.b32.cont [3/16] 0.0, 128
  %4711 = vxpose.xlu0.b32.cont [4/16] 0.0, 128
  %4712 = vxpose.xlu0.b32.cont [5/16] 0.0, 128
  %4713 = vxpose.xlu0.b32.cont [6/16] 0.0, 128
  %4714 = vxpose.xlu0.b32.cont [7/16] 0.0, 128
  %4715 = vxpose.xlu0.b32.cont [8/16] 0.0, 128
  %4716 = vxpose.xlu0.b32.cont [9/16] 0.0, 128
  %4717 = vxpose.xlu0.b32.cont [10/16] 0.0, 128
  %4718 = vxpose.xlu0.b32.cont [11/16] 0.0, 128
  %4719 = vxpose.xlu0.b32.cont [12/16] 0.0, 128
  %4720 = vxpose.xlu0.b32.cont [13/16] 0.0, 128
  %4721 = vxpose.xlu0.b32.cont [14/16] 0.0, 128
  %4722 = vxpose.xlu0.b32.cont [15/16] 0.0, 128
  %4723 = vxpose.xlu0.b32.end [16/16] 0.0, 128
  %v4724 = vpop.trf.xlu0
  %v4725 = vpop.trf.xlu0
  %v4726 = vpop.trf.xlu0
  %v4727 = vpop.trf.xlu0
  %v4728 = vpop.trf.xlu0
  %v4729 = vpop.trf.xlu0
  %v4730 = vpop.trf.xlu0
  %v4731 = vpop.trf.xlu0
  %v4732 = vpop.trf.xlu0
  %v4733 = vpop.trf.xlu0
  %v4734 = vpop.trf.xlu0
  %v4735 = vpop.trf.xlu0
  %v4736 = vpop.trf.xlu0
  %v4737 = vpop.trf.xlu0
  %v4738 = vpop.trf.xlu0
  %v4739 = vpop.trf.xlu0
  %v4741 = vsel %vm207, %v4724, 0
  %v4744 = vsel %vm207, %v4725, 0
  %v4747 = vsel %vm207, %v4726, 0
  %v4750 = vsel %vm207, %v4727, 0
  %v4753 = vsel %vm207, %v4728, 0
  %v4756 = vsel %vm207, %v4729, 0
  %v4759 = vsel %vm207, %v4730, 0
  %v4762 = vsel %vm207, %v4731, 0
  %4764 = vmatprep.subr.mxu0 %v3817
  %4765 = vmatpush1.msra.mxu0 %v3815
  %4766 = vmatprep.subr.mxu0 0.0
  %4767 = vmatpush1.msra.mxu0 0.0
  %4768 = vmatprep.subr.mxu0 0.0
  %4769 = vmatpush1.msra.mxu0 0.0
  %4770 = vmatprep.subr.mxu0 0.0
  %4771 = vmatpush1.msra.mxu0 0.0
  %4772 = vmatprep.subr.mxu0 0.0
  %4773 = vmatpush1.msra.mxu0 0.0
  %4774 = vmatprep.subr.mxu0 0.0
  %4775 = vmatpush1.msra.mxu0 0.0
  %4776 = vmatprep.subr.mxu0 0.0
  %4777 = vmatpush1.msra.mxu0 0.0
  %4778 = vmatprep.subr.mxu0 0.0
  %4779 = vmatpush1.msra.mxu0 0.0
  %4780 = vmatprep.subr.mxu0 0.0
  %4781 = vmatpush1.msra.mxu0 0.0
  %4782 = vmatprep.subr.mxu0 0.0
  %4783 = vmatpush1.msra.mxu0 0.0
  %4784 = vmatprep.subr.mxu0 0.0
  %4785 = vmatpush1.msra.mxu0 0.0
  %4786 = vmatprep.subr.mxu0 0.0
  %4787 = vmatpush1.msra.mxu0 0.0
  %4788 = vmatprep.subr.mxu0 0.0
  %4789 = vmatpush1.msra.mxu0 0.0
  %4790 = vmatprep.subr.mxu0 0.0
  %4791 = vmatpush1.msra.mxu0 0.0
  %4792 = vmatprep.subr.mxu0 0.0
  %4793 = vmatpush1.msra.mxu0 0.0
  %4794 = vmatprep.subr.mxu0 0.0
  %4795 = vmatpush1.msra.mxu0 0.0
  %4796 = vmatprep.subr.mxu0 0.0
  %4797 = vmatpush1.msra.mxu0 0.0
  %4798 = vmatprep.subr.mxu0 0.0
  %4799 = vmatpush1.msra.mxu0 0.0
  %4800 = vmatprep.subr.mxu0 0.0
  %4801 = vmatpush1.msra.mxu0 0.0
  %4802 = vmatprep.subr.mxu0 0.0
  %4803 = vmatpush1.msra.mxu0 0.0
  %4804 = vmatprep.subr.mxu0 0.0
  %4805 = vmatpush1.msra.mxu0 0.0
  %4806 = vmatprep.subr.mxu0 0.0
  %4807 = vmatpush1.msra.mxu0 0.0
  %4808 = vmatprep.subr.mxu0 0.0
  %4809 = vmatpush1.msra.mxu0 0.0
  %4810 = vmatprep.subr.mxu0 0.0
  %4811 = vmatpush1.msra.mxu0 0.0
  %4812 = vmatprep.subr.mxu0 0.0
  %4813 = vmatpush1.msra.mxu0 0.0
  %4814 = vmatprep.subr.mxu0 0.0
  %4815 = vmatpush1.msra.mxu0 0.0
  %4816 = vmatprep.subr.mxu0 0.0
  %4817 = vmatpush1.msra.mxu0 0.0
  %4818 = vmatprep.subr.mxu0 0.0
  %4819 = vmatpush1.msra.mxu0 0.0
  %4820 = vmatprep.subr.mxu0 0.0
  %4821 = vmatpush1.msra.mxu0 0.0
  %4822 = vmatprep.subr.mxu0 0.0
  %4823 = vmatpush1.msra.mxu0 0.0
  %4824 = vmatprep.subr.mxu0 0.0
  %4825 = vmatpush1.msra.mxu0 0.0
  %4826 = vmatprep.subr.mxu0 0.0
  %4827 = vmatpush1.msra.mxu0 0.0
  %4828 = vmatprep.mubr.f32.mxu0 0.0
  %4829 = vmatmul.mubr.f32.gmra.mrb[0].mxu0 %v4741
  %v4830 = vpop.f32.mrb[0].mxu0
  %v4831 = vadd.f32 0.0, %v4830
  %v4832 = vpop.f32.mrb[0].mxu0
  %v4833 = vadd.f32 0.0, %v4832
  %4834 = vmatprep.mubr.f32.mxu0 0.0
  %4835 = vmatmul.mubr.f32.gmra.mrb[0].mxu0 %v4744
  %v4836 = vpop.f32.mrb[0].mxu0
  %v4837 = vadd.f32 0.0, %v4836
  %v4838 = vpop.f32.mrb[0].mxu0
  %v4839 = vadd.f32 0.0, %v4838
  %4840 = vmatprep.mubr.f32.mxu0 0.0
  %4841 = vmatmul.mubr.f32.gmra.mrb[0].mxu0 %v4747
  %v4842 = vpop.f32.mrb[0].mxu0
  %v4843 = vadd.f32 0.0, %v4842
  %v4844 = vpop.f32.mrb[0].mxu0
  %v4845 = vadd.f32 0.0, %v4844
  %4846 = vmatprep.mubr.f32.mxu0 0.0
  %4847 = vmatmul.mubr.f32.gmra.mrb[0].mxu0 %v4750
  %v4848 = vpop.f32.mrb[0].mxu0
  %v4849 = vadd.f32 0.0, %v4848
  %v4850 = vpop.f32.mrb[0].mxu0
  %v4851 = vadd.f32 0.0, %v4850
  %4852 = vmatprep.mubr.f32.mxu0 0.0
  %4853 = vmatmul.mubr.f32.gmra.mrb[0].mxu0 %v4753
  %v4854 = vpop.f32.mrb[0].mxu0
  %v4855 = vadd.f32 0.0, %v4854
  %v4856 = vpop.f32.mrb[0].mxu0
  %v4857 = vadd.f32 0.0, %v4856
  %4858 = vmatprep.mubr.f32.mxu0 0.0
  %4859 = vmatmul.mubr.f32.gmra.mrb[0].mxu0 %v4756
  %v4860 = vpop.f32.mrb[0].mxu0
  %v4861 = vadd.f32 0.0, %v4860
  %v4862 = vpop.f32.mrb[0].mxu0
  %v4863 = vadd.f32 0.0, %v4862
  %4864 = vmatprep.mubr.f32.mxu0 0.0
  %4865 = vmatmul.mubr.f32.gmra.mrb[0].mxu0 %v4759
  %v4866 = vpop.f32.mrb[0].mxu0
  %v4867 = vadd.f32 0.0, %v4866
  %v4868 = vpop.f32.mrb[0].mxu0
  %v4869 = vadd.f32 0.0, %v4868
  %4870 = vmatprep.mubr.f32.mxu0 0.0
  %4871 = vmatmul.mubr.f32.gmra.mrb[0].mxu0 %v4762
  %v4872 = vpop.f32.mrb[0].mxu0
  %v4873 = vadd.f32 0.0, %v4872
  %v4874 = vpop.f32.mrb[0].mxu0
  %v4875 = vadd.f32 0.0, %v4874
  %4876 = vdwg.mxu0
  %v4877 = vld [vmem:[%s2 + $0x80] sm:$0xff]
  %v4878 = vld [vmem:[%s2 + $0x88] sm:$0xff]
  %v4879 = vld [vmem:[%s2 + $0x90] sm:$0xff]
  %v4880 = vld [vmem:[%s2 + $0x98] sm:$0xff]
  %v4881 = vld [vmem:[%s2 + $0xa0] sm:$0xff]
  %v4882 = vld [vmem:[%s2 + $0xa8] sm:$0xff]
  %v4883 = vld [vmem:[%s2 + $0xb0] sm:$0xff]
  %v4884 = vld [vmem:[%s2 + $0xb8] sm:$0xff]
  %4885 = vset.pattern.permute.xlu0 0
  %4886 = vperm.xlu0 %4885, %v4877
  %v4887 = vpop.permute.xlu0 %4886
  %4888 = vset.pattern.permute.xlu0 0
  %4889 = vperm.xlu0 %4888, %v4878
  %v4890 = vpop.permute.xlu0 %4889
  %4891 = vset.pattern.permute.xlu0 0
  %4892 = vperm.xlu0 %4891, %v4879
  %v4893 = vpop.permute.xlu0 %4892
  %4894 = vset.pattern.permute.xlu0 0
  %4895 = vperm.xlu0 %4894, %v4880
  %v4896 = vpop.permute.xlu0 %4895
  %4897 = vset.pattern.permute.xlu0 0
  %4898 = vperm.xlu0 %4897, %v4881
  %v4899 = vpop.permute.xlu0 %4898
  %4900 = vset.pattern.permute.xlu0 0
  %4901 = vperm.xlu0 %4900, %v4882
  %v4902 = vpop.permute.xlu0 %4901
  %4903 = vset.pattern.permute.xlu0 0
  %4904 = vperm.xlu0 %4903, %v4883
  %v4905 = vpop.permute.xlu0 %4904
  %4906 = vset.pattern.permute.xlu0 0
  %4907 = vperm.xlu0 %4906, %v4884
  %v4908 = vpop.permute.xlu0 %4907
  %vm4909 = vcmp.eq.s32.totalorder %v4887, %v380
  %vm4910 = vcmp.eq.s32.totalorder %v4887, %v384
  %vm4911 = vcmp.eq.s32.totalorder %v4890, %v380
  %vm4912 = vcmp.eq.s32.totalorder %v4890, %v384
  %vm4913 = vcmp.eq.s32.totalorder %v4893, %v380
  %vm4914 = vcmp.eq.s32.totalorder %v4893, %v384
  %vm4915 = vcmp.eq.s32.totalorder %v4896, %v380
  %vm4916 = vcmp.eq.s32.totalorder %v4896, %v384
  %vm4917 = vcmp.eq.s32.totalorder %v4899, %v380
  %vm4918 = vcmp.eq.s32.totalorder %v4899, %v384
  %vm4919 = vcmp.eq.s32.totalorder %v4902, %v380
  %vm4920 = vcmp.eq.s32.totalorder %v4902, %v384
  %vm4921 = vcmp.eq.s32.totalorder %v4905, %v380
  %vm4922 = vcmp.eq.s32.totalorder %v4905, %v384
  %vm4923 = vcmp.eq.s32.totalorder %v4908, %v380
  %vm4924 = vcmp.eq.s32.totalorder %v4908, %v384
  %v4925 = vsel %vm4909, %v4831, -1e+30
  %v4926 = vsel %vm4910, %v4833, -1e+30
  %v4927 = vsel %vm4911, %v4837, -1e+30
  %v4928 = vsel %vm4912, %v4839, -1e+30
  %v4929 = vsel %vm4913, %v4843, -1e+30
  %v4930 = vsel %vm4914, %v4845, -1e+30
  %v4931 = vsel %vm4915, %v4849, -1e+30
  %v4932 = vsel %vm4916, %v4851, -1e+30
  %v4933 = vsel %vm4917, %v4855, -1e+30
  %v4934 = vsel %vm4918, %v4857, -1e+30
  %v4935 = vsel %vm4919, %v4861, -1e+30
  %v4936 = vsel %vm4920, %v4863, -1e+30
  %v4937 = vsel %vm4921, %v4867, -1e+30
  %v4938 = vsel %vm4922, %v4869, -1e+30
  %v4939 = vsel %vm4923, %v4873, -1e+30
  %v4940 = vsel %vm4924, %v4875, -1e+30
  %v4941 = vmax.f32 %v4925, %v4926
  %4942 = vmax.xlane.f32.xlu0 %v4941
  %v4943 = vpop.xlane.xlu0 %4942
  %v4944 = vmax.f32 %v4927, %v4928
  %4945 = vmax.xlane.f32.xlu0 %v4944
  %v4946 = vpop.xlane.xlu0 %4945
  %v4947 = vmax.f32 %v4929, %v4930
  %4948 = vmax.xlane.f32.xlu0 %v4947
  %v4949 = vpop.xlane.xlu0 %4948
  %v4950 = vmax.f32 %v4931, %v4932
  %4951 = vmax.xlane.f32.xlu0 %v4950
  %v4952 = vpop.xlane.xlu0 %4951
  %v4953 = vmax.f32 %v4933, %v4934
  %4954 = vmax.xlane.f32.xlu0 %v4953
  %v4955 = vpop.xlane.xlu0 %4954
  %v4956 = vmax.f32 %v4935, %v4936
  %4957 = vmax.xlane.f32.xlu0 %v4956
  %v4958 = vpop.xlane.xlu0 %4957
  %v4959 = vmax.f32 %v4937, %v4938
  %4960 = vmax.xlane.f32.xlu0 %v4959
  %v4961 = vpop.xlane.xlu0 %4960
  %v4962 = vmax.f32 %v4939, %v4940
  %4963 = vmax.xlane.f32.xlu0 %v4962
  %v4964 = vpop.xlane.xlu0 %4963
  %v4965 = vsub.f32 %v4925, %v4943
  %v4966 = vsub.f32 %v4926, %v4943
  %v4967 = vsub.f32 %v4927, %v4946
  %v4968 = vsub.f32 %v4928, %v4946
  %v4969 = vsub.f32 %v4929, %v4949
  %v4970 = vsub.f32 %v4930, %v4949
  %v4971 = vsub.f32 %v4931, %v4952
  %v4972 = vsub.f32 %v4932, %v4952
  %v4973 = vsub.f32 %v4933, %v4955
  %v4974 = vsub.f32 %v4934, %v4955
  %v4975 = vsub.f32 %v4935, %v4958
  %v4976 = vsub.f32 %v4936, %v4958
  %v4977 = vsub.f32 %v4937, %v4961
  %v4978 = vsub.f32 %v4938, %v4961
  %v4979 = vsub.f32 %v4939, %v4964
  %v4980 = vsub.f32 %v4940, %v4964
  %v4981 = vmul.f32 %v4965, 1.442695
  %v4982 = vpow.pop %v4981
  %v4983 = vmul.f32 %v4966, 1.442695
  %v4984 = vpow.pop %v4983
  %v4985 = vmul.f32 %v4967, 1.442695
  %v4986 = vpow.pop %v4985
  %v4987 = vmul.f32 %v4968, 1.442695
  %v4988 = vpow.pop %v4987
  %v4989 = vmul.f32 %v4969, 1.442695
  %v4990 = vpow.pop %v4989
  %v4991 = vmul.f32 %v4970, 1.442695
  %v4992 = vpow.pop %v4991
  %v4993 = vmul.f32 %v4971, 1.442695
  %v4994 = vpow.pop %v4993
  %v4995 = vmul.f32 %v4972, 1.442695
  %v4996 = vpow.pop %v4995
  %v4997 = vmul.f32 %v4973, 1.442695
  %v4998 = vpow.pop %v4997
  %v4999 = vmul.f32 %v4974, 1.442695
  %v5000 = vpow.pop %v4999
  %v5001 = vmul.f32 %v4975, 1.442695
  %v5002 = vpow.pop %v5001
  %v5003 = vmul.f32 %v4976, 1.442695
  %v5004 = vpow.pop %v5003
  %v5005 = vmul.f32 %v4977, 1.442695
  %v5006 = vpow.pop %v5005
  %v5007 = vmul.f32 %v4978, 1.442695
  %v5008 = vpow.pop %v5007
  %v5009 = vmul.f32 %v4979, 1.442695
  %v5010 = vpow.pop %v5009
  %v5011 = vmul.f32 %v4980, 1.442695
  %v5012 = vpow.pop %v5011
  %v5013 = vadd.f32 %v4982, %v4984
  %5014 = vadd.xlane.f32.xlu0 %v5013
  %v5015 = vpop.xlane.xlu0 %5014
  %v5016 = vadd.f32 %v4986, %v4988
  %5017 = vadd.xlane.f32.xlu0 %v5016
  %v5018 = vpop.xlane.xlu0 %5017
  %v5019 = vadd.f32 %v4990, %v4992
  %5020 = vadd.xlane.f32.xlu0 %v5019
  %v5021 = vpop.xlane.xlu0 %5020
  %v5022 = vadd.f32 %v4994, %v4996
  %5023 = vadd.xlane.f32.xlu0 %v5022
  %v5024 = vpop.xlane.xlu0 %5023
  %v5025 = vadd.f32 %v4998, %v5000
  %5026 = vadd.xlane.f32.xlu0 %v5025
  %v5027 = vpop.xlane.xlu0 %5026
  %v5028 = vadd.f32 %v5002, %v5004
  %5029 = vadd.xlane.f32.xlu0 %v5028
  %v5030 = vpop.xlane.xlu0 %5029
  %v5031 = vadd.f32 %v5006, %v5008
  %5032 = vadd.xlane.f32.xlu0 %v5031
  %v5033 = vpop.xlane.xlu0 %5032
  %v5034 = vadd.f32 %v5010, %v5012
  %5035 = vadd.xlane.f32.xlu0 %v5034
  %v5036 = vpop.xlane.xlu0 %5035
  %v5037 = vrcp.pop %v5015
  %v5038 = vmul.f32 %v4982, %v5037
  %v5039 = vmul.f32 %v4984, %v5037
  %v5040 = vrcp.pop %v5018
  %v5041 = vmul.f32 %v4986, %v5040
  %v5042 = vmul.f32 %v4988, %v5040
  %v5043 = vrcp.pop %v5021
  %v5044 = vmul.f32 %v4990, %v5043
  %v5045 = vmul.f32 %v4992, %v5043
  %v5046 = vrcp.pop %v5024
  %v5047 = vmul.f32 %v4994, %v5046
  %v5048 = vmul.f32 %v4996, %v5046
  %v5049 = vrcp.pop %v5027
  %v5050 = vmul.f32 %v4998, %v5049
  %v5051 = vmul.f32 %v5000, %v5049
  %v5052 = vrcp.pop %v5030
  %v5053 = vmul.f32 %v5002, %v5052
  %v5054 = vmul.f32 %v5004, %v5052
  %v5055 = vrcp.pop %v5033
  %v5056 = vmul.f32 %v5006, %v5055
  %v5057 = vmul.f32 %v5008, %v5055
  %v5058 = vrcp.pop %v5036
  %v5059 = vmul.f32 %v5010, %v5058
  %v5060 = vmul.f32 %v5012, %v5058
  %v5062 = vsel %vm897, %v3841, 0
  %5064 = vmatprep.subr.mxu0 %v5039
  %5065 = vmatpush1.msra.mxu0 %v5038
  %5066 = vmatprep.subr.mxu0 %v5042
  %5067 = vmatpush1.msra.mxu0 %v5041
  %5068 = vmatprep.subr.mxu0 %v5045
  %5069 = vmatpush1.msra.mxu0 %v5044
  %5070 = vmatprep.subr.mxu0 %v5048
  %5071 = vmatpush1.msra.mxu0 %v5047
  %5072 = vmatprep.subr.mxu0 %v5051
  %5073 = vmatpush1.msra.mxu0 %v5050
  %5074 = vmatprep.subr.mxu0 %v5054
  %5075 = vmatpush1.msra.mxu0 %v5053
  %5076 = vmatprep.subr.mxu0 %v5057
  %5077 = vmatpush1.msra.mxu0 %v5056
  %5078 = vmatprep.subr.mxu0 %v5060
  %5079 = vmatpush1.msra.mxu0 %v5059
  %5080 = vmatprep.subr.mxu0 0.0
  %5081 = vmatpush1.msra.mxu0 0.0
  %5082 = vmatprep.subr.mxu0 0.0
  %5083 = vmatpush1.msra.mxu0 0.0
  %5084 = vmatprep.subr.mxu0 0.0
  %5085 = vmatpush1.msra.mxu0 0.0
  %5086 = vmatprep.subr.mxu0 0.0
  %5087 = vmatpush1.msra.mxu0 0.0
  %5088 = vmatprep.subr.mxu0 0.0
  %5089 = vmatpush1.msra.mxu0 0.0
  %5090 = vmatprep.subr.mxu0 0.0
  %5091 = vmatpush1.msra.mxu0 0.0
  %5092 = vmatprep.subr.mxu0 0.0
  %5093 = vmatpush1.msra.mxu0 0.0
  %5094 = vmatprep.subr.mxu0 0.0
  %5095 = vmatpush1.msra.mxu0 0.0
  %5096 = vmatprep.subr.mxu0 0.0
  %5097 = vmatpush1.msra.mxu0 0.0
  %5098 = vmatprep.subr.mxu0 0.0
  %5099 = vmatpush1.msra.mxu0 0.0
  %5100 = vmatprep.subr.mxu0 0.0
  %5101 = vmatpush1.msra.mxu0 0.0
  %5102 = vmatprep.subr.mxu0 0.0
  %5103 = vmatpush1.msra.mxu0 0.0
  %5104 = vmatprep.subr.mxu0 0.0
  %5105 = vmatpush1.msra.mxu0 0.0
  %5106 = vmatprep.subr.mxu0 0.0
  %5107 = vmatpush1.msra.mxu0 0.0
  %5108 = vmatprep.subr.mxu0 0.0
  %5109 = vmatpush1.msra.mxu0 0.0
  %5110 = vmatprep.subr.mxu0 0.0
  %5111 = vmatpush1.msra.mxu0 0.0
  %5112 = vmatprep.subr.mxu0 0.0
  %5113 = vmatpush1.msra.mxu0 0.0
  %5114 = vmatprep.subr.mxu0 0.0
  %5115 = vmatpush1.msra.mxu0 0.0
  %5116 = vmatprep.subr.mxu0 0.0
  %5117 = vmatpush1.msra.mxu0 0.0
  %5118 = vmatprep.subr.mxu0 0.0
  %5119 = vmatpush1.msra.mxu0 0.0
  %5120 = vmatprep.subr.mxu0 0.0
  %5121 = vmatpush1.msra.mxu0 0.0
  %5122 = vmatprep.subr.mxu0 0.0
  %5123 = vmatpush1.msra.mxu0 0.0
  %5124 = vmatprep.subr.mxu0 0.0
  %5125 = vmatpush1.msra.mxu0 0.0
  %5126 = vmatprep.subr.mxu0 0.0
  %5127 = vmatpush1.msra.mxu0 0.0
  %5128 = vmatprep.mubr.f32.mxu0 0.0
  %5129 = vmatmul.mubr.f32.gmra.mrb[0].mxu0 %v5062
  %v5130 = vpop.f32.mrb[0].mxu0
  %v5131 = vadd.f32 0.0, %v5130
  %v5132 = vpop.f32.mrb[0].mxu0
  %v5133 = vadd.f32 0.0, %v5132
  %5134 = vdwg.mxu0
  %v5135 = vadd.f32 %v4704, %v5131
  %v5136 = vadd.f32 %v4706, %v5133
  %5138 = vrot.lane.b32.xlu0 %v3829, 64
  %v5139 = vpop.permute.xlu0 %5138
  %5141 = vxpose.xlu0.b32.start [1/16] %v5139, 128
  %5142 = vxpose.xlu0.b32.cont [2/16] 0.0, 128
  %5143 = vxpose.xlu0.b32.cont [3/16] 0.0, 128
  %5144 = vxpose.xlu0.b32.cont [4/16] 0.0, 128
  %5145 = vxpose.xlu0.b32.cont [5/16] 0.0, 128
  %5146 = vxpose.xlu0.b32.cont [6/16] 0.0, 128
  %5147 = vxpose.xlu0.b32.cont [7/16] 0.0, 128
  %5148 = vxpose.xlu0.b32.cont [8/16] 0.0, 128
  %5149 = vxpose.xlu0.b32.cont [9/16] 0.0, 128
  %5150 = vxpose.xlu0.b32.cont [10/16] 0.0, 128
  %5151 = vxpose.xlu0.b32.cont [11/16] 0.0, 128
  %5152 = vxpose.xlu0.b32.cont [12/16] 0.0, 128
  %5153 = vxpose.xlu0.b32.cont [13/16] 0.0, 128
  %5154 = vxpose.xlu0.b32.cont [14/16] 0.0, 128
  %5155 = vxpose.xlu0.b32.cont [15/16] 0.0, 128
  %5156 = vxpose.xlu0.b32.end [16/16] 0.0, 128
  %v5157 = vpop.trf.xlu0
  %v5158 = vpop.trf.xlu0
  %v5159 = vpop.trf.xlu0
  %v5160 = vpop.trf.xlu0
  %v5161 = vpop.trf.xlu0
  %v5162 = vpop.trf.xlu0
  %v5163 = vpop.trf.xlu0
  %v5164 = vpop.trf.xlu0
  %v5165 = vpop.trf.xlu0
  %v5166 = vpop.trf.xlu0
  %v5167 = vpop.trf.xlu0
  %v5168 = vpop.trf.xlu0
  %v5169 = vpop.trf.xlu0
  %v5170 = vpop.trf.xlu0
  %v5171 = vpop.trf.xlu0
  %v5172 = vpop.trf.xlu0
  %v5174 = vsel %vm207, %v5157, 0
  %v5177 = vsel %vm207, %v5158, 0
  %v5180 = vsel %vm207, %v5159, 0
  %v5183 = vsel %vm207, %v5160, 0
  %v5186 = vsel %vm207, %v5161, 0
  %v5189 = vsel %vm207, %v5162, 0
  %v5192 = vsel %vm207, %v5163, 0
  %v5195 = vsel %vm207, %v5164, 0
  %5197 = vmatprep.subr.mxu0 %v3817
  %5198 = vmatpush1.msra.mxu0 %v3815
  %5199 = vmatprep.subr.mxu0 0.0
  %5200 = vmatpush1.msra.mxu0 0.0
  %5201 = vmatprep.subr.mxu0 0.0
  %5202 = vmatpush1.msra.mxu0 0.0
  %5203 = vmatprep.subr.mxu0 0.0
  %5204 = vmatpush1.msra.mxu0 0.0
  %5205 = vmatprep.subr.mxu0 0.0
  %5206 = vmatpush1.msra.mxu0 0.0
  %5207 = vmatprep.subr.mxu0 0.0
  %5208 = vmatpush1.msra.mxu0 0.0
  %5209 = vmatprep.subr.mxu0 0.0
  %5210 = vmatpush1.msra.mxu0 0.0
  %5211 = vmatprep.subr.mxu0 0.0
  %5212 = vmatpush1.msra.mxu0 0.0
  %5213 = vmatprep.subr.mxu0 0.0
  %5214 = vmatpush1.msra.mxu0 0.0
  %5215 = vmatprep.subr.mxu0 0.0
  %5216 = vmatpush1.msra.mxu0 0.0
  %5217 = vmatprep.subr.mxu0 0.0
  %5218 = vmatpush1.msra.mxu0 0.0
  %5219 = vmatprep.subr.mxu0 0.0
  %5220 = vmatpush1.msra.mxu0 0.0
  %5221 = vmatprep.subr.mxu0 0.0
  %5222 = vmatpush1.msra.mxu0 0.0
  %5223 = vmatprep.subr.mxu0 0.0
  %5224 = vmatpush1.msra.mxu0 0.0
  %5225 = vmatprep.subr.mxu0 0.0
  %5226 = vmatpush1.msra.mxu0 0.0
  %5227 = vmatprep.subr.mxu0 0.0
  %5228 = vmatpush1.msra.mxu0 0.0
  %5229 = vmatprep.subr.mxu0 0.0
  %5230 = vmatpush1.msra.mxu0 0.0
  %5231 = vmatprep.subr.mxu0 0.0
  %5232 = vmatpush1.msra.mxu0 0.0
  %5233 = vmatprep.subr.mxu0 0.0
  %5234 = vmatpush1.msra.mxu0 0.0
  %5235 = vmatprep.subr.mxu0 0.0
  %5236 = vmatpush1.msra.mxu0 0.0
  %5237 = vmatprep.subr.mxu0 0.0
  %5238 = vmatpush1.msra.mxu0 0.0
  %5239 = vmatprep.subr.mxu0 0.0
  %5240 = vmatpush1.msra.mxu0 0.0
  %5241 = vmatprep.subr.mxu0 0.0
  %5242 = vmatpush1.msra.mxu0 0.0
  %5243 = vmatprep.subr.mxu0 0.0
  %5244 = vmatpush1.msra.mxu0 0.0
  %5245 = vmatprep.subr.mxu0 0.0
  %5246 = vmatpush1.msra.mxu0 0.0
  %5247 = vmatprep.subr.mxu0 0.0
  %5248 = vmatpush1.msra.mxu0 0.0
  %5249 = vmatprep.subr.mxu0 0.0
  %5250 = vmatpush1.msra.mxu0 0.0
  %5251 = vmatprep.subr.mxu0 0.0
  %5252 = vmatpush1.msra.mxu0 0.0
  %5253 = vmatprep.subr.mxu0 0.0
  %5254 = vmatpush1.msra.mxu0 0.0
  %5255 = vmatprep.subr.mxu0 0.0
  %5256 = vmatpush1.msra.mxu0 0.0
  %5257 = vmatprep.subr.mxu0 0.0
  %5258 = vmatpush1.msra.mxu0 0.0
  %5259 = vmatprep.subr.mxu0 0.0
  %5260 = vmatpush1.msra.mxu0 0.0
  %5261 = vmatprep.mubr.f32.mxu0 0.0
  %5262 = vmatmul.mubr.f32.gmra.mrb[0].mxu0 %v5174
  %v5263 = vpop.f32.mrb[0].mxu0
  %v5264 = vadd.f32 0.0, %v5263
  %v5265 = vpop.f32.mrb[0].mxu0
  %v5266 = vadd.f32 0.0, %v5265
  %5267 = vmatprep.mubr.f32.mxu0 0.0
  %5268 = vmatmul.mubr.f32.gmra.mrb[0].mxu0 %v5177
  %v5269 = vpop.f32.mrb[0].mxu0
  %v5270 = vadd.f32 0.0, %v5269
  %v5271 = vpop.f32.mrb[0].mxu0
  %v5272 = vadd.f32 0.0, %v5271
  %5273 = vmatprep.mubr.f32.mxu0 0.0
  %5274 = vmatmul.mubr.f32.gmra.mrb[0].mxu0 %v5180
  %v5275 = vpop.f32.mrb[0].mxu0
  %v5276 = vadd.f32 0.0, %v5275
  %v5277 = vpop.f32.mrb[0].mxu0
  %v5278 = vadd.f32 0.0, %v5277
  %5279 = vmatprep.mubr.f32.mxu0 0.0
  %5280 = vmatmul.mubr.f32.gmra.mrb[0].mxu0 %v5183
  %v5281 = vpop.f32.mrb[0].mxu0
  %v5282 = vadd.f32 0.0, %v5281
  %v5283 = vpop.f32.mrb[0].mxu0
  %v5284 = vadd.f32 0.0, %v5283
  %5285 = vmatprep.mubr.f32.mxu0 0.0
  %5286 = vmatmul.mubr.f32.gmra.mrb[0].mxu0 %v5186
  %v5287 = vpop.f32.mrb[0].mxu0
  %v5288 = vadd.f32 0.0, %v5287
  %v5289 = vpop.f32.mrb[0].mxu0
  %v5290 = vadd.f32 0.0, %v5289
  %5291 = vmatprep.mubr.f32.mxu0 0.0
  %5292 = vmatmul.mubr.f32.gmra.mrb[0].mxu0 %v5189
  %v5293 = vpop.f32.mrb[0].mxu0
  %v5294 = vadd.f32 0.0, %v5293
  %v5295 = vpop.f32.mrb[0].mxu0
  %v5296 = vadd.f32 0.0, %v5295
  %5297 = vmatprep.mubr.f32.mxu0 0.0
  %5298 = vmatmul.mubr.f32.gmra.mrb[0].mxu0 %v5192
  %v5299 = vpop.f32.mrb[0].mxu0
  %v5300 = vadd.f32 0.0, %v5299
  %v5301 = vpop.f32.mrb[0].mxu0
  %v5302 = vadd.f32 0.0, %v5301
  %5303 = vmatprep.mubr.f32.mxu0 0.0
  %5304 = vmatmul.mubr.f32.gmra.mrb[0].mxu0 %v5195
  %v5305 = vpop.f32.mrb[0].mxu0
  %v5306 = vadd.f32 0.0, %v5305
  %v5307 = vpop.f32.mrb[0].mxu0
  %v5308 = vadd.f32 0.0, %v5307
  %5309 = vdwg.mxu0
  %v5310 = vld [vmem:[%s2 + $0xc0] sm:$0xff]
  %v5311 = vld [vmem:[%s2 + $0xc8] sm:$0xff]
  %v5312 = vld [vmem:[%s2 + $0xd0] sm:$0xff]
  %v5313 = vld [vmem:[%s2 + $0xd8] sm:$0xff]
  %v5314 = vld [vmem:[%s2 + $0xe0] sm:$0xff]
  %v5315 = vld [vmem:[%s2 + $0xe8] sm:$0xff]
  %v5316 = vld [vmem:[%s2 + $0xf0] sm:$0xff]
  %v5317 = vld [vmem:[%s2 + $0xf8] sm:$0xff]
  %5318 = vset.pattern.permute.xlu0 0
  %5319 = vperm.xlu0 %5318, %v5310
  %v5320 = vpop.permute.xlu0 %5319
  %5321 = vset.pattern.permute.xlu0 0
  %5322 = vperm.xlu0 %5321, %v5311
  %v5323 = vpop.permute.xlu0 %5322
  %5324 = vset.pattern.permute.xlu0 0
  %5325 = vperm.xlu0 %5324, %v5312
  %v5326 = vpop.permute.xlu0 %5325
  %5327 = vset.pattern.permute.xlu0 0
  %5328 = vperm.xlu0 %5327, %v5313
  %v5329 = vpop.permute.xlu0 %5328
  %5330 = vset.pattern.permute.xlu0 0
  %5331 = vperm.xlu0 %5330, %v5314
  %v5332 = vpop.permute.xlu0 %5331
  %5333 = vset.pattern.permute.xlu0 0
  %5334 = vperm.xlu0 %5333, %v5315
  %v5335 = vpop.permute.xlu0 %5334
  %5336 = vset.pattern.permute.xlu0 0
  %5337 = vperm.xlu0 %5336, %v5316
  %v5338 = vpop.permute.xlu0 %5337
  %5339 = vset.pattern.permute.xlu0 0
  %5340 = vperm.xlu0 %5339, %v5317
  %v5341 = vpop.permute.xlu0 %5340
  %vm5342 = vcmp.eq.s32.totalorder %v5320, %v380
  %vm5343 = vcmp.eq.s32.totalorder %v5320, %v384
  %vm5344 = vcmp.eq.s32.totalorder %v5323, %v380
  %vm5345 = vcmp.eq.s32.totalorder %v5323, %v384
  %vm5346 = vcmp.eq.s32.totalorder %v5326, %v380
  %vm5347 = vcmp.eq.s32.totalorder %v5326, %v384
  %vm5348 = vcmp.eq.s32.totalorder %v5329, %v380
  %vm5349 = vcmp.eq.s32.totalorder %v5329, %v384
  %vm5350 = vcmp.eq.s32.totalorder %v5332, %v380
  %vm5351 = vcmp.eq.s32.totalorder %v5332, %v384
  %vm5352 = vcmp.eq.s32.totalorder %v5335, %v380
  %vm5353 = vcmp.eq.s32.totalorder %v5335, %v384
  %vm5354 = vcmp.eq.s32.totalorder %v5338, %v380
  %vm5355 = vcmp.eq.s32.totalorder %v5338, %v384
  %vm5356 = vcmp.eq.s32.totalorder %v5341, %v380
  %vm5357 = vcmp.eq.s32.totalorder %v5341, %v384
  %v5358 = vsel %vm5342, %v5264, -1e+30
  %v5359 = vsel %vm5343, %v5266, -1e+30
  %v5360 = vsel %vm5344, %v5270, -1e+30
  %v5361 = vsel %vm5345, %v5272, -1e+30
  %v5362 = vsel %vm5346, %v5276, -1e+30
  %v5363 = vsel %vm5347, %v5278, -1e+30
  %v5364 = vsel %vm5348, %v5282, -1e+30
  %v5365 = vsel %vm5349, %v5284, -1e+30
  %v5366 = vsel %vm5350, %v5288, -1e+30
  %v5367 = vsel %vm5351, %v5290, -1e+30
  %v5368 = vsel %vm5352, %v5294, -1e+30
  %v5369 = vsel %vm5353, %v5296, -1e+30
  %v5370 = vsel %vm5354, %v5300, -1e+30
  %v5371 = vsel %vm5355, %v5302, -1e+30
  %v5372 = vsel %vm5356, %v5306, -1e+30
  %v5373 = vsel %vm5357, %v5308, -1e+30
  %v5374 = vmax.f32 %v5358, %v5359
  %5375 = vmax.xlane.f32.xlu0 %v5374
  %v5376 = vpop.xlane.xlu0 %5375
  %v5377 = vmax.f32 %v5360, %v5361
  %5378 = vmax.xlane.f32.xlu0 %v5377
  %v5379 = vpop.xlane.xlu0 %5378
  %v5380 = vmax.f32 %v5362, %v5363
  %5381 = vmax.xlane.f32.xlu0 %v5380
  %v5382 = vpop.xlane.xlu0 %5381
  %v5383 = vmax.f32 %v5364, %v5365
  %5384 = vmax.xlane.f32.xlu0 %v5383
  %v5385 = vpop.xlane.xlu0 %5384
  %v5386 = vmax.f32 %v5366, %v5367
  %5387 = vmax.xlane.f32.xlu0 %v5386
  %v5388 = vpop.xlane.xlu0 %5387
  %v5389 = vmax.f32 %v5368, %v5369
  %5390 = vmax.xlane.f32.xlu0 %v5389
  %v5391 = vpop.xlane.xlu0 %5390
  %v5392 = vmax.f32 %v5370, %v5371
  %5393 = vmax.xlane.f32.xlu0 %v5392
  %v5394 = vpop.xlane.xlu0 %5393
  %v5395 = vmax.f32 %v5372, %v5373
  %5396 = vmax.xlane.f32.xlu0 %v5395
  %v5397 = vpop.xlane.xlu0 %5396
  %v5398 = vsub.f32 %v5358, %v5376
  %v5399 = vsub.f32 %v5359, %v5376
  %v5400 = vsub.f32 %v5360, %v5379
  %v5401 = vsub.f32 %v5361, %v5379
  %v5402 = vsub.f32 %v5362, %v5382
  %v5403 = vsub.f32 %v5363, %v5382
  %v5404 = vsub.f32 %v5364, %v5385
  %v5405 = vsub.f32 %v5365, %v5385
  %v5406 = vsub.f32 %v5366, %v5388
  %v5407 = vsub.f32 %v5367, %v5388
  %v5408 = vsub.f32 %v5368, %v5391
  %v5409 = vsub.f32 %v5369, %v5391
  %v5410 = vsub.f32 %v5370, %v5394
  %v5411 = vsub.f32 %v5371, %v5394
  %v5412 = vsub.f32 %v5372, %v5397
  %v5413 = vsub.f32 %v5373, %v5397
  %v5414 = vmul.f32 %v5398, 1.442695
  %v5415 = vpow.pop %v5414
  %v5416 = vmul.f32 %v5399, 1.442695
  %v5417 = vpow.pop %v5416
  %v5418 = vmul.f32 %v5400, 1.442695
  %v5419 = vpow.pop %v5418
  %v5420 = vmul.f32 %v5401, 1.442695
  %v5421 = vpow.pop %v5420
  %v5422 = vmul.f32 %v5402, 1.442695
  %v5423 = vpow.pop %v5422
  %v5424 = vmul.f32 %v5403, 1.442695
  %v5425 = vpow.pop %v5424
  %v5426 = vmul.f32 %v5404, 1.442695
  %v5427 = vpow.pop %v5426
  %v5428 = vmul.f32 %v5405, 1.442695
  %v5429 = vpow.pop %v5428
  %v5430 = vmul.f32 %v5406, 1.442695
  %v5431 = vpow.pop %v5430
  %v5432 = vmul.f32 %v5407, 1.442695
  %v5433 = vpow.pop %v5432
  %v5434 = vmul.f32 %v5408, 1.442695
  %v5435 = vpow.pop %v5434
  %v5436 = vmul.f32 %v5409, 1.442695
  %v5437 = vpow.pop %v5436
  %v5438 = vmul.f32 %v5410, 1.442695
  %v5439 = vpow.pop %v5438
  %v5440 = vmul.f32 %v5411, 1.442695
  %v5441 = vpow.pop %v5440
  %v5442 = vmul.f32 %v5412, 1.442695
  %v5443 = vpow.pop %v5442
  %v5444 = vmul.f32 %v5413, 1.442695
  %v5445 = vpow.pop %v5444
  %v5446 = vadd.f32 %v5415, %v5417
  %5447 = vadd.xlane.f32.xlu0 %v5446
  %v5448 = vpop.xlane.xlu0 %5447
  %v5449 = vadd.f32 %v5419, %v5421
  %5450 = vadd.xlane.f32.xlu0 %v5449
  %v5451 = vpop.xlane.xlu0 %5450
  %v5452 = vadd.f32 %v5423, %v5425
  %5453 = vadd.xlane.f32.xlu0 %v5452
  %v5454 = vpop.xlane.xlu0 %5453
  %v5455 = vadd.f32 %v5427, %v5429
  %5456 = vadd.xlane.f32.xlu0 %v5455
  %v5457 = vpop.xlane.xlu0 %5456
  %v5458 = vadd.f32 %v5431, %v5433
  %5459 = vadd.xlane.f32.xlu0 %v5458
  %v5460 = vpop.xlane.xlu0 %5459
  %v5461 = vadd.f32 %v5435, %v5437
  %5462 = vadd.xlane.f32.xlu0 %v5461
  %v5463 = vpop.xlane.xlu0 %5462
  %v5464 = vadd.f32 %v5439, %v5441
  %5465 = vadd.xlane.f32.xlu0 %v5464
  %v5466 = vpop.xlane.xlu0 %5465
  %v5467 = vadd.f32 %v5443, %v5445
  %5468 = vadd.xlane.f32.xlu0 %v5467
  %v5469 = vpop.xlane.xlu0 %5468
  %v5470 = vrcp.pop %v5448
  %v5471 = vmul.f32 %v5415, %v5470
  %v5472 = vmul.f32 %v5417, %v5470
  %v5473 = vrcp.pop %v5451
  %v5474 = vmul.f32 %v5419, %v5473
  %v5475 = vmul.f32 %v5421, %v5473
  %v5476 = vrcp.pop %v5454
  %v5477 = vmul.f32 %v5423, %v5476
  %v5478 = vmul.f32 %v5425, %v5476
  %v5479 = vrcp.pop %v5457
  %v5480 = vmul.f32 %v5427, %v5479
  %v5481 = vmul.f32 %v5429, %v5479
  %v5482 = vrcp.pop %v5460
  %v5483 = vmul.f32 %v5431, %v5482
  %v5484 = vmul.f32 %v5433, %v5482
  %v5485 = vrcp.pop %v5463
  %v5486 = vmul.f32 %v5435, %v5485
  %v5487 = vmul.f32 %v5437, %v5485
  %v5488 = vrcp.pop %v5466
  %v5489 = vmul.f32 %v5439, %v5488
  %v5490 = vmul.f32 %v5441, %v5488
  %v5491 = vrcp.pop %v5469
  %v5492 = vmul.f32 %v5443, %v5491
  %v5493 = vmul.f32 %v5445, %v5491
  %5494 = vrot.lane.b32.xlu0 %v3841, 64
  %v5495 = vpop.permute.xlu0 %5494
  %v5496 = vsel %vm897, %v5495, 0
  %5498 = vmatprep.subr.mxu0 %v5472
  %5499 = vmatpush1.msra.mxu0 %v5471
  %5500 = vmatprep.subr.mxu0 %v5475
  %5501 = vmatpush1.msra.mxu0 %v5474
  %5502 = vmatprep.subr.mxu0 %v5478
  %5503 = vmatpush1.msra.mxu0 %v5477
  %5504 = vmatprep.subr.mxu0 %v5481
  %5505 = vmatpush1.msra.mxu0 %v5480
  %5506 = vmatprep.subr.mxu0 %v5484
  %5507 = vmatpush1.msra.mxu0 %v5483
  %5508 = vmatprep.subr.mxu0 %v5487
  %5509 = vmatpush1.msra.mxu0 %v5486
  %5510 = vmatprep.subr.mxu0 %v5490
  %5511 = vmatpush1.msra.mxu0 %v5489
  %5512 = vmatprep.subr.mxu0 %v5493
  %5513 = vmatpush1.msra.mxu0 %v5492
  %5514 = vmatprep.subr.mxu0 0.0
  %5515 = vmatpush1.msra.mxu0 0.0
  %5516 = vmatprep.subr.mxu0 0.0
  %5517 = vmatpush1.msra.mxu0 0.0
  %5518 = vmatprep.subr.mxu0 0.0
  %5519 = vmatpush1.msra.mxu0 0.0
  %5520 = vmatprep.subr.mxu0 0.0
  %5521 = vmatpush1.msra.mxu0 0.0
  %5522 = vmatprep.subr.mxu0 0.0
  %5523 = vmatpush1.msra.mxu0 0.0
  %5524 = vmatprep.subr.mxu0 0.0
  %5525 = vmatpush1.msra.mxu0 0.0
  %5526 = vmatprep.subr.mxu0 0.0
  %5527 = vmatpush1.msra.mxu0 0.0
  %5528 = vmatprep.subr.mxu0 0.0
  %5529 = vmatpush1.msra.mxu0 0.0
  %5530 = vmatprep.subr.mxu0 0.0
  %5531 = vmatpush1.msra.mxu0 0.0
  %5532 = vmatprep.subr.mxu0 0.0
  %5533 = vmatpush1.msra.mxu0 0.0
  %5534 = vmatprep.subr.mxu0 0.0
  %5535 = vmatpush1.msra.mxu0 0.0
  %5536 = vmatprep.subr.mxu0 0.0
  %5537 = vmatpush1.msra.mxu0 0.0
  %5538 = vmatprep.subr.mxu0 0.0
  %5539 = vmatpush1.msra.mxu0 0.0
  %5540 = vmatprep.subr.mxu0 0.0
  %5541 = vmatpush1.msra.mxu0 0.0
  %5542 = vmatprep.subr.mxu0 0.0
  %5543 = vmatpush1.msra.mxu0 0.0
  %5544 = vmatprep.subr.mxu0 0.0
  %5545 = vmatpush1.msra.mxu0 0.0
  %5546 = vmatprep.subr.mxu0 0.0
  %5547 = vmatpush1.msra.mxu0 0.0
  %5548 = vmatprep.subr.mxu0 0.0
  %5549 = vmatpush1.msra.mxu0 0.0
  %5550 = vmatprep.subr.mxu0 0.0
  %5551 = vmatpush1.msra.mxu0 0.0
  %5552 = vmatprep.subr.mxu0 0.0
  %5553 = vmatpush1.msra.mxu0 0.0
  %5554 = vmatprep.subr.mxu0 0.0
  %5555 = vmatpush1.msra.mxu0 0.0
  %5556 = vmatprep.subr.mxu0 0.0
  %5557 = vmatpush1.msra.mxu0 0.0
  %5558 = vmatprep.subr.mxu0 0.0
  %5559 = vmatpush1.msra.mxu0 0.0
  %5560 = vmatprep.subr.mxu0 0.0
  %5561 = vmatpush1.msra.mxu0 0.0
  %5562 = vmatprep.mubr.f32.mxu0 0.0
  %5563 = vmatmul.mubr.f32.gmra.mrb[0].mxu0 %v5496
  %v5564 = vpop.f32.mrb[0].mxu0
  %v5565 = vadd.f32 0.0, %v5564
  %v5566 = vpop.f32.mrb[0].mxu0
  %v5567 = vadd.f32 0.0, %v5566
  %5568 = vdwg.mxu0
  %v5569 = vadd.f32 %v5135, %v5565
  %v5570 = vadd.f32 %v5136, %v5567
  %5571 = vxpose.xlu0.b32.start [1/16] %v3833, 128
  %5572 = vxpose.xlu0.b32.cont [2/16] 0.0, 128
  %5573 = vxpose.xlu0.b32.cont [3/16] 0.0, 128
  %5574 = vxpose.xlu0.b32.cont [4/16] 0.0, 128
  %5575 = vxpose.xlu0.b32.cont [5/16] 0.0, 128
  %5576 = vxpose.xlu0.b32.cont [6/16] 0.0, 128
  %5577 = vxpose.xlu0.b32.cont [7/16] 0.0, 128
  %5578 = vxpose.xlu0.b32.cont [8/16] 0.0, 128
  %5579 = vxpose.xlu0.b32.cont [9/16] 0.0, 128
  %5580 = vxpose.xlu0.b32.cont [10/16] 0.0, 128
  %5581 = vxpose.xlu0.b32.cont [11/16] 0.0, 128
  %5582 = vxpose.xlu0.b32.cont [12/16] 0.0, 128
  %5583 = vxpose.xlu0.b32.cont [13/16] 0.0, 128
  %5584 = vxpose.xlu0.b32.cont [14/16] 0.0, 128
  %5585 = vxpose.xlu0.b32.cont [15/16] 0.0, 128
  %5586 = vxpose.xlu0.b32.end [16/16] 0.0, 128
  %v5587 = vpop.trf.xlu0
  %v5588 = vpop.trf.xlu0
  %v5589 = vpop.trf.xlu0
  %v5590 = vpop.trf.xlu0
  %v5591 = vpop.trf.xlu0
  %v5592 = vpop.trf.xlu0
  %v5593 = vpop.trf.xlu0
  %v5594 = vpop.trf.xlu0
  %v5595 = vpop.trf.xlu0
  %v5596 = vpop.trf.xlu0
  %v5597 = vpop.trf.xlu0
  %v5598 = vpop.trf.xlu0
  %v5599 = vpop.trf.xlu0
  %v5600 = vpop.trf.xlu0
  %v5601 = vpop.trf.xlu0
  %v5602 = vpop.trf.xlu0
  %v5604 = vsel %vm207, %v5587, 0
  %v5607 = vsel %vm207, %v5588, 0
  %v5610 = vsel %vm207, %v5589, 0
  %v5613 = vsel %vm207, %v5590, 0
  %v5616 = vsel %vm207, %v5591, 0
  %v5619 = vsel %vm207, %v5592, 0
  %v5622 = vsel %vm207, %v5593, 0
  %v5625 = vsel %vm207, %v5594, 0
  %5627 = vmatprep.subr.mxu0 %v3823
  %5628 = vmatpush1.msra.mxu0 %v3821
  %5629 = vmatprep.subr.mxu0 0.0
  %5630 = vmatpush1.msra.mxu0 0.0
  %5631 = vmatprep.subr.mxu0 0.0
  %5632 = vmatpush1.msra.mxu0 0.0
  %5633 = vmatprep.subr.mxu0 0.0
  %5634 = vmatpush1.msra.mxu0 0.0
  %5635 = vmatprep.subr.mxu0 0.0
  %5636 = vmatpush1.msra.mxu0 0.0
  %5637 = vmatprep.subr.mxu0 0.0
  %5638 = vmatpush1.msra.mxu0 0.0
  %5639 = vmatprep.subr.mxu0 0.0
  %5640 = vmatpush1.msra.mxu0 0.0
  %5641 = vmatprep.subr.mxu0 0.0
  %5642 = vmatpush1.msra.mxu0 0.0
  %5643 = vmatprep.subr.mxu0 0.0
  %5644 = vmatpush1.msra.mxu0 0.0
  %5645 = vmatprep.subr.mxu0 0.0
  %5646 = vmatpush1.msra.mxu0 0.0
  %5647 = vmatprep.subr.mxu0 0.0
  %5648 = vmatpush1.msra.mxu0 0.0
  %5649 = vmatprep.subr.mxu0 0.0
  %5650 = vmatpush1.msra.mxu0 0.0
  %5651 = vmatprep.subr.mxu0 0.0
  %5652 = vmatpush1.msra.mxu0 0.0
  %5653 = vmatprep.subr.mxu0 0.0
  %5654 = vmatpush1.msra.mxu0 0.0
  %5655 = vmatprep.subr.mxu0 0.0
  %5656 = vmatpush1.msra.mxu0 0.0
  %5657 = vmatprep.subr.mxu0 0.0
  %5658 = vmatpush1.msra.mxu0 0.0
  %5659 = vmatprep.subr.mxu0 0.0
  %5660 = vmatpush1.msra.mxu0 0.0
  %5661 = vmatprep.subr.mxu0 0.0
  %5662 = vmatpush1.msra.mxu0 0.0
  %5663 = vmatprep.subr.mxu0 0.0
  %5664 = vmatpush1.msra.mxu0 0.0
  %5665 = vmatprep.subr.mxu0 0.0
  %5666 = vmatpush1.msra.mxu0 0.0
  %5667 = vmatprep.subr.mxu0 0.0
  %5668 = vmatpush1.msra.mxu0 0.0
  %5669 = vmatprep.subr.mxu0 0.0
  %5670 = vmatpush1.msra.mxu0 0.0
  %5671 = vmatprep.subr.mxu0 0.0
  %5672 = vmatpush1.msra.mxu0 0.0
  %5673 = vmatprep.subr.mxu0 0.0
  %5674 = vmatpush1.msra.mxu0 0.0
  %5675 = vmatprep.subr.mxu0 0.0
  %5676 = vmatpush1.msra.mxu0 0.0
  %5677 = vmatprep.subr.mxu0 0.0
  %5678 = vmatpush1.msra.mxu0 0.0
  %5679 = vmatprep.subr.mxu0 0.0
  %5680 = vmatpush1.msra.mxu0 0.0
  %5681 = vmatprep.subr.mxu0 0.0
  %5682 = vmatpush1.msra.mxu0 0.0
  %5683 = vmatprep.subr.mxu0 0.0
  %5684 = vmatpush1.msra.mxu0 0.0
  %5685 = vmatprep.subr.mxu0 0.0
  %5686 = vmatpush1.msra.mxu0 0.0
  %5687 = vmatprep.subr.mxu0 0.0
  %5688 = vmatpush1.msra.mxu0 0.0
  %5689 = vmatprep.subr.mxu0 0.0
  %5690 = vmatpush1.msra.mxu0 0.0
  %5691 = vmatprep.mubr.f32.mxu0 0.0
  %5692 = vmatmul.mubr.f32.gmra.mrb[0].mxu0 %v5604
  %v5693 = vpop.f32.mrb[0].mxu0
  %v5694 = vadd.f32 0.0, %v5693
  %v5695 = vpop.f32.mrb[0].mxu0
  %v5696 = vadd.f32 0.0, %v5695
  %5697 = vmatprep.mubr.f32.mxu0 0.0
  %5698 = vmatmul.mubr.f32.gmra.mrb[0].mxu0 %v5607
  %v5699 = vpop.f32.mrb[0].mxu0
  %v5700 = vadd.f32 0.0, %v5699
  %v5701 = vpop.f32.mrb[0].mxu0
  %v5702 = vadd.f32 0.0, %v5701
  %5703 = vmatprep.mubr.f32.mxu0 0.0
  %5704 = vmatmul.mubr.f32.gmra.mrb[0].mxu0 %v5610
  %v5705 = vpop.f32.mrb[0].mxu0
  %v5706 = vadd.f32 0.0, %v5705
  %v5707 = vpop.f32.mrb[0].mxu0
  %v5708 = vadd.f32 0.0, %v5707
  %5709 = vmatprep.mubr.f32.mxu0 0.0
  %5710 = vmatmul.mubr.f32.gmra.mrb[0].mxu0 %v5613
  %v5711 = vpop.f32.mrb[0].mxu0
  %v5712 = vadd.f32 0.0, %v5711
  %v5713 = vpop.f32.mrb[0].mxu0
  %v5714 = vadd.f32 0.0, %v5713
  %5715 = vmatprep.mubr.f32.mxu0 0.0
  %5716 = vmatmul.mubr.f32.gmra.mrb[0].mxu0 %v5616
  %v5717 = vpop.f32.mrb[0].mxu0
  %v5718 = vadd.f32 0.0, %v5717
  %v5719 = vpop.f32.mrb[0].mxu0
  %v5720 = vadd.f32 0.0, %v5719
  %5721 = vmatprep.mubr.f32.mxu0 0.0
  %5722 = vmatmul.mubr.f32.gmra.mrb[0].mxu0 %v5619
  %v5723 = vpop.f32.mrb[0].mxu0
  %v5724 = vadd.f32 0.0, %v5723
  %v5725 = vpop.f32.mrb[0].mxu0
  %v5726 = vadd.f32 0.0, %v5725
  %5727 = vmatprep.mubr.f32.mxu0 0.0
  %5728 = vmatmul.mubr.f32.gmra.mrb[0].mxu0 %v5622
  %v5729 = vpop.f32.mrb[0].mxu0
  %v5730 = vadd.f32 0.0, %v5729
  %v5731 = vpop.f32.mrb[0].mxu0
  %v5732 = vadd.f32 0.0, %v5731
  %5733 = vmatprep.mubr.f32.mxu0 0.0
  %5734 = vmatmul.mubr.f32.gmra.mrb[0].mxu0 %v5625
  %v5735 = vpop.f32.mrb[0].mxu0
  %v5736 = vadd.f32 0.0, %v5735
  %v5737 = vpop.f32.mrb[0].mxu0
  %v5738 = vadd.f32 0.0, %v5737
  %5739 = vdwg.mxu0
  %v5740 = vsel %vm4050, %v5694, -1e+30
  %v5741 = vsel %vm4051, %v5696, -1e+30
  %v5742 = vsel %vm4052, %v5700, -1e+30
  %v5743 = vsel %vm4053, %v5702, -1e+30
  %v5744 = vsel %vm4054, %v5706, -1e+30
  %v5745 = vsel %vm4055, %v5708, -1e+30
  %v5746 = vsel %vm4056, %v5712, -1e+30
  %v5747 = vsel %vm4057, %v5714, -1e+30
  %v5748 = vsel %vm4058, %v5718, -1e+30
  %v5749 = vsel %vm4059, %v5720, -1e+30
  %v5750 = vsel %vm4060, %v5724, -1e+30
  %v5751 = vsel %vm4061, %v5726, -1e+30
  %v5752 = vsel %vm4062, %v5730, -1e+30
  %v5753 = vsel %vm4063, %v5732, -1e+30
  %v5754 = vsel %vm4064, %v5736, -1e+30
  %v5755 = vsel %vm4065, %v5738, -1e+30
  %v5756 = vmax.f32 %v5740, %v5741
  %5757 = vmax.xlane.f32.xlu0 %v5756
  %v5758 = vpop.xlane.xlu0 %5757
  %v5759 = vmax.f32 %v5742, %v5743
  %5760 = vmax.xlane.f32.xlu0 %v5759
  %v5761 = vpop.xlane.xlu0 %5760
  %v5762 = vmax.f32 %v5744, %v5745
  %5763 = vmax.xlane.f32.xlu0 %v5762
  %v5764 = vpop.xlane.xlu0 %5763
  %v5765 = vmax.f32 %v5746, %v5747
  %5766 = vmax.xlane.f32.xlu0 %v5765
  %v5767 = vpop.xlane.xlu0 %5766
  %v5768 = vmax.f32 %v5748, %v5749
  %5769 = vmax.xlane.f32.xlu0 %v5768
  %v5770 = vpop.xlane.xlu0 %5769
  %v5771 = vmax.f32 %v5750, %v5751
  %5772 = vmax.xlane.f32.xlu0 %v5771
  %v5773 = vpop.xlane.xlu0 %5772
  %v5774 = vmax.f32 %v5752, %v5753
  %5775 = vmax.xlane.f32.xlu0 %v5774
  %v5776 = vpop.xlane.xlu0 %5775
  %v5777 = vmax.f32 %v5754, %v5755
  %5778 = vmax.xlane.f32.xlu0 %v5777
  %v5779 = vpop.xlane.xlu0 %5778
  %v5780 = vsub.f32 %v5740, %v5758
  %v5781 = vsub.f32 %v5741, %v5758
  %v5782 = vsub.f32 %v5742, %v5761
  %v5783 = vsub.f32 %v5743, %v5761
  %v5784 = vsub.f32 %v5744, %v5764
  %v5785 = vsub.f32 %v5745, %v5764
  %v5786 = vsub.f32 %v5746, %v5767
  %v5787 = vsub.f32 %v5747, %v5767
  %v5788 = vsub.f32 %v5748, %v5770
  %v5789 = vsub.f32 %v5749, %v5770
  %v5790 = vsub.f32 %v5750, %v5773
  %v5791 = vsub.f32 %v5751, %v5773
  %v5792 = vsub.f32 %v5752, %v5776
  %v5793 = vsub.f32 %v5753, %v5776
  %v5794 = vsub.f32 %v5754, %v5779
  %v5795 = vsub.f32 %v5755, %v5779
  %v5796 = vmul.f32 %v5780, 1.442695
  %v5797 = vpow.pop %v5796
  %v5798 = vmul.f32 %v5781, 1.442695
  %v5799 = vpow.pop %v5798
  %v5800 = vmul.f32 %v5782, 1.442695
  %v5801 = vpow.pop %v5800
  %v5802 = vmul.f32 %v5783, 1.442695
  %v5803 = vpow.pop %v5802
  %v5804 = vmul.f32 %v5784, 1.442695
  %v5805 = vpow.pop %v5804
  %v5806 = vmul.f32 %v5785, 1.442695
  %v5807 = vpow.pop %v5806
  %v5808 = vmul.f32 %v5786, 1.442695
  %v5809 = vpow.pop %v5808
  %v5810 = vmul.f32 %v5787, 1.442695
  %v5811 = vpow.pop %v5810
  %v5812 = vmul.f32 %v5788, 1.442695
  %v5813 = vpow.pop %v5812
  %v5814 = vmul.f32 %v5789, 1.442695
  %v5815 = vpow.pop %v5814
  %v5816 = vmul.f32 %v5790, 1.442695
  %v5817 = vpow.pop %v5816
  %v5818 = vmul.f32 %v5791, 1.442695
  %v5819 = vpow.pop %v5818
  %v5820 = vmul.f32 %v5792, 1.442695
  %v5821 = vpow.pop %v5820
  %v5822 = vmul.f32 %v5793, 1.442695
  %v5823 = vpow.pop %v5822
  %v5824 = vmul.f32 %v5794, 1.442695
  %v5825 = vpow.pop %v5824
  %v5826 = vmul.f32 %v5795, 1.442695
  %v5827 = vpow.pop %v5826
  %v5828 = vadd.f32 %v5797, %v5799
  %5829 = vadd.xlane.f32.xlu0 %v5828
  %v5830 = vpop.xlane.xlu0 %5829
  %v5831 = vadd.f32 %v5801, %v5803
  %5832 = vadd.xlane.f32.xlu0 %v5831
  %v5833 = vpop.xlane.xlu0 %5832
  %v5834 = vadd.f32 %v5805, %v5807
  %5835 = vadd.xlane.f32.xlu0 %v5834
  %v5836 = vpop.xlane.xlu0 %5835
  %v5837 = vadd.f32 %v5809, %v5811
  %5838 = vadd.xlane.f32.xlu0 %v5837
  %v5839 = vpop.xlane.xlu0 %5838
  %v5840 = vadd.f32 %v5813, %v5815
  %5841 = vadd.xlane.f32.xlu0 %v5840
  %v5842 = vpop.xlane.xlu0 %5841
  %v5843 = vadd.f32 %v5817, %v5819
  %5844 = vadd.xlane.f32.xlu0 %v5843
  %v5845 = vpop.xlane.xlu0 %5844
  %v5846 = vadd.f32 %v5821, %v5823
  %5847 = vadd.xlane.f32.xlu0 %v5846
  %v5848 = vpop.xlane.xlu0 %5847
  %v5849 = vadd.f32 %v5825, %v5827
  %5850 = vadd.xlane.f32.xlu0 %v5849
  %v5851 = vpop.xlane.xlu0 %5850
  %v5852 = vrcp.pop %v5830
  %v5853 = vmul.f32 %v5797, %v5852
  %v5854 = vmul.f32 %v5799, %v5852
  %v5855 = vrcp.pop %v5833
  %v5856 = vmul.f32 %v5801, %v5855
  %v5857 = vmul.f32 %v5803, %v5855
  %v5858 = vrcp.pop %v5836
  %v5859 = vmul.f32 %v5805, %v5858
  %v5860 = vmul.f32 %v5807, %v5858
  %v5861 = vrcp.pop %v5839
  %v5862 = vmul.f32 %v5809, %v5861
  %v5863 = vmul.f32 %v5811, %v5861
  %v5864 = vrcp.pop %v5842
  %v5865 = vmul.f32 %v5813, %v5864
  %v5866 = vmul.f32 %v5815, %v5864
  %v5867 = vrcp.pop %v5845
  %v5868 = vmul.f32 %v5817, %v5867
  %v5869 = vmul.f32 %v5819, %v5867
  %v5870 = vrcp.pop %v5848
  %v5871 = vmul.f32 %v5821, %v5870
  %v5872 = vmul.f32 %v5823, %v5870
  %v5873 = vrcp.pop %v5851
  %v5874 = vmul.f32 %v5825, %v5873
  %v5875 = vmul.f32 %v5827, %v5873
  %5877 = vrot.lane.b32.xlu0 %v3833, 64
  %v5878 = vpop.permute.xlu0 %5877
  %5880 = vxpose.xlu0.b32.start [1/16] %v5878, 128
  %5881 = vxpose.xlu0.b32.cont [2/16] 0.0, 128
  %5882 = vxpose.xlu0.b32.cont [3/16] 0.0, 128
  %5883 = vxpose.xlu0.b32.cont [4/16] 0.0, 128
  %5884 = vxpose.xlu0.b32.cont [5/16] 0.0, 128
  %5885 = vxpose.xlu0.b32.cont [6/16] 0.0, 128
  %5886 = vxpose.xlu0.b32.cont [7/16] 0.0, 128
  %5887 = vxpose.xlu0.b32.cont [8/16] 0.0, 128
  %5888 = vxpose.xlu0.b32.cont [9/16] 0.0, 128
  %5889 = vxpose.xlu0.b32.cont [10/16] 0.0, 128
  %5890 = vxpose.xlu0.b32.cont [11/16] 0.0, 128
  %5891 = vxpose.xlu0.b32.cont [12/16] 0.0, 128
  %5892 = vxpose.xlu0.b32.cont [13/16] 0.0, 128
  %5893 = vxpose.xlu0.b32.cont [14/16] 0.0, 128
  %5894 = vxpose.xlu0.b32.cont [15/16] 0.0, 128
  %5895 = vxpose.xlu0.b32.end [16/16] 0.0, 128
  %v5896 = vpop.trf.xlu0
  %v5897 = vpop.trf.xlu0
  %v5898 = vpop.trf.xlu0
  %v5899 = vpop.trf.xlu0
  %v5900 = vpop.trf.xlu0
  %v5901 = vpop.trf.xlu0
  %v5902 = vpop.trf.xlu0
  %v5903 = vpop.trf.xlu0
  %v5904 = vpop.trf.xlu0
  %v5905 = vpop.trf.xlu0
  %v5906 = vpop.trf.xlu0
  %v5907 = vpop.trf.xlu0
  %v5908 = vpop.trf.xlu0
  %v5909 = vpop.trf.xlu0
  %v5910 = vpop.trf.xlu0
  %v5911 = vpop.trf.xlu0
  %v5913 = vsel %vm207, %v5896, 0
  %v5916 = vsel %vm207, %v5897, 0
  %v5919 = vsel %vm207, %v5898, 0
  %v5922 = vsel %vm207, %v5899, 0
  %v5925 = vsel %vm207, %v5900, 0
  %v5928 = vsel %vm207, %v5901, 0
  %v5931 = vsel %vm207, %v5902, 0
  %v5934 = vsel %vm207, %v5903, 0
  %5936 = vmatprep.subr.mxu0 %v3823
  %5937 = vmatpush1.msra.mxu0 %v3821
  %5938 = vmatprep.subr.mxu0 0.0
  %5939 = vmatpush1.msra.mxu0 0.0
  %5940 = vmatprep.subr.mxu0 0.0
  %5941 = vmatpush1.msra.mxu0 0.0
  %5942 = vmatprep.subr.mxu0 0.0
  %5943 = vmatpush1.msra.mxu0 0.0
  %5944 = vmatprep.subr.mxu0 0.0
  %5945 = vmatpush1.msra.mxu0 0.0
  %5946 = vmatprep.subr.mxu0 0.0
  %5947 = vmatpush1.msra.mxu0 0.0
  %5948 = vmatprep.subr.mxu0 0.0
  %5949 = vmatpush1.msra.mxu0 0.0
  %5950 = vmatprep.subr.mxu0 0.0
  %5951 = vmatpush1.msra.mxu0 0.0
  %5952 = vmatprep.subr.mxu0 0.0
  %5953 = vmatpush1.msra.mxu0 0.0
  %5954 = vmatprep.subr.mxu0 0.0
  %5955 = vmatpush1.msra.mxu0 0.0
  %5956 = vmatprep.subr.mxu0 0.0
  %5957 = vmatpush1.msra.mxu0 0.0
  %5958 = vmatprep.subr.mxu0 0.0
  %5959 = vmatpush1.msra.mxu0 0.0
  %5960 = vmatprep.subr.mxu0 0.0
  %5961 = vmatpush1.msra.mxu0 0.0
  %5962 = vmatprep.subr.mxu0 0.0
  %5963 = vmatpush1.msra.mxu0 0.0
  %5964 = vmatprep.subr.mxu0 0.0
  %5965 = vmatpush1.msra.mxu0 0.0
  %5966 = vmatprep.subr.mxu0 0.0
  %5967 = vmatpush1.msra.mxu0 0.0
  %5968 = vmatprep.subr.mxu0 0.0
  %5969 = vmatpush1.msra.mxu0 0.0
  %5970 = vmatprep.subr.mxu0 0.0
  %5971 = vmatpush1.msra.mxu0 0.0
  %5972 = vmatprep.subr.mxu0 0.0
  %5973 = vmatpush1.msra.mxu0 0.0
  %5974 = vmatprep.subr.mxu0 0.0
  %5975 = vmatpush1.msra.mxu0 0.0
  %5976 = vmatprep.subr.mxu0 0.0
  %5977 = vmatpush1.msra.mxu0 0.0
  %5978 = vmatprep.subr.mxu0 0.0
  %5979 = vmatpush1.msra.mxu0 0.0
  %5980 = vmatprep.subr.mxu0 0.0
  %5981 = vmatpush1.msra.mxu0 0.0
  %5982 = vmatprep.subr.mxu0 0.0
  %5983 = vmatpush1.msra.mxu0 0.0
  %5984 = vmatprep.subr.mxu0 0.0
  %5985 = vmatpush1.msra.mxu0 0.0
  %5986 = vmatprep.subr.mxu0 0.0
  %5987 = vmatpush1.msra.mxu0 0.0
  %5988 = vmatprep.subr.mxu0 0.0
  %5989 = vmatpush1.msra.mxu0 0.0
  %5990 = vmatprep.subr.mxu0 0.0
  %5991 = vmatpush1.msra.mxu0 0.0
  %5992 = vmatprep.subr.mxu0 0.0
  %5993 = vmatpush1.msra.mxu0 0.0
  %5994 = vmatprep.subr.mxu0 0.0
  %5995 = vmatpush1.msra.mxu0 0.0
  %5996 = vmatprep.subr.mxu0 0.0
  %5997 = vmatpush1.msra.mxu0 0.0
  %5998 = vmatprep.subr.mxu0 0.0
  %5999 = vmatpush1.msra.mxu0 0.0
  %6000 = vmatprep.mubr.f32.mxu0 0.0
  %6001 = vmatmul.mubr.f32.gmra.mrb[0].mxu0 %v5913
  %v6002 = vpop.f32.mrb[0].mxu0
  %v6003 = vadd.f32 0.0, %v6002
  %v6004 = vpop.f32.mrb[0].mxu0
  %v6005 = vadd.f32 0.0, %v6004
  %6006 = vmatprep.mubr.f32.mxu0 0.0
  %6007 = vmatmul.mubr.f32.gmra.mrb[0].mxu0 %v5916
  %v6008 = vpop.f32.mrb[0].mxu0
  %v6009 = vadd.f32 0.0, %v6008
  %v6010 = vpop.f32.mrb[0].mxu0
  %v6011 = vadd.f32 0.0, %v6010
  %6012 = vmatprep.mubr.f32.mxu0 0.0
  %6013 = vmatmul.mubr.f32.gmra.mrb[0].mxu0 %v5919
  %v6014 = vpop.f32.mrb[0].mxu0
  %v6015 = vadd.f32 0.0, %v6014
  %v6016 = vpop.f32.mrb[0].mxu0
  %v6017 = vadd.f32 0.0, %v6016
  %6018 = vmatprep.mubr.f32.mxu0 0.0
  %6019 = vmatmul.mubr.f32.gmra.mrb[0].mxu0 %v5922
  %v6020 = vpop.f32.mrb[0].mxu0
  %v6021 = vadd.f32 0.0, %v6020
  %v6022 = vpop.f32.mrb[0].mxu0
  %v6023 = vadd.f32 0.0, %v6022
  %6024 = vmatprep.mubr.f32.mxu0 0.0
  %6025 = vmatmul.mubr.f32.gmra.mrb[0].mxu0 %v5925
  %v6026 = vpop.f32.mrb[0].mxu0
  %v6027 = vadd.f32 0.0, %v6026
  %v6028 = vpop.f32.mrb[0].mxu0
  %v6029 = vadd.f32 0.0, %v6028
  %6030 = vmatprep.mubr.f32.mxu0 0.0
  %6031 = vmatmul.mubr.f32.gmra.mrb[0].mxu0 %v5928
  %v6032 = vpop.f32.mrb[0].mxu0
  %v6033 = vadd.f32 0.0, %v6032
  %v6034 = vpop.f32.mrb[0].mxu0
  %v6035 = vadd.f32 0.0, %v6034
  %6036 = vmatprep.mubr.f32.mxu0 0.0
  %6037 = vmatmul.mubr.f32.gmra.mrb[0].mxu0 %v5931
  %v6038 = vpop.f32.mrb[0].mxu0
  %v6039 = vadd.f32 0.0, %v6038
  %v6040 = vpop.f32.mrb[0].mxu0
  %v6041 = vadd.f32 0.0, %v6040
  %6042 = vmatprep.mubr.f32.mxu0 0.0
  %6043 = vmatmul.mubr.f32.gmra.mrb[0].mxu0 %v5934
  %v6044 = vpop.f32.mrb[0].mxu0
  %v6045 = vadd.f32 0.0, %v6044
  %v6046 = vpop.f32.mrb[0].mxu0
  %v6047 = vadd.f32 0.0, %v6046
  %6048 = vdwg.mxu0
  %v6049 = vsel %vm4407, %v6003, -1e+30
  %v6050 = vsel %vm4408, %v6005, -1e+30
  %v6051 = vsel %vm4409, %v6009, -1e+30
  %v6052 = vsel %vm4410, %v6011, -1e+30
  %v6053 = vsel %vm4411, %v6015, -1e+30
  %v6054 = vsel %vm4412, %v6017, -1e+30
  %v6055 = vsel %vm4413, %v6021, -1e+30
  %v6056 = vsel %vm4414, %v6023, -1e+30
  %v6057 = vsel %vm4415, %v6027, -1e+30
  %v6058 = vsel %vm4416, %v6029, -1e+30
  %v6059 = vsel %vm4417, %v6033, -1e+30
  %v6060 = vsel %vm4418, %v6035, -1e+30
  %v6061 = vsel %vm4419, %v6039, -1e+30
  %v6062 = vsel %vm4420, %v6041, -1e+30
  %v6063 = vsel %vm4421, %v6045, -1e+30
  %v6064 = vsel %vm4422, %v6047, -1e+30
  %v6065 = vmax.f32 %v6049, %v6050
  %6066 = vmax.xlane.f32.xlu0 %v6065
  %v6067 = vpop.xlane.xlu0 %6066
  %v6068 = vmax.f32 %v6051, %v6052
  %6069 = vmax.xlane.f32.xlu0 %v6068
  %v6070 = vpop.xlane.xlu0 %6069
  %v6071 = vmax.f32 %v6053, %v6054
  %6072 = vmax.xlane.f32.xlu0 %v6071
  %v6073 = vpop.xlane.xlu0 %6072
  %v6074 = vmax.f32 %v6055, %v6056
  %6075 = vmax.xlane.f32.xlu0 %v6074
  %v6076 = vpop.xlane.xlu0 %6075
  %v6077 = vmax.f32 %v6057, %v6058
  %6078 = vmax.xlane.f32.xlu0 %v6077
  %v6079 = vpop.xlane.xlu0 %6078
  %v6080 = vmax.f32 %v6059, %v6060
  %6081 = vmax.xlane.f32.xlu0 %v6080
  %v6082 = vpop.xlane.xlu0 %6081
  %v6083 = vmax.f32 %v6061, %v6062
  %6084 = vmax.xlane.f32.xlu0 %v6083
  %v6085 = vpop.xlane.xlu0 %6084
  %v6086 = vmax.f32 %v6063, %v6064
  %6087 = vmax.xlane.f32.xlu0 %v6086
  %v6088 = vpop.xlane.xlu0 %6087
  %v6089 = vsub.f32 %v6049, %v6067
  %v6090 = vsub.f32 %v6050, %v6067
  %v6091 = vsub.f32 %v6051, %v6070
  %v6092 = vsub.f32 %v6052, %v6070
  %v6093 = vsub.f32 %v6053, %v6073
  %v6094 = vsub.f32 %v6054, %v6073
  %v6095 = vsub.f32 %v6055, %v6076
  %v6096 = vsub.f32 %v6056, %v6076
  %v6097 = vsub.f32 %v6057, %v6079
  %v6098 = vsub.f32 %v6058, %v6079
  %v6099 = vsub.f32 %v6059, %v6082
  %v6100 = vsub.f32 %v6060, %v6082
  %v6101 = vsub.f32 %v6061, %v6085
  %v6102 = vsub.f32 %v6062, %v6085
  %v6103 = vsub.f32 %v6063, %v6088
  %v6104 = vsub.f32 %v6064, %v6088
  %v6105 = vmul.f32 %v6089, 1.442695
  %v6106 = vpow.pop %v6105
  %v6107 = vmul.f32 %v6090, 1.442695
  %v6108 = vpow.pop %v6107
  %v6109 = vmul.f32 %v6091, 1.442695
  %v6110 = vpow.pop %v6109
  %v6111 = vmul.f32 %v6092, 1.442695
  %v6112 = vpow.pop %v6111
  %v6113 = vmul.f32 %v6093, 1.442695
  %v6114 = vpow.pop %v6113
  %v6115 = vmul.f32 %v6094, 1.442695
  %v6116 = vpow.pop %v6115
  %v6117 = vmul.f32 %v6095, 1.442695
  %v6118 = vpow.pop %v6117
  %v6119 = vmul.f32 %v6096, 1.442695
  %v6120 = vpow.pop %v6119
  %v6121 = vmul.f32 %v6097, 1.442695
  %v6122 = vpow.pop %v6121
  %v6123 = vmul.f32 %v6098, 1.442695
  %v6124 = vpow.pop %v6123
  %v6125 = vmul.f32 %v6099, 1.442695
  %v6126 = vpow.pop %v6125
  %v6127 = vmul.f32 %v6100, 1.442695
  %v6128 = vpow.pop %v6127
  %v6129 = vmul.f32 %v6101, 1.442695
  %v6130 = vpow.pop %v6129
  %v6131 = vmul.f32 %v6102, 1.442695
  %v6132 = vpow.pop %v6131
  %v6133 = vmul.f32 %v6103, 1.442695
  %v6134 = vpow.pop %v6133
  %v6135 = vmul.f32 %v6104, 1.442695
  %v6136 = vpow.pop %v6135
  %v6137 = vadd.f32 %v6106, %v6108
  %6138 = vadd.xlane.f32.xlu0 %v6137
  %v6139 = vpop.xlane.xlu0 %6138
  %v6140 = vadd.f32 %v6110, %v6112
  %6141 = vadd.xlane.f32.xlu0 %v6140
  %v6142 = vpop.xlane.xlu0 %6141
  %v6143 = vadd.f32 %v6114, %v6116
  %6144 = vadd.xlane.f32.xlu0 %v6143
  %v6145 = vpop.xlane.xlu0 %6144
  %v6146 = vadd.f32 %v6118, %v6120
  %6147 = vadd.xlane.f32.xlu0 %v6146
  %v6148 = vpop.xlane.xlu0 %6147
  %v6149 = vadd.f32 %v6122, %v6124
  %6150 = vadd.xlane.f32.xlu0 %v6149
  %v6151 = vpop.xlane.xlu0 %6150
  %v6152 = vadd.f32 %v6126, %v6128
  %6153 = vadd.xlane.f32.xlu0 %v6152
  %v6154 = vpop.xlane.xlu0 %6153
  %v6155 = vadd.f32 %v6130, %v6132
  %6156 = vadd.xlane.f32.xlu0 %v6155
  %v6157 = vpop.xlane.xlu0 %6156
  %v6158 = vadd.f32 %v6134, %v6136
  %6159 = vadd.xlane.f32.xlu0 %v6158
  %v6160 = vpop.xlane.xlu0 %6159
  %v6161 = vrcp.pop %v6139
  %v6162 = vmul.f32 %v6106, %v6161
  %v6163 = vmul.f32 %v6108, %v6161
  %v6164 = vrcp.pop %v6142
  %v6165 = vmul.f32 %v6110, %v6164
  %v6166 = vmul.f32 %v6112, %v6164
  %v6167 = vrcp.pop %v6145
  %v6168 = vmul.f32 %v6114, %v6167
  %v6169 = vmul.f32 %v6116, %v6167
  %v6170 = vrcp.pop %v6148
  %v6171 = vmul.f32 %v6118, %v6170
  %v6172 = vmul.f32 %v6120, %v6170
  %v6173 = vrcp.pop %v6151
  %v6174 = vmul.f32 %v6122, %v6173
  %v6175 = vmul.f32 %v6124, %v6173
  %v6176 = vrcp.pop %v6154
  %v6177 = vmul.f32 %v6126, %v6176
  %v6178 = vmul.f32 %v6128, %v6176
  %v6179 = vrcp.pop %v6157
  %v6180 = vmul.f32 %v6130, %v6179
  %v6181 = vmul.f32 %v6132, %v6179
  %v6182 = vrcp.pop %v6160
  %v6183 = vmul.f32 %v6134, %v6182
  %v6184 = vmul.f32 %v6136, %v6182
  %6186 = vrot.lane.b32.xlu0 %v3845, 64
  %v6187 = vpop.permute.xlu0 %6186
  %v6188 = vsel %vm897, %v6187, 0
  %6190 = vmatprep.subr.mxu0 %v6163
  %6191 = vmatpush1.msra.mxu0 %v6162
  %6192 = vmatprep.subr.mxu0 %v6166
  %6193 = vmatpush1.msra.mxu0 %v6165
  %6194 = vmatprep.subr.mxu0 %v6169
  %6195 = vmatpush1.msra.mxu0 %v6168
  %6196 = vmatprep.subr.mxu0 %v6172
  %6197 = vmatpush1.msra.mxu0 %v6171
  %6198 = vmatprep.subr.mxu0 %v6175
  %6199 = vmatpush1.msra.mxu0 %v6174
  %6200 = vmatprep.subr.mxu0 %v6178
  %6201 = vmatpush1.msra.mxu0 %v6177
  %6202 = vmatprep.subr.mxu0 %v6181
  %6203 = vmatpush1.msra.mxu0 %v6180
  %6204 = vmatprep.subr.mxu0 %v6184
  %6205 = vmatpush1.msra.mxu0 %v6183
  %6206 = vmatprep.subr.mxu0 0.0
  %6207 = vmatpush1.msra.mxu0 0.0
  %6208 = vmatprep.subr.mxu0 0.0
  %6209 = vmatpush1.msra.mxu0 0.0
  %6210 = vmatprep.subr.mxu0 0.0
  %6211 = vmatpush1.msra.mxu0 0.0
  %6212 = vmatprep.subr.mxu0 0.0
  %6213 = vmatpush1.msra.mxu0 0.0
  %6214 = vmatprep.subr.mxu0 0.0
  %6215 = vmatpush1.msra.mxu0 0.0
  %6216 = vmatprep.subr.mxu0 0.0
  %6217 = vmatpush1.msra.mxu0 0.0
  %6218 = vmatprep.subr.mxu0 0.0
  %6219 = vmatpush1.msra.mxu0 0.0
  %6220 = vmatprep.subr.mxu0 0.0
  %6221 = vmatpush1.msra.mxu0 0.0
  %6222 = vmatprep.subr.mxu0 0.0
  %6223 = vmatpush1.msra.mxu0 0.0
  %6224 = vmatprep.subr.mxu0 0.0
  %6225 = vmatpush1.msra.mxu0 0.0
  %6226 = vmatprep.subr.mxu0 0.0
  %6227 = vmatpush1.msra.mxu0 0.0
  %6228 = vmatprep.subr.mxu0 0.0
  %6229 = vmatpush1.msra.mxu0 0.0
  %6230 = vmatprep.subr.mxu0 0.0
  %6231 = vmatpush1.msra.mxu0 0.0
  %6232 = vmatprep.subr.mxu0 0.0
  %6233 = vmatpush1.msra.mxu0 0.0
  %6234 = vmatprep.subr.mxu0 0.0
  %6235 = vmatpush1.msra.mxu0 0.0
  %6236 = vmatprep.subr.mxu0 0.0
  %6237 = vmatpush1.msra.mxu0 0.0
  %6238 = vmatprep.subr.mxu0 0.0
  %6239 = vmatpush1.msra.mxu0 0.0
  %6240 = vmatprep.subr.mxu0 0.0
  %6241 = vmatpush1.msra.mxu0 0.0
  %6242 = vmatprep.subr.mxu0 0.0
  %6243 = vmatpush1.msra.mxu0 0.0
  %6244 = vmatprep.subr.mxu0 0.0
  %6245 = vmatpush1.msra.mxu0 0.0
  %6246 = vmatprep.subr.mxu0 0.0
  %6247 = vmatpush1.msra.mxu0 0.0
  %6248 = vmatprep.subr.mxu0 0.0
  %6249 = vmatpush1.msra.mxu0 0.0
  %6250 = vmatprep.subr.mxu0 0.0
  %6251 = vmatpush1.msra.mxu0 0.0
  %6252 = vmatprep.subr.mxu0 0.0
  %6253 = vmatpush1.msra.mxu0 0.0
  %6254 = vmatprep.mubr.f32.mxu0 0.0
  %6255 = vmatmul.mubr.f32.gmra.mrb[0].mxu0 %v6188
  %v6256 = vpop.f32.mrb[0].mxu0
  %v6257 = vadd.f32 0.0, %v6256
  %v6258 = vpop.f32.mrb[0].mxu0
  %v6259 = vadd.f32 0.0, %v6258
  %6260 = vdwg.mxu0
  %v6261 = vsel %vm897, %v3845, 0
  %6263 = vmatprep.subr.mxu0 %v5854
  %6264 = vmatpush1.msra.mxu0 %v5853
  %6265 = vmatprep.subr.mxu0 %v5857
  %6266 = vmatpush1.msra.mxu0 %v5856
  %6267 = vmatprep.subr.mxu0 %v5860
  %6268 = vmatpush1.msra.mxu0 %v5859
  %6269 = vmatprep.subr.mxu0 %v5863
  %6270 = vmatpush1.msra.mxu0 %v5862
  %6271 = vmatprep.subr.mxu0 %v5866
  %6272 = vmatpush1.msra.mxu0 %v5865
  %6273 = vmatprep.subr.mxu0 %v5869
  %6274 = vmatpush1.msra.mxu0 %v5868
  %6275 = vmatprep.subr.mxu0 %v5872
  %6276 = vmatpush1.msra.mxu0 %v5871
  %6277 = vmatprep.subr.mxu0 %v5875
  %6278 = vmatpush1.msra.mxu0 %v5874
  %6279 = vmatprep.subr.mxu0 0.0
  %6280 = vmatpush1.msra.mxu0 0.0
  %6281 = vmatprep.subr.mxu0 0.0
  %6282 = vmatpush1.msra.mxu0 0.0
  %6283 = vmatprep.subr.mxu0 0.0
  %6284 = vmatpush1.msra.mxu0 0.0
  %6285 = vmatprep.subr.mxu0 0.0
  %6286 = vmatpush1.msra.mxu0 0.0
  %6287 = vmatprep.subr.mxu0 0.0
  %6288 = vmatpush1.msra.mxu0 0.0
  %6289 = vmatprep.subr.mxu0 0.0
  %6290 = vmatpush1.msra.mxu0 0.0
  %6291 = vmatprep.subr.mxu0 0.0
  %6292 = vmatpush1.msra.mxu0 0.0
  %6293 = vmatprep.subr.mxu0 0.0
  %6294 = vmatpush1.msra.mxu0 0.0
  %6295 = vmatprep.subr.mxu0 0.0
  %6296 = vmatpush1.msra.mxu0 0.0
  %6297 = vmatprep.subr.mxu0 0.0
  %6298 = vmatpush1.msra.mxu0 0.0
  %6299 = vmatprep.subr.mxu0 0.0
  %6300 = vmatpush1.msra.mxu0 0.0
  %6301 = vmatprep.subr.mxu0 0.0
  %6302 = vmatpush1.msra.mxu0 0.0
  %6303 = vmatprep.subr.mxu0 0.0
  %6304 = vmatpush1.msra.mxu0 0.0
  %6305 = vmatprep.subr.mxu0 0.0
  %6306 = vmatpush1.msra.mxu0 0.0
  %6307 = vmatprep.subr.mxu0 0.0
  %6308 = vmatpush1.msra.mxu0 0.0
  %6309 = vmatprep.subr.mxu0 0.0
  %6310 = vmatpush1.msra.mxu0 0.0
  %6311 = vmatprep.subr.mxu0 0.0
  %6312 = vmatpush1.msra.mxu0 0.0
  %6313 = vmatprep.subr.mxu0 0.0
  %6314 = vmatpush1.msra.mxu0 0.0
  %6315 = vmatprep.subr.mxu0 0.0
  %6316 = vmatpush1.msra.mxu0 0.0
  %6317 = vmatprep.subr.mxu0 0.0
  %6318 = vmatpush1.msra.mxu0 0.0
  %6319 = vmatprep.subr.mxu0 0.0
  %6320 = vmatpush1.msra.mxu0 0.0
  %6321 = vmatprep.subr.mxu0 0.0
  %6322 = vmatpush1.msra.mxu0 0.0
  %6323 = vmatprep.subr.mxu0 0.0
  %6324 = vmatpush1.msra.mxu0 0.0
  %6325 = vmatprep.subr.mxu0 0.0
  %6326 = vmatpush1.msra.mxu0 0.0
  %6327 = vmatprep.mubr.f32.mxu0 0.0
  %6328 = vmatmul.mubr.f32.gmra.mrb[0].mxu0 %v6261
  %v6329 = vpop.f32.mrb[0].mxu0
  %v6330 = vadd.f32 %v6257, %v6329
  %v6331 = vpop.f32.mrb[0].mxu0
  %v6332 = vadd.f32 %v6259, %v6331
  %6333 = vdwg.mxu0
  %6334 = vxpose.xlu0.b32.start [1/16] %v3835, 128
  %6335 = vxpose.xlu0.b32.cont [2/16] 0.0, 128
  %6336 = vxpose.xlu0.b32.cont [3/16] 0.0, 128
  %6337 = vxpose.xlu0.b32.cont [4/16] 0.0, 128
  %6338 = vxpose.xlu0.b32.cont [5/16] 0.0, 128
  %6339 = vxpose.xlu0.b32.cont [6/16] 0.0, 128
  %6340 = vxpose.xlu0.b32.cont [7/16] 0.0, 128
  %6341 = vxpose.xlu0.b32.cont [8/16] 0.0, 128
  %6342 = vxpose.xlu0.b32.cont [9/16] 0.0, 128
  %6343 = vxpose.xlu0.b32.cont [10/16] 0.0, 128
  %6344 = vxpose.xlu0.b32.cont [11/16] 0.0, 128
  %6345 = vxpose.xlu0.b32.cont [12/16] 0.0, 128
  %6346 = vxpose.xlu0.b32.cont [13/16] 0.0, 128
  %6347 = vxpose.xlu0.b32.cont [14/16] 0.0, 128
  %6348 = vxpose.xlu0.b32.cont [15/16] 0.0, 128
  %6349 = vxpose.xlu0.b32.end [16/16] 0.0, 128
  %v6350 = vpop.trf.xlu0
  %v6351 = vpop.trf.xlu0
  %v6352 = vpop.trf.xlu0
  %v6353 = vpop.trf.xlu0
  %v6354 = vpop.trf.xlu0
  %v6355 = vpop.trf.xlu0
  %v6356 = vpop.trf.xlu0
  %v6357 = vpop.trf.xlu0
  %v6358 = vpop.trf.xlu0
  %v6359 = vpop.trf.xlu0
  %v6360 = vpop.trf.xlu0
  %v6361 = vpop.trf.xlu0
  %v6362 = vpop.trf.xlu0
  %v6363 = vpop.trf.xlu0
  %v6364 = vpop.trf.xlu0
  %v6365 = vpop.trf.xlu0
  %v6367 = vsel %vm207, %v6350, 0
  %v6370 = vsel %vm207, %v6351, 0
  %v6373 = vsel %vm207, %v6352, 0
  %v6376 = vsel %vm207, %v6353, 0
  %v6379 = vsel %vm207, %v6354, 0
  %v6382 = vsel %vm207, %v6355, 0
  %v6385 = vsel %vm207, %v6356, 0
  %v6388 = vsel %vm207, %v6357, 0
  %6390 = vmatprep.subr.mxu0 %v3823
  %6391 = vmatpush1.msra.mxu0 %v3821
  %6392 = vmatprep.subr.mxu0 0.0
  %6393 = vmatpush1.msra.mxu0 0.0
  %6394 = vmatprep.subr.mxu0 0.0
  %6395 = vmatpush1.msra.mxu0 0.0
  %6396 = vmatprep.subr.mxu0 0.0
  %6397 = vmatpush1.msra.mxu0 0.0
  %6398 = vmatprep.subr.mxu0 0.0
  %6399 = vmatpush1.msra.mxu0 0.0
  %6400 = vmatprep.subr.mxu0 0.0
  %6401 = vmatpush1.msra.mxu0 0.0
  %6402 = vmatprep.subr.mxu0 0.0
  %6403 = vmatpush1.msra.mxu0 0.0
  %6404 = vmatprep.subr.mxu0 0.0
  %6405 = vmatpush1.msra.mxu0 0.0
  %6406 = vmatprep.subr.mxu0 0.0
  %6407 = vmatpush1.msra.mxu0 0.0
  %6408 = vmatprep.subr.mxu0 0.0
  %6409 = vmatpush1.msra.mxu0 0.0
  %6410 = vmatprep.subr.mxu0 0.0
  %6411 = vmatpush1.msra.mxu0 0.0
  %6412 = vmatprep.subr.mxu0 0.0
  %6413 = vmatpush1.msra.mxu0 0.0
  %6414 = vmatprep.subr.mxu0 0.0
  %6415 = vmatpush1.msra.mxu0 0.0
  %6416 = vmatprep.subr.mxu0 0.0
  %6417 = vmatpush1.msra.mxu0 0.0
  %6418 = vmatprep.subr.mxu0 0.0
  %6419 = vmatpush1.msra.mxu0 0.0
  %6420 = vmatprep.subr.mxu0 0.0
  %6421 = vmatpush1.msra.mxu0 0.0
  %6422 = vmatprep.subr.mxu0 0.0
  %6423 = vmatpush1.msra.mxu0 0.0
  %6424 = vmatprep.subr.mxu0 0.0
  %6425 = vmatpush1.msra.mxu0 0.0
  %6426 = vmatprep.subr.mxu0 0.0
  %6427 = vmatpush1.msra.mxu0 0.0
  %6428 = vmatprep.subr.mxu0 0.0
  %6429 = vmatpush1.msra.mxu0 0.0
  %6430 = vmatprep.subr.mxu0 0.0
  %6431 = vmatpush1.msra.mxu0 0.0
  %6432 = vmatprep.subr.mxu0 0.0
  %6433 = vmatpush1.msra.mxu0 0.0
  %6434 = vmatprep.subr.mxu0 0.0
  %6435 = vmatpush1.msra.mxu0 0.0
  %6436 = vmatprep.subr.mxu0 0.0
  %6437 = vmatpush1.msra.mxu0 0.0
  %6438 = vmatprep.subr.mxu0 0.0
  %6439 = vmatpush1.msra.mxu0 0.0
  %6440 = vmatprep.subr.mxu0 0.0
  %6441 = vmatpush1.msra.mxu0 0.0
  %6442 = vmatprep.subr.mxu0 0.0
  %6443 = vmatpush1.msra.mxu0 0.0
  %6444 = vmatprep.subr.mxu0 0.0
  %6445 = vmatpush1.msra.mxu0 0.0
  %6446 = vmatprep.subr.mxu0 0.0
  %6447 = vmatpush1.msra.mxu0 0.0
  %6448 = vmatprep.subr.mxu0 0.0
  %6449 = vmatpush1.msra.mxu0 0.0
  %6450 = vmatprep.subr.mxu0 0.0
  %6451 = vmatpush1.msra.mxu0 0.0
  %6452 = vmatprep.subr.mxu0 0.0
  %6453 = vmatpush1.msra.mxu0 0.0
  %6454 = vmatprep.mubr.f32.mxu0 0.0
  %6455 = vmatmul.mubr.f32.gmra.mrb[0].mxu0 %v6367
  %v6456 = vpop.f32.mrb[0].mxu0
  %v6457 = vadd.f32 0.0, %v6456
  %v6458 = vpop.f32.mrb[0].mxu0
  %v6459 = vadd.f32 0.0, %v6458
  %6460 = vmatprep.mubr.f32.mxu0 0.0
  %6461 = vmatmul.mubr.f32.gmra.mrb[0].mxu0 %v6370
  %v6462 = vpop.f32.mrb[0].mxu0
  %v6463 = vadd.f32 0.0, %v6462
  %v6464 = vpop.f32.mrb[0].mxu0
  %v6465 = vadd.f32 0.0, %v6464
  %6466 = vmatprep.mubr.f32.mxu0 0.0
  %6467 = vmatmul.mubr.f32.gmra.mrb[0].mxu0 %v6373
  %v6468 = vpop.f32.mrb[0].mxu0
  %v6469 = vadd.f32 0.0, %v6468
  %v6470 = vpop.f32.mrb[0].mxu0
  %v6471 = vadd.f32 0.0, %v6470
  %6472 = vmatprep.mubr.f32.mxu0 0.0
  %6473 = vmatmul.mubr.f32.gmra.mrb[0].mxu0 %v6376
  %v6474 = vpop.f32.mrb[0].mxu0
  %v6475 = vadd.f32 0.0, %v6474
  %v6476 = vpop.f32.mrb[0].mxu0
  %v6477 = vadd.f32 0.0, %v6476
  %6478 = vmatprep.mubr.f32.mxu0 0.0
  %6479 = vmatmul.mubr.f32.gmra.mrb[0].mxu0 %v6379
  %v6480 = vpop.f32.mrb[0].mxu0
  %v6481 = vadd.f32 0.0, %v6480
  %v6482 = vpop.f32.mrb[0].mxu0
  %v6483 = vadd.f32 0.0, %v6482
  %6484 = vmatprep.mubr.f32.mxu0 0.0
  %6485 = vmatmul.mubr.f32.gmra.mrb[0].mxu0 %v6382
  %v6486 = vpop.f32.mrb[0].mxu0
  %v6487 = vadd.f32 0.0, %v6486
  %v6488 = vpop.f32.mrb[0].mxu0
  %v6489 = vadd.f32 0.0, %v6488
  %6490 = vmatprep.mubr.f32.mxu0 0.0
  %6491 = vmatmul.mubr.f32.gmra.mrb[0].mxu0 %v6385
  %v6492 = vpop.f32.mrb[0].mxu0
  %v6493 = vadd.f32 0.0, %v6492
  %v6494 = vpop.f32.mrb[0].mxu0
  %v6495 = vadd.f32 0.0, %v6494
  %6496 = vmatprep.mubr.f32.mxu0 0.0
  %6497 = vmatmul.mubr.f32.gmra.mrb[0].mxu0 %v6388
  %v6498 = vpop.f32.mrb[0].mxu0
  %v6499 = vadd.f32 0.0, %v6498
  %v6500 = vpop.f32.mrb[0].mxu0
  %v6501 = vadd.f32 0.0, %v6500
  %6502 = vdwg.mxu0
  %v6503 = vsel %vm4909, %v6457, -1e+30
  %v6504 = vsel %vm4910, %v6459, -1e+30
  %v6505 = vsel %vm4911, %v6463, -1e+30
  %v6506 = vsel %vm4912, %v6465, -1e+30
  %v6507 = vsel %vm4913, %v6469, -1e+30
  %v6508 = vsel %vm4914, %v6471, -1e+30
  %v6509 = vsel %vm4915, %v6475, -1e+30
  %v6510 = vsel %vm4916, %v6477, -1e+30
  %v6511 = vsel %vm4917, %v6481, -1e+30
  %v6512 = vsel %vm4918, %v6483, -1e+30
  %v6513 = vsel %vm4919, %v6487, -1e+30
  %v6514 = vsel %vm4920, %v6489, -1e+30
  %v6515 = vsel %vm4921, %v6493, -1e+30
  %v6516 = vsel %vm4922, %v6495, -1e+30
  %v6517 = vsel %vm4923, %v6499, -1e+30
  %v6518 = vsel %vm4924, %v6501, -1e+30
  %v6519 = vmax.f32 %v6503, %v6504
  %6520 = vmax.xlane.f32.xlu0 %v6519
  %v6521 = vpop.xlane.xlu0 %6520
  %v6522 = vmax.f32 %v6505, %v6506
  %6523 = vmax.xlane.f32.xlu0 %v6522
  %v6524 = vpop.xlane.xlu0 %6523
  %v6525 = vmax.f32 %v6507, %v6508
  %6526 = vmax.xlane.f32.xlu0 %v6525
  %v6527 = vpop.xlane.xlu0 %6526
  %v6528 = vmax.f32 %v6509, %v6510
  %6529 = vmax.xlane.f32.xlu0 %v6528
  %v6530 = vpop.xlane.xlu0 %6529
  %v6531 = vmax.f32 %v6511, %v6512
  %6532 = vmax.xlane.f32.xlu0 %v6531
  %v6533 = vpop.xlane.xlu0 %6532
  %v6534 = vmax.f32 %v6513, %v6514
  %6535 = vmax.xlane.f32.xlu0 %v6534
  %v6536 = vpop.xlane.xlu0 %6535
  %v6537 = vmax.f32 %v6515, %v6516
  %6538 = vmax.xlane.f32.xlu0 %v6537
  %v6539 = vpop.xlane.xlu0 %6538
  %v6540 = vmax.f32 %v6517, %v6518
  %6541 = vmax.xlane.f32.xlu0 %v6540
  %v6542 = vpop.xlane.xlu0 %6541
  %v6543 = vsub.f32 %v6503, %v6521
  %v6544 = vsub.f32 %v6504, %v6521
  %v6545 = vsub.f32 %v6505, %v6524
  %v6546 = vsub.f32 %v6506, %v6524
  %v6547 = vsub.f32 %v6507, %v6527
  %v6548 = vsub.f32 %v6508, %v6527
  %v6549 = vsub.f32 %v6509, %v6530
  %v6550 = vsub.f32 %v6510, %v6530
  %v6551 = vsub.f32 %v6511, %v6533
  %v6552 = vsub.f32 %v6512, %v6533
  %v6553 = vsub.f32 %v6513, %v6536
  %v6554 = vsub.f32 %v6514, %v6536
  %v6555 = vsub.f32 %v6515, %v6539
  %v6556 = vsub.f32 %v6516, %v6539
  %v6557 = vsub.f32 %v6517, %v6542
  %v6558 = vsub.f32 %v6518, %v6542
  %v6559 = vmul.f32 %v6543, 1.442695
  %v6560 = vpow.pop %v6559
  %v6561 = vmul.f32 %v6544, 1.442695
  %v6562 = vpow.pop %v6561
  %v6563 = vmul.f32 %v6545, 1.442695
  %v6564 = vpow.pop %v6563
  %v6565 = vmul.f32 %v6546, 1.442695
  %v6566 = vpow.pop %v6565
  %v6567 = vmul.f32 %v6547, 1.442695
  %v6568 = vpow.pop %v6567
  %v6569 = vmul.f32 %v6548, 1.442695
  %v6570 = vpow.pop %v6569
  %v6571 = vmul.f32 %v6549, 1.442695
  %v6572 = vpow.pop %v6571
  %v6573 = vmul.f32 %v6550, 1.442695
  %v6574 = vpow.pop %v6573
  %v6575 = vmul.f32 %v6551, 1.442695
  %v6576 = vpow.pop %v6575
  %v6577 = vmul.f32 %v6552, 1.442695
  %v6578 = vpow.pop %v6577
  %v6579 = vmul.f32 %v6553, 1.442695
  %v6580 = vpow.pop %v6579
  %v6581 = vmul.f32 %v6554, 1.442695
  %v6582 = vpow.pop %v6581
  %v6583 = vmul.f32 %v6555, 1.442695
  %v6584 = vpow.pop %v6583
  %v6585 = vmul.f32 %v6556, 1.442695
  %v6586 = vpow.pop %v6585
  %v6587 = vmul.f32 %v6557, 1.442695
  %v6588 = vpow.pop %v6587
  %v6589 = vmul.f32 %v6558, 1.442695
  %v6590 = vpow.pop %v6589
  %v6591 = vadd.f32 %v6560, %v6562
  %6592 = vadd.xlane.f32.xlu0 %v6591
  %v6593 = vpop.xlane.xlu0 %6592
  %v6594 = vadd.f32 %v6564, %v6566
  %6595 = vadd.xlane.f32.xlu0 %v6594
  %v6596 = vpop.xlane.xlu0 %6595
  %v6597 = vadd.f32 %v6568, %v6570
  %6598 = vadd.xlane.f32.xlu0 %v6597
  %v6599 = vpop.xlane.xlu0 %6598
  %v6600 = vadd.f32 %v6572, %v6574
  %6601 = vadd.xlane.f32.xlu0 %v6600
  %v6602 = vpop.xlane.xlu0 %6601
  %v6603 = vadd.f32 %v6576, %v6578
  %6604 = vadd.xlane.f32.xlu0 %v6603
  %v6605 = vpop.xlane.xlu0 %6604
  %v6606 = vadd.f32 %v6580, %v6582
  %6607 = vadd.xlane.f32.xlu0 %v6606
  %v6608 = vpop.xlane.xlu0 %6607
  %v6609 = vadd.f32 %v6584, %v6586
  %6610 = vadd.xlane.f32.xlu0 %v6609
  %v6611 = vpop.xlane.xlu0 %6610
  %v6612 = vadd.f32 %v6588, %v6590
  %6613 = vadd.xlane.f32.xlu0 %v6612
  %v6614 = vpop.xlane.xlu0 %6613
  %v6615 = vrcp.pop %v6593
  %v6616 = vmul.f32 %v6560, %v6615
  %v6617 = vmul.f32 %v6562, %v6615
  %v6618 = vrcp.pop %v6596
  %v6619 = vmul.f32 %v6564, %v6618
  %v6620 = vmul.f32 %v6566, %v6618
  %v6621 = vrcp.pop %v6599
  %v6622 = vmul.f32 %v6568, %v6621
  %v6623 = vmul.f32 %v6570, %v6621
  %v6624 = vrcp.pop %v6602
  %v6625 = vmul.f32 %v6572, %v6624
  %v6626 = vmul.f32 %v6574, %v6624
  %v6627 = vrcp.pop %v6605
  %v6628 = vmul.f32 %v6576, %v6627
  %v6629 = vmul.f32 %v6578, %v6627
  %v6630 = vrcp.pop %v6608
  %v6631 = vmul.f32 %v6580, %v6630
  %v6632 = vmul.f32 %v6582, %v6630
  %v6633 = vrcp.pop %v6611
  %v6634 = vmul.f32 %v6584, %v6633
  %v6635 = vmul.f32 %v6586, %v6633
  %v6636 = vrcp.pop %v6614
  %v6637 = vmul.f32 %v6588, %v6636
  %v6638 = vmul.f32 %v6590, %v6636
  %v6640 = vsel %vm897, %v3847, 0
  %6642 = vmatprep.subr.mxu0 %v6617
  %6643 = vmatpush1.msra.mxu0 %v6616
  %6644 = vmatprep.subr.mxu0 %v6620
  %6645 = vmatpush1.msra.mxu0 %v6619
  %6646 = vmatprep.subr.mxu0 %v6623
  %6647 = vmatpush1.msra.mxu0 %v6622
  %6648 = vmatprep.subr.mxu0 %v6626
  %6649 = vmatpush1.msra.mxu0 %v6625
  %6650 = vmatprep.subr.mxu0 %v6629
  %6651 = vmatpush1.msra.mxu0 %v6628
  %6652 = vmatprep.subr.mxu0 %v6632
  %6653 = vmatpush1.msra.mxu0 %v6631
  %6654 = vmatprep.subr.mxu0 %v6635
  %6655 = vmatpush1.msra.mxu0 %v6634
  %6656 = vmatprep.subr.mxu0 %v6638
  %6657 = vmatpush1.msra.mxu0 %v6637
  %6658 = vmatprep.subr.mxu0 0.0
  %6659 = vmatpush1.msra.mxu0 0.0
  %6660 = vmatprep.subr.mxu0 0.0
  %6661 = vmatpush1.msra.mxu0 0.0
  %6662 = vmatprep.subr.mxu0 0.0
  %6663 = vmatpush1.msra.mxu0 0.0
  %6664 = vmatprep.subr.mxu0 0.0
  %6665 = vmatpush1.msra.mxu0 0.0
  %6666 = vmatprep.subr.mxu0 0.0
  %6667 = vmatpush1.msra.mxu0 0.0
  %6668 = vmatprep.subr.mxu0 0.0
  %6669 = vmatpush1.msra.mxu0 0.0
  %6670 = vmatprep.subr.mxu0 0.0
  %6671 = vmatpush1.msra.mxu0 0.0
  %6672 = vmatprep.subr.mxu0 0.0
  %6673 = vmatpush1.msra.mxu0 0.0
  %6674 = vmatprep.subr.mxu0 0.0
  %6675 = vmatpush1.msra.mxu0 0.0
  %6676 = vmatprep.subr.mxu0 0.0
  %6677 = vmatpush1.msra.mxu0 0.0
  %6678 = vmatprep.subr.mxu0 0.0
  %6679 = vmatpush1.msra.mxu0 0.0
  %6680 = vmatprep.subr.mxu0 0.0
  %6681 = vmatpush1.msra.mxu0 0.0
  %6682 = vmatprep.subr.mxu0 0.0
  %6683 = vmatpush1.msra.mxu0 0.0
  %6684 = vmatprep.subr.mxu0 0.0
  %6685 = vmatpush1.msra.mxu0 0.0
  %6686 = vmatprep.subr.mxu0 0.0
  %6687 = vmatpush1.msra.mxu0 0.0
  %6688 = vmatprep.subr.mxu0 0.0
  %6689 = vmatpush1.msra.mxu0 0.0
  %6690 = vmatprep.subr.mxu0 0.0
  %6691 = vmatpush1.msra.mxu0 0.0
  %6692 = vmatprep.subr.mxu0 0.0
  %6693 = vmatpush1.msra.mxu0 0.0
  %6694 = vmatprep.subr.mxu0 0.0
  %6695 = vmatpush1.msra.mxu0 0.0
  %6696 = vmatprep.subr.mxu0 0.0
  %6697 = vmatpush1.msra.mxu0 0.0
  %6698 = vmatprep.subr.mxu0 0.0
  %6699 = vmatpush1.msra.mxu0 0.0
  %6700 = vmatprep.subr.mxu0 0.0
  %6701 = vmatpush1.msra.mxu0 0.0
  %6702 = vmatprep.subr.mxu0 0.0
  %6703 = vmatpush1.msra.mxu0 0.0
  %6704 = vmatprep.subr.mxu0 0.0
  %6705 = vmatpush1.msra.mxu0 0.0
  %6706 = vmatprep.mubr.f32.mxu0 0.0
  %6707 = vmatmul.mubr.f32.gmra.mrb[0].mxu0 %v6640
  %v6708 = vpop.f32.mrb[0].mxu0
  %v6709 = vadd.f32 0.0, %v6708
  %v6710 = vpop.f32.mrb[0].mxu0
  %v6711 = vadd.f32 0.0, %v6710
  %6712 = vdwg.mxu0
  %v6713 = vadd.f32 %v6330, %v6709
  %v6714 = vadd.f32 %v6332, %v6711
  %6716 = vrot.lane.b32.xlu0 %v3835, 64
  %v6717 = vpop.permute.xlu0 %6716
  %6719 = vxpose.xlu0.b32.start [1/16] %v6717, 128
  %6720 = vxpose.xlu0.b32.cont [2/16] 0.0, 128
  %6721 = vxpose.xlu0.b32.cont [3/16] 0.0, 128
  %6722 = vxpose.xlu0.b32.cont [4/16] 0.0, 128
  %6723 = vxpose.xlu0.b32.cont [5/16] 0.0, 128
  %6724 = vxpose.xlu0.b32.cont [6/16] 0.0, 128
  %6725 = vxpose.xlu0.b32.cont [7/16] 0.0, 128
  %6726 = vxpose.xlu0.b32.cont [8/16] 0.0, 128
  %6727 = vxpose.xlu0.b32.cont [9/16] 0.0, 128
  %6728 = vxpose.xlu0.b32.cont [10/16] 0.0, 128
  %6729 = vxpose.xlu0.b32.cont [11/16] 0.0, 128
  %6730 = vxpose.xlu0.b32.cont [12/16] 0.0, 128
  %6731 = vxpose.xlu0.b32.cont [13/16] 0.0, 128
  %6732 = vxpose.xlu0.b32.cont [14/16] 0.0, 128
  %6733 = vxpose.xlu0.b32.cont [15/16] 0.0, 128
  %6734 = vxpose.xlu0.b32.end [16/16] 0.0, 128
  %v6735 = vpop.trf.xlu0
  %v6736 = vpop.trf.xlu0
  %v6737 = vpop.trf.xlu0
  %v6738 = vpop.trf.xlu0
  %v6739 = vpop.trf.xlu0
  %v6740 = vpop.trf.xlu0
  %v6741 = vpop.trf.xlu0
  %v6742 = vpop.trf.xlu0
  %v6743 = vpop.trf.xlu0
  %v6744 = vpop.trf.xlu0
  %v6745 = vpop.trf.xlu0
  %v6746 = vpop.trf.xlu0
  %v6747 = vpop.trf.xlu0
  %v6748 = vpop.trf.xlu0
  %v6749 = vpop.trf.xlu0
  %v6750 = vpop.trf.xlu0
  %v6752 = vsel %vm207, %v6735, 0
  %v6755 = vsel %vm207, %v6736, 0
  %v6758 = vsel %vm207, %v6737, 0
  %v6761 = vsel %vm207, %v6738, 0
  %v6764 = vsel %vm207, %v6739, 0
  %v6767 = vsel %vm207, %v6740, 0
  %v6770 = vsel %vm207, %v6741, 0
  %v6773 = vsel %vm207, %v6742, 0
  %6775 = vmatprep.subr.mxu0 %v3823
  %6776 = vmatpush1.msra.mxu0 %v3821
  %6777 = vmatprep.subr.mxu0 0.0
  %6778 = vmatpush1.msra.mxu0 0.0
  %6779 = vmatprep.subr.mxu0 0.0
  %6780 = vmatpush1.msra.mxu0 0.0
  %6781 = vmatprep.subr.mxu0 0.0
  %6782 = vmatpush1.msra.mxu0 0.0
  %6783 = vmatprep.subr.mxu0 0.0
  %6784 = vmatpush1.msra.mxu0 0.0
  %6785 = vmatprep.subr.mxu0 0.0
  %6786 = vmatpush1.msra.mxu0 0.0
  %6787 = vmatprep.subr.mxu0 0.0
  %6788 = vmatpush1.msra.mxu0 0.0
  %6789 = vmatprep.subr.mxu0 0.0
  %6790 = vmatpush1.msra.mxu0 0.0
  %6791 = vmatprep.subr.mxu0 0.0
  %6792 = vmatpush1.msra.mxu0 0.0
  %6793 = vmatprep.subr.mxu0 0.0
  %6794 = vmatpush1.msra.mxu0 0.0
  %6795 = vmatprep.subr.mxu0 0.0
  %6796 = vmatpush1.msra.mxu0 0.0
  %6797 = vmatprep.subr.mxu0 0.0
  %6798 = vmatpush1.msra.mxu0 0.0
  %6799 = vmatprep.subr.mxu0 0.0
  %6800 = vmatpush1.msra.mxu0 0.0
  %6801 = vmatprep.subr.mxu0 0.0
  %6802 = vmatpush1.msra.mxu0 0.0
  %6803 = vmatprep.subr.mxu0 0.0
  %6804 = vmatpush1.msra.mxu0 0.0
  %6805 = vmatprep.subr.mxu0 0.0
  %6806 = vmatpush1.msra.mxu0 0.0
  %6807 = vmatprep.subr.mxu0 0.0
  %6808 = vmatpush1.msra.mxu0 0.0
  %6809 = vmatprep.subr.mxu0 0.0
  %6810 = vmatpush1.msra.mxu0 0.0
  %6811 = vmatprep.subr.mxu0 0.0
  %6812 = vmatpush1.msra.mxu0 0.0
  %6813 = vmatprep.subr.mxu0 0.0
  %6814 = vmatpush1.msra.mxu0 0.0
  %6815 = vmatprep.subr.mxu0 0.0
  %6816 = vmatpush1.msra.mxu0 0.0
  %6817 = vmatprep.subr.mxu0 0.0
  %6818 = vmatpush1.msra.mxu0 0.0
  %6819 = vmatprep.subr.mxu0 0.0
  %6820 = vmatpush1.msra.mxu0 0.0
  %6821 = vmatprep.subr.mxu0 0.0
  %6822 = vmatpush1.msra.mxu0 0.0
  %6823 = vmatprep.subr.mxu0 0.0
  %6824 = vmatpush1.msra.mxu0 0.0
  %6825 = vmatprep.subr.mxu0 0.0
  %6826 = vmatpush1.msra.mxu0 0.0
  %6827 = vmatprep.subr.mxu0 0.0
  %6828 = vmatpush1.msra.mxu0 0.0
  %6829 = vmatprep.subr.mxu0 0.0
  %6830 = vmatpush1.msra.mxu0 0.0
  %6831 = vmatprep.subr.mxu0 0.0
  %6832 = vmatpush1.msra.mxu0 0.0
  %6833 = vmatprep.subr.mxu0 0.0
  %6834 = vmatpush1.msra.mxu0 0.0
  %6835 = vmatprep.subr.mxu0 0.0
  %6836 = vmatpush1.msra.mxu0 0.0
  %6837 = vmatprep.subr.mxu0 0.0
  %6838 = vmatpush1.msra.mxu0 0.0
  %6839 = vmatprep.mubr.f32.mxu0 0.0
  %6840 = vmatmul.mubr.f32.gmra.mrb[0].mxu0 %v6752
  %v6841 = vpop.f32.mrb[0].mxu0
  %v6842 = vadd.f32 0.0, %v6841
  %v6843 = vpop.f32.mrb[0].mxu0
  %v6844 = vadd.f32 0.0, %v6843
  %6845 = vmatprep.mubr.f32.mxu0 0.0
  %6846 = vmatmul.mubr.f32.gmra.mrb[0].mxu0 %v6755
  %v6847 = vpop.f32.mrb[0].mxu0
  %v6848 = vadd.f32 0.0, %v6847
  %v6849 = vpop.f32.mrb[0].mxu0
  %v6850 = vadd.f32 0.0, %v6849
  %6851 = vmatprep.mubr.f32.mxu0 0.0
  %6852 = vmatmul.mubr.f32.gmra.mrb[0].mxu0 %v6758
  %v6853 = vpop.f32.mrb[0].mxu0
  %v6854 = vadd.f32 0.0, %v6853
  %v6855 = vpop.f32.mrb[0].mxu0
  %v6856 = vadd.f32 0.0, %v6855
  %6857 = vmatprep.mubr.f32.mxu0 0.0
  %6858 = vmatmul.mubr.f32.gmra.mrb[0].mxu0 %v6761
  %v6859 = vpop.f32.mrb[0].mxu0
  %v6860 = vadd.f32 0.0, %v6859
  %v6861 = vpop.f32.mrb[0].mxu0
  %v6862 = vadd.f32 0.0, %v6861
  %6863 = vmatprep.mubr.f32.mxu0 0.0
  %6864 = vmatmul.mubr.f32.gmra.mrb[0].mxu0 %v6764
  %v6865 = vpop.f32.mrb[0].mxu0
  %v6866 = vadd.f32 0.0, %v6865
  %v6867 = vpop.f32.mrb[0].mxu0
  %v6868 = vadd.f32 0.0, %v6867
  %6869 = vmatprep.mubr.f32.mxu0 0.0
  %6870 = vmatmul.mubr.f32.gmra.mrb[0].mxu0 %v6767
  %v6871 = vpop.f32.mrb[0].mxu0
  %v6872 = vadd.f32 0.0, %v6871
  %v6873 = vpop.f32.mrb[0].mxu0
  %v6874 = vadd.f32 0.0, %v6873
  %6875 = vmatprep.mubr.f32.mxu0 0.0
  %6876 = vmatmul.mubr.f32.gmra.mrb[0].mxu0 %v6770
  %v6877 = vpop.f32.mrb[0].mxu0
  %v6878 = vadd.f32 0.0, %v6877
  %v6879 = vpop.f32.mrb[0].mxu0
  %v6880 = vadd.f32 0.0, %v6879
  %6881 = vmatprep.mubr.f32.mxu0 0.0
  %6882 = vmatmul.mubr.f32.gmra.mrb[0].mxu0 %v6773
  %v6883 = vpop.f32.mrb[0].mxu0
  %v6884 = vadd.f32 0.0, %v6883
  %v6885 = vpop.f32.mrb[0].mxu0
  %v6886 = vadd.f32 0.0, %v6885
  %6887 = vdwg.mxu0
  %v6888 = vsel %vm5342, %v6842, -1e+30
  %v6889 = vsel %vm5343, %v6844, -1e+30
  %v6890 = vsel %vm5344, %v6848, -1e+30
  %v6891 = vsel %vm5345, %v6850, -1e+30
  %v6892 = vsel %vm5346, %v6854, -1e+30
  %v6893 = vsel %vm5347, %v6856, -1e+30
  %v6894 = vsel %vm5348, %v6860, -1e+30
  %v6895 = vsel %vm5349, %v6862, -1e+30
  %v6896 = vsel %vm5350, %v6866, -1e+30
  %v6897 = vsel %vm5351, %v6868, -1e+30
  %v6898 = vsel %vm5352, %v6872, -1e+30
  %v6899 = vsel %vm5353, %v6874, -1e+30
  %v6900 = vsel %vm5354, %v6878, -1e+30
  %v6901 = vsel %vm5355, %v6880, -1e+30
  %v6902 = vsel %vm5356, %v6884, -1e+30
  %v6903 = vsel %vm5357, %v6886, -1e+30
  %v6904 = vmax.f32 %v6888, %v6889
  %6905 = vmax.xlane.f32.xlu0 %v6904
  %v6906 = vpop.xlane.xlu0 %6905
  %v6907 = vmax.f32 %v6890, %v6891
  %6908 = vmax.xlane.f32.xlu0 %v6907
  %v6909 = vpop.xlane.xlu0 %6908
  %v6910 = vmax.f32 %v6892, %v6893
  %6911 = vmax.xlane.f32.xlu0 %v6910
  %v6912 = vpop.xlane.xlu0 %6911
  %v6913 = vmax.f32 %v6894, %v6895
  %6914 = vmax.xlane.f32.xlu0 %v6913
  %v6915 = vpop.xlane.xlu0 %6914
  %v6916 = vmax.f32 %v6896, %v6897
  %6917 = vmax.xlane.f32.xlu0 %v6916
  %v6918 = vpop.xlane.xlu0 %6917
  %v6919 = vmax.f32 %v6898, %v6899
  %6920 = vmax.xlane.f32.xlu0 %v6919
  %v6921 = vpop.xlane.xlu0 %6920
  %v6922 = vmax.f32 %v6900, %v6901
  %6923 = vmax.xlane.f32.xlu0 %v6922
  %v6924 = vpop.xlane.xlu0 %6923
  %v6925 = vmax.f32 %v6902, %v6903
  %6926 = vmax.xlane.f32.xlu0 %v6925
  %v6927 = vpop.xlane.xlu0 %6926
  %v6928 = vsub.f32 %v6888, %v6906
  %v6929 = vsub.f32 %v6889, %v6906
  %v6930 = vsub.f32 %v6890, %v6909
  %v6931 = vsub.f32 %v6891, %v6909
  %v6932 = vsub.f32 %v6892, %v6912
  %v6933 = vsub.f32 %v6893, %v6912
  %v6934 = vsub.f32 %v6894, %v6915
  %v6935 = vsub.f32 %v6895, %v6915
  %v6936 = vsub.f32 %v6896, %v6918
  %v6937 = vsub.f32 %v6897, %v6918
  %v6938 = vsub.f32 %v6898, %v6921
  %v6939 = vsub.f32 %v6899, %v6921
  %v6940 = vsub.f32 %v6900, %v6924
  %v6941 = vsub.f32 %v6901, %v6924
  %v6942 = vsub.f32 %v6902, %v6927
  %v6943 = vsub.f32 %v6903, %v6927
  %v6944 = vmul.f32 %v6928, 1.442695
  %v6945 = vpow.pop %v6944
  %v6946 = vmul.f32 %v6929, 1.442695
  %v6947 = vpow.pop %v6946
  %v6948 = vmul.f32 %v6930, 1.442695
  %v6949 = vpow.pop %v6948
  %v6950 = vmul.f32 %v6931, 1.442695
  %v6951 = vpow.pop %v6950
  %v6952 = vmul.f32 %v6932, 1.442695
  %v6953 = vpow.pop %v6952
  %v6954 = vmul.f32 %v6933, 1.442695
  %v6955 = vpow.pop %v6954
  %v6956 = vmul.f32 %v6934, 1.442695
  %v6957 = vpow.pop %v6956
  %v6958 = vmul.f32 %v6935, 1.442695
  %v6959 = vpow.pop %v6958
  %v6960 = vmul.f32 %v6936, 1.442695
  %v6961 = vpow.pop %v6960
  %v6962 = vmul.f32 %v6937, 1.442695
  %v6963 = vpow.pop %v6962
  %v6964 = vmul.f32 %v6938, 1.442695
  %v6965 = vpow.pop %v6964
  %v6966 = vmul.f32 %v6939, 1.442695
  %v6967 = vpow.pop %v6966
  %v6968 = vmul.f32 %v6940, 1.442695
  %v6969 = vpow.pop %v6968
  %v6970 = vmul.f32 %v6941, 1.442695
  %v6971 = vpow.pop %v6970
  %v6972 = vmul.f32 %v6942, 1.442695
  %v6973 = vpow.pop %v6972
  %v6974 = vmul.f32 %v6943, 1.442695
  %v6975 = vpow.pop %v6974
  %v6976 = vadd.f32 %v6945, %v6947
  %6977 = vadd.xlane.f32.xlu0 %v6976
  %v6978 = vpop.xlane.xlu0 %6977
  %v6979 = vadd.f32 %v6949, %v6951
  %6980 = vadd.xlane.f32.xlu0 %v6979
  %v6981 = vpop.xlane.xlu0 %6980
  %v6982 = vadd.f32 %v6953, %v6955
  %6983 = vadd.xlane.f32.xlu0 %v6982
  %v6984 = vpop.xlane.xlu0 %6983
  %v6985 = vadd.f32 %v6957, %v6959
  %6986 = vadd.xlane.f32.xlu0 %v6985
  %v6987 = vpop.xlane.xlu0 %6986
  %v6988 = vadd.f32 %v6961, %v6963
  %6989 = vadd.xlane.f32.xlu0 %v6988
  %v6990 = vpop.xlane.xlu0 %6989
  %v6991 = vadd.f32 %v6965, %v6967
  %6992 = vadd.xlane.f32.xlu0 %v6991
  %v6993 = vpop.xlane.xlu0 %6992
  %v6994 = vadd.f32 %v6969, %v6971
  %6995 = vadd.xlane.f32.xlu0 %v6994
  %v6996 = vpop.xlane.xlu0 %6995
  %v6997 = vadd.f32 %v6973, %v6975
  %6998 = vadd.xlane.f32.xlu0 %v6997
  %v6999 = vpop.xlane.xlu0 %6998
  %v7000 = vrcp.pop %v6978
  %v7001 = vmul.f32 %v6945, %v7000
  %v7002 = vmul.f32 %v6947, %v7000
  %v7003 = vrcp.pop %v6981
  %v7004 = vmul.f32 %v6949, %v7003
  %v7005 = vmul.f32 %v6951, %v7003
  %v7006 = vrcp.pop %v6984
  %v7007 = vmul.f32 %v6953, %v7006
  %v7008 = vmul.f32 %v6955, %v7006
  %v7009 = vrcp.pop %v6987
  %v7010 = vmul.f32 %v6957, %v7009
  %v7011 = vmul.f32 %v6959, %v7009
  %v7012 = vrcp.pop %v6990
  %v7013 = vmul.f32 %v6961, %v7012
  %v7014 = vmul.f32 %v6963, %v7012
  %v7015 = vrcp.pop %v6993
  %v7016 = vmul.f32 %v6965, %v7015
  %v7017 = vmul.f32 %v6967, %v7015
  %v7018 = vrcp.pop %v6996
  %v7019 = vmul.f32 %v6969, %v7018
  %v7020 = vmul.f32 %v6971, %v7018
  %v7021 = vrcp.pop %v6999
  %v7022 = vmul.f32 %v6973, %v7021
  %v7023 = vmul.f32 %v6975, %v7021
  %7024 = vrot.lane.b32.xlu0 %v3847, 64
  %v7025 = vpop.permute.xlu0 %7024
  %v7026 = vsel %vm897, %v7025, 0
  %7028 = vmatprep.subr.mxu0 %v7002
  %7029 = vmatpush1.msra.mxu0 %v7001
  %7030 = vmatprep.subr.mxu0 %v7005
  %7031 = vmatpush1.msra.mxu0 %v7004
  %7032 = vmatprep.subr.mxu0 %v7008
  %7033 = vmatpush1.msra.mxu0 %v7007
  %7034 = vmatprep.subr.mxu0 %v7011
  %7035 = vmatpush1.msra.mxu0 %v7010
  %7036 = vmatprep.subr.mxu0 %v7014
  %7037 = vmatpush1.msra.mxu0 %v7013
  %7038 = vmatprep.subr.mxu0 %v7017
  %7039 = vmatpush1.msra.mxu0 %v7016
  %7040 = vmatprep.subr.mxu0 %v7020
  %7041 = vmatpush1.msra.mxu0 %v7019
  %7042 = vmatprep.subr.mxu0 %v7023
  %7043 = vmatpush1.msra.mxu0 %v7022
  %7044 = vmatprep.subr.mxu0 0.0
  %7045 = vmatpush1.msra.mxu0 0.0
  %7046 = vmatprep.subr.mxu0 0.0
  %7047 = vmatpush1.msra.mxu0 0.0
  %7048 = vmatprep.subr.mxu0 0.0
  %7049 = vmatpush1.msra.mxu0 0.0
  %7050 = vmatprep.subr.mxu0 0.0
  %7051 = vmatpush1.msra.mxu0 0.0
  %7052 = vmatprep.subr.mxu0 0.0
  %7053 = vmatpush1.msra.mxu0 0.0
  %7054 = vmatprep.subr.mxu0 0.0
  %7055 = vmatpush1.msra.mxu0 0.0
  %7056 = vmatprep.subr.mxu0 0.0
  %7057 = vmatpush1.msra.mxu0 0.0
  %7058 = vmatprep.subr.mxu0 0.0
  %7059 = vmatpush1.msra.mxu0 0.0
  %7060 = vmatprep.subr.mxu0 0.0
  %7061 = vmatpush1.msra.mxu0 0.0
  %7062 = vmatprep.subr.mxu0 0.0
  %7063 = vmatpush1.msra.mxu0 0.0
  %7064 = vmatprep.subr.mxu0 0.0
  %7065 = vmatpush1.msra.mxu0 0.0
  %7066 = vmatprep.subr.mxu0 0.0
  %7067 = vmatpush1.msra.mxu0 0.0
  %7068 = vmatprep.subr.mxu0 0.0
  %7069 = vmatpush1.msra.mxu0 0.0
  %7070 = vmatprep.subr.mxu0 0.0
  %7071 = vmatpush1.msra.mxu0 0.0
  %7072 = vmatprep.subr.mxu0 0.0
  %7073 = vmatpush1.msra.mxu0 0.0
  %7074 = vmatprep.subr.mxu0 0.0
  %7075 = vmatpush1.msra.mxu0 0.0
  %7076 = vmatprep.subr.mxu0 0.0
  %7077 = vmatpush1.msra.mxu0 0.0
  %7078 = vmatprep.subr.mxu0 0.0
  %7079 = vmatpush1.msra.mxu0 0.0
  %7080 = vmatprep.subr.mxu0 0.0
  %7081 = vmatpush1.msra.mxu0 0.0
  %7082 = vmatprep.subr.mxu0 0.0
  %7083 = vmatpush1.msra.mxu0 0.0
  %7084 = vmatprep.subr.mxu0 0.0
  %7085 = vmatpush1.msra.mxu0 0.0
  %7086 = vmatprep.subr.mxu0 0.0
  %7087 = vmatpush1.msra.mxu0 0.0
  %7088 = vmatprep.subr.mxu0 0.0
  %7089 = vmatpush1.msra.mxu0 0.0
  %7090 = vmatprep.subr.mxu0 0.0
  %7091 = vmatpush1.msra.mxu0 0.0
  %7092 = vmatprep.mubr.f32.mxu0 0.0
  %7093 = vmatmul.mubr.f32.gmra.mrb[0].mxu0 %v7026
  %v7094 = vpop.f32.mrb[0].mxu0
  %v7095 = vadd.f32 0.0, %v7094
  %v7096 = vpop.f32.mrb[0].mxu0
  %v7097 = vadd.f32 0.0, %v7096
  %7098 = vdwg.mxu0
  %v7099 = vadd.f32 %v6713, %v7095
  %v7100 = vadd.f32 %v6714, %v7097
  %v7101 = vld [vmem:[%s5] sm:$0xff]
  %v7102 = vld [vmem:[%s5 + $0x8] sm:$0xff]
  %v7103 = vld [vmem:[%s6] sm:$0xff]
  %v7104 = vld [vmem:[%s6 + $0x8] sm:$0xff]
  %7106 = vset.pattern.permute.xlu0 0
  %7107 = vperm.xlu0 %7106, %v7103
  %v7108 = vpop.permute.xlu0 %7107
  %7111 = vset.pattern.permute.xlu0 0
  %7112 = vperm.xlu0 %7111, %v7104
  %v7113 = vpop.permute.xlu0 %7112
  %v7116 = vsel %vm55, %v7101, 0
  %v7119 = vsel %vm55, %v7102, 0
  %7121 = vmatprep.subr.mxu0 %v5570
  %7122 = vmatpush1.msra.mxu0 %v5569
  %7123 = vmatprep.subr.mxu0 %v7100
  %7124 = vmatpush1.msra.mxu0 %v7099
  %7125 = vmatprep.subr.mxu0 0.0
  %7126 = vmatpush1.msra.mxu0 0.0
  %7127 = vmatprep.subr.mxu0 0.0
  %7128 = vmatpush1.msra.mxu0 0.0
  %7129 = vmatprep.subr.mxu0 0.0
  %7130 = vmatpush1.msra.mxu0 0.0
  %7131 = vmatprep.subr.mxu0 0.0
  %7132 = vmatpush1.msra.mxu0 0.0
  %7133 = vmatprep.subr.mxu0 0.0
  %7134 = vmatpush1.msra.mxu0 0.0
  %7135 = vmatprep.subr.mxu0 0.0
  %7136 = vmatpush1.msra.mxu0 0.0
  %7137 = vmatprep.subr.mxu0 0.0
  %7138 = vmatpush1.msra.mxu0 0.0
  %7139 = vmatprep.subr.mxu0 0.0
  %7140 = vmatpush1.msra.mxu0 0.0
  %7141 = vmatprep.subr.mxu0 0.0
  %7142 = vmatpush1.msra.mxu0 0.0
  %7143 = vmatprep.subr.mxu0 0.0
  %7144 = vmatpush1.msra.mxu0 0.0
  %7145 = vmatprep.subr.mxu0 0.0
  %7146 = vmatpush1.msra.mxu0 0.0
  %7147 = vmatprep.subr.mxu0 0.0
  %7148 = vmatpush1.msra.mxu0 0.0
  %7149 = vmatprep.subr.mxu0 0.0
  %7150 = vmatpush1.msra.mxu0 0.0
  %7151 = vmatprep.subr.mxu0 0.0
  %7152 = vmatpush1.msra.mxu0 0.0
  %7153 = vmatprep.subr.mxu0 0.0
  %7154 = vmatpush1.msra.mxu0 0.0
  %7155 = vmatprep.subr.mxu0 0.0
  %7156 = vmatpush1.msra.mxu0 0.0
  %7157 = vmatprep.subr.mxu0 0.0
  %7158 = vmatpush1.msra.mxu0 0.0
  %7159 = vmatprep.subr.mxu0 0.0
  %7160 = vmatpush1.msra.mxu0 0.0
  %7161 = vmatprep.subr.mxu0 0.0
  %7162 = vmatpush1.msra.mxu0 0.0
  %7163 = vmatprep.subr.mxu0 0.0
  %7164 = vmatpush1.msra.mxu0 0.0
  %7165 = vmatprep.subr.mxu0 0.0
  %7166 = vmatpush1.msra.mxu0 0.0
  %7167 = vmatprep.subr.mxu0 0.0
  %7168 = vmatpush1.msra.mxu0 0.0
  %7169 = vmatprep.subr.mxu0 0.0
  %7170 = vmatpush1.msra.mxu0 0.0
  %7171 = vmatprep.subr.mxu0 0.0
  %7172 = vmatpush1.msra.mxu0 0.0
  %7173 = vmatprep.subr.mxu0 0.0
  %7174 = vmatpush1.msra.mxu0 0.0
  %7175 = vmatprep.subr.mxu0 0.0
  %7176 = vmatpush1.msra.mxu0 0.0
  %7177 = vmatprep.subr.mxu0 0.0
  %7178 = vmatpush1.msra.mxu0 0.0
  %7179 = vmatprep.subr.mxu0 0.0
  %7180 = vmatpush1.msra.mxu0 0.0
  %7181 = vmatprep.subr.mxu0 0.0
  %7182 = vmatpush1.msra.mxu0 0.0
  %7183 = vmatprep.subr.mxu0 0.0
  %7184 = vmatpush1.msra.mxu0 0.0
  %7185 = vmatprep.mubr.f32.mxu0 0.0
  %7186 = vmatmul.mubr.f32.gmra.mrb[0].mxu0 %v7116
  %v7187 = vpop.f32.mrb[0].mxu0
  %v7188 = vadd.f32 %v7108, %v7187
  %v7189 = vpop.f32.mrb[0].mxu0
  %v7190 = vadd.f32 %v7108, %v7189
  %7191 = vmatprep.mubr.f32.mxu0 0.0
  %7192 = vmatmul.mubr.f32.gmra.mrb[0].mxu0 %v7119
  %v7193 = vpop.f32.mrb[0].mxu0
  %v7194 = vadd.f32 %v7113, %v7193
  %v7195 = vpop.f32.mrb[0].mxu0
  %v7196 = vadd.f32 %v7113, %v7195
  %7197 = vdwg.mxu0
  %v7198 = vmax.f32 %v7188, 0.0
  %v7199 = vmax.f32 %v7190, 0.0
  %v7200 = vmax.f32 %v7194, 0.0
  %v7201 = vmax.f32 %v7196, 0.0
  %v7202 = vand.u32 2147483647, %v7188
  %v7203 = vand.u32 2147483647, %v7190
  %v7204 = vand.u32 2147483647, %v7194
  %v7205 = vand.u32 2147483647, %v7196
  %v7206 = vsub.f32 0.0, %v7202
  %v7207 = vsub.f32 0.0, %v7203
  %v7208 = vsub.f32 0.0, %v7204
  %v7209 = vsub.f32 0.0, %v7205
  %v7210 = vmul.f32 %v7206, 1.442695
  %v7211 = vpow.pop %v7210
  %v7212 = vmul.f32 %v7207, 1.442695
  %v7213 = vpow.pop %v7212
  %v7214 = vmul.f32 %v7208, 1.442695
  %v7215 = vpow.pop %v7214
  %v7216 = vmul.f32 %v7209, 1.442695
  %v7217 = vpow.pop %v7216
  %v7218 = vadd.f32 %v7211, 1.0
  %v7219 = vlog2.pop %v7218
  %v7220 = vmul.f32 %v7219, 0.6931472
  %v7221 = vmul.f32 -0.5, %v7211
  %v7222 = vadd.f32 %v7221, 1.0
  %v7223 = vmul.f32 %v7222, %v7211
  %v7224 = vand.u32 2147483647, %v7211
  %vm7225 = vcmp.lt.f32.partialorder %v7224, 0.0004427343
  %v7226 = vsel %vm7225, %v7223, %v7220
  %v7227 = vadd.f32 %v7213, 1.0
  %v7228 = vlog2.pop %v7227
  %v7229 = vmul.f32 %v7228, 0.6931472
  %v7230 = vmul.f32 -0.5, %v7213
  %v7231 = vadd.f32 %v7230, 1.0
  %v7232 = vmul.f32 %v7231, %v7213
  %v7233 = vand.u32 2147483647, %v7213
  %vm7234 = vcmp.lt.f32.partialorder %v7233, 0.0004427343
  %v7235 = vsel %vm7234, %v7232, %v7229
  %v7236 = vadd.f32 %v7215, 1.0
  %v7237 = vlog2.pop %v7236
  %v7238 = vmul.f32 %v7237, 0.6931472
  %v7239 = vmul.f32 -0.5, %v7215
  %v7240 = vadd.f32 %v7239, 1.0
  %v7241 = vmul.f32 %v7240, %v7215
  %v7242 = vand.u32 2147483647, %v7215
  %vm7243 = vcmp.lt.f32.partialorder %v7242, 0.0004427343
  %v7244 = vsel %vm7243, %v7241, %v7238
  %v7245 = vadd.f32 %v7217, 1.0
  %v7246 = vlog2.pop %v7245
  %v7247 = vmul.f32 %v7246, 0.6931472
  %v7248 = vmul.f32 -0.5, %v7217
  %v7249 = vadd.f32 %v7248, 1.0
  %v7250 = vmul.f32 %v7249, %v7217
  %v7251 = vand.u32 2147483647, %v7217
  %vm7252 = vcmp.lt.f32.partialorder %v7251, 0.0004427343
  %v7253 = vsel %vm7252, %v7250, %v7247
  %v7254 = vadd.f32 %v7198, %v7226
  %v7255 = vadd.f32 %v7199, %v7235
  %v7256 = vadd.f32 %v7200, %v7244
  %v7257 = vadd.f32 %v7201, %v7253
  %v7258 = vtanh.pop %v7254
  %v7259 = vtanh.pop %v7255
  %v7260 = vtanh.pop %v7256
  %v7261 = vtanh.pop %v7257
  %v7262 = vmul.f32 %v7188, %v7258
  %v7263 = vmul.f32 %v7190, %v7259
  %v7264 = vmul.f32 %v7194, %v7260
  %v7265 = vmul.f32 %v7196, %v7261
  %v7266 = vld [vmem:[%s7] sm:$0xff]
  %v7267 = vld [vmem:[%s7 + $0x8] sm:$0xff]
  %v7268 = vld [vmem:[%s8] sm:$0xff]
  %v7269 = vld [vmem:[%s8 + $0x8] sm:$0xff]
  %7271 = vset.pattern.permute.xlu0 0
  %7272 = vperm.xlu0 %7271, %v7268
  %v7273 = vpop.permute.xlu0 %7272
  %7276 = vset.pattern.permute.xlu0 0
  %7277 = vperm.xlu0 %7276, %v7269
  %v7278 = vpop.permute.xlu0 %7277
  %v7281 = vsel %vm55, %v7266, 0
  %v7284 = vsel %vm55, %v7267, 0
  %7286 = vmatprep.subr.mxu0 %v7263
  %7287 = vmatpush1.msra.mxu0 %v7262
  %7288 = vmatprep.subr.mxu0 %v7265
  %7289 = vmatpush1.msra.mxu0 %v7264
  %7290 = vmatprep.subr.mxu0 0.0
  %7291 = vmatpush1.msra.mxu0 0.0
  %7292 = vmatprep.subr.mxu0 0.0
  %7293 = vmatpush1.msra.mxu0 0.0
  %7294 = vmatprep.subr.mxu0 0.0
  %7295 = vmatpush1.msra.mxu0 0.0
  %7296 = vmatprep.subr.mxu0 0.0
  %7297 = vmatpush1.msra.mxu0 0.0
  %7298 = vmatprep.subr.mxu0 0.0
  %7299 = vmatpush1.msra.mxu0 0.0
  %7300 = vmatprep.subr.mxu0 0.0
  %7301 = vmatpush1.msra.mxu0 0.0
  %7302 = vmatprep.subr.mxu0 0.0
  %7303 = vmatpush1.msra.mxu0 0.0
  %7304 = vmatprep.subr.mxu0 0.0
  %7305 = vmatpush1.msra.mxu0 0.0
  %7306 = vmatprep.subr.mxu0 0.0
  %7307 = vmatpush1.msra.mxu0 0.0
  %7308 = vmatprep.subr.mxu0 0.0
  %7309 = vmatpush1.msra.mxu0 0.0
  %7310 = vmatprep.subr.mxu0 0.0
  %7311 = vmatpush1.msra.mxu0 0.0
  %7312 = vmatprep.subr.mxu0 0.0
  %7313 = vmatpush1.msra.mxu0 0.0
  %7314 = vmatprep.subr.mxu0 0.0
  %7315 = vmatpush1.msra.mxu0 0.0
  %7316 = vmatprep.subr.mxu0 0.0
  %7317 = vmatpush1.msra.mxu0 0.0
  %7318 = vmatprep.subr.mxu0 0.0
  %7319 = vmatpush1.msra.mxu0 0.0
  %7320 = vmatprep.subr.mxu0 0.0
  %7321 = vmatpush1.msra.mxu0 0.0
  %7322 = vmatprep.subr.mxu0 0.0
  %7323 = vmatpush1.msra.mxu0 0.0
  %7324 = vmatprep.subr.mxu0 0.0
  %7325 = vmatpush1.msra.mxu0 0.0
  %7326 = vmatprep.subr.mxu0 0.0
  %7327 = vmatpush1.msra.mxu0 0.0
  %7328 = vmatprep.subr.mxu0 0.0
  %7329 = vmatpush1.msra.mxu0 0.0
  %7330 = vmatprep.subr.mxu0 0.0
  %7331 = vmatpush1.msra.mxu0 0.0
  %7332 = vmatprep.subr.mxu0 0.0
  %7333 = vmatpush1.msra.mxu0 0.0
  %7334 = vmatprep.subr.mxu0 0.0
  %7335 = vmatpush1.msra.mxu0 0.0
  %7336 = vmatprep.subr.mxu0 0.0
  %7337 = vmatpush1.msra.mxu0 0.0
  %7338 = vmatprep.subr.mxu0 0.0
  %7339 = vmatpush1.msra.mxu0 0.0
  %7340 = vmatprep.subr.mxu0 0.0
  %7341 = vmatpush1.msra.mxu0 0.0
  %7342 = vmatprep.subr.mxu0 0.0
  %7343 = vmatpush1.msra.mxu0 0.0
  %7344 = vmatprep.subr.mxu0 0.0
  %7345 = vmatpush1.msra.mxu0 0.0
  %7346 = vmatprep.subr.mxu0 0.0
  %7347 = vmatpush1.msra.mxu0 0.0
  %7348 = vmatprep.subr.mxu0 0.0
  %7349 = vmatpush1.msra.mxu0 0.0
  %7350 = vmatprep.mubr.f32.mxu0 0.0
  %7351 = vmatmul.mubr.f32.gmra.mrb[0].mxu0 %v7281
  %v7352 = vpop.f32.mrb[0].mxu0
  %v7353 = vadd.f32 %v7273, %v7352
  %v7354 = vpop.f32.mrb[0].mxu0
  %v7355 = vadd.f32 %v7273, %v7354
  %7356 = vmatprep.mubr.f32.mxu0 0.0
  %7357 = vmatmul.mubr.f32.gmra.mrb[0].mxu0 %v7284
  %v7358 = vpop.f32.mrb[0].mxu0
  %v7359 = vadd.f32 %v7278, %v7358
  %v7360 = vpop.f32.mrb[0].mxu0
  %v7361 = vadd.f32 %v7278, %v7360
  %7362 = vdwg.mxu0
  %v7363 = vadd.f32 %v7353, %v3708
  %v7364 = vadd.f32 %v7355, %v3709
  %v7365 = vadd.f32 %v7359, %v3710
  %v7366 = vadd.f32 %v7361, %v3711
  %s7367 = scalar_lea.vmem %s9, 32
  %7368 = vst [vmem:[%s7367] sm:$0xff] %v7363
  %7369 = vst [vmem:[%s7367 + $0x8] sm:$0xff] %v7364
  %7370 = vst [vmem:[%s7367 + $0x10] sm:$0xff] %v7365
  %7371 = vst [vmem:[%s7367 + $0x18] sm:$0xff] %v7366
  // Predicated region
  $region38: #{attention_layer.1} parent=0 // pred_check
    _
  $region39: #{attention_layer.1} parent=0 // pred_check_branch
    %7373 = sbr.rel (0) target = $region41
  $region40: #{attention_layer.1} parent=0 // pred_region
    _
  $region41: #{attention_layer.1} parent=0 // pred_fallthru
    _
  // Predicated region
  $region42: #{attention_layer.1} parent=0 // pred_check
    _
  $region43: #{attention_layer.1} parent=0 // pred_check_branch
    %7375 = sbr.rel (0) target = $region45
  $region44: #{attention_layer.1} parent=0 // pred_region
    _
  $region45: #{attention_layer.1} parent=0 // pred_fallthru
    _

</llo_original>
